<compile_context>
chip_gen: v7x
topology: tpu7x:2x2x1
jax: 0.10.0
libtpu: 0.0.40
codegen_flags: <defaults>
</compile_context>

<pallas_src>
import jax
import jax.numpy as jnp
from jax.experimental import pallas as pl
from jax.experimental.pallas import tpu as pltpu

# ---------------- configuration (mirrors the PyTorch `args` namespace) -------
B = 2                       # batch
MAX_POST = 7                # args.max_post
N = MAX_POST + 1            # nodes per graph (posts + 1 special c_node)
N_HEAD = 6                  # GAT.n_head (hard-coded in the module)
EMB = 48                    # args.embedding_dim == args.d_model (divisible by 6)
D_HEAD = EMB // N_HEAD      # 8
GAT_LAYERS = 2              # args.gat_num_layers
FINAL_HIDDEN = 32           # args.final_hidden_size
NUM_CLASSES = 3             # args.num_classes
NUM_MLPS = 2                # args.num_mlps (1 input layer + 1 hidden layer)
NHN = N_HEAD * N            # score columns, indexed c = h*N + k
BN = B * N                  # flattened (batch, node) rows
# args.use_senticnet = True  -> input_dim_MLP = embedding_dim
# args.no_special_node = False


# ----------------------------- fused kernel ----------------------------------
def multigat_kernel(feat_ref, off_ref, kselbn_ref, gblk_ref, rep_ref, blk_ref,
                    summask_ref, ehn_ref, specsel_ref, colmask_ref,
                    w_ref, aq_ref, ak_ref,
                    w1_ref, b1_ref, w2_ref, b2_ref, wf_ref, bf_ref,
                    o_ref):
    # feat_ref:    (BN, EMB)          flattened node features (batch-major)
    # off_ref:     (BN, NHN)  float   1.0 where there is NO edge (per q row, tiled over heads)
    # kselbn_ref:  (BN, NHN)          kselbn[b*N+k', h*N+k] = (k'==k)
    # gblk_ref:    (BN, BN)           per-graph block of ones
    # rep_ref:     (NHN, N)           rep[h*N+k, k'] = (k==k')   (row replication)
    # blk_ref:     (NHN, EMB)         blk[h*N+k, c] = (c // D_HEAD == h)
    # summask_ref: (NHN, N_HEAD)      per-head column-sum selector
    # ehn_ref:     (N_HEAD, NHN)      per-head column-expansion selector
    # specsel_ref: (4B, 4*BN)         picks the special-node row per (branch, batch)
    # colmask_ref: (4, 4*NUM_CLASSES) colmask[g, j] = (j // NUM_CLASSES == g)
    # w_ref:       (4*EMB, EMB)       per-branch W stacked (pre-transposed, x @ W)
    # aq/ak_ref:   (4*EMB, NHN)       pre-expanded block-diag attention projections
    # w1/b1/w2/b2: shared MLP         wf_ref: (FINAL_HIDDEN, 4*NUM_CLASSES), bf_ref: (1, 4*NUM_CLASSES)
    # o_ref:       (B, 4*NUM_CLASSES)
    feat0 = feat_ref[...]
    off = off_ref[...] > 0.5
    kselbn = kselbn_ref[...]
    gblk = gblk_ref[...]
    rep = rep_ref[...]
    blk = blk_ref[...]
    summask = summask_ref[...]
    ehn = ehn_ref[...]
    neg = jnp.float32(-1e-8)        # masked_fill value taken verbatim from the module

    feats = []                      # final per-branch features, (BN, EMB) each
    for g in range(4):
        w_g = w_ref[g * EMB:(g + 1) * EMB, :]
        aq_g = aq_ref[g * EMB:(g + 1) * EMB, :]
        ak_g = ak_ref[g * EMB:(g + 1) * EMB, :]
        feat = feat0
        for _ in range(GAT_LAYERS):
            # W projection for all heads / both graphs at once
            qk = jnp.dot(feat, w_g, preferred_element_type=jnp.float32)       # (BN, EMB)
            # query/key scalars, already expanded to the (q, h*N+k) column layout
            sq = jnp.dot(qk, aq_g, preferred_element_type=jnp.float32)        # sq[q, h*N+k] = sq[q, h]
            skE = jnp.dot(qk, ak_g, preferred_element_type=jnp.float32)       # skE[r, h*N+k] = sk[r, h]
            # key-row expansion: r_all[b*N+q, h*N+k] = sk[b*N+k, h]  (one matmul, both graphs)
            r_all = jnp.dot(gblk, skE * kselbn, preferred_element_type=jnp.float32)

            s = jnp.tanh(sq + r_all)                                          # scores, all heads
            s = jnp.where(off, neg, s)                                        # masked_fill((1-adj).bool(), -1e-8)
            e = jnp.exp(s)                                                    # softmax over k (per q, head)
            den = jnp.dot(e, summask, preferred_element_type=jnp.float32)     # (BN, N_HEAD)
            p = e / jnp.dot(den, ehn, preferred_element_type=jnp.float32)     # (BN, NHN)

            # attention-weighted aggregation: one block-structured matmul per graph
            hid_rows = []
            for b in range(B):
                qk_b = qk[b * N:(b + 1) * N, :]                               # (N, EMB)
                qk_bd = jnp.dot(rep, qk_b,
                                preferred_element_type=jnp.float32) * blk     # (NHN, EMB) block-diag
                p_b = p[b * N:(b + 1) * N, :]                                 # (N, NHN)
                hid_rows.append(jnp.tanh(
                    jnp.dot(p_b, qk_bd, preferred_element_type=jnp.float32)))
            feat = feat + jnp.concatenate(hid_rows, axis=0)                   # residual
        feats.append(feat)

    # special node (last node of each graph) for every branch, row = 2*g + b
    feats_cat = jnp.concatenate(feats, axis=0)                                # (4*BN, EMB)
    x = jnp.dot(specsel_ref[...], feats_cat, preferred_element_type=jnp.float32)  # (4B, EMB)

    # shared MLP head (fcs1..fcs4 share the same Linear objects) + 4 stacked classifiers
    h = jnp.maximum(
        jnp.dot(x, w1_ref[...], preferred_element_type=jnp.float32) + b1_ref[...], 0.0)
    h = jnp.maximum(
        jnp.dot(h, w2_ref[...], preferred_element_type=jnp.float32) + b2_ref[...], 0.0)
    logits_all = jnp.dot(h, wf_ref[...], preferred_element_type=jnp.float32) + bf_ref[...]  # (4B, 12)

    # pick, for each branch g, its own row-block (2g:2g+2) and column-block (3g:3g+3)
    cm = colmask_ref[...]                                                     # (4, 12)
    out = jnp.zeros((B, 4 * NUM_CLASSES), jnp.float32)
    for g in range(4):
        out = out + logits_all[2 * g:2 * g + 2, :] * cm[g:g + 1, :]
    o_ref[...] = out


# ----------------------------- wrapper ---------------------------------------
def _multigat_forward(p_mask, feature, c_node, params):
    f32 = jnp.float32
    new_p_mask = jnp.concatenate([p_mask, jnp.ones((B, 1), f32)], axis=1)     # (B, N)
    feat = jnp.concatenate([feature, c_node], axis=1).reshape(BN, EMB)        # (BN, EMB)

    # adjacency / no-edge selector, tiled over heads (column layout h*N + k)
    adj = new_p_mask[:, :, None] * new_p_mask[:, None, :]                     # (B, N, N)
    off = ((1.0 - adj) != 0.0).astype(f32)
    off_cat = jnp.concatenate([off] * N_HEAD, axis=-1).reshape(BN, NHN)       # (BN, NHN)

    # constant selector / expansion matrices
    eye_h = jnp.eye(N_HEAD, dtype=f32)
    eye_n = jnp.eye(N, dtype=f32)
    ehn = jnp.repeat(eye_h, N, axis=1)                                        # (N_HEAD, NHN)
    summask = ehn.T                                                           # (NHN, N_HEAD)
    kselbn = jnp.tile(jnp.tile(eye_n, (1, N_HEAD)), (B, 1))                   # (BN, NHN)
    rows = jnp.arange(BN) // N
    gblk = (rows[:, None] == rows[None, :]).astype(f32)                       # (BN, BN)
    rep = jnp.tile(eye_n, (N_HEAD, 1))                                        # (NHN, N)
    row_h = jnp.arange(NHN) // N
    col_h = jnp.arange(EMB) // D_HEAD
    blk = (row_h[:, None] == col_h[None, :]).astype(f32)                      # (NHN, EMB)
    # special-node row selector: row 2*g + b picks column g*BN + b*N + (N-1)
    specsel = jnp.zeros((4 * B, 4 * BN), f32)
    for g in range(4):
        for b in range(B):
            specsel = specsel.at[2 * g + b, g * BN + b * N + N - 1].set(1.0)
    colmask = (jnp.arange(4)[:, None] ==
               (jnp.arange(4 * NUM_CLASSES)[None, :] // NUM_CLASSES)).astype(f32)  # (4, 12)

    def expand_attn(a):  # (N_HEAD, D_HEAD) -> (EMB, NHN), block-diagonal then lane-expanded
        a_bd = (a[:, :, None] * eye_h[:, None, :]).reshape(EMB, N_HEAD)
        return a_bd @ ehn

    w_all = jnp.concatenate([params["gat"][g]["w"] for g in range(4)], axis=0)        # (4*EMB, EMB)
    aq_all = jnp.concatenate([expand_attn(params["gat"][g]["aq"]) for g in range(4)], axis=0)
    ak_all = jnp.concatenate([expand_attn(params["gat"][g]["ak"]) for g in range(4)], axis=0)
    wf_cat = jnp.concatenate([params["fc_final"][g]["w"] for g in range(4)], axis=1)  # (32, 12)
    bf_cat = jnp.concatenate([params["fc_final"][g]["b"] for g in range(4)], axis=1)  # (1, 12)

    vmem = lambda: pl.BlockSpec(memory_space=pltpu.MemorySpace.VMEM)
    out = pl.pallas_call(
        multigat_kernel,
        out_shape=jax.ShapeDtypeStruct((B, 4 * NUM_CLASSES), jnp.float32),
        in_specs=[vmem() for _ in range(19)],
        out_specs=vmem(),
    )(feat, off_cat, kselbn, gblk, rep, blk, summask, ehn, specsel, colmask,
      w_all, aq_all, ak_all,
      params["mlp"]["w1"], params["mlp"]["b1"],
      params["mlp"]["w2"], params["mlp"]["b2"],
      wf_cat, bf_cat)

    return tuple(out[:, g * NUM_CLASSES:(g + 1) * NUM_CLASSES] for g in range(4))


multigat_forward = jax.jit(_multigat_forward)


# ----------------------------- pure-JAX reference ----------------------------
def gat_ref(p_mask, feat, w, aq, ak):
    adj = p_mask[:, :, None] * p_mask[:, None, :]
    off = (1.0 - adj) != 0.0
    for _ in range(GAT_LAYERS):
        qk = feat @ w
        qk_r = qk.reshape(B, N, N_HEAD, D_HEAD)
        sq = jnp.einsum('bnhd,hd->bnh', qk_r, aq)
        sk = jnp.einsum('bnhd,hd->bnh', qk_r, ak)
        s = jnp.tanh(sq[:, :, None, :] + sk[:, None, :, :])
        s = jnp.where(off[:, :, :, None], jnp.float32(-1e-8), s)
        s = jax.nn.softmax(s, axis=2)
        hid = jnp.tanh(jnp.einsum('bqkh,bkhd->bqhd', s, qk_r))
        feat = feat + hid.reshape(B, N, EMB)
    return feat


def multigat_ref(p_mask, feature, c_node, params):
    new_p_mask = jnp.concatenate([p_mask, jnp.ones((B, 1), jnp.float32)], axis=1)
    feat_full = jnp.concatenate([feature, c_node], axis=1)
    logits = []
    for i in range(4):
        g = params["gat"][i]
        go = gat_ref(new_p_mask, feat_full, g["w"], g["aq"], g["ak"])
        out = go[:, -1, :]
        h = jnp.maximum(out @ params["mlp"]["w1"] + params["mlp"]["b1"], 0.0)
        h = jnp.maximum(h @ params["mlp"]["w2"] + params["mlp"]["b2"], 0.0)
        f = params["fc_final"][i]
        logits.append(h @ f["w"] + f["b"])
    return tuple(logits)


# ----------------------------- deterministic params --------------------------
def init_params(key):
    keys = jax.random.split(key, 32)
    ki = iter(keys)
    params = {"gat": [], "fc_final": []}
    for _ in range(4):
        w = 0.1 * jax.random.normal(next(ki), (EMB, EMB), jnp.float32)        # [in, out]
        attn_w = 0.1 * jax.random.normal(next(ki), (N_HEAD, 2 * D_HEAD), jnp.float32)
        params["gat"].append({"w": w,
                              "aq": attn_w[:, :D_HEAD],
                              "ak": attn_w[:, D_HEAD:]})
    # fcs1..fcs4 share the SAME layer objects in the PyTorch module -> shared weights here
    params["mlp"] = {
        "w1": 0.1 * jax.random.normal(next(ki), (EMB, FINAL_HIDDEN), jnp.float32),
        "b1": 0.01 * jax.random.normal(next(ki), (1, FINAL_HIDDEN), jnp.float32),
        "w2": 0.1 * jax.random.normal(next(ki), (FINAL_HIDDEN, FINAL_HIDDEN), jnp.float32),
        "b2": 0.01 * jax.random.normal(next(ki), (1, FINAL_HIDDEN), jnp.float32),
    }
    for _ in range(4):
        params["fc_final"].append({
            "w": 0.1 * jax.random.normal(next(ki), (FINAL_HIDDEN, NUM_CLASSES), jnp.float32),
            "b": 0.01 * jax.random.normal(next(ki), (1, NUM_CLASSES), jnp.float32),
        })
    return params


# ----------------------------- main -------------------------------------------
if __name__ == "__main__":
    key = jax.random.PRNGKey(0)
    k_mask, k_feat, k_cnode, k_param = jax.random.split(key, 4)

    p_mask = (jax.random.uniform(k_mask, (B, MAX_POST)) > 0.3).astype(jnp.float32)
    feature = jax.random.normal(k_feat, (B, MAX_POST, EMB), jnp.float32)
    c_node = jax.random.normal(k_cnode, (B, 1, EMB), jnp.float32)
    params = init_params(k_param)

    logits = multigat_forward(p_mask, feature, c_node, params)
    logits = jax.block_until_ready(logits)

    ref_logits = multigat_ref(p_mask, feature, c_node, params)
    for got, want in zip(logits, ref_logits):
        assert got.shape == (B, NUM_CLASSES)
        assert jnp.allclose(got, want, rtol=1e-4, atol=1e-4), (got, want)

    # TODO(synk): nn.Dropout layers are treated as identity (eval-mode semantics).
    print("KERNEL_OK")
</pallas_src>

<mosaic_0001>
module attributes {stable_mosaic.version = 11 : i64} {
  func.func @multigat_kernel(%arg0: memref<16x48xf32, #tpu.memory_space<vmem>>, %arg1: memref<16x48xf32, #tpu.memory_space<vmem>>, %arg2: memref<16x48xf32, #tpu.memory_space<vmem>>, %arg3: memref<16x16xf32, #tpu.memory_space<vmem>>, %arg4: memref<48x8xf32, #tpu.memory_space<vmem>>, %arg5: memref<48x48xf32, #tpu.memory_space<vmem>>, %arg6: memref<48x6xf32, #tpu.memory_space<vmem>>, %arg7: memref<6x48xf32, #tpu.memory_space<vmem>>, %arg8: memref<8x64xf32, #tpu.memory_space<vmem>>, %arg9: memref<4x12xf32, #tpu.memory_space<vmem>>, %arg10: memref<192x48xf32, #tpu.memory_space<vmem>>, %arg11: memref<192x48xf32, #tpu.memory_space<vmem>>, %arg12: memref<192x48xf32, #tpu.memory_space<vmem>>, %arg13: memref<48x32xf32, #tpu.memory_space<vmem>>, %arg14: memref<1x32xf32, #tpu.memory_space<vmem>>, %arg15: memref<32x32xf32, #tpu.memory_space<vmem>>, %arg16: memref<1x32xf32, #tpu.memory_space<vmem>>, %arg17: memref<32x12xf32, #tpu.memory_space<vmem>>, %arg18: memref<1x12xf32, #tpu.memory_space<vmem>>, %arg19: memref<2x12xf32, #tpu.memory_space<vmem>>) attributes {dimension_semantics = [], scalar_prefetch = 0 : i64, scratch_operands = 0 : i64, tpu.core_type = #tpu.core_type<tc>} {
    %c0 = arith.constant 0 : index
    %c0_0 = arith.constant 0 : index
    %0 = vector.load %arg0[%c0, %c0_0] : memref<16x48xf32, #tpu.memory_space<vmem>>, vector<16x48xf32>
    %c0_1 = arith.constant 0 : index
    %c0_2 = arith.constant 0 : index
    %1 = vector.load %arg1[%c0_1, %c0_2] : memref<16x48xf32, #tpu.memory_space<vmem>>, vector<16x48xf32>
    %cst = arith.constant 5.000000e-01 : f32
    %2 = vector.broadcast %cst : f32 to vector<16x48xf32>
    %3 = arith.cmpf ogt, %1, %2 : vector<16x48xf32>
    %c0_3 = arith.constant 0 : index
    %c0_4 = arith.constant 0 : index
    %4 = vector.load %arg2[%c0_3, %c0_4] : memref<16x48xf32, #tpu.memory_space<vmem>>, vector<16x48xf32>
    %c0_5 = arith.constant 0 : index
    %c0_6 = arith.constant 0 : index
    %5 = vector.load %arg3[%c0_5, %c0_6] : memref<16x16xf32, #tpu.memory_space<vmem>>, vector<16x16xf32>
    %c0_7 = arith.constant 0 : index
    %c0_8 = arith.constant 0 : index
    %6 = vector.load %arg4[%c0_7, %c0_8] : memref<48x8xf32, #tpu.memory_space<vmem>>, vector<48x8xf32>
    %c0_9 = arith.constant 0 : index
    %c0_10 = arith.constant 0 : index
    %7 = vector.load %arg5[%c0_9, %c0_10] : memref<48x48xf32, #tpu.memory_space<vmem>>, vector<48x48xf32>
    %c0_11 = arith.constant 0 : index
    %c0_12 = arith.constant 0 : index
    %8 = vector.load %arg6[%c0_11, %c0_12] : memref<48x6xf32, #tpu.memory_space<vmem>>, vector<48x6xf32>
    %c0_13 = arith.constant 0 : index
    %c0_14 = arith.constant 0 : index
    %9 = vector.load %arg7[%c0_13, %c0_14] : memref<6x48xf32, #tpu.memory_space<vmem>>, vector<6x48xf32>
    %c0_15 = arith.constant 0 : index
    %c0_16 = arith.constant 0 : index
    %10 = vector.load %arg10[%c0_15, %c0_16] : memref<192x48xf32, #tpu.memory_space<vmem>>, vector<48x48xf32>
    %c0_17 = arith.constant 0 : index
    %c0_18 = arith.constant 0 : index
    %11 = vector.load %arg11[%c0_17, %c0_18] : memref<192x48xf32, #tpu.memory_space<vmem>>, vector<48x48xf32>
    %c0_19 = arith.constant 0 : index
    %c0_20 = arith.constant 0 : index
    %12 = vector.load %arg12[%c0_19, %c0_20] : memref<192x48xf32, #tpu.memory_space<vmem>>, vector<48x48xf32>
    %cst_21 = arith.constant dense<0.000000e+00> : vector<16x48xf32>
    %13 = tpu.matmul %0, %10, %cst_21 {dimension_numbers = #tpu.dot_dimension_numbers<[1], [0], [0], [1], [0, 0, 1, 1], [], []>} : vector<16x48xf32>, vector<48x48xf32>, vector<16x48xf32> -> vector<16x48xf32>
    %cst_22 = arith.constant dense<0.000000e+00> : vector<16x48xf32>
    %14 = tpu.matmul %13, %11, %cst_22 {dimension_numbers = #tpu.dot_dimension_numbers<[1], [0], [0], [1], [0, 0, 1, 1], [], []>} : vector<16x48xf32>, vector<48x48xf32>, vector<16x48xf32> -> vector<16x48xf32>
    %cst_23 = arith.constant dense<0.000000e+00> : vector<16x48xf32>
    %15 = tpu.matmul %13, %12, %cst_23 {dimension_numbers = #tpu.dot_dimension_numbers<[1], [0], [0], [1], [0, 0, 1, 1], [], []>} : vector<16x48xf32>, vector<48x48xf32>, vector<16x48xf32> -> vector<16x48xf32>
    %16 = arith.mulf %15, %4 : vector<16x48xf32>
    %cst_24 = arith.constant dense<0.000000e+00> : vector<16x48xf32>
    %17 = tpu.matmul %5, %16, %cst_24 {dimension_numbers = #tpu.dot_dimension_numbers<[1], [0], [0], [1], [0, 0, 1, 1], [], []>} : vector<16x16xf32>, vector<16x48xf32>, vector<16x48xf32> -> vector<16x48xf32>
    %18 = arith.addf %14, %17 : vector<16x48xf32>
    %19 = math.tanh %18 : vector<16x48xf32>
    %cst_25 = arith.constant -9.99999993E-9 : f32
    %20 = vector.broadcast %cst_25 : f32 to vector<16x48xf32>
    %21 = arith.select %3, %20, %19 : vector<16x48xi1>, vector<16x48xf32>
    %22 = math.exp %21 : vector<16x48xf32>
    %cst_26 = arith.constant dense<0.000000e+00> : vector<16x6xf32>
    %23 = tpu.matmul %22, %8, %cst_26 {dimension_numbers = #tpu.dot_dimension_numbers<[1], [0], [0], [1], [0, 0, 1, 1], [], []>} : vector<16x48xf32>, vector<48x6xf32>, vector<16x6xf32> -> vector<16x6xf32>
    %cst_27 = arith.constant dense<0.000000e+00> : vector<16x48xf32>
    %24 = tpu.matmul %23, %9, %cst_27 {dimension_numbers = #tpu.dot_dimension_numbers<[1], [0], [0], [1], [0, 0, 1, 1], [], []>} : vector<16x6xf32>, vector<6x48xf32>, vector<16x48xf32> -> vector<16x48xf32>
    %25 = arith.divf %22, %24 : vector<16x48xf32>
    %26 = vector.extract_strided_slice %13 {offsets = [0, 0], sizes = [8, 48], strides = [1, 1]} : vector<16x48xf32> to vector<8x48xf32>
    %cst_28 = arith.constant dense<0.000000e+00> : vector<48x48xf32>
    %27 = tpu.matmul %6, %26, %cst_28 {dimension_numbers = #tpu.dot_dimension_numbers<[1], [0], [0], [1], [0, 0, 1, 1], [], []>} : vector<48x8xf32>, vector<8x48xf32>, vector<48x48xf32> -> vector<48x48xf32>
    %28 = arith.mulf %27, %7 : vector<48x48xf32>
    %29 = vector.extract_strided_slice %25 {offsets = [0, 0], sizes = [8, 48], strides = [1, 1]} : vector<16x48xf32> to vector<8x48xf32>
    %cst_29 = arith.constant dense<0.000000e+00> : vector<8x48xf32>
    %30 = tpu.matmul %29, %28, %cst_29 {dimension_numbers = #tpu.dot_dimension_numbers<[1], [0], [0], [1], [0, 0, 1, 1], [], []>} : vector<8x48xf32>, vector<48x48xf32>, vector<8x48xf32> -> vector<8x48xf32>
    %31 = math.tanh %30 : vector<8x48xf32>
    %32 = vector.extract_strided_slice %13 {offsets = [8, 0], sizes = [8, 48], strides = [1, 1]} : vector<16x48xf32> to vector<8x48xf32>
    %cst_30 = arith.constant dense<0.000000e+00> : vector<48x48xf32>
    %33 = tpu.matmul %6, %32, %cst_30 {dimension_numbers = #tpu.dot_dimension_numbers<[1], [0], [0], [1], [0, 0, 1, 1], [], []>} : vector<48x8xf32>, vector<8x48xf32>, vector<48x48xf32> -> vector<48x48xf32>
    %34 = arith.mulf %33, %7 : vector<48x48xf32>
    %35 = vector.extract_strided_slice %25 {offsets = [8, 0], sizes = [8, 48], strides = [1, 1]} : vector<16x48xf32> to vector<8x48xf32>
    %cst_31 = arith.constant dense<0.000000e+00> : vector<8x48xf32>
    %36 = tpu.matmul %35, %34, %cst_31 {dimension_numbers = #tpu.dot_dimension_numbers<[1], [0], [0], [1], [0, 0, 1, 1], [], []>} : vector<8x48xf32>, vector<48x48xf32>, vector<8x48xf32> -> vector<8x48xf32>
    %37 = math.tanh %36 : vector<8x48xf32>
    %38 = tpu.concatenate %31, %37 in 0 : vector<8x48xf32>, vector<8x48xf32> -> vector<16x48xf32>
    %39 = arith.addf %0, %38 : vector<16x48xf32>
    %cst_32 = arith.constant dense<0.000000e+00> : vector<16x48xf32>
    %40 = tpu.matmul %39, %10, %cst_32 {dimension_numbers = #tpu.dot_dimension_numbers<[1], [0], [0], [1], [0, 0, 1, 1], [], []>} : vector<16x48xf32>, vector<48x48xf32>, vector<16x48xf32> -> vector<16x48xf32>
    %cst_33 = arith.constant dense<0.000000e+00> : vector<16x48xf32>
    %41 = tpu.matmul %40, %11, %cst_33 {dimension_numbers = #tpu.dot_dimension_numbers<[1], [0], [0], [1], [0, 0, 1, 1], [], []>} : vector<16x48xf32>, vector<48x48xf32>, vector<16x48xf32> -> vector<16x48xf32>
    %cst_34 = arith.constant dense<0.000000e+00> : vector<16x48xf32>
    %42 = tpu.matmul %40, %12, %cst_34 {dimension_numbers = #tpu.dot_dimension_numbers<[1], [0], [0], [1], [0, 0, 1, 1], [], []>} : vector<16x48xf32>, vector<48x48xf32>, vector<16x48xf32> -> vector<16x48xf32>
    %43 = arith.mulf %42, %4 : vector<16x48xf32>
    %cst_35 = arith.constant dense<0.000000e+00> : vector<16x48xf32>
    %44 = tpu.matmul %5, %43, %cst_35 {dimension_numbers = #tpu.dot_dimension_numbers<[1], [0], [0], [1], [0, 0, 1, 1], [], []>} : vector<16x16xf32>, vector<16x48xf32>, vector<16x48xf32> -> vector<16x48xf32>
    %45 = arith.addf %41, %44 : vector<16x48xf32>
    %46 = math.tanh %45 : vector<16x48xf32>
    %cst_36 = arith.constant -9.99999993E-9 : f32
    %47 = vector.broadcast %cst_36 : f32 to vector<16x48xf32>
    %48 = arith.select %3, %47, %46 : vector<16x48xi1>, vector<16x48xf32>
    %49 = math.exp %48 : vector<16x48xf32>
    %cst_37 = arith.constant dense<0.000000e+00> : vector<16x6xf32>
    %50 = tpu.matmul %49, %8, %cst_37 {dimension_numbers = #tpu.dot_dimension_numbers<[1], [0], [0], [1], [0, 0, 1, 1], [], []>} : vector<16x48xf32>, vector<48x6xf32>, vector<16x6xf32> -> vector<16x6xf32>
    %cst_38 = arith.constant dense<0.000000e+00> : vector<16x48xf32>
    %51 = tpu.matmul %50, %9, %cst_38 {dimension_numbers = #tpu.dot_dimension_numbers<[1], [0], [0], [1], [0, 0, 1, 1], [], []>} : vector<16x6xf32>, vector<6x48xf32>, vector<16x48xf32> -> vector<16x48xf32>
    %52 = arith.divf %49, %51 : vector<16x48xf32>
    %53 = vector.extract_strided_slice %40 {offsets = [0, 0], sizes = [8, 48], strides = [1, 1]} : vector<16x48xf32> to vector<8x48xf32>
    %cst_39 = arith.constant dense<0.000000e+00> : vector<48x48xf32>
    %54 = tpu.matmul %6, %53, %cst_39 {dimension_numbers = #tpu.dot_dimension_numbers<[1], [0], [0], [1], [0, 0, 1, 1], [], []>} : vector<48x8xf32>, vector<8x48xf32>, vector<48x48xf32> -> vector<48x48xf32>
    %55 = arith.mulf %54, %7 : vector<48x48xf32>
    %56 = vector.extract_strided_slice %52 {offsets = [0, 0], sizes = [8, 48], strides = [1, 1]} : vector<16x48xf32> to vector<8x48xf32>
    %cst_40 = arith.constant dense<0.000000e+00> : vector<8x48xf32>
    %57 = tpu.matmul %56, %55, %cst_40 {dimension_numbers = #tpu.dot_dimension_numbers<[1], [0], [0], [1], [0, 0, 1, 1], [], []>} : vector<8x48xf32>, vector<48x48xf32>, vector<8x48xf32> -> vector<8x48xf32>
    %58 = math.tanh %57 : vector<8x48xf32>
    %59 = vector.extract_strided_slice %40 {offsets = [8, 0], sizes = [8, 48], strides = [1, 1]} : vector<16x48xf32> to vector<8x48xf32>
    %cst_41 = arith.constant dense<0.000000e+00> : vector<48x48xf32>
    %60 = tpu.matmul %6, %59, %cst_41 {dimension_numbers = #tpu.dot_dimension_numbers<[1], [0], [0], [1], [0, 0, 1, 1], [], []>} : vector<48x8xf32>, vector<8x48xf32>, vector<48x48xf32> -> vector<48x48xf32>
    %61 = arith.mulf %60, %7 : vector<48x48xf32>
    %62 = vector.extract_strided_slice %52 {offsets = [8, 0], sizes = [8, 48], strides = [1, 1]} : vector<16x48xf32> to vector<8x48xf32>
    %cst_42 = arith.constant dense<0.000000e+00> : vector<8x48xf32>
    %63 = tpu.matmul %62, %61, %cst_42 {dimension_numbers = #tpu.dot_dimension_numbers<[1], [0], [0], [1], [0, 0, 1, 1], [], []>} : vector<8x48xf32>, vector<48x48xf32>, vector<8x48xf32> -> vector<8x48xf32>
    %64 = math.tanh %63 : vector<8x48xf32>
    %65 = tpu.concatenate %58, %64 in 0 : vector<8x48xf32>, vector<8x48xf32> -> vector<16x48xf32>
    %66 = arith.addf %39, %65 : vector<16x48xf32>
    %c48 = arith.constant 48 : index
    %c0_43 = arith.constant 0 : index
    %67 = vector.load %arg10[%c48, %c0_43] : memref<192x48xf32, #tpu.memory_space<vmem>>, vector<48x48xf32>
    %c48_44 = arith.constant 48 : index
    %c0_45 = arith.constant 0 : index
    %68 = vector.load %arg11[%c48_44, %c0_45] : memref<192x48xf32, #tpu.memory_space<vmem>>, vector<48x48xf32>
    %c48_46 = arith.constant 48 : index
    %c0_47 = arith.constant 0 : index
    %69 = vector.load %arg12[%c48_46, %c0_47] : memref<192x48xf32, #tpu.memory_space<vmem>>, vector<48x48xf32>
    %cst_48 = arith.constant dense<0.000000e+00> : vector<16x48xf32>
    %70 = tpu.matmul %0, %67, %cst_48 {dimension_numbers = #tpu.dot_dimension_numbers<[1], [0], [0], [1], [0, 0, 1, 1], [], []>} : vector<16x48xf32>, vector<48x48xf32>, vector<16x48xf32> -> vector<16x48xf32>
    %cst_49 = arith.constant dense<0.000000e+00> : vector<16x48xf32>
    %71 = tpu.matmul %70, %68, %cst_49 {dimension_numbers = #tpu.dot_dimension_numbers<[1], [0], [0], [1], [0, 0, 1, 1], [], []>} : vector<16x48xf32>, vector<48x48xf32>, vector<16x48xf32> -> vector<16x48xf32>
    %cst_50 = arith.constant dense<0.000000e+00> : vector<16x48xf32>
    %72 = tpu.matmul %70, %69, %cst_50 {dimension_numbers = #tpu.dot_dimension_numbers<[1], [0], [0], [1], [0, 0, 1, 1], [], []>} : vector<16x48xf32>, vector<48x48xf32>, vector<16x48xf32> -> vector<16x48xf32>
    %73 = arith.mulf %72, %4 : vector<16x48xf32>
    %cst_51 = arith.constant dense<0.000000e+00> : vector<16x48xf32>
    %74 = tpu.matmul %5, %73, %cst_51 {dimension_numbers = #tpu.dot_dimension_numbers<[1], [0], [0], [1], [0, 0, 1, 1], [], []>} : vector<16x16xf32>, vector<16x48xf32>, vector<16x48xf32> -> vector<16x48xf32>
    %75 = arith.addf %71, %74 : vector<16x48xf32>
    %76 = math.tanh %75 : vector<16x48xf32>
    %cst_52 = arith.constant -9.99999993E-9 : f32
    %77 = vector.broadcast %cst_52 : f32 to vector<16x48xf32>
    %78 = arith.select %3, %77, %76 : vector<16x48xi1>, vector<16x48xf32>
    %79 = math.exp %78 : vector<16x48xf32>
    %cst_53 = arith.constant dense<0.000000e+00> : vector<16x6xf32>
    %80 = tpu.matmul %79, %8, %cst_53 {dimension_numbers = #tpu.dot_dimension_numbers<[1], [0], [0], [1], [0, 0, 1, 1], [], []>} : vector<16x48xf32>, vector<48x6xf32>, vector<16x6xf32> -> vector<16x6xf32>
    %cst_54 = arith.constant dense<0.000000e+00> : vector<16x48xf32>
    %81 = tpu.matmul %80, %9, %cst_54 {dimension_numbers = #tpu.dot_dimension_numbers<[1], [0], [0], [1], [0, 0, 1, 1], [], []>} : vector<16x6xf32>, vector<6x48xf32>, vector<16x48xf32> -> vector<16x48xf32>
    %82 = arith.divf %79, %81 : vector<16x48xf32>
    %83 = vector.extract_strided_slice %70 {offsets = [0, 0], sizes = [8, 48], strides = [1, 1]} : vector<16x48xf32> to vector<8x48xf32>
    %cst_55 = arith.constant dense<0.000000e+00> : vector<48x48xf32>
    %84 = tpu.matmul %6, %83, %cst_55 {dimension_numbers = #tpu.dot_dimension_numbers<[1], [0], [0], [1], [0, 0, 1, 1], [], []>} : vector<48x8xf32>, vector<8x48xf32>, vector<48x48xf32> -> vector<48x48xf32>
    %85 = arith.mulf %84, %7 : vector<48x48xf32>
    %86 = vector.extract_strided_slice %82 {offsets = [0, 0], sizes = [8, 48], strides = [1, 1]} : vector<16x48xf32> to vector<8x48xf32>
    %cst_56 = arith.constant dense<0.000000e+00> : vector<8x48xf32>
    %87 = tpu.matmul %86, %85, %cst_56 {dimension_numbers = #tpu.dot_dimension_numbers<[1], [0], [0], [1], [0, 0, 1, 1], [], []>} : vector<8x48xf32>, vector<48x48xf32>, vector<8x48xf32> -> vector<8x48xf32>
    %88 = math.tanh %87 : vector<8x48xf32>
    %89 = vector.extract_strided_slice %70 {offsets = [8, 0], sizes = [8, 48], strides = [1, 1]} : vector<16x48xf32> to vector<8x48xf32>
    %cst_57 = arith.constant dense<0.000000e+00> : vector<48x48xf32>
    %90 = tpu.matmul %6, %89, %cst_57 {dimension_numbers = #tpu.dot_dimension_numbers<[1], [0], [0], [1], [0, 0, 1, 1], [], []>} : vector<48x8xf32>, vector<8x48xf32>, vector<48x48xf32> -> vector<48x48xf32>
    %91 = arith.mulf %90, %7 : vector<48x48xf32>
    %92 = vector.extract_strided_slice %82 {offsets = [8, 0], sizes = [8, 48], strides = [1, 1]} : vector<16x48xf32> to vector<8x48xf32>
    %cst_58 = arith.constant dense<0.000000e+00> : vector<8x48xf32>
    %93 = tpu.matmul %92, %91, %cst_58 {dimension_numbers = #tpu.dot_dimension_numbers<[1], [0], [0], [1], [0, 0, 1, 1], [], []>} : vector<8x48xf32>, vector<48x48xf32>, vector<8x48xf32> -> vector<8x48xf32>
    %94 = math.tanh %93 : vector<8x48xf32>
    %95 = tpu.concatenate %88, %94 in 0 : vector<8x48xf32>, vector<8x48xf32> -> vector<16x48xf32>
    %96 = arith.addf %0, %95 : vector<16x48xf32>
    %cst_59 = arith.constant dense<0.000000e+00> : vector<16x48xf32>
    %97 = tpu.matmul %96, %67, %cst_59 {dimension_numbers = #tpu.dot_dimension_numbers<[1], [0], [0], [1], [0, 0, 1, 1], [], []>} : vector<16x48xf32>, vector<48x48xf32>, vector<16x48xf32> -> vector<16x48xf32>
    %cst_60 = arith.constant dense<0.000000e+00> : vector<16x48xf32>
    %98 = tpu.matmul %97, %68, %cst_60 {dimension_numbers = #tpu.dot_dimension_numbers<[1], [0], [0], [1], [0, 0, 1, 1], [], []>} : vector<16x48xf32>, vector<48x48xf32>, vector<16x48xf32> -> vector<16x48xf32>
    %cst_61 = arith.constant dense<0.000000e+00> : vector<16x48xf32>
    %99 = tpu.matmul %97, %69, %cst_61 {dimension_numbers = #tpu.dot_dimension_numbers<[1], [0], [0], [1], [0, 0, 1, 1], [], []>} : vector<16x48xf32>, vector<48x48xf32>, vector<16x48xf32> -> vector<16x48xf32>
    %100 = arith.mulf %99, %4 : vector<16x48xf32>
    %cst_62 = arith.constant dense<0.000000e+00> : vector<16x48xf32>
    %101 = tpu.matmul %5, %100, %cst_62 {dimension_numbers = #tpu.dot_dimension_numbers<[1], [0], [0], [1], [0, 0, 1, 1], [], []>} : vector<16x16xf32>, vector<16x48xf32>, vector<16x48xf32> -> vector<16x48xf32>
    %102 = arith.addf %98, %101 : vector<16x48xf32>
    %103 = math.tanh %102 : vector<16x48xf32>
    %cst_63 = arith.constant -9.99999993E-9 : f32
    %104 = vector.broadcast %cst_63 : f32 to vector<16x48xf32>
    %105 = arith.select %3, %104, %103 : vector<16x48xi1>, vector<16x48xf32>
    %106 = math.exp %105 : vector<16x48xf32>
    %cst_64 = arith.constant dense<0.000000e+00> : vector<16x6xf32>
    %107 = tpu.matmul %106, %8, %cst_64 {dimension_numbers = #tpu.dot_dimension_numbers<[1], [0], [0], [1], [0, 0, 1, 1], [], []>} : vector<16x48xf32>, vector<48x6xf32>, vector<16x6xf32> -> vector<16x6xf32>
    %cst_65 = arith.constant dense<0.000000e+00> : vector<16x48xf32>
    %108 = tpu.matmul %107, %9, %cst_65 {dimension_numbers = #tpu.dot_dimension_numbers<[1], [0], [0], [1], [0, 0, 1, 1], [], []>} : vector<16x6xf32>, vector<6x48xf32>, vector<16x48xf32> -> vector<16x48xf32>
    %109 = arith.divf %106, %108 : vector<16x48xf32>
    %110 = vector.extract_strided_slice %97 {offsets = [0, 0], sizes = [8, 48], strides = [1, 1]} : vector<16x48xf32> to vector<8x48xf32>
    %cst_66 = arith.constant dense<0.000000e+00> : vector<48x48xf32>
    %111 = tpu.matmul %6, %110, %cst_66 {dimension_numbers = #tpu.dot_dimension_numbers<[1], [0], [0], [1], [0, 0, 1, 1], [], []>} : vector<48x8xf32>, vector<8x48xf32>, vector<48x48xf32> -> vector<48x48xf32>
    %112 = arith.mulf %111, %7 : vector<48x48xf32>
    %113 = vector.extract_strided_slice %109 {offsets = [0, 0], sizes = [8, 48], strides = [1, 1]} : vector<16x48xf32> to vector<8x48xf32>
    %cst_67 = arith.constant dense<0.000000e+00> : vector<8x48xf32>
    %114 = tpu.matmul %113, %112, %cst_67 {dimension_numbers = #tpu.dot_dimension_numbers<[1], [0], [0], [1], [0, 0, 1, 1], [], []>} : vector<8x48xf32>, vector<48x48xf32>, vector<8x48xf32> -> vector<8x48xf32>
    %115 = math.tanh %114 : vector<8x48xf32>
    %116 = vector.extract_strided_slice %97 {offsets = [8, 0], sizes = [8, 48], strides = [1, 1]} : vector<16x48xf32> to vector<8x48xf32>
    %cst_68 = arith.constant dense<0.000000e+00> : vector<48x48xf32>
    %117 = tpu.matmul %6, %116, %cst_68 {dimension_numbers = #tpu.dot_dimension_numbers<[1], [0], [0], [1], [0, 0, 1, 1], [], []>} : vector<48x8xf32>, vector<8x48xf32>, vector<48x48xf32> -> vector<48x48xf32>
    %118 = arith.mulf %117, %7 : vector<48x48xf32>
    %119 = vector.extract_strided_slice %109 {offsets = [8, 0], sizes = [8, 48], strides = [1, 1]} : vector<16x48xf32> to vector<8x48xf32>
    %cst_69 = arith.constant dense<0.000000e+00> : vector<8x48xf32>
    %120 = tpu.matmul %119, %118, %cst_69 {dimension_numbers = #tpu.dot_dimension_numbers<[1], [0], [0], [1], [0, 0, 1, 1], [], []>} : vector<8x48xf32>, vector<48x48xf32>, vector<8x48xf32> -> vector<8x48xf32>
    %121 = math.tanh %120 : vector<8x48xf32>
    %122 = tpu.concatenate %115, %121 in 0 : vector<8x48xf32>, vector<8x48xf32> -> vector<16x48xf32>
    %123 = arith.addf %96, %122 : vector<16x48xf32>
    %c96 = arith.constant 96 : index
    %c0_70 = arith.constant 0 : index
    %124 = vector.load %arg10[%c96, %c0_70] : memref<192x48xf32, #tpu.memory_space<vmem>>, vector<48x48xf32>
    %c96_71 = arith.constant 96 : index
    %c0_72 = arith.constant 0 : index
    %125 = vector.load %arg11[%c96_71, %c0_72] : memref<192x48xf32, #tpu.memory_space<vmem>>, vector<48x48xf32>
    %c96_73 = arith.constant 96 : index
    %c0_74 = arith.constant 0 : index
    %126 = vector.load %arg12[%c96_73, %c0_74] : memref<192x48xf32, #tpu.memory_space<vmem>>, vector<48x48xf32>
    %cst_75 = arith.constant dense<0.000000e+00> : vector<16x48xf32>
    %127 = tpu.matmul %0, %124, %cst_75 {dimension_numbers = #tpu.dot_dimension_numbers<[1], [0], [0], [1], [0, 0, 1, 1], [], []>} : vector<16x48xf32>, vector<48x48xf32>, vector<16x48xf32> -> vector<16x48xf32>
    %cst_76 = arith.constant dense<0.000000e+00> : vector<16x48xf32>
    %128 = tpu.matmul %127, %125, %cst_76 {dimension_numbers = #tpu.dot_dimension_numbers<[1], [0], [0], [1], [0, 0, 1, 1], [], []>} : vector<16x48xf32>, vector<48x48xf32>, vector<16x48xf32> -> vector<16x48xf32>
    %cst_77 = arith.constant dense<0.000000e+00> : vector<16x48xf32>
    %129 = tpu.matmul %127, %126, %cst_77 {dimension_numbers = #tpu.dot_dimension_numbers<[1], [0], [0], [1], [0, 0, 1, 1], [], []>} : vector<16x48xf32>, vector<48x48xf32>, vector<16x48xf32> -> vector<16x48xf32>
    %130 = arith.mulf %129, %4 : vector<16x48xf32>
    %cst_78 = arith.constant dense<0.000000e+00> : vector<16x48xf32>
    %131 = tpu.matmul %5, %130, %cst_78 {dimension_numbers = #tpu.dot_dimension_numbers<[1], [0], [0], [1], [0, 0, 1, 1], [], []>} : vector<16x16xf32>, vector<16x48xf32>, vector<16x48xf32> -> vector<16x48xf32>
    %132 = arith.addf %128, %131 : vector<16x48xf32>
    %133 = math.tanh %132 : vector<16x48xf32>
    %cst_79 = arith.constant -9.99999993E-9 : f32
    %134 = vector.broadcast %cst_79 : f32 to vector<16x48xf32>
    %135 = arith.select %3, %134, %133 : vector<16x48xi1>, vector<16x48xf32>
    %136 = math.exp %135 : vector<16x48xf32>
    %cst_80 = arith.constant dense<0.000000e+00> : vector<16x6xf32>
    %137 = tpu.matmul %136, %8, %cst_80 {dimension_numbers = #tpu.dot_dimension_numbers<[1], [0], [0], [1], [0, 0, 1, 1], [], []>} : vector<16x48xf32>, vector<48x6xf32>, vector<16x6xf32> -> vector<16x6xf32>
    %cst_81 = arith.constant dense<0.000000e+00> : vector<16x48xf32>
    %138 = tpu.matmul %137, %9, %cst_81 {dimension_numbers = #tpu.dot_dimension_numbers<[1], [0], [0], [1], [0, 0, 1, 1], [], []>} : vector<16x6xf32>, vector<6x48xf32>, vector<16x48xf32> -> vector<16x48xf32>
    %139 = arith.divf %136, %138 : vector<16x48xf32>
    %140 = vector.extract_strided_slice %127 {offsets = [0, 0], sizes = [8, 48], strides = [1, 1]} : vector<16x48xf32> to vector<8x48xf32>
    %cst_82 = arith.constant dense<0.000000e+00> : vector<48x48xf32>
    %141 = tpu.matmul %6, %140, %cst_82 {dimension_numbers = #tpu.dot_dimension_numbers<[1], [0], [0], [1], [0, 0, 1, 1], [], []>} : vector<48x8xf32>, vector<8x48xf32>, vector<48x48xf32> -> vector<48x48xf32>
    %142 = arith.mulf %141, %7 : vector<48x48xf32>
    %143 = vector.extract_strided_slice %139 {offsets = [0, 0], sizes = [8, 48], strides = [1, 1]} : vector<16x48xf32> to vector<8x48xf32>
    %cst_83 = arith.constant dense<0.000000e+00> : vector<8x48xf32>
    %144 = tpu.matmul %143, %142, %cst_83 {dimension_numbers = #tpu.dot_dimension_numbers<[1], [0], [0], [1], [0, 0, 1, 1], [], []>} : vector<8x48xf32>, vector<48x48xf32>, vector<8x48xf32> -> vector<8x48xf32>
    %145 = math.tanh %144 : vector<8x48xf32>
    %146 = vector.extract_strided_slice %127 {offsets = [8, 0], sizes = [8, 48], strides = [1, 1]} : vector<16x48xf32> to vector<8x48xf32>
    %cst_84 = arith.constant dense<0.000000e+00> : vector<48x48xf32>
    %147 = tpu.matmul %6, %146, %cst_84 {dimension_numbers = #tpu.dot_dimension_numbers<[1], [0], [0], [1], [0, 0, 1, 1], [], []>} : vector<48x8xf32>, vector<8x48xf32>, vector<48x48xf32> -> vector<48x48xf32>
    %148 = arith.mulf %147, %7 : vector<48x48xf32>
    %149 = vector.extract_strided_slice %139 {offsets = [8, 0], sizes = [8, 48], strides = [1, 1]} : vector<16x48xf32> to vector<8x48xf32>
    %cst_85 = arith.constant dense<0.000000e+00> : vector<8x48xf32>
    %150 = tpu.matmul %149, %148, %cst_85 {dimension_numbers = #tpu.dot_dimension_numbers<[1], [0], [0], [1], [0, 0, 1, 1], [], []>} : vector<8x48xf32>, vector<48x48xf32>, vector<8x48xf32> -> vector<8x48xf32>
    %151 = math.tanh %150 : vector<8x48xf32>
    %152 = tpu.concatenate %145, %151 in 0 : vector<8x48xf32>, vector<8x48xf32> -> vector<16x48xf32>
    %153 = arith.addf %0, %152 : vector<16x48xf32>
    %cst_86 = arith.constant dense<0.000000e+00> : vector<16x48xf32>
    %154 = tpu.matmul %153, %124, %cst_86 {dimension_numbers = #tpu.dot_dimension_numbers<[1], [0], [0], [1], [0, 0, 1, 1], [], []>} : vector<16x48xf32>, vector<48x48xf32>, vector<16x48xf32> -> vector<16x48xf32>
    %cst_87 = arith.constant dense<0.000000e+00> : vector<16x48xf32>
    %155 = tpu.matmul %154, %125, %cst_87 {dimension_numbers = #tpu.dot_dimension_numbers<[1], [0], [0], [1], [0, 0, 1, 1], [], []>} : vector<16x48xf32>, vector<48x48xf32>, vector<16x48xf32> -> vector<16x48xf32>
    %cst_88 = arith.constant dense<0.000000e+00> : vector<16x48xf32>
    %156 = tpu.matmul %154, %126, %cst_88 {dimension_numbers = #tpu.dot_dimension_numbers<[1], [0], [0], [1], [0, 0, 1, 1], [], []>} : vector<16x48xf32>, vector<48x48xf32>, vector<16x48xf32> -> vector<16x48xf32>
    %157 = arith.mulf %156, %4 : vector<16x48xf32>
    %cst_89 = arith.constant dense<0.000000e+00> : vector<16x48xf32>
    %158 = tpu.matmul %5, %157, %cst_89 {dimension_numbers = #tpu.dot_dimension_numbers<[1], [0], [0], [1], [0, 0, 1, 1], [], []>} : vector<16x16xf32>, vector<16x48xf32>, vector<16x48xf32> -> vector<16x48xf32>
    %159 = arith.addf %155, %158 : vector<16x48xf32>
    %160 = math.tanh %159 : vector<16x48xf32>
    %cst_90 = arith.constant -9.99999993E-9 : f32
    %161 = vector.broadcast %cst_90 : f32 to vector<16x48xf32>
    %162 = arith.select %3, %161, %160 : vector<16x48xi1>, vector<16x48xf32>
    %163 = math.exp %162 : vector<16x48xf32>
    %cst_91 = arith.constant dense<0.000000e+00> : vector<16x6xf32>
    %164 = tpu.matmul %163, %8, %cst_91 {dimension_numbers = #tpu.dot_dimension_numbers<[1], [0], [0], [1], [0, 0, 1, 1], [], []>} : vector<16x48xf32>, vector<48x6xf32>, vector<16x6xf32> -> vector<16x6xf32>
    %cst_92 = arith.constant dense<0.000000e+00> : vector<16x48xf32>
    %165 = tpu.matmul %164, %9, %cst_92 {dimension_numbers = #tpu.dot_dimension_numbers<[1], [0], [0], [1], [0, 0, 1, 1], [], []>} : vector<16x6xf32>, vector<6x48xf32>, vector<16x48xf32> -> vector<16x48xf32>
    %166 = arith.divf %163, %165 : vector<16x48xf32>
    %167 = vector.extract_strided_slice %154 {offsets = [0, 0], sizes = [8, 48], strides = [1, 1]} : vector<16x48xf32> to vector<8x48xf32>
    %cst_93 = arith.constant dense<0.000000e+00> : vector<48x48xf32>
    %168 = tpu.matmul %6, %167, %cst_93 {dimension_numbers = #tpu.dot_dimension_numbers<[1], [0], [0], [1], [0, 0, 1, 1], [], []>} : vector<48x8xf32>, vector<8x48xf32>, vector<48x48xf32> -> vector<48x48xf32>
    %169 = arith.mulf %168, %7 : vector<48x48xf32>
    %170 = vector.extract_strided_slice %166 {offsets = [0, 0], sizes = [8, 48], strides = [1, 1]} : vector<16x48xf32> to vector<8x48xf32>
    %cst_94 = arith.constant dense<0.000000e+00> : vector<8x48xf32>
    %171 = tpu.matmul %170, %169, %cst_94 {dimension_numbers = #tpu.dot_dimension_numbers<[1], [0], [0], [1], [0, 0, 1, 1], [], []>} : vector<8x48xf32>, vector<48x48xf32>, vector<8x48xf32> -> vector<8x48xf32>
    %172 = math.tanh %171 : vector<8x48xf32>
    %173 = vector.extract_strided_slice %154 {offsets = [8, 0], sizes = [8, 48], strides = [1, 1]} : vector<16x48xf32> to vector<8x48xf32>
    %cst_95 = arith.constant dense<0.000000e+00> : vector<48x48xf32>
    %174 = tpu.matmul %6, %173, %cst_95 {dimension_numbers = #tpu.dot_dimension_numbers<[1], [0], [0], [1], [0, 0, 1, 1], [], []>} : vector<48x8xf32>, vector<8x48xf32>, vector<48x48xf32> -> vector<48x48xf32>
    %175 = arith.mulf %174, %7 : vector<48x48xf32>
    %176 = vector.extract_strided_slice %166 {offsets = [8, 0], sizes = [8, 48], strides = [1, 1]} : vector<16x48xf32> to vector<8x48xf32>
    %cst_96 = arith.constant dense<0.000000e+00> : vector<8x48xf32>
    %177 = tpu.matmul %176, %175, %cst_96 {dimension_numbers = #tpu.dot_dimension_numbers<[1], [0], [0], [1], [0, 0, 1, 1], [], []>} : vector<8x48xf32>, vector<48x48xf32>, vector<8x48xf32> -> vector<8x48xf32>
    %178 = math.tanh %177 : vector<8x48xf32>
    %179 = tpu.concatenate %172, %178 in 0 : vector<8x48xf32>, vector<8x48xf32> -> vector<16x48xf32>
    %180 = arith.addf %153, %179 : vector<16x48xf32>
    %c144 = arith.constant 144 : index
    %c0_97 = arith.constant 0 : index
    %181 = vector.load %arg10[%c144, %c0_97] : memref<192x48xf32, #tpu.memory_space<vmem>>, vector<48x48xf32>
    %c144_98 = arith.constant 144 : index
    %c0_99 = arith.constant 0 : index
    %182 = vector.load %arg11[%c144_98, %c0_99] : memref<192x48xf32, #tpu.memory_space<vmem>>, vector<48x48xf32>
    %c144_100 = arith.constant 144 : index
    %c0_101 = arith.constant 0 : index
    %183 = vector.load %arg12[%c144_100, %c0_101] : memref<192x48xf32, #tpu.memory_space<vmem>>, vector<48x48xf32>
    %cst_102 = arith.constant dense<0.000000e+00> : vector<16x48xf32>
    %184 = tpu.matmul %0, %181, %cst_102 {dimension_numbers = #tpu.dot_dimension_numbers<[1], [0], [0], [1], [0, 0, 1, 1], [], []>} : vector<16x48xf32>, vector<48x48xf32>, vector<16x48xf32> -> vector<16x48xf32>
    %cst_103 = arith.constant dense<0.000000e+00> : vector<16x48xf32>
    %185 = tpu.matmul %184, %182, %cst_103 {dimension_numbers = #tpu.dot_dimension_numbers<[1], [0], [0], [1], [0, 0, 1, 1], [], []>} : vector<16x48xf32>, vector<48x48xf32>, vector<16x48xf32> -> vector<16x48xf32>
    %cst_104 = arith.constant dense<0.000000e+00> : vector<16x48xf32>
    %186 = tpu.matmul %184, %183, %cst_104 {dimension_numbers = #tpu.dot_dimension_numbers<[1], [0], [0], [1], [0, 0, 1, 1], [], []>} : vector<16x48xf32>, vector<48x48xf32>, vector<16x48xf32> -> vector<16x48xf32>
    %187 = arith.mulf %186, %4 : vector<16x48xf32>
    %cst_105 = arith.constant dense<0.000000e+00> : vector<16x48xf32>
    %188 = tpu.matmul %5, %187, %cst_105 {dimension_numbers = #tpu.dot_dimension_numbers<[1], [0], [0], [1], [0, 0, 1, 1], [], []>} : vector<16x16xf32>, vector<16x48xf32>, vector<16x48xf32> -> vector<16x48xf32>
    %189 = arith.addf %185, %188 : vector<16x48xf32>
    %190 = math.tanh %189 : vector<16x48xf32>
    %cst_106 = arith.constant -9.99999993E-9 : f32
    %191 = vector.broadcast %cst_106 : f32 to vector<16x48xf32>
    %192 = arith.select %3, %191, %190 : vector<16x48xi1>, vector<16x48xf32>
    %193 = math.exp %192 : vector<16x48xf32>
    %cst_107 = arith.constant dense<0.000000e+00> : vector<16x6xf32>
    %194 = tpu.matmul %193, %8, %cst_107 {dimension_numbers = #tpu.dot_dimension_numbers<[1], [0], [0], [1], [0, 0, 1, 1], [], []>} : vector<16x48xf32>, vector<48x6xf32>, vector<16x6xf32> -> vector<16x6xf32>
    %cst_108 = arith.constant dense<0.000000e+00> : vector<16x48xf32>
    %195 = tpu.matmul %194, %9, %cst_108 {dimension_numbers = #tpu.dot_dimension_numbers<[1], [0], [0], [1], [0, 0, 1, 1], [], []>} : vector<16x6xf32>, vector<6x48xf32>, vector<16x48xf32> -> vector<16x48xf32>
    %196 = arith.divf %193, %195 : vector<16x48xf32>
    %197 = vector.extract_strided_slice %184 {offsets = [0, 0], sizes = [8, 48], strides = [1, 1]} : vector<16x48xf32> to vector<8x48xf32>
    %cst_109 = arith.constant dense<0.000000e+00> : vector<48x48xf32>
    %198 = tpu.matmul %6, %197, %cst_109 {dimension_numbers = #tpu.dot_dimension_numbers<[1], [0], [0], [1], [0, 0, 1, 1], [], []>} : vector<48x8xf32>, vector<8x48xf32>, vector<48x48xf32> -> vector<48x48xf32>
    %199 = arith.mulf %198, %7 : vector<48x48xf32>
    %200 = vector.extract_strided_slice %196 {offsets = [0, 0], sizes = [8, 48], strides = [1, 1]} : vector<16x48xf32> to vector<8x48xf32>
    %cst_110 = arith.constant dense<0.000000e+00> : vector<8x48xf32>
    %201 = tpu.matmul %200, %199, %cst_110 {dimension_numbers = #tpu.dot_dimension_numbers<[1], [0], [0], [1], [0, 0, 1, 1], [], []>} : vector<8x48xf32>, vector<48x48xf32>, vector<8x48xf32> -> vector<8x48xf32>
    %202 = math.tanh %201 : vector<8x48xf32>
    %203 = vector.extract_strided_slice %184 {offsets = [8, 0], sizes = [8, 48], strides = [1, 1]} : vector<16x48xf32> to vector<8x48xf32>
    %cst_111 = arith.constant dense<0.000000e+00> : vector<48x48xf32>
    %204 = tpu.matmul %6, %203, %cst_111 {dimension_numbers = #tpu.dot_dimension_numbers<[1], [0], [0], [1], [0, 0, 1, 1], [], []>} : vector<48x8xf32>, vector<8x48xf32>, vector<48x48xf32> -> vector<48x48xf32>
    %205 = arith.mulf %204, %7 : vector<48x48xf32>
    %206 = vector.extract_strided_slice %196 {offsets = [8, 0], sizes = [8, 48], strides = [1, 1]} : vector<16x48xf32> to vector<8x48xf32>
    %cst_112 = arith.constant dense<0.000000e+00> : vector<8x48xf32>
    %207 = tpu.matmul %206, %205, %cst_112 {dimension_numbers = #tpu.dot_dimension_numbers<[1], [0], [0], [1], [0, 0, 1, 1], [], []>} : vector<8x48xf32>, vector<48x48xf32>, vector<8x48xf32> -> vector<8x48xf32>
    %208 = math.tanh %207 : vector<8x48xf32>
    %209 = tpu.concatenate %202, %208 in 0 : vector<8x48xf32>, vector<8x48xf32> -> vector<16x48xf32>
    %210 = arith.addf %0, %209 : vector<16x48xf32>
    %cst_113 = arith.constant dense<0.000000e+00> : vector<16x48xf32>
    %211 = tpu.matmul %210, %181, %cst_113 {dimension_numbers = #tpu.dot_dimension_numbers<[1], [0], [0], [1], [0, 0, 1, 1], [], []>} : vector<16x48xf32>, vector<48x48xf32>, vector<16x48xf32> -> vector<16x48xf32>
    %cst_114 = arith.constant dense<0.000000e+00> : vector<16x48xf32>
    %212 = tpu.matmul %211, %182, %cst_114 {dimension_numbers = #tpu.dot_dimension_numbers<[1], [0], [0], [1], [0, 0, 1, 1], [], []>} : vector<16x48xf32>, vector<48x48xf32>, vector<16x48xf32> -> vector<16x48xf32>
    %cst_115 = arith.constant dense<0.000000e+00> : vector<16x48xf32>
    %213 = tpu.matmul %211, %183, %cst_115 {dimension_numbers = #tpu.dot_dimension_numbers<[1], [0], [0], [1], [0, 0, 1, 1], [], []>} : vector<16x48xf32>, vector<48x48xf32>, vector<16x48xf32> -> vector<16x48xf32>
    %214 = arith.mulf %213, %4 : vector<16x48xf32>
    %cst_116 = arith.constant dense<0.000000e+00> : vector<16x48xf32>
    %215 = tpu.matmul %5, %214, %cst_116 {dimension_numbers = #tpu.dot_dimension_numbers<[1], [0], [0], [1], [0, 0, 1, 1], [], []>} : vector<16x16xf32>, vector<16x48xf32>, vector<16x48xf32> -> vector<16x48xf32>
    %216 = arith.addf %212, %215 : vector<16x48xf32>
    %217 = math.tanh %216 : vector<16x48xf32>
    %cst_117 = arith.constant -9.99999993E-9 : f32
    %218 = vector.broadcast %cst_117 : f32 to vector<16x48xf32>
    %219 = arith.select %3, %218, %217 : vector<16x48xi1>, vector<16x48xf32>
    %220 = math.exp %219 : vector<16x48xf32>
    %cst_118 = arith.constant dense<0.000000e+00> : vector<16x6xf32>
    %221 = tpu.matmul %220, %8, %cst_118 {dimension_numbers = #tpu.dot_dimension_numbers<[1], [0], [0], [1], [0, 0, 1, 1], [], []>} : vector<16x48xf32>, vector<48x6xf32>, vector<16x6xf32> -> vector<16x6xf32>
    %cst_119 = arith.constant dense<0.000000e+00> : vector<16x48xf32>
    %222 = tpu.matmul %221, %9, %cst_119 {dimension_numbers = #tpu.dot_dimension_numbers<[1], [0], [0], [1], [0, 0, 1, 1], [], []>} : vector<16x6xf32>, vector<6x48xf32>, vector<16x48xf32> -> vector<16x48xf32>
    %223 = arith.divf %220, %222 : vector<16x48xf32>
    %224 = vector.extract_strided_slice %211 {offsets = [0, 0], sizes = [8, 48], strides = [1, 1]} : vector<16x48xf32> to vector<8x48xf32>
    %cst_120 = arith.constant dense<0.000000e+00> : vector<48x48xf32>
    %225 = tpu.matmul %6, %224, %cst_120 {dimension_numbers = #tpu.dot_dimension_numbers<[1], [0], [0], [1], [0, 0, 1, 1], [], []>} : vector<48x8xf32>, vector<8x48xf32>, vector<48x48xf32> -> vector<48x48xf32>
    %226 = arith.mulf %225, %7 : vector<48x48xf32>
    %227 = vector.extract_strided_slice %223 {offsets = [0, 0], sizes = [8, 48], strides = [1, 1]} : vector<16x48xf32> to vector<8x48xf32>
    %cst_121 = arith.constant dense<0.000000e+00> : vector<8x48xf32>
    %228 = tpu.matmul %227, %226, %cst_121 {dimension_numbers = #tpu.dot_dimension_numbers<[1], [0], [0], [1], [0, 0, 1, 1], [], []>} : vector<8x48xf32>, vector<48x48xf32>, vector<8x48xf32> -> vector<8x48xf32>
    %229 = math.tanh %228 : vector<8x48xf32>
    %230 = vector.extract_strided_slice %211 {offsets = [8, 0], sizes = [8, 48], strides = [1, 1]} : vector<16x48xf32> to vector<8x48xf32>
    %cst_122 = arith.constant dense<0.000000e+00> : vector<48x48xf32>
    %231 = tpu.matmul %6, %230, %cst_122 {dimension_numbers = #tpu.dot_dimension_numbers<[1], [0], [0], [1], [0, 0, 1, 1], [], []>} : vector<48x8xf32>, vector<8x48xf32>, vector<48x48xf32> -> vector<48x48xf32>
    %232 = arith.mulf %231, %7 : vector<48x48xf32>
    %233 = vector.extract_strided_slice %223 {offsets = [8, 0], sizes = [8, 48], strides = [1, 1]} : vector<16x48xf32> to vector<8x48xf32>
    %cst_123 = arith.constant dense<0.000000e+00> : vector<8x48xf32>
    %234 = tpu.matmul %233, %232, %cst_123 {dimension_numbers = #tpu.dot_dimension_numbers<[1], [0], [0], [1], [0, 0, 1, 1], [], []>} : vector<8x48xf32>, vector<48x48xf32>, vector<8x48xf32> -> vector<8x48xf32>
    %235 = math.tanh %234 : vector<8x48xf32>
    %236 = tpu.concatenate %229, %235 in 0 : vector<8x48xf32>, vector<8x48xf32> -> vector<16x48xf32>
    %237 = arith.addf %210, %236 : vector<16x48xf32>
    %238 = tpu.concatenate %66, %123, %180, %237 in 0 : vector<16x48xf32>, vector<16x48xf32>, vector<16x48xf32>, vector<16x48xf32> -> vector<64x48xf32>
    %c0_124 = arith.constant 0 : index
    %c0_125 = arith.constant 0 : index
    %239 = vector.load %arg8[%c0_124, %c0_125] : memref<8x64xf32, #tpu.memory_space<vmem>>, vector<8x64xf32>
    %cst_126 = arith.constant dense<0.000000e+00> : vector<8x48xf32>
    %240 = tpu.matmul %239, %238, %cst_126 {dimension_numbers = #tpu.dot_dimension_numbers<[1], [0], [0], [1], [0, 0, 1, 1], [], []>} : vector<8x64xf32>, vector<64x48xf32>, vector<8x48xf32> -> vector<8x48xf32>
    %c0_127 = arith.constant 0 : index
    %c0_128 = arith.constant 0 : index
    %241 = vector.load %arg13[%c0_127, %c0_128] : memref<48x32xf32, #tpu.memory_space<vmem>>, vector<48x32xf32>
    %cst_129 = arith.constant dense<0.000000e+00> : vector<8x32xf32>
    %242 = tpu.matmul %240, %241, %cst_129 {dimension_numbers = #tpu.dot_dimension_numbers<[1], [0], [0], [1], [0, 0, 1, 1], [], []>} : vector<8x48xf32>, vector<48x32xf32>, vector<8x32xf32> -> vector<8x32xf32>
    %c0_130 = arith.constant 0 : index
    %c0_131 = arith.constant 0 : index
    %243 = vector.load %arg14[%c0_130, %c0_131] : memref<1x32xf32, #tpu.memory_space<vmem>>, vector<1x32xf32>
    %244 = vector.broadcast %243 : vector<1x32xf32> to vector<8x32xf32>
    %245 = arith.addf %242, %244 : vector<8x32xf32>
    %cst_132 = arith.constant 0.000000e+00 : f32
    %246 = vector.broadcast %cst_132 : f32 to vector<8x32xf32>
    %247 = arith.maximumf %245, %246 : vector<8x32xf32>
    %c0_133 = arith.constant 0 : index
    %c0_134 = arith.constant 0 : index
    %248 = vector.load %arg15[%c0_133, %c0_134] : memref<32x32xf32, #tpu.memory_space<vmem>>, vector<32x32xf32>
    %cst_135 = arith.constant dense<0.000000e+00> : vector<8x32xf32>
    %249 = tpu.matmul %247, %248, %cst_135 {dimension_numbers = #tpu.dot_dimension_numbers<[1], [0], [0], [1], [0, 0, 1, 1], [], []>} : vector<8x32xf32>, vector<32x32xf32>, vector<8x32xf32> -> vector<8x32xf32>
    %c0_136 = arith.constant 0 : index
    %c0_137 = arith.constant 0 : index
    %250 = vector.load %arg16[%c0_136, %c0_137] : memref<1x32xf32, #tpu.memory_space<vmem>>, vector<1x32xf32>
    %251 = vector.broadcast %250 : vector<1x32xf32> to vector<8x32xf32>
    %252 = arith.addf %249, %251 : vector<8x32xf32>
    %cst_138 = arith.constant 0.000000e+00 : f32
    %253 = vector.broadcast %cst_138 : f32 to vector<8x32xf32>
    %254 = arith.maximumf %252, %253 : vector<8x32xf32>
    %c0_139 = arith.constant 0 : index
    %c0_140 = arith.constant 0 : index
    %255 = vector.load %arg17[%c0_139, %c0_140] : memref<32x12xf32, #tpu.memory_space<vmem>>, vector<32x12xf32>
    %cst_141 = arith.constant dense<0.000000e+00> : vector<8x12xf32>
    %256 = tpu.matmul %254, %255, %cst_141 {dimension_numbers = #tpu.dot_dimension_numbers<[1], [0], [0], [1], [0, 0, 1, 1], [], []>} : vector<8x32xf32>, vector<32x12xf32>, vector<8x12xf32> -> vector<8x12xf32>
    %c0_142 = arith.constant 0 : index
    %c0_143 = arith.constant 0 : index
    %257 = vector.load %arg18[%c0_142, %c0_143] : memref<1x12xf32, #tpu.memory_space<vmem>>, vector<1x12xf32>
    %258 = vector.broadcast %257 : vector<1x12xf32> to vector<8x12xf32>
    %259 = arith.addf %256, %258 : vector<8x12xf32>
    %c0_144 = arith.constant 0 : index
    %c0_145 = arith.constant 0 : index
    %260 = vector.load %arg9[%c0_144, %c0_145] : memref<4x12xf32, #tpu.memory_space<vmem>>, vector<4x12xf32>
    %cst_146 = arith.constant 0.000000e+00 : f32
    %261 = vector.broadcast %cst_146 : f32 to vector<2x12xf32>
    %262 = vector.extract_strided_slice %259 {offsets = [0, 0], sizes = [2, 12], strides = [1, 1]} : vector<8x12xf32> to vector<2x12xf32>
    %263 = vector.extract_strided_slice %260 {offsets = [0, 0], sizes = [1, 12], strides = [1, 1]} : vector<4x12xf32> to vector<1x12xf32>
    %264 = vector.broadcast %263 : vector<1x12xf32> to vector<2x12xf32>
    %265 = arith.mulf %262, %264 : vector<2x12xf32>
    %266 = arith.addf %261, %265 : vector<2x12xf32>
    %267 = vector.extract_strided_slice %259 {offsets = [2, 0], sizes = [2, 12], strides = [1, 1]} : vector<8x12xf32> to vector<2x12xf32>
    %268 = vector.extract_strided_slice %260 {offsets = [1, 0], sizes = [1, 12], strides = [1, 1]} : vector<4x12xf32> to vector<1x12xf32>
    %269 = vector.broadcast %268 : vector<1x12xf32> to vector<2x12xf32>
    %270 = arith.mulf %267, %269 : vector<2x12xf32>
    %271 = arith.addf %266, %270 : vector<2x12xf32>
    %272 = vector.extract_strided_slice %259 {offsets = [4, 0], sizes = [2, 12], strides = [1, 1]} : vector<8x12xf32> to vector<2x12xf32>
    %273 = vector.extract_strided_slice %260 {offsets = [2, 0], sizes = [1, 12], strides = [1, 1]} : vector<4x12xf32> to vector<1x12xf32>
    %274 = vector.broadcast %273 : vector<1x12xf32> to vector<2x12xf32>
    %275 = arith.mulf %272, %274 : vector<2x12xf32>
    %276 = arith.addf %271, %275 : vector<2x12xf32>
    %277 = vector.extract_strided_slice %259 {offsets = [6, 0], sizes = [2, 12], strides = [1, 1]} : vector<8x12xf32> to vector<2x12xf32>
    %278 = vector.extract_strided_slice %260 {offsets = [3, 0], sizes = [1, 12], strides = [1, 1]} : vector<4x12xf32> to vector<1x12xf32>
    %279 = vector.broadcast %278 : vector<1x12xf32> to vector<2x12xf32>
    %280 = arith.mulf %277, %279 : vector<2x12xf32>
    %281 = arith.addf %276, %280 : vector<2x12xf32>
    %c0_147 = arith.constant 0 : index
    %c0_148 = arith.constant 0 : index
    %282 = vector.load %arg19[%c0_147, %c0_148] : memref<2x12xf32, #tpu.memory_space<vmem>>, vector<2x12xf32>
    tpu.vector_store %arg19[%c0_147, %c0_148], %281 {strides = array<i32>} : memref<2x12xf32, #tpu.memory_space<vmem>>, vector<2x12xf32>,
    return
  }
}

</mosaic_0001>

<llo_original>
// kernel: _multigat_forward.1
$region0: #{_multigat_forward.1}
  #allocation0 [shape = 'u32[]', space=smem, size = 0x4, offset = 0x4, fixed_abs, tag = 'smem constant byte address 0x4 - core index']
  #allocation1 [shape = 'u32[144,128]{1,0:T(1,128)}', space=vmem, size = 0x12000, scoped, tag = 'internal scratch']
  %s0 = inlined_call_operand.vmem [shape: f32[16,48], index: 0, kind: input, shape index: {}]
  %s1 = inlined_call_operand.vmem [shape: f32[16,48], index: 1, kind: input, shape index: {}]
  %s2 = inlined_call_operand.vmem [shape: f32[16,48], index: 2, kind: input, shape index: {}]
  %s3 = inlined_call_operand.vmem [shape: f32[16,16], index: 3, kind: input, shape index: {}]
  %s4 = inlined_call_operand.vmem [shape: f32[48,8], index: 4, kind: input, shape index: {}]
  %s5 = inlined_call_operand.vmem [shape: f32[48,48], index: 5, kind: input, shape index: {}]
  %s6 = inlined_call_operand.vmem [shape: f32[48,6], index: 6, kind: input, shape index: {}]
  %s7 = inlined_call_operand.vmem [shape: f32[6,48], index: 7, kind: input, shape index: {}]
  %s8 = inlined_call_operand.vmem [shape: f32[8,64], index: 8, kind: input, shape index: {}]
  %s9 = inlined_call_operand.vmem [shape: f32[4,12], index: 9, kind: input, shape index: {}]
  %s10 = inlined_call_operand.vmem [shape: f32[192,48], index: 10, kind: input, shape index: {}]
  %s11 = inlined_call_operand.vmem [shape: f32[192,48], index: 11, kind: input, shape index: {}]
  %s12 = inlined_call_operand.vmem [shape: f32[192,48], index: 12, kind: input, shape index: {}]
  %s13 = inlined_call_operand.vmem [shape: f32[48,32], index: 13, kind: input, shape index: {}]
  %s14 = inlined_call_operand.vmem [shape: f32[1,32], index: 14, kind: input, shape index: {}]
  %s15 = inlined_call_operand.vmem [shape: f32[32,32], index: 15, kind: input, shape index: {}]
  %s16 = inlined_call_operand.vmem [shape: f32[1,32], index: 16, kind: input, shape index: {}]
  %s17 = inlined_call_operand.vmem [shape: f32[32,12], index: 17, kind: input, shape index: {}]
  %s18 = inlined_call_operand.vmem [shape: f32[1,12], index: 18, kind: input, shape index: {}]
  %s19 = inlined_call_operand.vmem [shape: f32[2,12], index: 19, kind: output, shape index: {}]
  %s20 = sld [smem:[#allocation0]]
  $region86: #{_multigat_forward.1} parent=0
    _
  %s22 = ssub.s32 1, %s20
  %s23 = scalar_select 0, %s22, %s20
  // Predicated region
  $region2: #{_multigat_forward.1} parent=0 // pred_check
    _
  $region3: #{_multigat_forward.1} parent=0 // pred_check_branch
    %25 = sbr.rel (0) target = $region5
  $region4: #{_multigat_forward.1} parent=0 // pred_region
    _
  $region5: #{_multigat_forward.1} parent=0 // pred_fallthru
    _
  // Predicated region
  $region6: #{_multigat_forward.1} parent=0 // pred_check
    _
  $region7: #{_multigat_forward.1} parent=0 // pred_check_branch
    %27 = sbr.rel (0) target = $region9
  $region8: #{_multigat_forward.1} parent=0 // pred_region
    _
  $region9: #{_multigat_forward.1} parent=0 // pred_fallthru
    _
  // Predicated region
  $region10: #{_multigat_forward.1} parent=0 // pred_check
    _
  $region11: #{_multigat_forward.1} parent=0 // pred_check_branch
    %29 = sbr.rel (0) target = $region13
  $region12: #{_multigat_forward.1} parent=0 // pred_region
    _
  $region13: #{_multigat_forward.1} parent=0 // pred_fallthru
    _
  // Predicated region
  $region14: #{_multigat_forward.1} parent=0 // pred_check
    _
  $region15: #{_multigat_forward.1} parent=0 // pred_check_branch
    %31 = sbr.rel (0) target = $region17
  $region16: #{_multigat_forward.1} parent=0 // pred_region
    _
  $region17: #{_multigat_forward.1} parent=0 // pred_fallthru
    _
  // Predicated region
  $region18: #{_multigat_forward.1} parent=0 // pred_check
    _
  $region19: #{_multigat_forward.1} parent=0 // pred_check_branch
    %33 = sbr.rel (0) target = $region21
  $region20: #{_multigat_forward.1} parent=0 // pred_region
    _
  $region21: #{_multigat_forward.1} parent=0 // pred_fallthru
    _
  // Predicated region
  $region22: #{_multigat_forward.1} parent=0 // pred_check
    _
  $region23: #{_multigat_forward.1} parent=0 // pred_check_branch
    %35 = sbr.rel (0) target = $region25
  $region24: #{_multigat_forward.1} parent=0 // pred_region
    _
  $region25: #{_multigat_forward.1} parent=0 // pred_fallthru
    _
  // Predicated region
  $region26: #{_multigat_forward.1} parent=0 // pred_check
    _
  $region27: #{_multigat_forward.1} parent=0 // pred_check_branch
    %37 = sbr.rel (0) target = $region29
  $region28: #{_multigat_forward.1} parent=0 // pred_region
    _
  $region29: #{_multigat_forward.1} parent=0 // pred_fallthru
    _
  // Predicated region
  $region30: #{_multigat_forward.1} parent=0 // pred_check
    _
  $region31: #{_multigat_forward.1} parent=0 // pred_check_branch
    %39 = sbr.rel (0) target = $region33
  $region32: #{_multigat_forward.1} parent=0 // pred_region
    _
  $region33: #{_multigat_forward.1} parent=0 // pred_fallthru
    _
  // Predicated region
  $region34: #{_multigat_forward.1} parent=0 // pred_check
    _
  $region35: #{_multigat_forward.1} parent=0 // pred_check_branch
    %41 = sbr.rel (0) target = $region37
  $region36: #{_multigat_forward.1} parent=0 // pred_region
    _
  $region37: #{_multigat_forward.1} parent=0 // pred_fallthru
    _
  // Predicated region
  $region38: #{_multigat_forward.1} parent=0 // pred_check
    _
  $region39: #{_multigat_forward.1} parent=0 // pred_check_branch
    %43 = sbr.rel (0) target = $region41
  $region40: #{_multigat_forward.1} parent=0 // pred_region
    _
  $region41: #{_multigat_forward.1} parent=0 // pred_fallthru
    _
  // Predicated region
  $region42: #{_multigat_forward.1} parent=0 // pred_check
    _
  $region43: #{_multigat_forward.1} parent=0 // pred_check_branch
    %45 = sbr.rel (0) target = $region45
  $region44: #{_multigat_forward.1} parent=0 // pred_region
    _
  $region45: #{_multigat_forward.1} parent=0 // pred_fallthru
    _
  // Predicated region
  $region46: #{_multigat_forward.1} parent=0 // pred_check
    _
  $region47: #{_multigat_forward.1} parent=0 // pred_check_branch
    %47 = sbr.rel (0) target = $region49
  $region48: #{_multigat_forward.1} parent=0 // pred_region
    _
  $region49: #{_multigat_forward.1} parent=0 // pred_fallthru
    _
  // Predicated region
  $region50: #{_multigat_forward.1} parent=0 // pred_check
    _
  $region51: #{_multigat_forward.1} parent=0 // pred_check_branch
    %49 = sbr.rel (0) target = $region53
  $region52: #{_multigat_forward.1} parent=0 // pred_region
    _
  $region53: #{_multigat_forward.1} parent=0 // pred_fallthru
    _
  // Predicated region
  $region54: #{_multigat_forward.1} parent=0 // pred_check
    _
  $region55: #{_multigat_forward.1} parent=0 // pred_check_branch
    %51 = sbr.rel (0) target = $region57
  $region56: #{_multigat_forward.1} parent=0 // pred_region
    _
  $region57: #{_multigat_forward.1} parent=0 // pred_fallthru
    _
  // Predicated region
  $region58: #{_multigat_forward.1} parent=0 // pred_check
    _
  $region59: #{_multigat_forward.1} parent=0 // pred_check_branch
    %53 = sbr.rel (0) target = $region61
  $region60: #{_multigat_forward.1} parent=0 // pred_region
    _
  $region61: #{_multigat_forward.1} parent=0 // pred_fallthru
    _
  // Predicated region
  $region62: #{_multigat_forward.1} parent=0 // pred_check
    _
  $region63: #{_multigat_forward.1} parent=0 // pred_check_branch
    %55 = sbr.rel (0) target = $region65
  $region64: #{_multigat_forward.1} parent=0 // pred_region
    _
  $region65: #{_multigat_forward.1} parent=0 // pred_fallthru
    _
  // Predicated region
  $region66: #{_multigat_forward.1} parent=0 // pred_check
    _
  $region67: #{_multigat_forward.1} parent=0 // pred_check_branch
    %57 = sbr.rel (0) target = $region69
  $region68: #{_multigat_forward.1} parent=0 // pred_region
    _
  $region69: #{_multigat_forward.1} parent=0 // pred_fallthru
    _
  // Predicated region
  $region70: #{_multigat_forward.1} parent=0 // pred_check
    _
  $region71: #{_multigat_forward.1} parent=0 // pred_check_branch
    %59 = sbr.rel (0) target = $region73
  $region72: #{_multigat_forward.1} parent=0 // pred_region
    _
  $region73: #{_multigat_forward.1} parent=0 // pred_fallthru
    _
  // Predicated region
  $region74: #{_multigat_forward.1} parent=0 // pred_check
    _
  $region75: #{_multigat_forward.1} parent=0 // pred_check_branch
    %61 = sbr.rel (0) target = $region77
  $region76: #{_multigat_forward.1} parent=0 // pred_region
    _
  $region77: #{_multigat_forward.1} parent=0 // pred_fallthru
    _
  %v62 = vld [vmem:[%s0] sm:$0xff]
  %v63 = vld [vmem:[%s0 + $0x8] sm:$0xff]
  %v64 = vld [vmem:[%s1] sm:$0xff]
  %v65 = vld [vmem:[%s1 + $0x8] sm:$0xff]
  %vm66 = vcmp.gt.f32.partialorder %v64, 0.5
  %vm67 = vcmp.gt.f32.partialorder %v65, 0.5
  %v68 = vld [vmem:[%s2] sm:$0xff]
  %v69 = vld [vmem:[%s2 + $0x8] sm:$0xff]
  %v70 = vld [vmem:[%s3] sm:$0xff]
  %v71 = vld [vmem:[%s3 + $0x8] sm:$0xff]
  %v72 = vld [vmem:[%s4] sm:$0xff]
  %v73 = vld [vmem:[%s4 + $0x8] sm:$0xff]
  %v74 = vld [vmem:[%s4 + $0x10] sm:$0xff]
  %v75 = vld [vmem:[%s4 + $0x18] sm:$0xff]
  %v76 = vld [vmem:[%s4 + $0x20] sm:$0xff]
  %v77 = vld [vmem:[%s4 + $0x28] sm:$0xff]
  %v78 = vld [vmem:[%s5] sm:$0xff]
  %v79 = vld [vmem:[%s5 + $0x8] sm:$0xff]
  %v80 = vld [vmem:[%s5 + $0x10] sm:$0xff]
  %v81 = vld [vmem:[%s5 + $0x18] sm:$0xff]
  %v82 = vld [vmem:[%s5 + $0x20] sm:$0xff]
  %v83 = vld [vmem:[%s5 + $0x28] sm:$0xff]
  %v84 = vld [vmem:[%s6] sm:$0xff]
  %v85 = vld [vmem:[%s6 + $0x8] sm:$0xff]
  %v86 = vld [vmem:[%s6 + $0x10] sm:$0xff]
  %v87 = vld [vmem:[%s6 + $0x18] sm:$0xff]
  %v88 = vld [vmem:[%s6 + $0x20] sm:$0xff]
  %v89 = vld [vmem:[%s6 + $0x28] sm:$0xff]
  %v90 = vld [vmem:[%s7] sm:$0x3f]
  %v91 = vld [vmem:[%s10] sm:$0xff]
  %v92 = vld [vmem:[%s10 + $0x8] sm:$0xff]
  %v93 = vld [vmem:[%s10 + $0x10] sm:$0xff]
  %v94 = vld [vmem:[%s10 + $0x18] sm:$0xff]
  %v95 = vld [vmem:[%s10 + $0x20] sm:$0xff]
  %v96 = vld [vmem:[%s10 + $0x28] sm:$0xff]
  %v97 = vld [vmem:[%s11] sm:$0xff]
  %v98 = vld [vmem:[%s11 + $0x8] sm:$0xff]
  %v99 = vld [vmem:[%s11 + $0x10] sm:$0xff]
  %v100 = vld [vmem:[%s11 + $0x18] sm:$0xff]
  %v101 = vld [vmem:[%s11 + $0x20] sm:$0xff]
  %v102 = vld [vmem:[%s11 + $0x28] sm:$0xff]
  %v103 = vld [vmem:[%s12] sm:$0xff]
  %v104 = vld [vmem:[%s12 + $0x8] sm:$0xff]
  %v105 = vld [vmem:[%s12 + $0x10] sm:$0xff]
  %v106 = vld [vmem:[%s12 + $0x18] sm:$0xff]
  %v107 = vld [vmem:[%s12 + $0x20] sm:$0xff]
  %v108 = vld [vmem:[%s12 + $0x28] sm:$0xff]
  %vm109 = vcmask 392192
  %v111 = vsel %vm109, %v62, 0
  %v114 = vsel %vm109, %v63, 0
  %116 = vmatprep.subr.mxu0 0.0
  %117 = vmatpush1.msra.mxu0 %v91
  %118 = vmatprep.subr.mxu0 0.0
  %119 = vmatpush1.msra.mxu0 %v92
  %120 = vmatprep.subr.mxu0 0.0
  %121 = vmatpush1.msra.mxu0 %v93
  %122 = vmatprep.subr.mxu0 0.0
  %123 = vmatpush1.msra.mxu0 %v94
  %124 = vmatprep.subr.mxu0 0.0
  %125 = vmatpush1.msra.mxu0 %v95
  %126 = vmatprep.subr.mxu0 0.0
  %127 = vmatpush1.msra.mxu0 %v96
  %128 = vmatprep.subr.mxu0 0.0
  %129 = vmatpush1.msra.mxu0 0.0
  %130 = vmatprep.subr.mxu0 0.0
  %131 = vmatpush1.msra.mxu0 0.0
  %132 = vmatprep.subr.mxu0 0.0
  %133 = vmatpush1.msra.mxu0 0.0
  %134 = vmatprep.subr.mxu0 0.0
  %135 = vmatpush1.msra.mxu0 0.0
  %136 = vmatprep.subr.mxu0 0.0
  %137 = vmatpush1.msra.mxu0 0.0
  %138 = vmatprep.subr.mxu0 0.0
  %139 = vmatpush1.msra.mxu0 0.0
  %140 = vmatprep.subr.mxu0 0.0
  %141 = vmatpush1.msra.mxu0 0.0
  %142 = vmatprep.subr.mxu0 0.0
  %143 = vmatpush1.msra.mxu0 0.0
  %144 = vmatprep.subr.mxu0 0.0
  %145 = vmatpush1.msra.mxu0 0.0
  %146 = vmatprep.subr.mxu0 0.0
  %147 = vmatpush1.msra.mxu0 0.0
  %148 = vmatprep.subr.mxu0 0.0
  %149 = vmatpush1.msra.mxu0 0.0
  %150 = vmatprep.subr.mxu0 0.0
  %151 = vmatpush1.msra.mxu0 0.0
  %152 = vmatprep.subr.mxu0 0.0
  %153 = vmatpush1.msra.mxu0 0.0
  %154 = vmatprep.subr.mxu0 0.0
  %155 = vmatpush1.msra.mxu0 0.0
  %156 = vmatprep.subr.mxu0 0.0
  %157 = vmatpush1.msra.mxu0 0.0
  %158 = vmatprep.subr.mxu0 0.0
  %159 = vmatpush1.msra.mxu0 0.0
  %160 = vmatprep.subr.mxu0 0.0
  %161 = vmatpush1.msra.mxu0 0.0
  %162 = vmatprep.subr.mxu0 0.0
  %163 = vmatpush1.msra.mxu0 0.0
  %164 = vmatprep.subr.mxu0 0.0
  %165 = vmatpush1.msra.mxu0 0.0
  %166 = vmatprep.subr.mxu0 0.0
  %167 = vmatpush1.msra.mxu0 0.0
  %168 = vmatprep.subr.mxu0 0.0
  %169 = vmatpush1.msra.mxu0 0.0
  %170 = vmatprep.subr.mxu0 0.0
  %171 = vmatpush1.msra.mxu0 0.0
  %172 = vmatprep.subr.mxu0 0.0
  %173 = vmatpush1.msra.mxu0 0.0
  %174 = vmatprep.subr.mxu0 0.0
  %175 = vmatpush1.msra.mxu0 0.0
  %176 = vmatprep.subr.mxu0 0.0
  %177 = vmatpush1.msra.mxu0 0.0
  %178 = vmatprep.subr.mxu0 0.0
  %179 = vmatpush1.msra.mxu0 0.0
  %180 = vmatprep.mubr.f32.mxu0 0.0
  %181 = vmatmul.mubr.f32.gmra.mrb[0].mxu0 %v111
  %v182 = vpop.f32.mrb[0].mxu0
  %v183 = vadd.f32 0.0, %v182
  %v184 = vpop.f32.mrb[0].mxu0
  %185 = vmatprep.mubr.f32.mxu0 0.0
  %186 = vmatmul.mubr.f32.gmra.mrb[0].mxu0 %v114
  %v187 = vpop.f32.mrb[0].mxu0
  %v188 = vadd.f32 0.0, %v187
  %v189 = vpop.f32.mrb[0].mxu0
  %190 = vdwg.mxu0
  %v192 = vsel %vm109, %v183, 0
  %v195 = vsel %vm109, %v188, 0
  %197 = vmatprep.subr.mxu0 0.0
  %198 = vmatpush1.msra.mxu0 %v103
  %199 = vmatprep.subr.mxu0 0.0
  %200 = vmatpush1.msra.mxu0 %v104
  %201 = vmatprep.subr.mxu0 0.0
  %202 = vmatpush1.msra.mxu0 %v105
  %203 = vmatprep.subr.mxu0 0.0
  %204 = vmatpush1.msra.mxu0 %v106
  %205 = vmatprep.subr.mxu0 0.0
  %206 = vmatpush1.msra.mxu0 %v107
  %207 = vmatprep.subr.mxu0 0.0
  %208 = vmatpush1.msra.mxu0 %v108
  %209 = vmatprep.subr.mxu0 0.0
  %210 = vmatpush1.msra.mxu0 0.0
  %211 = vmatprep.subr.mxu0 0.0
  %212 = vmatpush1.msra.mxu0 0.0
  %213 = vmatprep.subr.mxu0 0.0
  %214 = vmatpush1.msra.mxu0 0.0
  %215 = vmatprep.subr.mxu0 0.0
  %216 = vmatpush1.msra.mxu0 0.0
  %217 = vmatprep.subr.mxu0 0.0
  %218 = vmatpush1.msra.mxu0 0.0
  %219 = vmatprep.subr.mxu0 0.0
  %220 = vmatpush1.msra.mxu0 0.0
  %221 = vmatprep.subr.mxu0 0.0
  %222 = vmatpush1.msra.mxu0 0.0
  %223 = vmatprep.subr.mxu0 0.0
  %224 = vmatpush1.msra.mxu0 0.0
  %225 = vmatprep.subr.mxu0 0.0
  %226 = vmatpush1.msra.mxu0 0.0
  %227 = vmatprep.subr.mxu0 0.0
  %228 = vmatpush1.msra.mxu0 0.0
  %229 = vmatprep.subr.mxu0 0.0
  %230 = vmatpush1.msra.mxu0 0.0
  %231 = vmatprep.subr.mxu0 0.0
  %232 = vmatpush1.msra.mxu0 0.0
  %233 = vmatprep.subr.mxu0 0.0
  %234 = vmatpush1.msra.mxu0 0.0
  %235 = vmatprep.subr.mxu0 0.0
  %236 = vmatpush1.msra.mxu0 0.0
  %237 = vmatprep.subr.mxu0 0.0
  %238 = vmatpush1.msra.mxu0 0.0
  %239 = vmatprep.subr.mxu0 0.0
  %240 = vmatpush1.msra.mxu0 0.0
  %241 = vmatprep.subr.mxu0 0.0
  %242 = vmatpush1.msra.mxu0 0.0
  %243 = vmatprep.subr.mxu0 0.0
  %244 = vmatpush1.msra.mxu0 0.0
  %245 = vmatprep.subr.mxu0 0.0
  %246 = vmatpush1.msra.mxu0 0.0
  %247 = vmatprep.subr.mxu0 0.0
  %248 = vmatpush1.msra.mxu0 0.0
  %249 = vmatprep.subr.mxu0 0.0
  %250 = vmatpush1.msra.mxu0 0.0
  %251 = vmatprep.subr.mxu0 0.0
  %252 = vmatpush1.msra.mxu0 0.0
  %253 = vmatprep.subr.mxu0 0.0
  %254 = vmatpush1.msra.mxu0 0.0
  %255 = vmatprep.subr.mxu0 0.0
  %256 = vmatpush1.msra.mxu0 0.0
  %257 = vmatprep.subr.mxu0 0.0
  %258 = vmatpush1.msra.mxu0 0.0
  %259 = vmatprep.subr.mxu0 0.0
  %260 = vmatpush1.msra.mxu0 0.0
  %261 = vmatprep.mubr.f32.mxu0 0.0
  %262 = vmatmul.mubr.f32.gmra.mrb[0].mxu0 %v192
  %v263 = vpop.f32.mrb[0].mxu0
  %v264 = vadd.f32 0.0, %v263
  %v265 = vpop.f32.mrb[0].mxu0
  %266 = vmatprep.mubr.f32.mxu0 0.0
  %267 = vmatmul.mubr.f32.gmra.mrb[0].mxu0 %v195
  %v268 = vpop.f32.mrb[0].mxu0
  %v269 = vadd.f32 0.0, %v268
  %v270 = vpop.f32.mrb[0].mxu0
  %271 = vdwg.mxu0
  %v272 = vmul.f32 %v264, %v68
  %v273 = vmul.f32 %v269, %v69
  %vm274 = vcmask 130048
  %v276 = vsel %vm274, %v70, 0
  %v279 = vsel %vm274, %v71, 0
  %281 = vmatprep.subr.mxu0 0.0
  %282 = vmatpush1.msra.mxu0 %v272
  %283 = vmatprep.subr.mxu0 0.0
  %284 = vmatpush1.msra.mxu0 %v273
  %285 = vmatprep.subr.mxu0 0.0
  %286 = vmatpush1.msra.mxu0 0.0
  %287 = vmatprep.subr.mxu0 0.0
  %288 = vmatpush1.msra.mxu0 0.0
  %289 = vmatprep.subr.mxu0 0.0
  %290 = vmatpush1.msra.mxu0 0.0
  %291 = vmatprep.subr.mxu0 0.0
  %292 = vmatpush1.msra.mxu0 0.0
  %293 = vmatprep.subr.mxu0 0.0
  %294 = vmatpush1.msra.mxu0 0.0
  %295 = vmatprep.subr.mxu0 0.0
  %296 = vmatpush1.msra.mxu0 0.0
  %297 = vmatprep.subr.mxu0 0.0
  %298 = vmatpush1.msra.mxu0 0.0
  %299 = vmatprep.subr.mxu0 0.0
  %300 = vmatpush1.msra.mxu0 0.0
  %301 = vmatprep.subr.mxu0 0.0
  %302 = vmatpush1.msra.mxu0 0.0
  %303 = vmatprep.subr.mxu0 0.0
  %304 = vmatpush1.msra.mxu0 0.0
  %305 = vmatprep.subr.mxu0 0.0
  %306 = vmatpush1.msra.mxu0 0.0
  %307 = vmatprep.subr.mxu0 0.0
  %308 = vmatpush1.msra.mxu0 0.0
  %309 = vmatprep.subr.mxu0 0.0
  %310 = vmatpush1.msra.mxu0 0.0
  %311 = vmatprep.subr.mxu0 0.0
  %312 = vmatpush1.msra.mxu0 0.0
  %313 = vmatprep.subr.mxu0 0.0
  %314 = vmatpush1.msra.mxu0 0.0
  %315 = vmatprep.subr.mxu0 0.0
  %316 = vmatpush1.msra.mxu0 0.0
  %317 = vmatprep.subr.mxu0 0.0
  %318 = vmatpush1.msra.mxu0 0.0
  %319 = vmatprep.subr.mxu0 0.0
  %320 = vmatpush1.msra.mxu0 0.0
  %321 = vmatprep.subr.mxu0 0.0
  %322 = vmatpush1.msra.mxu0 0.0
  %323 = vmatprep.subr.mxu0 0.0
  %324 = vmatpush1.msra.mxu0 0.0
  %325 = vmatprep.subr.mxu0 0.0
  %326 = vmatpush1.msra.mxu0 0.0
  %327 = vmatprep.subr.mxu0 0.0
  %328 = vmatpush1.msra.mxu0 0.0
  %329 = vmatprep.subr.mxu0 0.0
  %330 = vmatpush1.msra.mxu0 0.0
  %331 = vmatprep.subr.mxu0 0.0
  %332 = vmatpush1.msra.mxu0 0.0
  %333 = vmatprep.subr.mxu0 0.0
  %334 = vmatpush1.msra.mxu0 0.0
  %335 = vmatprep.subr.mxu0 0.0
  %336 = vmatpush1.msra.mxu0 0.0
  %337 = vmatprep.subr.mxu0 0.0
  %338 = vmatpush1.msra.mxu0 0.0
  %339 = vmatprep.subr.mxu0 0.0
  %340 = vmatpush1.msra.mxu0 0.0
  %341 = vmatprep.subr.mxu0 0.0
  %342 = vmatpush1.msra.mxu0 0.0
  %343 = vmatprep.subr.mxu0 0.0
  %344 = vmatpush1.msra.mxu0 0.0
  %345 = vmatprep.mubr.f32.mxu0 0.0
  %346 = vmatmul.mubr.f32.gmra.mrb[0].mxu0 %v276
  %v347 = vpop.f32.mrb[0].mxu0
  %v348 = vadd.f32 0.0, %v347
  %v349 = vpop.f32.mrb[0].mxu0
  %350 = vmatprep.mubr.f32.mxu0 0.0
  %351 = vmatmul.mubr.f32.gmra.mrb[0].mxu0 %v279
  %v352 = vpop.f32.mrb[0].mxu0
  %v353 = vadd.f32 0.0, %v352
  %v354 = vpop.f32.mrb[0].mxu0
  %355 = vdwg.mxu0
  %356 = vmatprep.subr.mxu0 0.0
  %357 = vmatpush1.msra.mxu0 %v97
  %358 = vmatprep.subr.mxu0 0.0
  %359 = vmatpush1.msra.mxu0 %v98
  %360 = vmatprep.subr.mxu0 0.0
  %361 = vmatpush1.msra.mxu0 %v99
  %362 = vmatprep.subr.mxu0 0.0
  %363 = vmatpush1.msra.mxu0 %v100
  %364 = vmatprep.subr.mxu0 0.0
  %365 = vmatpush1.msra.mxu0 %v101
  %366 = vmatprep.subr.mxu0 0.0
  %367 = vmatpush1.msra.mxu0 %v102
  %368 = vmatprep.subr.mxu0 0.0
  %369 = vmatpush1.msra.mxu0 0.0
  %370 = vmatprep.subr.mxu0 0.0
  %371 = vmatpush1.msra.mxu0 0.0
  %372 = vmatprep.subr.mxu0 0.0
  %373 = vmatpush1.msra.mxu0 0.0
  %374 = vmatprep.subr.mxu0 0.0
  %375 = vmatpush1.msra.mxu0 0.0
  %376 = vmatprep.subr.mxu0 0.0
  %377 = vmatpush1.msra.mxu0 0.0
  %378 = vmatprep.subr.mxu0 0.0
  %379 = vmatpush1.msra.mxu0 0.0
  %380 = vmatprep.subr.mxu0 0.0
  %381 = vmatpush1.msra.mxu0 0.0
  %382 = vmatprep.subr.mxu0 0.0
  %383 = vmatpush1.msra.mxu0 0.0
  %384 = vmatprep.subr.mxu0 0.0
  %385 = vmatpush1.msra.mxu0 0.0
  %386 = vmatprep.subr.mxu0 0.0
  %387 = vmatpush1.msra.mxu0 0.0
  %388 = vmatprep.subr.mxu0 0.0
  %389 = vmatpush1.msra.mxu0 0.0
  %390 = vmatprep.subr.mxu0 0.0
  %391 = vmatpush1.msra.mxu0 0.0
  %392 = vmatprep.subr.mxu0 0.0
  %393 = vmatpush1.msra.mxu0 0.0
  %394 = vmatprep.subr.mxu0 0.0
  %395 = vmatpush1.msra.mxu0 0.0
  %396 = vmatprep.subr.mxu0 0.0
  %397 = vmatpush1.msra.mxu0 0.0
  %398 = vmatprep.subr.mxu0 0.0
  %399 = vmatpush1.msra.mxu0 0.0
  %400 = vmatprep.subr.mxu0 0.0
  %401 = vmatpush1.msra.mxu0 0.0
  %402 = vmatprep.subr.mxu0 0.0
  %403 = vmatpush1.msra.mxu0 0.0
  %404 = vmatprep.subr.mxu0 0.0
  %405 = vmatpush1.msra.mxu0 0.0
  %406 = vmatprep.subr.mxu0 0.0
  %407 = vmatpush1.msra.mxu0 0.0
  %408 = vmatprep.subr.mxu0 0.0
  %409 = vmatpush1.msra.mxu0 0.0
  %410 = vmatprep.subr.mxu0 0.0
  %411 = vmatpush1.msra.mxu0 0.0
  %412 = vmatprep.subr.mxu0 0.0
  %413 = vmatpush1.msra.mxu0 0.0
  %414 = vmatprep.subr.mxu0 0.0
  %415 = vmatpush1.msra.mxu0 0.0
  %416 = vmatprep.subr.mxu0 0.0
  %417 = vmatpush1.msra.mxu0 0.0
  %418 = vmatprep.subr.mxu0 0.0
  %419 = vmatpush1.msra.mxu0 0.0
  %420 = vmatprep.mubr.f32.mxu0 0.0
  %421 = vmatmul.mubr.f32.gmra.mrb[0].mxu0 %v192
  %v422 = vpop.f32.mrb[0].mxu0
  %v423 = vadd.f32 %v348, %v422
  %v424 = vpop.f32.mrb[0].mxu0
  %425 = vmatprep.mubr.f32.mxu0 0.0
  %426 = vmatmul.mubr.f32.gmra.mrb[0].mxu0 %v195
  %v427 = vpop.f32.mrb[0].mxu0
  %v428 = vadd.f32 %v353, %v427
  %v429 = vpop.f32.mrb[0].mxu0
  %430 = vdwg.mxu0
  %v431 = vtanh.pop %v423
  %v432 = vtanh.pop %v428
  %v433 = vsel %vm66, -1e-08, %v431
  %v434 = vsel %vm67, -1e-08, %v432
  %v435 = vmul.f32 %v433, 1.442695
  %v436 = vpow.pop %v435
  %v437 = vmul.f32 %v434, 1.442695
  %v438 = vpow.pop %v437
  %v440 = vsel %vm109, %v436, 0
  %v443 = vsel %vm109, %v438, 0
  %445 = vmatprep.subr.mxu0 0.0
  %446 = vmatpush1.msra.mxu0 %v84
  %447 = vmatprep.subr.mxu0 0.0
  %448 = vmatpush1.msra.mxu0 %v85
  %449 = vmatprep.subr.mxu0 0.0
  %450 = vmatpush1.msra.mxu0 %v86
  %451 = vmatprep.subr.mxu0 0.0
  %452 = vmatpush1.msra.mxu0 %v87
  %453 = vmatprep.subr.mxu0 0.0
  %454 = vmatpush1.msra.mxu0 %v88
  %455 = vmatprep.subr.mxu0 0.0
  %456 = vmatpush1.msra.mxu0 %v89
  %457 = vmatprep.subr.mxu0 0.0
  %458 = vmatpush1.msra.mxu0 0.0
  %459 = vmatprep.subr.mxu0 0.0
  %460 = vmatpush1.msra.mxu0 0.0
  %461 = vmatprep.subr.mxu0 0.0
  %462 = vmatpush1.msra.mxu0 0.0
  %463 = vmatprep.subr.mxu0 0.0
  %464 = vmatpush1.msra.mxu0 0.0
  %465 = vmatprep.subr.mxu0 0.0
  %466 = vmatpush1.msra.mxu0 0.0
  %467 = vmatprep.subr.mxu0 0.0
  %468 = vmatpush1.msra.mxu0 0.0
  %469 = vmatprep.subr.mxu0 0.0
  %470 = vmatpush1.msra.mxu0 0.0
  %471 = vmatprep.subr.mxu0 0.0
  %472 = vmatpush1.msra.mxu0 0.0
  %473 = vmatprep.subr.mxu0 0.0
  %474 = vmatpush1.msra.mxu0 0.0
  %475 = vmatprep.subr.mxu0 0.0
  %476 = vmatpush1.msra.mxu0 0.0
  %477 = vmatprep.subr.mxu0 0.0
  %478 = vmatpush1.msra.mxu0 0.0
  %479 = vmatprep.subr.mxu0 0.0
  %480 = vmatpush1.msra.mxu0 0.0
  %481 = vmatprep.subr.mxu0 0.0
  %482 = vmatpush1.msra.mxu0 0.0
  %483 = vmatprep.subr.mxu0 0.0
  %484 = vmatpush1.msra.mxu0 0.0
  %485 = vmatprep.subr.mxu0 0.0
  %486 = vmatpush1.msra.mxu0 0.0
  %487 = vmatprep.subr.mxu0 0.0
  %488 = vmatpush1.msra.mxu0 0.0
  %489 = vmatprep.subr.mxu0 0.0
  %490 = vmatpush1.msra.mxu0 0.0
  %491 = vmatprep.subr.mxu0 0.0
  %492 = vmatpush1.msra.mxu0 0.0
  %493 = vmatprep.subr.mxu0 0.0
  %494 = vmatpush1.msra.mxu0 0.0
  %495 = vmatprep.subr.mxu0 0.0
  %496 = vmatpush1.msra.mxu0 0.0
  %497 = vmatprep.subr.mxu0 0.0
  %498 = vmatpush1.msra.mxu0 0.0
  %499 = vmatprep.subr.mxu0 0.0
  %500 = vmatpush1.msra.mxu0 0.0
  %501 = vmatprep.subr.mxu0 0.0
  %502 = vmatpush1.msra.mxu0 0.0
  %503 = vmatprep.subr.mxu0 0.0
  %504 = vmatpush1.msra.mxu0 0.0
  %505 = vmatprep.subr.mxu0 0.0
  %506 = vmatpush1.msra.mxu0 0.0
  %507 = vmatprep.subr.mxu0 0.0
  %508 = vmatpush1.msra.mxu0 0.0
  %509 = vmatprep.mubr.f32.mxu0 0.0
  %510 = vmatmul.mubr.f32.gmra.mrb[0].mxu0 %v440
  %v511 = vpop.f32.mrb[0].mxu0
  %v512 = vadd.f32 0.0, %v511
  %v513 = vpop.f32.mrb[0].mxu0
  %514 = vmatprep.mubr.f32.mxu0 0.0
  %515 = vmatmul.mubr.f32.gmra.mrb[0].mxu0 %v443
  %v516 = vpop.f32.mrb[0].mxu0
  %v517 = vadd.f32 0.0, %v516
  %v518 = vpop.f32.mrb[0].mxu0
  %519 = vdwg.mxu0
  %vm520 = vcmask 48128
  %v522 = vsel %vm520, %v512, 0
  %v525 = vsel %vm520, %v517, 0
  %vm527 = vcmask 1045504
  %v529 = vsel %vm527, %v90, 0
  %531 = vmatprep.subr.mxu0 0.0
  %532 = vmatpush1.msra.mxu0 %v529
  %533 = vmatprep.subr.mxu0 0.0
  %534 = vmatpush1.msra.mxu0 0.0
  %535 = vmatprep.subr.mxu0 0.0
  %536 = vmatpush1.msra.mxu0 0.0
  %537 = vmatprep.subr.mxu0 0.0
  %538 = vmatpush1.msra.mxu0 0.0
  %539 = vmatprep.subr.mxu0 0.0
  %540 = vmatpush1.msra.mxu0 0.0
  %541 = vmatprep.subr.mxu0 0.0
  %542 = vmatpush1.msra.mxu0 0.0
  %543 = vmatprep.subr.mxu0 0.0
  %544 = vmatpush1.msra.mxu0 0.0
  %545 = vmatprep.subr.mxu0 0.0
  %546 = vmatpush1.msra.mxu0 0.0
  %547 = vmatprep.subr.mxu0 0.0
  %548 = vmatpush1.msra.mxu0 0.0
  %549 = vmatprep.subr.mxu0 0.0
  %550 = vmatpush1.msra.mxu0 0.0
  %551 = vmatprep.subr.mxu0 0.0
  %552 = vmatpush1.msra.mxu0 0.0
  %553 = vmatprep.subr.mxu0 0.0
  %554 = vmatpush1.msra.mxu0 0.0
  %555 = vmatprep.subr.mxu0 0.0
  %556 = vmatpush1.msra.mxu0 0.0
  %557 = vmatprep.subr.mxu0 0.0
  %558 = vmatpush1.msra.mxu0 0.0
  %559 = vmatprep.subr.mxu0 0.0
  %560 = vmatpush1.msra.mxu0 0.0
  %561 = vmatprep.subr.mxu0 0.0
  %562 = vmatpush1.msra.mxu0 0.0
  %563 = vmatprep.subr.mxu0 0.0
  %564 = vmatpush1.msra.mxu0 0.0
  %565 = vmatprep.subr.mxu0 0.0
  %566 = vmatpush1.msra.mxu0 0.0
  %567 = vmatprep.subr.mxu0 0.0
  %568 = vmatpush1.msra.mxu0 0.0
  %569 = vmatprep.subr.mxu0 0.0
  %570 = vmatpush1.msra.mxu0 0.0
  %571 = vmatprep.subr.mxu0 0.0
  %572 = vmatpush1.msra.mxu0 0.0
  %573 = vmatprep.subr.mxu0 0.0
  %574 = vmatpush1.msra.mxu0 0.0
  %575 = vmatprep.subr.mxu0 0.0
  %576 = vmatpush1.msra.mxu0 0.0
  %577 = vmatprep.subr.mxu0 0.0
  %578 = vmatpush1.msra.mxu0 0.0
  %579 = vmatprep.subr.mxu0 0.0
  %580 = vmatpush1.msra.mxu0 0.0
  %581 = vmatprep.subr.mxu0 0.0
  %582 = vmatpush1.msra.mxu0 0.0
  %583 = vmatprep.subr.mxu0 0.0
  %584 = vmatpush1.msra.mxu0 0.0
  %585 = vmatprep.subr.mxu0 0.0
  %586 = vmatpush1.msra.mxu0 0.0
  %587 = vmatprep.subr.mxu0 0.0
  %588 = vmatpush1.msra.mxu0 0.0
  %589 = vmatprep.subr.mxu0 0.0
  %590 = vmatpush1.msra.mxu0 0.0
  %591 = vmatprep.subr.mxu0 0.0
  %592 = vmatpush1.msra.mxu0 0.0
  %593 = vmatprep.subr.mxu0 0.0
  %594 = vmatpush1.msra.mxu0 0.0
  %595 = vmatprep.mubr.f32.mxu0 0.0
  %596 = vmatmul.mubr.f32.gmra.mrb[0].mxu0 %v522
  %v597 = vpop.f32.mrb[0].mxu0
  %v598 = vadd.f32 0.0, %v597
  %v599 = vpop.f32.mrb[0].mxu0
  %600 = vmatprep.mubr.f32.mxu0 0.0
  %601 = vmatmul.mubr.f32.gmra.mrb[0].mxu0 %v525
  %v602 = vpop.f32.mrb[0].mxu0
  %v603 = vadd.f32 0.0, %v602
  %v604 = vpop.f32.mrb[0].mxu0
  %605 = vdwg.mxu0
  %v606 = vrcp.pop %v598
  %v607 = vmul.f32 %v436, %v606
  %v608 = vrcp.pop %v603
  %v609 = vmul.f32 %v438, %v608
  %vm610 = vcmask 64512
  %v612 = vsel %vm610, %v72, 0
  %v615 = vsel %vm610, %v73, 0
  %v618 = vsel %vm610, %v74, 0
  %v621 = vsel %vm610, %v75, 0
  %v624 = vsel %vm610, %v76, 0
  %v627 = vsel %vm610, %v77, 0
  %629 = vmatprep.subr.mxu0 0.0
  %630 = vmatpush1.msra.mxu0 %v183
  %631 = vmatprep.subr.mxu0 0.0
  %632 = vmatpush1.msra.mxu0 0.0
  %633 = vmatprep.subr.mxu0 0.0
  %634 = vmatpush1.msra.mxu0 0.0
  %635 = vmatprep.subr.mxu0 0.0
  %636 = vmatpush1.msra.mxu0 0.0
  %637 = vmatprep.subr.mxu0 0.0
  %638 = vmatpush1.msra.mxu0 0.0
  %639 = vmatprep.subr.mxu0 0.0
  %640 = vmatpush1.msra.mxu0 0.0
  %641 = vmatprep.subr.mxu0 0.0
  %642 = vmatpush1.msra.mxu0 0.0
  %643 = vmatprep.subr.mxu0 0.0
  %644 = vmatpush1.msra.mxu0 0.0
  %645 = vmatprep.subr.mxu0 0.0
  %646 = vmatpush1.msra.mxu0 0.0
  %647 = vmatprep.subr.mxu0 0.0
  %648 = vmatpush1.msra.mxu0 0.0
  %649 = vmatprep.subr.mxu0 0.0
  %650 = vmatpush1.msra.mxu0 0.0
  %651 = vmatprep.subr.mxu0 0.0
  %652 = vmatpush1.msra.mxu0 0.0
  %653 = vmatprep.subr.mxu0 0.0
  %654 = vmatpush1.msra.mxu0 0.0
  %655 = vmatprep.subr.mxu0 0.0
  %656 = vmatpush1.msra.mxu0 0.0
  %657 = vmatprep.subr.mxu0 0.0
  %658 = vmatpush1.msra.mxu0 0.0
  %659 = vmatprep.subr.mxu0 0.0
  %660 = vmatpush1.msra.mxu0 0.0
  %661 = vmatprep.subr.mxu0 0.0
  %662 = vmatpush1.msra.mxu0 0.0
  %663 = vmatprep.subr.mxu0 0.0
  %664 = vmatpush1.msra.mxu0 0.0
  %665 = vmatprep.subr.mxu0 0.0
  %666 = vmatpush1.msra.mxu0 0.0
  %667 = vmatprep.subr.mxu0 0.0
  %668 = vmatpush1.msra.mxu0 0.0
  %669 = vmatprep.subr.mxu0 0.0
  %670 = vmatpush1.msra.mxu0 0.0
  %671 = vmatprep.subr.mxu0 0.0
  %672 = vmatpush1.msra.mxu0 0.0
  %673 = vmatprep.subr.mxu0 0.0
  %674 = vmatpush1.msra.mxu0 0.0
  %675 = vmatprep.subr.mxu0 0.0
  %676 = vmatpush1.msra.mxu0 0.0
  %677 = vmatprep.subr.mxu0 0.0
  %678 = vmatpush1.msra.mxu0 0.0
  %679 = vmatprep.subr.mxu0 0.0
  %680 = vmatpush1.msra.mxu0 0.0
  %681 = vmatprep.subr.mxu0 0.0
  %682 = vmatpush1.msra.mxu0 0.0
  %683 = vmatprep.subr.mxu0 0.0
  %684 = vmatpush1.msra.mxu0 0.0
  %685 = vmatprep.subr.mxu0 0.0
  %686 = vmatpush1.msra.mxu0 0.0
  %687 = vmatprep.subr.mxu0 0.0
  %688 = vmatpush1.msra.mxu0 0.0
  %689 = vmatprep.subr.mxu0 0.0
  %690 = vmatpush1.msra.mxu0 0.0
  %691 = vmatprep.subr.mxu0 0.0
  %692 = vmatpush1.msra.mxu0 0.0
  %693 = vmatprep.mubr.f32.mxu0 0.0
  %694 = vmatmul.mubr.f32.gmra.mrb[0].mxu0 %v612
  %v695 = vpop.f32.mrb[0].mxu0
  %v696 = vadd.f32 0.0, %v695
  %v697 = vpop.f32.mrb[0].mxu0
  %698 = vmatprep.mubr.f32.mxu0 0.0
  %699 = vmatmul.mubr.f32.gmra.mrb[0].mxu0 %v615
  %v700 = vpop.f32.mrb[0].mxu0
  %v701 = vadd.f32 0.0, %v700
  %v702 = vpop.f32.mrb[0].mxu0
  %703 = vmatprep.mubr.f32.mxu0 0.0
  %704 = vmatmul.mubr.f32.gmra.mrb[0].mxu0 %v618
  %v705 = vpop.f32.mrb[0].mxu0
  %v706 = vadd.f32 0.0, %v705
  %v707 = vpop.f32.mrb[0].mxu0
  %708 = vmatprep.mubr.f32.mxu0 0.0
  %709 = vmatmul.mubr.f32.gmra.mrb[0].mxu0 %v621
  %v710 = vpop.f32.mrb[0].mxu0
  %v711 = vadd.f32 0.0, %v710
  %v712 = vpop.f32.mrb[0].mxu0
  %713 = vmatprep.mubr.f32.mxu0 0.0
  %714 = vmatmul.mubr.f32.gmra.mrb[0].mxu0 %v624
  %v715 = vpop.f32.mrb[0].mxu0
  %v716 = vadd.f32 0.0, %v715
  %v717 = vpop.f32.mrb[0].mxu0
  %718 = vmatprep.mubr.f32.mxu0 0.0
  %719 = vmatmul.mubr.f32.gmra.mrb[0].mxu0 %v627
  %v720 = vpop.f32.mrb[0].mxu0
  %v721 = vadd.f32 0.0, %v720
  %v722 = vpop.f32.mrb[0].mxu0
  %723 = vdwg.mxu0
  %v724 = vmul.f32 %v696, %v78
  %v725 = vmul.f32 %v701, %v79
  %v726 = vmul.f32 %v706, %v80
  %v727 = vmul.f32 %v711, %v81
  %v728 = vmul.f32 %v716, %v82
  %v729 = vmul.f32 %v721, %v83
  %v731 = vsel %vm109, %v607, 0
  %733 = vmatprep.subr.mxu0 0.0
  %734 = vmatpush1.msra.mxu0 %v724
  %735 = vmatprep.subr.mxu0 0.0
  %736 = vmatpush1.msra.mxu0 %v725
  %737 = vmatprep.subr.mxu0 0.0
  %738 = vmatpush1.msra.mxu0 %v726
  %739 = vmatprep.subr.mxu0 0.0
  %740 = vmatpush1.msra.mxu0 %v727
  %741 = vmatprep.subr.mxu0 0.0
  %742 = vmatpush1.msra.mxu0 %v728
  %743 = vmatprep.subr.mxu0 0.0
  %744 = vmatpush1.msra.mxu0 %v729
  %745 = vmatprep.subr.mxu0 0.0
  %746 = vmatpush1.msra.mxu0 0.0
  %747 = vmatprep.subr.mxu0 0.0
  %748 = vmatpush1.msra.mxu0 0.0
  %749 = vmatprep.subr.mxu0 0.0
  %750 = vmatpush1.msra.mxu0 0.0
  %751 = vmatprep.subr.mxu0 0.0
  %752 = vmatpush1.msra.mxu0 0.0
  %753 = vmatprep.subr.mxu0 0.0
  %754 = vmatpush1.msra.mxu0 0.0
  %755 = vmatprep.subr.mxu0 0.0
  %756 = vmatpush1.msra.mxu0 0.0
  %757 = vmatprep.subr.mxu0 0.0
  %758 = vmatpush1.msra.mxu0 0.0
  %759 = vmatprep.subr.mxu0 0.0
  %760 = vmatpush1.msra.mxu0 0.0
  %761 = vmatprep.subr.mxu0 0.0
  %762 = vmatpush1.msra.mxu0 0.0
  %763 = vmatprep.subr.mxu0 0.0
  %764 = vmatpush1.msra.mxu0 0.0
  %765 = vmatprep.subr.mxu0 0.0
  %766 = vmatpush1.msra.mxu0 0.0
  %767 = vmatprep.subr.mxu0 0.0
  %768 = vmatpush1.msra.mxu0 0.0
  %769 = vmatprep.subr.mxu0 0.0
  %770 = vmatpush1.msra.mxu0 0.0
  %771 = vmatprep.subr.mxu0 0.0
  %772 = vmatpush1.msra.mxu0 0.0
  %773 = vmatprep.subr.mxu0 0.0
  %774 = vmatpush1.msra.mxu0 0.0
  %775 = vmatprep.subr.mxu0 0.0
  %776 = vmatpush1.msra.mxu0 0.0
  %777 = vmatprep.subr.mxu0 0.0
  %778 = vmatpush1.msra.mxu0 0.0
  %779 = vmatprep.subr.mxu0 0.0
  %780 = vmatpush1.msra.mxu0 0.0
  %781 = vmatprep.subr.mxu0 0.0
  %782 = vmatpush1.msra.mxu0 0.0
  %783 = vmatprep.subr.mxu0 0.0
  %784 = vmatpush1.msra.mxu0 0.0
  %785 = vmatprep.subr.mxu0 0.0
  %786 = vmatpush1.msra.mxu0 0.0
  %787 = vmatprep.subr.mxu0 0.0
  %788 = vmatpush1.msra.mxu0 0.0
  %789 = vmatprep.subr.mxu0 0.0
  %790 = vmatpush1.msra.mxu0 0.0
  %791 = vmatprep.subr.mxu0 0.0
  %792 = vmatpush1.msra.mxu0 0.0
  %793 = vmatprep.subr.mxu0 0.0
  %794 = vmatpush1.msra.mxu0 0.0
  %795 = vmatprep.subr.mxu0 0.0
  %796 = vmatpush1.msra.mxu0 0.0
  %797 = vmatprep.mubr.f32.mxu0 0.0
  %798 = vmatmul.mubr.f32.gmra.mrb[0].mxu0 %v731
  %v799 = vpop.f32.mrb[0].mxu0
  %v800 = vadd.f32 0.0, %v799
  %v801 = vpop.f32.mrb[0].mxu0
  %802 = vdwg.mxu0
  %v803 = vtanh.pop %v800
  %804 = vmatprep.subr.mxu0 0.0
  %805 = vmatpush1.msra.mxu0 %v188
  %806 = vmatprep.subr.mxu0 0.0
  %807 = vmatpush1.msra.mxu0 0.0
  %808 = vmatprep.subr.mxu0 0.0
  %809 = vmatpush1.msra.mxu0 0.0
  %810 = vmatprep.subr.mxu0 0.0
  %811 = vmatpush1.msra.mxu0 0.0
  %812 = vmatprep.subr.mxu0 0.0
  %813 = vmatpush1.msra.mxu0 0.0
  %814 = vmatprep.subr.mxu0 0.0
  %815 = vmatpush1.msra.mxu0 0.0
  %816 = vmatprep.subr.mxu0 0.0
  %817 = vmatpush1.msra.mxu0 0.0
  %818 = vmatprep.subr.mxu0 0.0
  %819 = vmatpush1.msra.mxu0 0.0
  %820 = vmatprep.subr.mxu0 0.0
  %821 = vmatpush1.msra.mxu0 0.0
  %822 = vmatprep.subr.mxu0 0.0
  %823 = vmatpush1.msra.mxu0 0.0
  %824 = vmatprep.subr.mxu0 0.0
  %825 = vmatpush1.msra.mxu0 0.0
  %826 = vmatprep.subr.mxu0 0.0
  %827 = vmatpush1.msra.mxu0 0.0
  %828 = vmatprep.subr.mxu0 0.0
  %829 = vmatpush1.msra.mxu0 0.0
  %830 = vmatprep.subr.mxu0 0.0
  %831 = vmatpush1.msra.mxu0 0.0
  %832 = vmatprep.subr.mxu0 0.0
  %833 = vmatpush1.msra.mxu0 0.0
  %834 = vmatprep.subr.mxu0 0.0
  %835 = vmatpush1.msra.mxu0 0.0
  %836 = vmatprep.subr.mxu0 0.0
  %837 = vmatpush1.msra.mxu0 0.0
  %838 = vmatprep.subr.mxu0 0.0
  %839 = vmatpush1.msra.mxu0 0.0
  %840 = vmatprep.subr.mxu0 0.0
  %841 = vmatpush1.msra.mxu0 0.0
  %842 = vmatprep.subr.mxu0 0.0
  %843 = vmatpush1.msra.mxu0 0.0
  %844 = vmatprep.subr.mxu0 0.0
  %845 = vmatpush1.msra.mxu0 0.0
  %846 = vmatprep.subr.mxu0 0.0
  %847 = vmatpush1.msra.mxu0 0.0
  %848 = vmatprep.subr.mxu0 0.0
  %849 = vmatpush1.msra.mxu0 0.0
  %850 = vmatprep.subr.mxu0 0.0
  %851 = vmatpush1.msra.mxu0 0.0
  %852 = vmatprep.subr.mxu0 0.0
  %853 = vmatpush1.msra.mxu0 0.0
  %854 = vmatprep.subr.mxu0 0.0
  %855 = vmatpush1.msra.mxu0 0.0
  %856 = vmatprep.subr.mxu0 0.0
  %857 = vmatpush1.msra.mxu0 0.0
  %858 = vmatprep.subr.mxu0 0.0
  %859 = vmatpush1.msra.mxu0 0.0
  %860 = vmatprep.subr.mxu0 0.0
  %861 = vmatpush1.msra.mxu0 0.0
  %862 = vmatprep.subr.mxu0 0.0
  %863 = vmatpush1.msra.mxu0 0.0
  %864 = vmatprep.subr.mxu0 0.0
  %865 = vmatpush1.msra.mxu0 0.0
  %866 = vmatprep.subr.mxu0 0.0
  %867 = vmatpush1.msra.mxu0 0.0
  %868 = vmatprep.mubr.f32.mxu0 0.0
  %869 = vmatmul.mubr.f32.gmra.mrb[0].mxu0 %v612
  %v870 = vpop.f32.mrb[0].mxu0
  %v871 = vadd.f32 0.0, %v870
  %v872 = vpop.f32.mrb[0].mxu0
  %873 = vmatprep.mubr.f32.mxu0 0.0
  %874 = vmatmul.mubr.f32.gmra.mrb[0].mxu0 %v615
  %v875 = vpop.f32.mrb[0].mxu0
  %v876 = vadd.f32 0.0, %v875
  %v877 = vpop.f32.mrb[0].mxu0
  %878 = vmatprep.mubr.f32.mxu0 0.0
  %879 = vmatmul.mubr.f32.gmra.mrb[0].mxu0 %v618
  %v880 = vpop.f32.mrb[0].mxu0
  %v881 = vadd.f32 0.0, %v880
  %v882 = vpop.f32.mrb[0].mxu0
  %883 = vmatprep.mubr.f32.mxu0 0.0
  %884 = vmatmul.mubr.f32.gmra.mrb[0].mxu0 %v621
  %v885 = vpop.f32.mrb[0].mxu0
  %v886 = vadd.f32 0.0, %v885
  %v887 = vpop.f32.mrb[0].mxu0
  %888 = vmatprep.mubr.f32.mxu0 0.0
  %889 = vmatmul.mubr.f32.gmra.mrb[0].mxu0 %v624
  %v890 = vpop.f32.mrb[0].mxu0
  %v891 = vadd.f32 0.0, %v890
  %v892 = vpop.f32.mrb[0].mxu0
  %893 = vmatprep.mubr.f32.mxu0 0.0
  %894 = vmatmul.mubr.f32.gmra.mrb[0].mxu0 %v627
  %v895 = vpop.f32.mrb[0].mxu0
  %v896 = vadd.f32 0.0, %v895
  %v897 = vpop.f32.mrb[0].mxu0
  %898 = vdwg.mxu0
  %v899 = vmul.f32 %v871, %v78
  %v900 = vmul.f32 %v876, %v79
  %v901 = vmul.f32 %v881, %v80
  %v902 = vmul.f32 %v886, %v81
  %v903 = vmul.f32 %v891, %v82
  %v904 = vmul.f32 %v896, %v83
  %v906 = vsel %vm109, %v609, 0
  %908 = vmatprep.subr.mxu0 0.0
  %909 = vmatpush1.msra.mxu0 %v899
  %910 = vmatprep.subr.mxu0 0.0
  %911 = vmatpush1.msra.mxu0 %v900
  %912 = vmatprep.subr.mxu0 0.0
  %913 = vmatpush1.msra.mxu0 %v901
  %914 = vmatprep.subr.mxu0 0.0
  %915 = vmatpush1.msra.mxu0 %v902
  %916 = vmatprep.subr.mxu0 0.0
  %917 = vmatpush1.msra.mxu0 %v903
  %918 = vmatprep.subr.mxu0 0.0
  %919 = vmatpush1.msra.mxu0 %v904
  %920 = vmatprep.subr.mxu0 0.0
  %921 = vmatpush1.msra.mxu0 0.0
  %922 = vmatprep.subr.mxu0 0.0
  %923 = vmatpush1.msra.mxu0 0.0
  %924 = vmatprep.subr.mxu0 0.0
  %925 = vmatpush1.msra.mxu0 0.0
  %926 = vmatprep.subr.mxu0 0.0
  %927 = vmatpush1.msra.mxu0 0.0
  %928 = vmatprep.subr.mxu0 0.0
  %929 = vmatpush1.msra.mxu0 0.0
  %930 = vmatprep.subr.mxu0 0.0
  %931 = vmatpush1.msra.mxu0 0.0
  %932 = vmatprep.subr.mxu0 0.0
  %933 = vmatpush1.msra.mxu0 0.0
  %934 = vmatprep.subr.mxu0 0.0
  %935 = vmatpush1.msra.mxu0 0.0
  %936 = vmatprep.subr.mxu0 0.0
  %937 = vmatpush1.msra.mxu0 0.0
  %938 = vmatprep.subr.mxu0 0.0
  %939 = vmatpush1.msra.mxu0 0.0
  %940 = vmatprep.subr.mxu0 0.0
  %941 = vmatpush1.msra.mxu0 0.0
  %942 = vmatprep.subr.mxu0 0.0
  %943 = vmatpush1.msra.mxu0 0.0
  %944 = vmatprep.subr.mxu0 0.0
  %945 = vmatpush1.msra.mxu0 0.0
  %946 = vmatprep.subr.mxu0 0.0
  %947 = vmatpush1.msra.mxu0 0.0
  %948 = vmatprep.subr.mxu0 0.0
  %949 = vmatpush1.msra.mxu0 0.0
  %950 = vmatprep.subr.mxu0 0.0
  %951 = vmatpush1.msra.mxu0 0.0
  %952 = vmatprep.subr.mxu0 0.0
  %953 = vmatpush1.msra.mxu0 0.0
  %954 = vmatprep.subr.mxu0 0.0
  %955 = vmatpush1.msra.mxu0 0.0
  %956 = vmatprep.subr.mxu0 0.0
  %957 = vmatpush1.msra.mxu0 0.0
  %958 = vmatprep.subr.mxu0 0.0
  %959 = vmatpush1.msra.mxu0 0.0
  %960 = vmatprep.subr.mxu0 0.0
  %961 = vmatpush1.msra.mxu0 0.0
  %962 = vmatprep.subr.mxu0 0.0
  %963 = vmatpush1.msra.mxu0 0.0
  %964 = vmatprep.subr.mxu0 0.0
  %965 = vmatpush1.msra.mxu0 0.0
  %966 = vmatprep.subr.mxu0 0.0
  %967 = vmatpush1.msra.mxu0 0.0
  %968 = vmatprep.subr.mxu0 0.0
  %969 = vmatpush1.msra.mxu0 0.0
  %970 = vmatprep.subr.mxu0 0.0
  %971 = vmatpush1.msra.mxu0 0.0
  %972 = vmatprep.mubr.f32.mxu0 0.0
  %973 = vmatmul.mubr.f32.gmra.mrb[0].mxu0 %v906
  %v974 = vpop.f32.mrb[0].mxu0
  %v975 = vadd.f32 0.0, %v974
  %v976 = vpop.f32.mrb[0].mxu0
  %977 = vdwg.mxu0
  %v978 = vtanh.pop %v975
  %v979 = vadd.f32 %v62, %v803
  %v980 = vadd.f32 %v63, %v978
  %v982 = vsel %vm109, %v979, 0
  %v985 = vsel %vm109, %v980, 0
  %987 = vmatprep.subr.mxu0 0.0
  %988 = vmatpush1.msra.mxu0 %v91
  %989 = vmatprep.subr.mxu0 0.0
  %990 = vmatpush1.msra.mxu0 %v92
  %991 = vmatprep.subr.mxu0 0.0
  %992 = vmatpush1.msra.mxu0 %v93
  %993 = vmatprep.subr.mxu0 0.0
  %994 = vmatpush1.msra.mxu0 %v94
  %995 = vmatprep.subr.mxu0 0.0
  %996 = vmatpush1.msra.mxu0 %v95
  %997 = vmatprep.subr.mxu0 0.0
  %998 = vmatpush1.msra.mxu0 %v96
  %999 = vmatprep.subr.mxu0 0.0
  %1000 = vmatpush1.msra.mxu0 0.0
  %1001 = vmatprep.subr.mxu0 0.0
  %1002 = vmatpush1.msra.mxu0 0.0
  %1003 = vmatprep.subr.mxu0 0.0
  %1004 = vmatpush1.msra.mxu0 0.0
  %1005 = vmatprep.subr.mxu0 0.0
  %1006 = vmatpush1.msra.mxu0 0.0
  %1007 = vmatprep.subr.mxu0 0.0
  %1008 = vmatpush1.msra.mxu0 0.0
  %1009 = vmatprep.subr.mxu0 0.0
  %1010 = vmatpush1.msra.mxu0 0.0
  %1011 = vmatprep.subr.mxu0 0.0
  %1012 = vmatpush1.msra.mxu0 0.0
  %1013 = vmatprep.subr.mxu0 0.0
  %1014 = vmatpush1.msra.mxu0 0.0
  %1015 = vmatprep.subr.mxu0 0.0
  %1016 = vmatpush1.msra.mxu0 0.0
  %1017 = vmatprep.subr.mxu0 0.0
  %1018 = vmatpush1.msra.mxu0 0.0
  %1019 = vmatprep.subr.mxu0 0.0
  %1020 = vmatpush1.msra.mxu0 0.0
  %1021 = vmatprep.subr.mxu0 0.0
  %1022 = vmatpush1.msra.mxu0 0.0
  %1023 = vmatprep.subr.mxu0 0.0
  %1024 = vmatpush1.msra.mxu0 0.0
  %1025 = vmatprep.subr.mxu0 0.0
  %1026 = vmatpush1.msra.mxu0 0.0
  %1027 = vmatprep.subr.mxu0 0.0
  %1028 = vmatpush1.msra.mxu0 0.0
  %1029 = vmatprep.subr.mxu0 0.0
  %1030 = vmatpush1.msra.mxu0 0.0
  %1031 = vmatprep.subr.mxu0 0.0
  %1032 = vmatpush1.msra.mxu0 0.0
  %1033 = vmatprep.subr.mxu0 0.0
  %1034 = vmatpush1.msra.mxu0 0.0
  %1035 = vmatprep.subr.mxu0 0.0
  %1036 = vmatpush1.msra.mxu0 0.0
  %1037 = vmatprep.subr.mxu0 0.0
  %1038 = vmatpush1.msra.mxu0 0.0
  %1039 = vmatprep.subr.mxu0 0.0
  %1040 = vmatpush1.msra.mxu0 0.0
  %1041 = vmatprep.subr.mxu0 0.0
  %1042 = vmatpush1.msra.mxu0 0.0
  %1043 = vmatprep.subr.mxu0 0.0
  %1044 = vmatpush1.msra.mxu0 0.0
  %1045 = vmatprep.subr.mxu0 0.0
  %1046 = vmatpush1.msra.mxu0 0.0
  %1047 = vmatprep.subr.mxu0 0.0
  %1048 = vmatpush1.msra.mxu0 0.0
  %1049 = vmatprep.subr.mxu0 0.0
  %1050 = vmatpush1.msra.mxu0 0.0
  %1051 = vmatprep.mubr.f32.mxu0 0.0
  %1052 = vmatmul.mubr.f32.gmra.mrb[0].mxu0 %v982
  %v1053 = vpop.f32.mrb[0].mxu0
  %v1054 = vadd.f32 0.0, %v1053
  %v1055 = vpop.f32.mrb[0].mxu0
  %1056 = vmatprep.mubr.f32.mxu0 0.0
  %1057 = vmatmul.mubr.f32.gmra.mrb[0].mxu0 %v985
  %v1058 = vpop.f32.mrb[0].mxu0
  %v1059 = vadd.f32 0.0, %v1058
  %v1060 = vpop.f32.mrb[0].mxu0
  %1061 = vdwg.mxu0
  %v1063 = vsel %vm109, %v1054, 0
  %v1066 = vsel %vm109, %v1059, 0
  %1068 = vmatprep.subr.mxu0 0.0
  %1069 = vmatpush1.msra.mxu0 %v103
  %1070 = vmatprep.subr.mxu0 0.0
  %1071 = vmatpush1.msra.mxu0 %v104
  %1072 = vmatprep.subr.mxu0 0.0
  %1073 = vmatpush1.msra.mxu0 %v105
  %1074 = vmatprep.subr.mxu0 0.0
  %1075 = vmatpush1.msra.mxu0 %v106
  %1076 = vmatprep.subr.mxu0 0.0
  %1077 = vmatpush1.msra.mxu0 %v107
  %1078 = vmatprep.subr.mxu0 0.0
  %1079 = vmatpush1.msra.mxu0 %v108
  %1080 = vmatprep.subr.mxu0 0.0
  %1081 = vmatpush1.msra.mxu0 0.0
  %1082 = vmatprep.subr.mxu0 0.0
  %1083 = vmatpush1.msra.mxu0 0.0
  %1084 = vmatprep.subr.mxu0 0.0
  %1085 = vmatpush1.msra.mxu0 0.0
  %1086 = vmatprep.subr.mxu0 0.0
  %1087 = vmatpush1.msra.mxu0 0.0
  %1088 = vmatprep.subr.mxu0 0.0
  %1089 = vmatpush1.msra.mxu0 0.0
  %1090 = vmatprep.subr.mxu0 0.0
  %1091 = vmatpush1.msra.mxu0 0.0
  %1092 = vmatprep.subr.mxu0 0.0
  %1093 = vmatpush1.msra.mxu0 0.0
  %1094 = vmatprep.subr.mxu0 0.0
  %1095 = vmatpush1.msra.mxu0 0.0
  %1096 = vmatprep.subr.mxu0 0.0
  %1097 = vmatpush1.msra.mxu0 0.0
  %1098 = vmatprep.subr.mxu0 0.0
  %1099 = vmatpush1.msra.mxu0 0.0
  %1100 = vmatprep.subr.mxu0 0.0
  %1101 = vmatpush1.msra.mxu0 0.0
  %1102 = vmatprep.subr.mxu0 0.0
  %1103 = vmatpush1.msra.mxu0 0.0
  %1104 = vmatprep.subr.mxu0 0.0
  %1105 = vmatpush1.msra.mxu0 0.0
  %1106 = vmatprep.subr.mxu0 0.0
  %1107 = vmatpush1.msra.mxu0 0.0
  %1108 = vmatprep.subr.mxu0 0.0
  %1109 = vmatpush1.msra.mxu0 0.0
  %1110 = vmatprep.subr.mxu0 0.0
  %1111 = vmatpush1.msra.mxu0 0.0
  %1112 = vmatprep.subr.mxu0 0.0
  %1113 = vmatpush1.msra.mxu0 0.0
  %1114 = vmatprep.subr.mxu0 0.0
  %1115 = vmatpush1.msra.mxu0 0.0
  %1116 = vmatprep.subr.mxu0 0.0
  %1117 = vmatpush1.msra.mxu0 0.0
  %1118 = vmatprep.subr.mxu0 0.0
  %1119 = vmatpush1.msra.mxu0 0.0
  %1120 = vmatprep.subr.mxu0 0.0
  %1121 = vmatpush1.msra.mxu0 0.0
  %1122 = vmatprep.subr.mxu0 0.0
  %1123 = vmatpush1.msra.mxu0 0.0
  %1124 = vmatprep.subr.mxu0 0.0
  %1125 = vmatpush1.msra.mxu0 0.0
  %1126 = vmatprep.subr.mxu0 0.0
  %1127 = vmatpush1.msra.mxu0 0.0
  %1128 = vmatprep.subr.mxu0 0.0
  %1129 = vmatpush1.msra.mxu0 0.0
  %1130 = vmatprep.subr.mxu0 0.0
  %1131 = vmatpush1.msra.mxu0 0.0
  %1132 = vmatprep.mubr.f32.mxu0 0.0
  %1133 = vmatmul.mubr.f32.gmra.mrb[0].mxu0 %v1063
  %v1134 = vpop.f32.mrb[0].mxu0
  %v1135 = vadd.f32 0.0, %v1134
  %v1136 = vpop.f32.mrb[0].mxu0
  %1137 = vmatprep.mubr.f32.mxu0 0.0
  %1138 = vmatmul.mubr.f32.gmra.mrb[0].mxu0 %v1066
  %v1139 = vpop.f32.mrb[0].mxu0
  %v1140 = vadd.f32 0.0, %v1139
  %v1141 = vpop.f32.mrb[0].mxu0
  %1142 = vdwg.mxu0
  %v1143 = vmul.f32 %v1135, %v68
  %v1144 = vmul.f32 %v1140, %v69
  %1145 = vmatprep.subr.mxu0 0.0
  %1146 = vmatpush1.msra.mxu0 %v1143
  %1147 = vmatprep.subr.mxu0 0.0
  %1148 = vmatpush1.msra.mxu0 %v1144
  %1149 = vmatprep.subr.mxu0 0.0
  %1150 = vmatpush1.msra.mxu0 0.0
  %1151 = vmatprep.subr.mxu0 0.0
  %1152 = vmatpush1.msra.mxu0 0.0
  %1153 = vmatprep.subr.mxu0 0.0
  %1154 = vmatpush1.msra.mxu0 0.0
  %1155 = vmatprep.subr.mxu0 0.0
  %1156 = vmatpush1.msra.mxu0 0.0
  %1157 = vmatprep.subr.mxu0 0.0
  %1158 = vmatpush1.msra.mxu0 0.0
  %1159 = vmatprep.subr.mxu0 0.0
  %1160 = vmatpush1.msra.mxu0 0.0
  %1161 = vmatprep.subr.mxu0 0.0
  %1162 = vmatpush1.msra.mxu0 0.0
  %1163 = vmatprep.subr.mxu0 0.0
  %1164 = vmatpush1.msra.mxu0 0.0
  %1165 = vmatprep.subr.mxu0 0.0
  %1166 = vmatpush1.msra.mxu0 0.0
  %1167 = vmatprep.subr.mxu0 0.0
  %1168 = vmatpush1.msra.mxu0 0.0
  %1169 = vmatprep.subr.mxu0 0.0
  %1170 = vmatpush1.msra.mxu0 0.0
  %1171 = vmatprep.subr.mxu0 0.0
  %1172 = vmatpush1.msra.mxu0 0.0
  %1173 = vmatprep.subr.mxu0 0.0
  %1174 = vmatpush1.msra.mxu0 0.0
  %1175 = vmatprep.subr.mxu0 0.0
  %1176 = vmatpush1.msra.mxu0 0.0
  %1177 = vmatprep.subr.mxu0 0.0
  %1178 = vmatpush1.msra.mxu0 0.0
  %1179 = vmatprep.subr.mxu0 0.0
  %1180 = vmatpush1.msra.mxu0 0.0
  %1181 = vmatprep.subr.mxu0 0.0
  %1182 = vmatpush1.msra.mxu0 0.0
  %1183 = vmatprep.subr.mxu0 0.0
  %1184 = vmatpush1.msra.mxu0 0.0
  %1185 = vmatprep.subr.mxu0 0.0
  %1186 = vmatpush1.msra.mxu0 0.0
  %1187 = vmatprep.subr.mxu0 0.0
  %1188 = vmatpush1.msra.mxu0 0.0
  %1189 = vmatprep.subr.mxu0 0.0
  %1190 = vmatpush1.msra.mxu0 0.0
  %1191 = vmatprep.subr.mxu0 0.0
  %1192 = vmatpush1.msra.mxu0 0.0
  %1193 = vmatprep.subr.mxu0 0.0
  %1194 = vmatpush1.msra.mxu0 0.0
  %1195 = vmatprep.subr.mxu0 0.0
  %1196 = vmatpush1.msra.mxu0 0.0
  %1197 = vmatprep.subr.mxu0 0.0
  %1198 = vmatpush1.msra.mxu0 0.0
  %1199 = vmatprep.subr.mxu0 0.0
  %1200 = vmatpush1.msra.mxu0 0.0
  %1201 = vmatprep.subr.mxu0 0.0
  %1202 = vmatpush1.msra.mxu0 0.0
  %1203 = vmatprep.subr.mxu0 0.0
  %1204 = vmatpush1.msra.mxu0 0.0
  %1205 = vmatprep.subr.mxu0 0.0
  %1206 = vmatpush1.msra.mxu0 0.0
  %1207 = vmatprep.subr.mxu0 0.0
  %1208 = vmatpush1.msra.mxu0 0.0
  %1209 = vmatprep.mubr.f32.mxu0 0.0
  %1210 = vmatmul.mubr.f32.gmra.mrb[0].mxu0 %v276
  %v1211 = vpop.f32.mrb[0].mxu0
  %v1212 = vadd.f32 0.0, %v1211
  %v1213 = vpop.f32.mrb[0].mxu0
  %1214 = vmatprep.mubr.f32.mxu0 0.0
  %1215 = vmatmul.mubr.f32.gmra.mrb[0].mxu0 %v279
  %v1216 = vpop.f32.mrb[0].mxu0
  %v1217 = vadd.f32 0.0, %v1216
  %v1218 = vpop.f32.mrb[0].mxu0
  %1219 = vdwg.mxu0
  %1220 = vmatprep.subr.mxu0 0.0
  %1221 = vmatpush1.msra.mxu0 %v97
  %1222 = vmatprep.subr.mxu0 0.0
  %1223 = vmatpush1.msra.mxu0 %v98
  %1224 = vmatprep.subr.mxu0 0.0
  %1225 = vmatpush1.msra.mxu0 %v99
  %1226 = vmatprep.subr.mxu0 0.0
  %1227 = vmatpush1.msra.mxu0 %v100
  %1228 = vmatprep.subr.mxu0 0.0
  %1229 = vmatpush1.msra.mxu0 %v101
  %1230 = vmatprep.subr.mxu0 0.0
  %1231 = vmatpush1.msra.mxu0 %v102
  %1232 = vmatprep.subr.mxu0 0.0
  %1233 = vmatpush1.msra.mxu0 0.0
  %1234 = vmatprep.subr.mxu0 0.0
  %1235 = vmatpush1.msra.mxu0 0.0
  %1236 = vmatprep.subr.mxu0 0.0
  %1237 = vmatpush1.msra.mxu0 0.0
  %1238 = vmatprep.subr.mxu0 0.0
  %1239 = vmatpush1.msra.mxu0 0.0
  %1240 = vmatprep.subr.mxu0 0.0
  %1241 = vmatpush1.msra.mxu0 0.0
  %1242 = vmatprep.subr.mxu0 0.0
  %1243 = vmatpush1.msra.mxu0 0.0
  %1244 = vmatprep.subr.mxu0 0.0
  %1245 = vmatpush1.msra.mxu0 0.0
  %1246 = vmatprep.subr.mxu0 0.0
  %1247 = vmatpush1.msra.mxu0 0.0
  %1248 = vmatprep.subr.mxu0 0.0
  %1249 = vmatpush1.msra.mxu0 0.0
  %1250 = vmatprep.subr.mxu0 0.0
  %1251 = vmatpush1.msra.mxu0 0.0
  %1252 = vmatprep.subr.mxu0 0.0
  %1253 = vmatpush1.msra.mxu0 0.0
  %1254 = vmatprep.subr.mxu0 0.0
  %1255 = vmatpush1.msra.mxu0 0.0
  %1256 = vmatprep.subr.mxu0 0.0
  %1257 = vmatpush1.msra.mxu0 0.0
  %1258 = vmatprep.subr.mxu0 0.0
  %1259 = vmatpush1.msra.mxu0 0.0
  %1260 = vmatprep.subr.mxu0 0.0
  %1261 = vmatpush1.msra.mxu0 0.0
  %1262 = vmatprep.subr.mxu0 0.0
  %1263 = vmatpush1.msra.mxu0 0.0
  %1264 = vmatprep.subr.mxu0 0.0
  %1265 = vmatpush1.msra.mxu0 0.0
  %1266 = vmatprep.subr.mxu0 0.0
  %1267 = vmatpush1.msra.mxu0 0.0
  %1268 = vmatprep.subr.mxu0 0.0
  %1269 = vmatpush1.msra.mxu0 0.0
  %1270 = vmatprep.subr.mxu0 0.0
  %1271 = vmatpush1.msra.mxu0 0.0
  %1272 = vmatprep.subr.mxu0 0.0
  %1273 = vmatpush1.msra.mxu0 0.0
  %1274 = vmatprep.subr.mxu0 0.0
  %1275 = vmatpush1.msra.mxu0 0.0
  %1276 = vmatprep.subr.mxu0 0.0
  %1277 = vmatpush1.msra.mxu0 0.0
  %1278 = vmatprep.subr.mxu0 0.0
  %1279 = vmatpush1.msra.mxu0 0.0
  %1280 = vmatprep.subr.mxu0 0.0
  %1281 = vmatpush1.msra.mxu0 0.0
  %1282 = vmatprep.subr.mxu0 0.0
  %1283 = vmatpush1.msra.mxu0 0.0
  %1284 = vmatprep.mubr.f32.mxu0 0.0
  %1285 = vmatmul.mubr.f32.gmra.mrb[0].mxu0 %v1063
  %v1286 = vpop.f32.mrb[0].mxu0
  %v1287 = vadd.f32 %v1212, %v1286
  %v1288 = vpop.f32.mrb[0].mxu0
  %1289 = vmatprep.mubr.f32.mxu0 0.0
  %1290 = vmatmul.mubr.f32.gmra.mrb[0].mxu0 %v1066
  %v1291 = vpop.f32.mrb[0].mxu0
  %v1292 = vadd.f32 %v1217, %v1291
  %v1293 = vpop.f32.mrb[0].mxu0
  %1294 = vdwg.mxu0
  %v1295 = vtanh.pop %v1287
  %v1296 = vtanh.pop %v1292
  %v1297 = vsel %vm66, -1e-08, %v1295
  %v1298 = vsel %vm67, -1e-08, %v1296
  %v1299 = vmul.f32 %v1297, 1.442695
  %v1300 = vpow.pop %v1299
  %v1301 = vmul.f32 %v1298, 1.442695
  %v1302 = vpow.pop %v1301
  %v1304 = vsel %vm109, %v1300, 0
  %v1307 = vsel %vm109, %v1302, 0
  %1309 = vmatprep.subr.mxu0 0.0
  %1310 = vmatpush1.msra.mxu0 %v84
  %1311 = vmatprep.subr.mxu0 0.0
  %1312 = vmatpush1.msra.mxu0 %v85
  %1313 = vmatprep.subr.mxu0 0.0
  %1314 = vmatpush1.msra.mxu0 %v86
  %1315 = vmatprep.subr.mxu0 0.0
  %1316 = vmatpush1.msra.mxu0 %v87
  %1317 = vmatprep.subr.mxu0 0.0
  %1318 = vmatpush1.msra.mxu0 %v88
  %1319 = vmatprep.subr.mxu0 0.0
  %1320 = vmatpush1.msra.mxu0 %v89
  %1321 = vmatprep.subr.mxu0 0.0
  %1322 = vmatpush1.msra.mxu0 0.0
  %1323 = vmatprep.subr.mxu0 0.0
  %1324 = vmatpush1.msra.mxu0 0.0
  %1325 = vmatprep.subr.mxu0 0.0
  %1326 = vmatpush1.msra.mxu0 0.0
  %1327 = vmatprep.subr.mxu0 0.0
  %1328 = vmatpush1.msra.mxu0 0.0
  %1329 = vmatprep.subr.mxu0 0.0
  %1330 = vmatpush1.msra.mxu0 0.0
  %1331 = vmatprep.subr.mxu0 0.0
  %1332 = vmatpush1.msra.mxu0 0.0
  %1333 = vmatprep.subr.mxu0 0.0
  %1334 = vmatpush1.msra.mxu0 0.0
  %1335 = vmatprep.subr.mxu0 0.0
  %1336 = vmatpush1.msra.mxu0 0.0
  %1337 = vmatprep.subr.mxu0 0.0
  %1338 = vmatpush1.msra.mxu0 0.0
  %1339 = vmatprep.subr.mxu0 0.0
  %1340 = vmatpush1.msra.mxu0 0.0
  %1341 = vmatprep.subr.mxu0 0.0
  %1342 = vmatpush1.msra.mxu0 0.0
  %1343 = vmatprep.subr.mxu0 0.0
  %1344 = vmatpush1.msra.mxu0 0.0
  %1345 = vmatprep.subr.mxu0 0.0
  %1346 = vmatpush1.msra.mxu0 0.0
  %1347 = vmatprep.subr.mxu0 0.0
  %1348 = vmatpush1.msra.mxu0 0.0
  %1349 = vmatprep.subr.mxu0 0.0
  %1350 = vmatpush1.msra.mxu0 0.0
  %1351 = vmatprep.subr.mxu0 0.0
  %1352 = vmatpush1.msra.mxu0 0.0
  %1353 = vmatprep.subr.mxu0 0.0
  %1354 = vmatpush1.msra.mxu0 0.0
  %1355 = vmatprep.subr.mxu0 0.0
  %1356 = vmatpush1.msra.mxu0 0.0
  %1357 = vmatprep.subr.mxu0 0.0
  %1358 = vmatpush1.msra.mxu0 0.0
  %1359 = vmatprep.subr.mxu0 0.0
  %1360 = vmatpush1.msra.mxu0 0.0
  %1361 = vmatprep.subr.mxu0 0.0
  %1362 = vmatpush1.msra.mxu0 0.0
  %1363 = vmatprep.subr.mxu0 0.0
  %1364 = vmatpush1.msra.mxu0 0.0
  %1365 = vmatprep.subr.mxu0 0.0
  %1366 = vmatpush1.msra.mxu0 0.0
  %1367 = vmatprep.subr.mxu0 0.0
  %1368 = vmatpush1.msra.mxu0 0.0
  %1369 = vmatprep.subr.mxu0 0.0
  %1370 = vmatpush1.msra.mxu0 0.0
  %1371 = vmatprep.subr.mxu0 0.0
  %1372 = vmatpush1.msra.mxu0 0.0
  %1373 = vmatprep.mubr.f32.mxu0 0.0
  %1374 = vmatmul.mubr.f32.gmra.mrb[0].mxu0 %v1304
  %v1375 = vpop.f32.mrb[0].mxu0
  %v1376 = vadd.f32 0.0, %v1375
  %v1377 = vpop.f32.mrb[0].mxu0
  %1378 = vmatprep.mubr.f32.mxu0 0.0
  %1379 = vmatmul.mubr.f32.gmra.mrb[0].mxu0 %v1307
  %v1380 = vpop.f32.mrb[0].mxu0
  %v1381 = vadd.f32 0.0, %v1380
  %v1382 = vpop.f32.mrb[0].mxu0
  %1383 = vdwg.mxu0
  %v1385 = vsel %vm520, %v1376, 0
  %v1388 = vsel %vm520, %v1381, 0
  %1390 = vmatprep.subr.mxu0 0.0
  %1391 = vmatpush1.msra.mxu0 %v529
  %1392 = vmatprep.subr.mxu0 0.0
  %1393 = vmatpush1.msra.mxu0 0.0
  %1394 = vmatprep.subr.mxu0 0.0
  %1395 = vmatpush1.msra.mxu0 0.0
  %1396 = vmatprep.subr.mxu0 0.0
  %1397 = vmatpush1.msra.mxu0 0.0
  %1398 = vmatprep.subr.mxu0 0.0
  %1399 = vmatpush1.msra.mxu0 0.0
  %1400 = vmatprep.subr.mxu0 0.0
  %1401 = vmatpush1.msra.mxu0 0.0
  %1402 = vmatprep.subr.mxu0 0.0
  %1403 = vmatpush1.msra.mxu0 0.0
  %1404 = vmatprep.subr.mxu0 0.0
  %1405 = vmatpush1.msra.mxu0 0.0
  %1406 = vmatprep.subr.mxu0 0.0
  %1407 = vmatpush1.msra.mxu0 0.0
  %1408 = vmatprep.subr.mxu0 0.0
  %1409 = vmatpush1.msra.mxu0 0.0
  %1410 = vmatprep.subr.mxu0 0.0
  %1411 = vmatpush1.msra.mxu0 0.0
  %1412 = vmatprep.subr.mxu0 0.0
  %1413 = vmatpush1.msra.mxu0 0.0
  %1414 = vmatprep.subr.mxu0 0.0
  %1415 = vmatpush1.msra.mxu0 0.0
  %1416 = vmatprep.subr.mxu0 0.0
  %1417 = vmatpush1.msra.mxu0 0.0
  %1418 = vmatprep.subr.mxu0 0.0
  %1419 = vmatpush1.msra.mxu0 0.0
  %1420 = vmatprep.subr.mxu0 0.0
  %1421 = vmatpush1.msra.mxu0 0.0
  %1422 = vmatprep.subr.mxu0 0.0
  %1423 = vmatpush1.msra.mxu0 0.0
  %1424 = vmatprep.subr.mxu0 0.0
  %1425 = vmatpush1.msra.mxu0 0.0
  %1426 = vmatprep.subr.mxu0 0.0
  %1427 = vmatpush1.msra.mxu0 0.0
  %1428 = vmatprep.subr.mxu0 0.0
  %1429 = vmatpush1.msra.mxu0 0.0
  %1430 = vmatprep.subr.mxu0 0.0
  %1431 = vmatpush1.msra.mxu0 0.0
  %1432 = vmatprep.subr.mxu0 0.0
  %1433 = vmatpush1.msra.mxu0 0.0
  %1434 = vmatprep.subr.mxu0 0.0
  %1435 = vmatpush1.msra.mxu0 0.0
  %1436 = vmatprep.subr.mxu0 0.0
  %1437 = vmatpush1.msra.mxu0 0.0
  %1438 = vmatprep.subr.mxu0 0.0
  %1439 = vmatpush1.msra.mxu0 0.0
  %1440 = vmatprep.subr.mxu0 0.0
  %1441 = vmatpush1.msra.mxu0 0.0
  %1442 = vmatprep.subr.mxu0 0.0
  %1443 = vmatpush1.msra.mxu0 0.0
  %1444 = vmatprep.subr.mxu0 0.0
  %1445 = vmatpush1.msra.mxu0 0.0
  %1446 = vmatprep.subr.mxu0 0.0
  %1447 = vmatpush1.msra.mxu0 0.0
  %1448 = vmatprep.subr.mxu0 0.0
  %1449 = vmatpush1.msra.mxu0 0.0
  %1450 = vmatprep.subr.mxu0 0.0
  %1451 = vmatpush1.msra.mxu0 0.0
  %1452 = vmatprep.subr.mxu0 0.0
  %1453 = vmatpush1.msra.mxu0 0.0
  %1454 = vmatprep.mubr.f32.mxu0 0.0
  %1455 = vmatmul.mubr.f32.gmra.mrb[0].mxu0 %v1385
  %v1456 = vpop.f32.mrb[0].mxu0
  %v1457 = vadd.f32 0.0, %v1456
  %v1458 = vpop.f32.mrb[0].mxu0
  %1459 = vmatprep.mubr.f32.mxu0 0.0
  %1460 = vmatmul.mubr.f32.gmra.mrb[0].mxu0 %v1388
  %v1461 = vpop.f32.mrb[0].mxu0
  %v1462 = vadd.f32 0.0, %v1461
  %v1463 = vpop.f32.mrb[0].mxu0
  %1464 = vdwg.mxu0
  %v1465 = vrcp.pop %v1457
  %v1466 = vmul.f32 %v1300, %v1465
  %v1467 = vrcp.pop %v1462
  %v1468 = vmul.f32 %v1302, %v1467
  %1469 = vmatprep.subr.mxu0 0.0
  %1470 = vmatpush1.msra.mxu0 %v1054
  %1471 = vmatprep.subr.mxu0 0.0
  %1472 = vmatpush1.msra.mxu0 0.0
  %1473 = vmatprep.subr.mxu0 0.0
  %1474 = vmatpush1.msra.mxu0 0.0
  %1475 = vmatprep.subr.mxu0 0.0
  %1476 = vmatpush1.msra.mxu0 0.0
  %1477 = vmatprep.subr.mxu0 0.0
  %1478 = vmatpush1.msra.mxu0 0.0
  %1479 = vmatprep.subr.mxu0 0.0
  %1480 = vmatpush1.msra.mxu0 0.0
  %1481 = vmatprep.subr.mxu0 0.0
  %1482 = vmatpush1.msra.mxu0 0.0
  %1483 = vmatprep.subr.mxu0 0.0
  %1484 = vmatpush1.msra.mxu0 0.0
  %1485 = vmatprep.subr.mxu0 0.0
  %1486 = vmatpush1.msra.mxu0 0.0
  %1487 = vmatprep.subr.mxu0 0.0
  %1488 = vmatpush1.msra.mxu0 0.0
  %1489 = vmatprep.subr.mxu0 0.0
  %1490 = vmatpush1.msra.mxu0 0.0
  %1491 = vmatprep.subr.mxu0 0.0
  %1492 = vmatpush1.msra.mxu0 0.0
  %1493 = vmatprep.subr.mxu0 0.0
  %1494 = vmatpush1.msra.mxu0 0.0
  %1495 = vmatprep.subr.mxu0 0.0
  %1496 = vmatpush1.msra.mxu0 0.0
  %1497 = vmatprep.subr.mxu0 0.0
  %1498 = vmatpush1.msra.mxu0 0.0
  %1499 = vmatprep.subr.mxu0 0.0
  %1500 = vmatpush1.msra.mxu0 0.0
  %1501 = vmatprep.subr.mxu0 0.0
  %1502 = vmatpush1.msra.mxu0 0.0
  %1503 = vmatprep.subr.mxu0 0.0
  %1504 = vmatpush1.msra.mxu0 0.0
  %1505 = vmatprep.subr.mxu0 0.0
  %1506 = vmatpush1.msra.mxu0 0.0
  %1507 = vmatprep.subr.mxu0 0.0
  %1508 = vmatpush1.msra.mxu0 0.0
  %1509 = vmatprep.subr.mxu0 0.0
  %1510 = vmatpush1.msra.mxu0 0.0
  %1511 = vmatprep.subr.mxu0 0.0
  %1512 = vmatpush1.msra.mxu0 0.0
  %1513 = vmatprep.subr.mxu0 0.0
  %1514 = vmatpush1.msra.mxu0 0.0
  %1515 = vmatprep.subr.mxu0 0.0
  %1516 = vmatpush1.msra.mxu0 0.0
  %1517 = vmatprep.subr.mxu0 0.0
  %1518 = vmatpush1.msra.mxu0 0.0
  %1519 = vmatprep.subr.mxu0 0.0
  %1520 = vmatpush1.msra.mxu0 0.0
  %1521 = vmatprep.subr.mxu0 0.0
  %1522 = vmatpush1.msra.mxu0 0.0
  %1523 = vmatprep.subr.mxu0 0.0
  %1524 = vmatpush1.msra.mxu0 0.0
  %1525 = vmatprep.subr.mxu0 0.0
  %1526 = vmatpush1.msra.mxu0 0.0
  %1527 = vmatprep.subr.mxu0 0.0
  %1528 = vmatpush1.msra.mxu0 0.0
  %1529 = vmatprep.subr.mxu0 0.0
  %1530 = vmatpush1.msra.mxu0 0.0
  %1531 = vmatprep.subr.mxu0 0.0
  %1532 = vmatpush1.msra.mxu0 0.0
  %1533 = vmatprep.mubr.f32.mxu0 0.0
  %1534 = vmatmul.mubr.f32.gmra.mrb[0].mxu0 %v612
  %v1535 = vpop.f32.mrb[0].mxu0
  %v1536 = vadd.f32 0.0, %v1535
  %v1537 = vpop.f32.mrb[0].mxu0
  %1538 = vmatprep.mubr.f32.mxu0 0.0
  %1539 = vmatmul.mubr.f32.gmra.mrb[0].mxu0 %v615
  %v1540 = vpop.f32.mrb[0].mxu0
  %v1541 = vadd.f32 0.0, %v1540
  %v1542 = vpop.f32.mrb[0].mxu0
  %1543 = vmatprep.mubr.f32.mxu0 0.0
  %1544 = vmatmul.mubr.f32.gmra.mrb[0].mxu0 %v618
  %v1545 = vpop.f32.mrb[0].mxu0
  %v1546 = vadd.f32 0.0, %v1545
  %v1547 = vpop.f32.mrb[0].mxu0
  %1548 = vmatprep.mubr.f32.mxu0 0.0
  %1549 = vmatmul.mubr.f32.gmra.mrb[0].mxu0 %v621
  %v1550 = vpop.f32.mrb[0].mxu0
  %v1551 = vadd.f32 0.0, %v1550
  %v1552 = vpop.f32.mrb[0].mxu0
  %1553 = vmatprep.mubr.f32.mxu0 0.0
  %1554 = vmatmul.mubr.f32.gmra.mrb[0].mxu0 %v624
  %v1555 = vpop.f32.mrb[0].mxu0
  %v1556 = vadd.f32 0.0, %v1555
  %v1557 = vpop.f32.mrb[0].mxu0
  %1558 = vmatprep.mubr.f32.mxu0 0.0
  %1559 = vmatmul.mubr.f32.gmra.mrb[0].mxu0 %v627
  %v1560 = vpop.f32.mrb[0].mxu0
  %v1561 = vadd.f32 0.0, %v1560
  %v1562 = vpop.f32.mrb[0].mxu0
  %1563 = vdwg.mxu0
  %v1564 = vmul.f32 %v1536, %v78
  %v1565 = vmul.f32 %v1541, %v79
  %v1566 = vmul.f32 %v1546, %v80
  %v1567 = vmul.f32 %v1551, %v81
  %v1568 = vmul.f32 %v1556, %v82
  %v1569 = vmul.f32 %v1561, %v83
  %v1571 = vsel %vm109, %v1466, 0
  %1573 = vmatprep.subr.mxu0 0.0
  %1574 = vmatpush1.msra.mxu0 %v1564
  %1575 = vmatprep.subr.mxu0 0.0
  %1576 = vmatpush1.msra.mxu0 %v1565
  %1577 = vmatprep.subr.mxu0 0.0
  %1578 = vmatpush1.msra.mxu0 %v1566
  %1579 = vmatprep.subr.mxu0 0.0
  %1580 = vmatpush1.msra.mxu0 %v1567
  %1581 = vmatprep.subr.mxu0 0.0
  %1582 = vmatpush1.msra.mxu0 %v1568
  %1583 = vmatprep.subr.mxu0 0.0
  %1584 = vmatpush1.msra.mxu0 %v1569
  %1585 = vmatprep.subr.mxu0 0.0
  %1586 = vmatpush1.msra.mxu0 0.0
  %1587 = vmatprep.subr.mxu0 0.0
  %1588 = vmatpush1.msra.mxu0 0.0
  %1589 = vmatprep.subr.mxu0 0.0
  %1590 = vmatpush1.msra.mxu0 0.0
  %1591 = vmatprep.subr.mxu0 0.0
  %1592 = vmatpush1.msra.mxu0 0.0
  %1593 = vmatprep.subr.mxu0 0.0
  %1594 = vmatpush1.msra.mxu0 0.0
  %1595 = vmatprep.subr.mxu0 0.0
  %1596 = vmatpush1.msra.mxu0 0.0
  %1597 = vmatprep.subr.mxu0 0.0
  %1598 = vmatpush1.msra.mxu0 0.0
  %1599 = vmatprep.subr.mxu0 0.0
  %1600 = vmatpush1.msra.mxu0 0.0
  %1601 = vmatprep.subr.mxu0 0.0
  %1602 = vmatpush1.msra.mxu0 0.0
  %1603 = vmatprep.subr.mxu0 0.0
  %1604 = vmatpush1.msra.mxu0 0.0
  %1605 = vmatprep.subr.mxu0 0.0
  %1606 = vmatpush1.msra.mxu0 0.0
  %1607 = vmatprep.subr.mxu0 0.0
  %1608 = vmatpush1.msra.mxu0 0.0
  %1609 = vmatprep.subr.mxu0 0.0
  %1610 = vmatpush1.msra.mxu0 0.0
  %1611 = vmatprep.subr.mxu0 0.0
  %1612 = vmatpush1.msra.mxu0 0.0
  %1613 = vmatprep.subr.mxu0 0.0
  %1614 = vmatpush1.msra.mxu0 0.0
  %1615 = vmatprep.subr.mxu0 0.0
  %1616 = vmatpush1.msra.mxu0 0.0
  %1617 = vmatprep.subr.mxu0 0.0
  %1618 = vmatpush1.msra.mxu0 0.0
  %1619 = vmatprep.subr.mxu0 0.0
  %1620 = vmatpush1.msra.mxu0 0.0
  %1621 = vmatprep.subr.mxu0 0.0
  %1622 = vmatpush1.msra.mxu0 0.0
  %1623 = vmatprep.subr.mxu0 0.0
  %1624 = vmatpush1.msra.mxu0 0.0
  %1625 = vmatprep.subr.mxu0 0.0
  %1626 = vmatpush1.msra.mxu0 0.0
  %1627 = vmatprep.subr.mxu0 0.0
  %1628 = vmatpush1.msra.mxu0 0.0
  %1629 = vmatprep.subr.mxu0 0.0
  %1630 = vmatpush1.msra.mxu0 0.0
  %1631 = vmatprep.subr.mxu0 0.0
  %1632 = vmatpush1.msra.mxu0 0.0
  %1633 = vmatprep.subr.mxu0 0.0
  %1634 = vmatpush1.msra.mxu0 0.0
  %1635 = vmatprep.subr.mxu0 0.0
  %1636 = vmatpush1.msra.mxu0 0.0
  %1637 = vmatprep.mubr.f32.mxu0 0.0
  %1638 = vmatmul.mubr.f32.gmra.mrb[0].mxu0 %v1571
  %v1639 = vpop.f32.mrb[0].mxu0
  %v1640 = vadd.f32 0.0, %v1639
  %v1641 = vpop.f32.mrb[0].mxu0
  %1642 = vdwg.mxu0
  %v1643 = vtanh.pop %v1640
  %1644 = vmatprep.subr.mxu0 0.0
  %1645 = vmatpush1.msra.mxu0 %v1059
  %1646 = vmatprep.subr.mxu0 0.0
  %1647 = vmatpush1.msra.mxu0 0.0
  %1648 = vmatprep.subr.mxu0 0.0
  %1649 = vmatpush1.msra.mxu0 0.0
  %1650 = vmatprep.subr.mxu0 0.0
  %1651 = vmatpush1.msra.mxu0 0.0
  %1652 = vmatprep.subr.mxu0 0.0
  %1653 = vmatpush1.msra.mxu0 0.0
  %1654 = vmatprep.subr.mxu0 0.0
  %1655 = vmatpush1.msra.mxu0 0.0
  %1656 = vmatprep.subr.mxu0 0.0
  %1657 = vmatpush1.msra.mxu0 0.0
  %1658 = vmatprep.subr.mxu0 0.0
  %1659 = vmatpush1.msra.mxu0 0.0
  %1660 = vmatprep.subr.mxu0 0.0
  %1661 = vmatpush1.msra.mxu0 0.0
  %1662 = vmatprep.subr.mxu0 0.0
  %1663 = vmatpush1.msra.mxu0 0.0
  %1664 = vmatprep.subr.mxu0 0.0
  %1665 = vmatpush1.msra.mxu0 0.0
  %1666 = vmatprep.subr.mxu0 0.0
  %1667 = vmatpush1.msra.mxu0 0.0
  %1668 = vmatprep.subr.mxu0 0.0
  %1669 = vmatpush1.msra.mxu0 0.0
  %1670 = vmatprep.subr.mxu0 0.0
  %1671 = vmatpush1.msra.mxu0 0.0
  %1672 = vmatprep.subr.mxu0 0.0
  %1673 = vmatpush1.msra.mxu0 0.0
  %1674 = vmatprep.subr.mxu0 0.0
  %1675 = vmatpush1.msra.mxu0 0.0
  %1676 = vmatprep.subr.mxu0 0.0
  %1677 = vmatpush1.msra.mxu0 0.0
  %1678 = vmatprep.subr.mxu0 0.0
  %1679 = vmatpush1.msra.mxu0 0.0
  %1680 = vmatprep.subr.mxu0 0.0
  %1681 = vmatpush1.msra.mxu0 0.0
  %1682 = vmatprep.subr.mxu0 0.0
  %1683 = vmatpush1.msra.mxu0 0.0
  %1684 = vmatprep.subr.mxu0 0.0
  %1685 = vmatpush1.msra.mxu0 0.0
  %1686 = vmatprep.subr.mxu0 0.0
  %1687 = vmatpush1.msra.mxu0 0.0
  %1688 = vmatprep.subr.mxu0 0.0
  %1689 = vmatpush1.msra.mxu0 0.0
  %1690 = vmatprep.subr.mxu0 0.0
  %1691 = vmatpush1.msra.mxu0 0.0
  %1692 = vmatprep.subr.mxu0 0.0
  %1693 = vmatpush1.msra.mxu0 0.0
  %1694 = vmatprep.subr.mxu0 0.0
  %1695 = vmatpush1.msra.mxu0 0.0
  %1696 = vmatprep.subr.mxu0 0.0
  %1697 = vmatpush1.msra.mxu0 0.0
  %1698 = vmatprep.subr.mxu0 0.0
  %1699 = vmatpush1.msra.mxu0 0.0
  %1700 = vmatprep.subr.mxu0 0.0
  %1701 = vmatpush1.msra.mxu0 0.0
  %1702 = vmatprep.subr.mxu0 0.0
  %1703 = vmatpush1.msra.mxu0 0.0
  %1704 = vmatprep.subr.mxu0 0.0
  %1705 = vmatpush1.msra.mxu0 0.0
  %1706 = vmatprep.subr.mxu0 0.0
  %1707 = vmatpush1.msra.mxu0 0.0
  %1708 = vmatprep.mubr.f32.mxu0 0.0
  %1709 = vmatmul.mubr.f32.gmra.mrb[0].mxu0 %v612
  %v1710 = vpop.f32.mrb[0].mxu0
  %v1711 = vadd.f32 0.0, %v1710
  %v1712 = vpop.f32.mrb[0].mxu0
  %1713 = vmatprep.mubr.f32.mxu0 0.0
  %1714 = vmatmul.mubr.f32.gmra.mrb[0].mxu0 %v615
  %v1715 = vpop.f32.mrb[0].mxu0
  %v1716 = vadd.f32 0.0, %v1715
  %v1717 = vpop.f32.mrb[0].mxu0
  %1718 = vmatprep.mubr.f32.mxu0 0.0
  %1719 = vmatmul.mubr.f32.gmra.mrb[0].mxu0 %v618
  %v1720 = vpop.f32.mrb[0].mxu0
  %v1721 = vadd.f32 0.0, %v1720
  %v1722 = vpop.f32.mrb[0].mxu0
  %1723 = vmatprep.mubr.f32.mxu0 0.0
  %1724 = vmatmul.mubr.f32.gmra.mrb[0].mxu0 %v621
  %v1725 = vpop.f32.mrb[0].mxu0
  %v1726 = vadd.f32 0.0, %v1725
  %v1727 = vpop.f32.mrb[0].mxu0
  %1728 = vmatprep.mubr.f32.mxu0 0.0
  %1729 = vmatmul.mubr.f32.gmra.mrb[0].mxu0 %v624
  %v1730 = vpop.f32.mrb[0].mxu0
  %v1731 = vadd.f32 0.0, %v1730
  %v1732 = vpop.f32.mrb[0].mxu0
  %1733 = vmatprep.mubr.f32.mxu0 0.0
  %1734 = vmatmul.mubr.f32.gmra.mrb[0].mxu0 %v627
  %v1735 = vpop.f32.mrb[0].mxu0
  %v1736 = vadd.f32 0.0, %v1735
  %v1737 = vpop.f32.mrb[0].mxu0
  %1738 = vdwg.mxu0
  %v1739 = vmul.f32 %v1711, %v78
  %v1740 = vmul.f32 %v1716, %v79
  %v1741 = vmul.f32 %v1721, %v80
  %v1742 = vmul.f32 %v1726, %v81
  %v1743 = vmul.f32 %v1731, %v82
  %v1744 = vmul.f32 %v1736, %v83
  %v1746 = vsel %vm109, %v1468, 0
  %1748 = vmatprep.subr.mxu0 0.0
  %1749 = vmatpush1.msra.mxu0 %v1739
  %1750 = vmatprep.subr.mxu0 0.0
  %1751 = vmatpush1.msra.mxu0 %v1740
  %1752 = vmatprep.subr.mxu0 0.0
  %1753 = vmatpush1.msra.mxu0 %v1741
  %1754 = vmatprep.subr.mxu0 0.0
  %1755 = vmatpush1.msra.mxu0 %v1742
  %1756 = vmatprep.subr.mxu0 0.0
  %1757 = vmatpush1.msra.mxu0 %v1743
  %1758 = vmatprep.subr.mxu0 0.0
  %1759 = vmatpush1.msra.mxu0 %v1744
  %1760 = vmatprep.subr.mxu0 0.0
  %1761 = vmatpush1.msra.mxu0 0.0
  %1762 = vmatprep.subr.mxu0 0.0
  %1763 = vmatpush1.msra.mxu0 0.0
  %1764 = vmatprep.subr.mxu0 0.0
  %1765 = vmatpush1.msra.mxu0 0.0
  %1766 = vmatprep.subr.mxu0 0.0
  %1767 = vmatpush1.msra.mxu0 0.0
  %1768 = vmatprep.subr.mxu0 0.0
  %1769 = vmatpush1.msra.mxu0 0.0
  %1770 = vmatprep.subr.mxu0 0.0
  %1771 = vmatpush1.msra.mxu0 0.0
  %1772 = vmatprep.subr.mxu0 0.0
  %1773 = vmatpush1.msra.mxu0 0.0
  %1774 = vmatprep.subr.mxu0 0.0
  %1775 = vmatpush1.msra.mxu0 0.0
  %1776 = vmatprep.subr.mxu0 0.0
  %1777 = vmatpush1.msra.mxu0 0.0
  %1778 = vmatprep.subr.mxu0 0.0
  %1779 = vmatpush1.msra.mxu0 0.0
  %1780 = vmatprep.subr.mxu0 0.0
  %1781 = vmatpush1.msra.mxu0 0.0
  %1782 = vmatprep.subr.mxu0 0.0
  %1783 = vmatpush1.msra.mxu0 0.0
  %1784 = vmatprep.subr.mxu0 0.0
  %1785 = vmatpush1.msra.mxu0 0.0
  %1786 = vmatprep.subr.mxu0 0.0
  %1787 = vmatpush1.msra.mxu0 0.0
  %1788 = vmatprep.subr.mxu0 0.0
  %1789 = vmatpush1.msra.mxu0 0.0
  %1790 = vmatprep.subr.mxu0 0.0
  %1791 = vmatpush1.msra.mxu0 0.0
  %1792 = vmatprep.subr.mxu0 0.0
  %1793 = vmatpush1.msra.mxu0 0.0
  %1794 = vmatprep.subr.mxu0 0.0
  %1795 = vmatpush1.msra.mxu0 0.0
  %1796 = vmatprep.subr.mxu0 0.0
  %1797 = vmatpush1.msra.mxu0 0.0
  %1798 = vmatprep.subr.mxu0 0.0
  %1799 = vmatpush1.msra.mxu0 0.0
  %1800 = vmatprep.subr.mxu0 0.0
  %1801 = vmatpush1.msra.mxu0 0.0
  %1802 = vmatprep.subr.mxu0 0.0
  %1803 = vmatpush1.msra.mxu0 0.0
  %1804 = vmatprep.subr.mxu0 0.0
  %1805 = vmatpush1.msra.mxu0 0.0
  %1806 = vmatprep.subr.mxu0 0.0
  %1807 = vmatpush1.msra.mxu0 0.0
  %1808 = vmatprep.subr.mxu0 0.0
  %1809 = vmatpush1.msra.mxu0 0.0
  %1810 = vmatprep.subr.mxu0 0.0
  %1811 = vmatpush1.msra.mxu0 0.0
  %1812 = vmatprep.mubr.f32.mxu0 0.0
  %1813 = vmatmul.mubr.f32.gmra.mrb[0].mxu0 %v1746
  %v1814 = vpop.f32.mrb[0].mxu0
  %v1815 = vadd.f32 0.0, %v1814
  %v1816 = vpop.f32.mrb[0].mxu0
  %1817 = vdwg.mxu0
  %v1818 = vtanh.pop %v1815
  %v1819 = vadd.f32 %v979, %v1643
  %v1820 = vadd.f32 %v980, %v1818
  %v1821 = vld [vmem:[%s10 + $0x30] sm:$0xff]
  %v1822 = vld [vmem:[%s10 + $0x38] sm:$0xff]
  %v1823 = vld [vmem:[%s10 + $0x40] sm:$0xff]
  %v1824 = vld [vmem:[%s10 + $0x48] sm:$0xff]
  %v1825 = vld [vmem:[%s10 + $0x50] sm:$0xff]
  %v1826 = vld [vmem:[%s10 + $0x58] sm:$0xff]
  %v1827 = vld [vmem:[%s11 + $0x30] sm:$0xff]
  %v1828 = vld [vmem:[%s11 + $0x38] sm:$0xff]
  %v1829 = vld [vmem:[%s11 + $0x40] sm:$0xff]
  %v1830 = vld [vmem:[%s11 + $0x48] sm:$0xff]
  %v1831 = vld [vmem:[%s11 + $0x50] sm:$0xff]
  %v1832 = vld [vmem:[%s11 + $0x58] sm:$0xff]
  %v1833 = vld [vmem:[%s12 + $0x30] sm:$0xff]
  %v1834 = vld [vmem:[%s12 + $0x38] sm:$0xff]
  %v1835 = vld [vmem:[%s12 + $0x40] sm:$0xff]
  %v1836 = vld [vmem:[%s12 + $0x48] sm:$0xff]
  %v1837 = vld [vmem:[%s12 + $0x50] sm:$0xff]
  %v1838 = vld [vmem:[%s12 + $0x58] sm:$0xff]
  %1839 = vmatprep.subr.mxu0 0.0
  %1840 = vmatpush1.msra.mxu0 %v1821
  %1841 = vmatprep.subr.mxu0 0.0
  %1842 = vmatpush1.msra.mxu0 %v1822
  %1843 = vmatprep.subr.mxu0 0.0
  %1844 = vmatpush1.msra.mxu0 %v1823
  %1845 = vmatprep.subr.mxu0 0.0
  %1846 = vmatpush1.msra.mxu0 %v1824
  %1847 = vmatprep.subr.mxu0 0.0
  %1848 = vmatpush1.msra.mxu0 %v1825
  %1849 = vmatprep.subr.mxu0 0.0
  %1850 = vmatpush1.msra.mxu0 %v1826
  %1851 = vmatprep.subr.mxu0 0.0
  %1852 = vmatpush1.msra.mxu0 0.0
  %1853 = vmatprep.subr.mxu0 0.0
  %1854 = vmatpush1.msra.mxu0 0.0
  %1855 = vmatprep.subr.mxu0 0.0
  %1856 = vmatpush1.msra.mxu0 0.0
  %1857 = vmatprep.subr.mxu0 0.0
  %1858 = vmatpush1.msra.mxu0 0.0
  %1859 = vmatprep.subr.mxu0 0.0
  %1860 = vmatpush1.msra.mxu0 0.0
  %1861 = vmatprep.subr.mxu0 0.0
  %1862 = vmatpush1.msra.mxu0 0.0
  %1863 = vmatprep.subr.mxu0 0.0
  %1864 = vmatpush1.msra.mxu0 0.0
  %1865 = vmatprep.subr.mxu0 0.0
  %1866 = vmatpush1.msra.mxu0 0.0
  %1867 = vmatprep.subr.mxu0 0.0
  %1868 = vmatpush1.msra.mxu0 0.0
  %1869 = vmatprep.subr.mxu0 0.0
  %1870 = vmatpush1.msra.mxu0 0.0
  %1871 = vmatprep.subr.mxu0 0.0
  %1872 = vmatpush1.msra.mxu0 0.0
  %1873 = vmatprep.subr.mxu0 0.0
  %1874 = vmatpush1.msra.mxu0 0.0
  %1875 = vmatprep.subr.mxu0 0.0
  %1876 = vmatpush1.msra.mxu0 0.0
  %1877 = vmatprep.subr.mxu0 0.0
  %1878 = vmatpush1.msra.mxu0 0.0
  %1879 = vmatprep.subr.mxu0 0.0
  %1880 = vmatpush1.msra.mxu0 0.0
  %1881 = vmatprep.subr.mxu0 0.0
  %1882 = vmatpush1.msra.mxu0 0.0
  %1883 = vmatprep.subr.mxu0 0.0
  %1884 = vmatpush1.msra.mxu0 0.0
  %1885 = vmatprep.subr.mxu0 0.0
  %1886 = vmatpush1.msra.mxu0 0.0
  %1887 = vmatprep.subr.mxu0 0.0
  %1888 = vmatpush1.msra.mxu0 0.0
  %1889 = vmatprep.subr.mxu0 0.0
  %1890 = vmatpush1.msra.mxu0 0.0
  %1891 = vmatprep.subr.mxu0 0.0
  %1892 = vmatpush1.msra.mxu0 0.0
  %1893 = vmatprep.subr.mxu0 0.0
  %1894 = vmatpush1.msra.mxu0 0.0
  %1895 = vmatprep.subr.mxu0 0.0
  %1896 = vmatpush1.msra.mxu0 0.0
  %1897 = vmatprep.subr.mxu0 0.0
  %1898 = vmatpush1.msra.mxu0 0.0
  %1899 = vmatprep.subr.mxu0 0.0
  %1900 = vmatpush1.msra.mxu0 0.0
  %1901 = vmatprep.subr.mxu0 0.0
  %1902 = vmatpush1.msra.mxu0 0.0
  %1903 = vmatprep.mubr.f32.mxu0 0.0
  %1904 = vmatmul.mubr.f32.gmra.mrb[0].mxu0 %v111
  %v1905 = vpop.f32.mrb[0].mxu0
  %v1906 = vadd.f32 0.0, %v1905
  %v1907 = vpop.f32.mrb[0].mxu0
  %1908 = vmatprep.mubr.f32.mxu0 0.0
  %1909 = vmatmul.mubr.f32.gmra.mrb[0].mxu0 %v114
  %v1910 = vpop.f32.mrb[0].mxu0
  %v1911 = vadd.f32 0.0, %v1910
  %v1912 = vpop.f32.mrb[0].mxu0
  %1913 = vdwg.mxu0
  %v1915 = vsel %vm109, %v1906, 0
  %v1918 = vsel %vm109, %v1911, 0
  %1920 = vmatprep.subr.mxu0 0.0
  %1921 = vmatpush1.msra.mxu0 %v1833
  %1922 = vmatprep.subr.mxu0 0.0
  %1923 = vmatpush1.msra.mxu0 %v1834
  %1924 = vmatprep.subr.mxu0 0.0
  %1925 = vmatpush1.msra.mxu0 %v1835
  %1926 = vmatprep.subr.mxu0 0.0
  %1927 = vmatpush1.msra.mxu0 %v1836
  %1928 = vmatprep.subr.mxu0 0.0
  %1929 = vmatpush1.msra.mxu0 %v1837
  %1930 = vmatprep.subr.mxu0 0.0
  %1931 = vmatpush1.msra.mxu0 %v1838
  %1932 = vmatprep.subr.mxu0 0.0
  %1933 = vmatpush1.msra.mxu0 0.0
  %1934 = vmatprep.subr.mxu0 0.0
  %1935 = vmatpush1.msra.mxu0 0.0
  %1936 = vmatprep.subr.mxu0 0.0
  %1937 = vmatpush1.msra.mxu0 0.0
  %1938 = vmatprep.subr.mxu0 0.0
  %1939 = vmatpush1.msra.mxu0 0.0
  %1940 = vmatprep.subr.mxu0 0.0
  %1941 = vmatpush1.msra.mxu0 0.0
  %1942 = vmatprep.subr.mxu0 0.0
  %1943 = vmatpush1.msra.mxu0 0.0
  %1944 = vmatprep.subr.mxu0 0.0
  %1945 = vmatpush1.msra.mxu0 0.0
  %1946 = vmatprep.subr.mxu0 0.0
  %1947 = vmatpush1.msra.mxu0 0.0
  %1948 = vmatprep.subr.mxu0 0.0
  %1949 = vmatpush1.msra.mxu0 0.0
  %1950 = vmatprep.subr.mxu0 0.0
  %1951 = vmatpush1.msra.mxu0 0.0
  %1952 = vmatprep.subr.mxu0 0.0
  %1953 = vmatpush1.msra.mxu0 0.0
  %1954 = vmatprep.subr.mxu0 0.0
  %1955 = vmatpush1.msra.mxu0 0.0
  %1956 = vmatprep.subr.mxu0 0.0
  %1957 = vmatpush1.msra.mxu0 0.0
  %1958 = vmatprep.subr.mxu0 0.0
  %1959 = vmatpush1.msra.mxu0 0.0
  %1960 = vmatprep.subr.mxu0 0.0
  %1961 = vmatpush1.msra.mxu0 0.0
  %1962 = vmatprep.subr.mxu0 0.0
  %1963 = vmatpush1.msra.mxu0 0.0
  %1964 = vmatprep.subr.mxu0 0.0
  %1965 = vmatpush1.msra.mxu0 0.0
  %1966 = vmatprep.subr.mxu0 0.0
  %1967 = vmatpush1.msra.mxu0 0.0
  %1968 = vmatprep.subr.mxu0 0.0
  %1969 = vmatpush1.msra.mxu0 0.0
  %1970 = vmatprep.subr.mxu0 0.0
  %1971 = vmatpush1.msra.mxu0 0.0
  %1972 = vmatprep.subr.mxu0 0.0
  %1973 = vmatpush1.msra.mxu0 0.0
  %1974 = vmatprep.subr.mxu0 0.0
  %1975 = vmatpush1.msra.mxu0 0.0
  %1976 = vmatprep.subr.mxu0 0.0
  %1977 = vmatpush1.msra.mxu0 0.0
  %1978 = vmatprep.subr.mxu0 0.0
  %1979 = vmatpush1.msra.mxu0 0.0
  %1980 = vmatprep.subr.mxu0 0.0
  %1981 = vmatpush1.msra.mxu0 0.0
  %1982 = vmatprep.subr.mxu0 0.0
  %1983 = vmatpush1.msra.mxu0 0.0
  %1984 = vmatprep.mubr.f32.mxu0 0.0
  %1985 = vmatmul.mubr.f32.gmra.mrb[0].mxu0 %v1915
  %v1986 = vpop.f32.mrb[0].mxu0
  %v1987 = vadd.f32 0.0, %v1986
  %v1988 = vpop.f32.mrb[0].mxu0
  %1989 = vmatprep.mubr.f32.mxu0 0.0
  %1990 = vmatmul.mubr.f32.gmra.mrb[0].mxu0 %v1918
  %v1991 = vpop.f32.mrb[0].mxu0
  %v1992 = vadd.f32 0.0, %v1991
  %v1993 = vpop.f32.mrb[0].mxu0
  %1994 = vdwg.mxu0
  %v1995 = vmul.f32 %v1987, %v68
  %v1996 = vmul.f32 %v1992, %v69
  %1997 = vmatprep.subr.mxu0 0.0
  %1998 = vmatpush1.msra.mxu0 %v1995
  %1999 = vmatprep.subr.mxu0 0.0
  %2000 = vmatpush1.msra.mxu0 %v1996
  %2001 = vmatprep.subr.mxu0 0.0
  %2002 = vmatpush1.msra.mxu0 0.0
  %2003 = vmatprep.subr.mxu0 0.0
  %2004 = vmatpush1.msra.mxu0 0.0
  %2005 = vmatprep.subr.mxu0 0.0
  %2006 = vmatpush1.msra.mxu0 0.0
  %2007 = vmatprep.subr.mxu0 0.0
  %2008 = vmatpush1.msra.mxu0 0.0
  %2009 = vmatprep.subr.mxu0 0.0
  %2010 = vmatpush1.msra.mxu0 0.0
  %2011 = vmatprep.subr.mxu0 0.0
  %2012 = vmatpush1.msra.mxu0 0.0
  %2013 = vmatprep.subr.mxu0 0.0
  %2014 = vmatpush1.msra.mxu0 0.0
  %2015 = vmatprep.subr.mxu0 0.0
  %2016 = vmatpush1.msra.mxu0 0.0
  %2017 = vmatprep.subr.mxu0 0.0
  %2018 = vmatpush1.msra.mxu0 0.0
  %2019 = vmatprep.subr.mxu0 0.0
  %2020 = vmatpush1.msra.mxu0 0.0
  %2021 = vmatprep.subr.mxu0 0.0
  %2022 = vmatpush1.msra.mxu0 0.0
  %2023 = vmatprep.subr.mxu0 0.0
  %2024 = vmatpush1.msra.mxu0 0.0
  %2025 = vmatprep.subr.mxu0 0.0
  %2026 = vmatpush1.msra.mxu0 0.0
  %2027 = vmatprep.subr.mxu0 0.0
  %2028 = vmatpush1.msra.mxu0 0.0
  %2029 = vmatprep.subr.mxu0 0.0
  %2030 = vmatpush1.msra.mxu0 0.0
  %2031 = vmatprep.subr.mxu0 0.0
  %2032 = vmatpush1.msra.mxu0 0.0
  %2033 = vmatprep.subr.mxu0 0.0
  %2034 = vmatpush1.msra.mxu0 0.0
  %2035 = vmatprep.subr.mxu0 0.0
  %2036 = vmatpush1.msra.mxu0 0.0
  %2037 = vmatprep.subr.mxu0 0.0
  %2038 = vmatpush1.msra.mxu0 0.0
  %2039 = vmatprep.subr.mxu0 0.0
  %2040 = vmatpush1.msra.mxu0 0.0
  %2041 = vmatprep.subr.mxu0 0.0
  %2042 = vmatpush1.msra.mxu0 0.0
  %2043 = vmatprep.subr.mxu0 0.0
  %2044 = vmatpush1.msra.mxu0 0.0
  %2045 = vmatprep.subr.mxu0 0.0
  %2046 = vmatpush1.msra.mxu0 0.0
  %2047 = vmatprep.subr.mxu0 0.0
  %2048 = vmatpush1.msra.mxu0 0.0
  %2049 = vmatprep.subr.mxu0 0.0
  %2050 = vmatpush1.msra.mxu0 0.0
  %2051 = vmatprep.subr.mxu0 0.0
  %2052 = vmatpush1.msra.mxu0 0.0
  %2053 = vmatprep.subr.mxu0 0.0
  %2054 = vmatpush1.msra.mxu0 0.0
  %2055 = vmatprep.subr.mxu0 0.0
  %2056 = vmatpush1.msra.mxu0 0.0
  %2057 = vmatprep.subr.mxu0 0.0
  %2058 = vmatpush1.msra.mxu0 0.0
  %2059 = vmatprep.subr.mxu0 0.0
  %2060 = vmatpush1.msra.mxu0 0.0
  %2061 = vmatprep.mubr.f32.mxu0 0.0
  %2062 = vmatmul.mubr.f32.gmra.mrb[0].mxu0 %v276
  %v2063 = vpop.f32.mrb[0].mxu0
  %v2064 = vadd.f32 0.0, %v2063
  %v2065 = vpop.f32.mrb[0].mxu0
  %2066 = vmatprep.mubr.f32.mxu0 0.0
  %2067 = vmatmul.mubr.f32.gmra.mrb[0].mxu0 %v279
  %v2068 = vpop.f32.mrb[0].mxu0
  %v2069 = vadd.f32 0.0, %v2068
  %v2070 = vpop.f32.mrb[0].mxu0
  %2071 = vdwg.mxu0
  %2072 = vmatprep.subr.mxu0 0.0
  %2073 = vmatpush1.msra.mxu0 %v1827
  %2074 = vmatprep.subr.mxu0 0.0
  %2075 = vmatpush1.msra.mxu0 %v1828
  %2076 = vmatprep.subr.mxu0 0.0
  %2077 = vmatpush1.msra.mxu0 %v1829
  %2078 = vmatprep.subr.mxu0 0.0
  %2079 = vmatpush1.msra.mxu0 %v1830
  %2080 = vmatprep.subr.mxu0 0.0
  %2081 = vmatpush1.msra.mxu0 %v1831
  %2082 = vmatprep.subr.mxu0 0.0
  %2083 = vmatpush1.msra.mxu0 %v1832
  %2084 = vmatprep.subr.mxu0 0.0
  %2085 = vmatpush1.msra.mxu0 0.0
  %2086 = vmatprep.subr.mxu0 0.0
  %2087 = vmatpush1.msra.mxu0 0.0
  %2088 = vmatprep.subr.mxu0 0.0
  %2089 = vmatpush1.msra.mxu0 0.0
  %2090 = vmatprep.subr.mxu0 0.0
  %2091 = vmatpush1.msra.mxu0 0.0
  %2092 = vmatprep.subr.mxu0 0.0
  %2093 = vmatpush1.msra.mxu0 0.0
  %2094 = vmatprep.subr.mxu0 0.0
  %2095 = vmatpush1.msra.mxu0 0.0
  %2096 = vmatprep.subr.mxu0 0.0
  %2097 = vmatpush1.msra.mxu0 0.0
  %2098 = vmatprep.subr.mxu0 0.0
  %2099 = vmatpush1.msra.mxu0 0.0
  %2100 = vmatprep.subr.mxu0 0.0
  %2101 = vmatpush1.msra.mxu0 0.0
  %2102 = vmatprep.subr.mxu0 0.0
  %2103 = vmatpush1.msra.mxu0 0.0
  %2104 = vmatprep.subr.mxu0 0.0
  %2105 = vmatpush1.msra.mxu0 0.0
  %2106 = vmatprep.subr.mxu0 0.0
  %2107 = vmatpush1.msra.mxu0 0.0
  %2108 = vmatprep.subr.mxu0 0.0
  %2109 = vmatpush1.msra.mxu0 0.0
  %2110 = vmatprep.subr.mxu0 0.0
  %2111 = vmatpush1.msra.mxu0 0.0
  %2112 = vmatprep.subr.mxu0 0.0
  %2113 = vmatpush1.msra.mxu0 0.0
  %2114 = vmatprep.subr.mxu0 0.0
  %2115 = vmatpush1.msra.mxu0 0.0
  %2116 = vmatprep.subr.mxu0 0.0
  %2117 = vmatpush1.msra.mxu0 0.0
  %2118 = vmatprep.subr.mxu0 0.0
  %2119 = vmatpush1.msra.mxu0 0.0
  %2120 = vmatprep.subr.mxu0 0.0
  %2121 = vmatpush1.msra.mxu0 0.0
  %2122 = vmatprep.subr.mxu0 0.0
  %2123 = vmatpush1.msra.mxu0 0.0
  %2124 = vmatprep.subr.mxu0 0.0
  %2125 = vmatpush1.msra.mxu0 0.0
  %2126 = vmatprep.subr.mxu0 0.0
  %2127 = vmatpush1.msra.mxu0 0.0
  %2128 = vmatprep.subr.mxu0 0.0
  %2129 = vmatpush1.msra.mxu0 0.0
  %2130 = vmatprep.subr.mxu0 0.0
  %2131 = vmatpush1.msra.mxu0 0.0
  %2132 = vmatprep.subr.mxu0 0.0
  %2133 = vmatpush1.msra.mxu0 0.0
  %2134 = vmatprep.subr.mxu0 0.0
  %2135 = vmatpush1.msra.mxu0 0.0
  %2136 = vmatprep.mubr.f32.mxu0 0.0
  %2137 = vmatmul.mubr.f32.gmra.mrb[0].mxu0 %v1915
  %v2138 = vpop.f32.mrb[0].mxu0
  %v2139 = vadd.f32 %v2064, %v2138
  %v2140 = vpop.f32.mrb[0].mxu0
  %2141 = vmatprep.mubr.f32.mxu0 0.0
  %2142 = vmatmul.mubr.f32.gmra.mrb[0].mxu0 %v1918
  %v2143 = vpop.f32.mrb[0].mxu0
  %v2144 = vadd.f32 %v2069, %v2143
  %v2145 = vpop.f32.mrb[0].mxu0
  %2146 = vdwg.mxu0
  %v2147 = vtanh.pop %v2139
  %v2148 = vtanh.pop %v2144
  %v2149 = vsel %vm66, -1e-08, %v2147
  %v2150 = vsel %vm67, -1e-08, %v2148
  %v2151 = vmul.f32 %v2149, 1.442695
  %v2152 = vpow.pop %v2151
  %v2153 = vmul.f32 %v2150, 1.442695
  %v2154 = vpow.pop %v2153
  %v2156 = vsel %vm109, %v2152, 0
  %v2159 = vsel %vm109, %v2154, 0
  %2161 = vmatprep.subr.mxu0 0.0
  %2162 = vmatpush1.msra.mxu0 %v84
  %2163 = vmatprep.subr.mxu0 0.0
  %2164 = vmatpush1.msra.mxu0 %v85
  %2165 = vmatprep.subr.mxu0 0.0
  %2166 = vmatpush1.msra.mxu0 %v86
  %2167 = vmatprep.subr.mxu0 0.0
  %2168 = vmatpush1.msra.mxu0 %v87
  %2169 = vmatprep.subr.mxu0 0.0
  %2170 = vmatpush1.msra.mxu0 %v88
  %2171 = vmatprep.subr.mxu0 0.0
  %2172 = vmatpush1.msra.mxu0 %v89
  %2173 = vmatprep.subr.mxu0 0.0
  %2174 = vmatpush1.msra.mxu0 0.0
  %2175 = vmatprep.subr.mxu0 0.0
  %2176 = vmatpush1.msra.mxu0 0.0
  %2177 = vmatprep.subr.mxu0 0.0
  %2178 = vmatpush1.msra.mxu0 0.0
  %2179 = vmatprep.subr.mxu0 0.0
  %2180 = vmatpush1.msra.mxu0 0.0
  %2181 = vmatprep.subr.mxu0 0.0
  %2182 = vmatpush1.msra.mxu0 0.0
  %2183 = vmatprep.subr.mxu0 0.0
  %2184 = vmatpush1.msra.mxu0 0.0
  %2185 = vmatprep.subr.mxu0 0.0
  %2186 = vmatpush1.msra.mxu0 0.0
  %2187 = vmatprep.subr.mxu0 0.0
  %2188 = vmatpush1.msra.mxu0 0.0
  %2189 = vmatprep.subr.mxu0 0.0
  %2190 = vmatpush1.msra.mxu0 0.0
  %2191 = vmatprep.subr.mxu0 0.0
  %2192 = vmatpush1.msra.mxu0 0.0
  %2193 = vmatprep.subr.mxu0 0.0
  %2194 = vmatpush1.msra.mxu0 0.0
  %2195 = vmatprep.subr.mxu0 0.0
  %2196 = vmatpush1.msra.mxu0 0.0
  %2197 = vmatprep.subr.mxu0 0.0
  %2198 = vmatpush1.msra.mxu0 0.0
  %2199 = vmatprep.subr.mxu0 0.0
  %2200 = vmatpush1.msra.mxu0 0.0
  %2201 = vmatprep.subr.mxu0 0.0
  %2202 = vmatpush1.msra.mxu0 0.0
  %2203 = vmatprep.subr.mxu0 0.0
  %2204 = vmatpush1.msra.mxu0 0.0
  %2205 = vmatprep.subr.mxu0 0.0
  %2206 = vmatpush1.msra.mxu0 0.0
  %2207 = vmatprep.subr.mxu0 0.0
  %2208 = vmatpush1.msra.mxu0 0.0
  %2209 = vmatprep.subr.mxu0 0.0
  %2210 = vmatpush1.msra.mxu0 0.0
  %2211 = vmatprep.subr.mxu0 0.0
  %2212 = vmatpush1.msra.mxu0 0.0
  %2213 = vmatprep.subr.mxu0 0.0
  %2214 = vmatpush1.msra.mxu0 0.0
  %2215 = vmatprep.subr.mxu0 0.0
  %2216 = vmatpush1.msra.mxu0 0.0
  %2217 = vmatprep.subr.mxu0 0.0
  %2218 = vmatpush1.msra.mxu0 0.0
  %2219 = vmatprep.subr.mxu0 0.0
  %2220 = vmatpush1.msra.mxu0 0.0
  %2221 = vmatprep.subr.mxu0 0.0
  %2222 = vmatpush1.msra.mxu0 0.0
  %2223 = vmatprep.subr.mxu0 0.0
  %2224 = vmatpush1.msra.mxu0 0.0
  %2225 = vmatprep.mubr.f32.mxu0 0.0
  %2226 = vmatmul.mubr.f32.gmra.mrb[0].mxu0 %v2156
  %v2227 = vpop.f32.mrb[0].mxu0
  %v2228 = vadd.f32 0.0, %v2227
  %v2229 = vpop.f32.mrb[0].mxu0
  %2230 = vmatprep.mubr.f32.mxu0 0.0
  %2231 = vmatmul.mubr.f32.gmra.mrb[0].mxu0 %v2159
  %v2232 = vpop.f32.mrb[0].mxu0
  %v2233 = vadd.f32 0.0, %v2232
  %v2234 = vpop.f32.mrb[0].mxu0
  %2235 = vdwg.mxu0
  %v2237 = vsel %vm520, %v2228, 0
  %v2240 = vsel %vm520, %v2233, 0
  %2242 = vmatprep.subr.mxu0 0.0
  %2243 = vmatpush1.msra.mxu0 %v529
  %2244 = vmatprep.subr.mxu0 0.0
  %2245 = vmatpush1.msra.mxu0 0.0
  %2246 = vmatprep.subr.mxu0 0.0
  %2247 = vmatpush1.msra.mxu0 0.0
  %2248 = vmatprep.subr.mxu0 0.0
  %2249 = vmatpush1.msra.mxu0 0.0
  %2250 = vmatprep.subr.mxu0 0.0
  %2251 = vmatpush1.msra.mxu0 0.0
  %2252 = vmatprep.subr.mxu0 0.0
  %2253 = vmatpush1.msra.mxu0 0.0
  %2254 = vmatprep.subr.mxu0 0.0
  %2255 = vmatpush1.msra.mxu0 0.0
  %2256 = vmatprep.subr.mxu0 0.0
  %2257 = vmatpush1.msra.mxu0 0.0
  %2258 = vmatprep.subr.mxu0 0.0
  %2259 = vmatpush1.msra.mxu0 0.0
  %2260 = vmatprep.subr.mxu0 0.0
  %2261 = vmatpush1.msra.mxu0 0.0
  %2262 = vmatprep.subr.mxu0 0.0
  %2263 = vmatpush1.msra.mxu0 0.0
  %2264 = vmatprep.subr.mxu0 0.0
  %2265 = vmatpush1.msra.mxu0 0.0
  %2266 = vmatprep.subr.mxu0 0.0
  %2267 = vmatpush1.msra.mxu0 0.0
  %2268 = vmatprep.subr.mxu0 0.0
  %2269 = vmatpush1.msra.mxu0 0.0
  %2270 = vmatprep.subr.mxu0 0.0
  %2271 = vmatpush1.msra.mxu0 0.0
  %2272 = vmatprep.subr.mxu0 0.0
  %2273 = vmatpush1.msra.mxu0 0.0
  %2274 = vmatprep.subr.mxu0 0.0
  %2275 = vmatpush1.msra.mxu0 0.0
  %2276 = vmatprep.subr.mxu0 0.0
  %2277 = vmatpush1.msra.mxu0 0.0
  %2278 = vmatprep.subr.mxu0 0.0
  %2279 = vmatpush1.msra.mxu0 0.0
  %2280 = vmatprep.subr.mxu0 0.0
  %2281 = vmatpush1.msra.mxu0 0.0
  %2282 = vmatprep.subr.mxu0 0.0
  %2283 = vmatpush1.msra.mxu0 0.0
  %2284 = vmatprep.subr.mxu0 0.0
  %2285 = vmatpush1.msra.mxu0 0.0
  %2286 = vmatprep.subr.mxu0 0.0
  %2287 = vmatpush1.msra.mxu0 0.0
  %2288 = vmatprep.subr.mxu0 0.0
  %2289 = vmatpush1.msra.mxu0 0.0
  %2290 = vmatprep.subr.mxu0 0.0
  %2291 = vmatpush1.msra.mxu0 0.0
  %2292 = vmatprep.subr.mxu0 0.0
  %2293 = vmatpush1.msra.mxu0 0.0
  %2294 = vmatprep.subr.mxu0 0.0
  %2295 = vmatpush1.msra.mxu0 0.0
  %2296 = vmatprep.subr.mxu0 0.0
  %2297 = vmatpush1.msra.mxu0 0.0
  %2298 = vmatprep.subr.mxu0 0.0
  %2299 = vmatpush1.msra.mxu0 0.0
  %2300 = vmatprep.subr.mxu0 0.0
  %2301 = vmatpush1.msra.mxu0 0.0
  %2302 = vmatprep.subr.mxu0 0.0
  %2303 = vmatpush1.msra.mxu0 0.0
  %2304 = vmatprep.subr.mxu0 0.0
  %2305 = vmatpush1.msra.mxu0 0.0
  %2306 = vmatprep.mubr.f32.mxu0 0.0
  %2307 = vmatmul.mubr.f32.gmra.mrb[0].mxu0 %v2237
  %v2308 = vpop.f32.mrb[0].mxu0
  %v2309 = vadd.f32 0.0, %v2308
  %v2310 = vpop.f32.mrb[0].mxu0
  %2311 = vmatprep.mubr.f32.mxu0 0.0
  %2312 = vmatmul.mubr.f32.gmra.mrb[0].mxu0 %v2240
  %v2313 = vpop.f32.mrb[0].mxu0
  %v2314 = vadd.f32 0.0, %v2313
  %v2315 = vpop.f32.mrb[0].mxu0
  %2316 = vdwg.mxu0
  %v2317 = vrcp.pop %v2309
  %v2318 = vmul.f32 %v2152, %v2317
  %v2319 = vrcp.pop %v2314
  %v2320 = vmul.f32 %v2154, %v2319
  %2321 = vmatprep.subr.mxu0 0.0
  %2322 = vmatpush1.msra.mxu0 %v1906
  %2323 = vmatprep.subr.mxu0 0.0
  %2324 = vmatpush1.msra.mxu0 0.0
  %2325 = vmatprep.subr.mxu0 0.0
  %2326 = vmatpush1.msra.mxu0 0.0
  %2327 = vmatprep.subr.mxu0 0.0
  %2328 = vmatpush1.msra.mxu0 0.0
  %2329 = vmatprep.subr.mxu0 0.0
  %2330 = vmatpush1.msra.mxu0 0.0
  %2331 = vmatprep.subr.mxu0 0.0
  %2332 = vmatpush1.msra.mxu0 0.0
  %2333 = vmatprep.subr.mxu0 0.0
  %2334 = vmatpush1.msra.mxu0 0.0
  %2335 = vmatprep.subr.mxu0 0.0
  %2336 = vmatpush1.msra.mxu0 0.0
  %2337 = vmatprep.subr.mxu0 0.0
  %2338 = vmatpush1.msra.mxu0 0.0
  %2339 = vmatprep.subr.mxu0 0.0
  %2340 = vmatpush1.msra.mxu0 0.0
  %2341 = vmatprep.subr.mxu0 0.0
  %2342 = vmatpush1.msra.mxu0 0.0
  %2343 = vmatprep.subr.mxu0 0.0
  %2344 = vmatpush1.msra.mxu0 0.0
  %2345 = vmatprep.subr.mxu0 0.0
  %2346 = vmatpush1.msra.mxu0 0.0
  %2347 = vmatprep.subr.mxu0 0.0
  %2348 = vmatpush1.msra.mxu0 0.0
  %2349 = vmatprep.subr.mxu0 0.0
  %2350 = vmatpush1.msra.mxu0 0.0
  %2351 = vmatprep.subr.mxu0 0.0
  %2352 = vmatpush1.msra.mxu0 0.0
  %2353 = vmatprep.subr.mxu0 0.0
  %2354 = vmatpush1.msra.mxu0 0.0
  %2355 = vmatprep.subr.mxu0 0.0
  %2356 = vmatpush1.msra.mxu0 0.0
  %2357 = vmatprep.subr.mxu0 0.0
  %2358 = vmatpush1.msra.mxu0 0.0
  %2359 = vmatprep.subr.mxu0 0.0
  %2360 = vmatpush1.msra.mxu0 0.0
  %2361 = vmatprep.subr.mxu0 0.0
  %2362 = vmatpush1.msra.mxu0 0.0
  %2363 = vmatprep.subr.mxu0 0.0
  %2364 = vmatpush1.msra.mxu0 0.0
  %2365 = vmatprep.subr.mxu0 0.0
  %2366 = vmatpush1.msra.mxu0 0.0
  %2367 = vmatprep.subr.mxu0 0.0
  %2368 = vmatpush1.msra.mxu0 0.0
  %2369 = vmatprep.subr.mxu0 0.0
  %2370 = vmatpush1.msra.mxu0 0.0
  %2371 = vmatprep.subr.mxu0 0.0
  %2372 = vmatpush1.msra.mxu0 0.0
  %2373 = vmatprep.subr.mxu0 0.0
  %2374 = vmatpush1.msra.mxu0 0.0
  %2375 = vmatprep.subr.mxu0 0.0
  %2376 = vmatpush1.msra.mxu0 0.0
  %2377 = vmatprep.subr.mxu0 0.0
  %2378 = vmatpush1.msra.mxu0 0.0
  %2379 = vmatprep.subr.mxu0 0.0
  %2380 = vmatpush1.msra.mxu0 0.0
  %2381 = vmatprep.subr.mxu0 0.0
  %2382 = vmatpush1.msra.mxu0 0.0
  %2383 = vmatprep.subr.mxu0 0.0
  %2384 = vmatpush1.msra.mxu0 0.0
  %2385 = vmatprep.mubr.f32.mxu0 0.0
  %2386 = vmatmul.mubr.f32.gmra.mrb[0].mxu0 %v612
  %v2387 = vpop.f32.mrb[0].mxu0
  %v2388 = vadd.f32 0.0, %v2387
  %v2389 = vpop.f32.mrb[0].mxu0
  %2390 = vmatprep.mubr.f32.mxu0 0.0
  %2391 = vmatmul.mubr.f32.gmra.mrb[0].mxu0 %v615
  %v2392 = vpop.f32.mrb[0].mxu0
  %v2393 = vadd.f32 0.0, %v2392
  %v2394 = vpop.f32.mrb[0].mxu0
  %2395 = vmatprep.mubr.f32.mxu0 0.0
  %2396 = vmatmul.mubr.f32.gmra.mrb[0].mxu0 %v618
  %v2397 = vpop.f32.mrb[0].mxu0
  %v2398 = vadd.f32 0.0, %v2397
  %v2399 = vpop.f32.mrb[0].mxu0
  %2400 = vmatprep.mubr.f32.mxu0 0.0
  %2401 = vmatmul.mubr.f32.gmra.mrb[0].mxu0 %v621
  %v2402 = vpop.f32.mrb[0].mxu0
  %v2403 = vadd.f32 0.0, %v2402
  %v2404 = vpop.f32.mrb[0].mxu0
  %2405 = vmatprep.mubr.f32.mxu0 0.0
  %2406 = vmatmul.mubr.f32.gmra.mrb[0].mxu0 %v624
  %v2407 = vpop.f32.mrb[0].mxu0
  %v2408 = vadd.f32 0.0, %v2407
  %v2409 = vpop.f32.mrb[0].mxu0
  %2410 = vmatprep.mubr.f32.mxu0 0.0
  %2411 = vmatmul.mubr.f32.gmra.mrb[0].mxu0 %v627
  %v2412 = vpop.f32.mrb[0].mxu0
  %v2413 = vadd.f32 0.0, %v2412
  %v2414 = vpop.f32.mrb[0].mxu0
  %2415 = vdwg.mxu0
  %v2416 = vmul.f32 %v2388, %v78
  %v2417 = vmul.f32 %v2393, %v79
  %v2418 = vmul.f32 %v2398, %v80
  %v2419 = vmul.f32 %v2403, %v81
  %v2420 = vmul.f32 %v2408, %v82
  %v2421 = vmul.f32 %v2413, %v83
  %v2423 = vsel %vm109, %v2318, 0
  %2425 = vmatprep.subr.mxu0 0.0
  %2426 = vmatpush1.msra.mxu0 %v2416
  %2427 = vmatprep.subr.mxu0 0.0
  %2428 = vmatpush1.msra.mxu0 %v2417
  %2429 = vmatprep.subr.mxu0 0.0
  %2430 = vmatpush1.msra.mxu0 %v2418
  %2431 = vmatprep.subr.mxu0 0.0
  %2432 = vmatpush1.msra.mxu0 %v2419
  %2433 = vmatprep.subr.mxu0 0.0
  %2434 = vmatpush1.msra.mxu0 %v2420
  %2435 = vmatprep.subr.mxu0 0.0
  %2436 = vmatpush1.msra.mxu0 %v2421
  %2437 = vmatprep.subr.mxu0 0.0
  %2438 = vmatpush1.msra.mxu0 0.0
  %2439 = vmatprep.subr.mxu0 0.0
  %2440 = vmatpush1.msra.mxu0 0.0
  %2441 = vmatprep.subr.mxu0 0.0
  %2442 = vmatpush1.msra.mxu0 0.0
  %2443 = vmatprep.subr.mxu0 0.0
  %2444 = vmatpush1.msra.mxu0 0.0
  %2445 = vmatprep.subr.mxu0 0.0
  %2446 = vmatpush1.msra.mxu0 0.0
  %2447 = vmatprep.subr.mxu0 0.0
  %2448 = vmatpush1.msra.mxu0 0.0
  %2449 = vmatprep.subr.mxu0 0.0
  %2450 = vmatpush1.msra.mxu0 0.0
  %2451 = vmatprep.subr.mxu0 0.0
  %2452 = vmatpush1.msra.mxu0 0.0
  %2453 = vmatprep.subr.mxu0 0.0
  %2454 = vmatpush1.msra.mxu0 0.0
  %2455 = vmatprep.subr.mxu0 0.0
  %2456 = vmatpush1.msra.mxu0 0.0
  %2457 = vmatprep.subr.mxu0 0.0
  %2458 = vmatpush1.msra.mxu0 0.0
  %2459 = vmatprep.subr.mxu0 0.0
  %2460 = vmatpush1.msra.mxu0 0.0
  %2461 = vmatprep.subr.mxu0 0.0
  %2462 = vmatpush1.msra.mxu0 0.0
  %2463 = vmatprep.subr.mxu0 0.0
  %2464 = vmatpush1.msra.mxu0 0.0
  %2465 = vmatprep.subr.mxu0 0.0
  %2466 = vmatpush1.msra.mxu0 0.0
  %2467 = vmatprep.subr.mxu0 0.0
  %2468 = vmatpush1.msra.mxu0 0.0
  %2469 = vmatprep.subr.mxu0 0.0
  %2470 = vmatpush1.msra.mxu0 0.0
  %2471 = vmatprep.subr.mxu0 0.0
  %2472 = vmatpush1.msra.mxu0 0.0
  %2473 = vmatprep.subr.mxu0 0.0
  %2474 = vmatpush1.msra.mxu0 0.0
  %2475 = vmatprep.subr.mxu0 0.0
  %2476 = vmatpush1.msra.mxu0 0.0
  %2477 = vmatprep.subr.mxu0 0.0
  %2478 = vmatpush1.msra.mxu0 0.0
  %2479 = vmatprep.subr.mxu0 0.0
  %2480 = vmatpush1.msra.mxu0 0.0
  %2481 = vmatprep.subr.mxu0 0.0
  %2482 = vmatpush1.msra.mxu0 0.0
  %2483 = vmatprep.subr.mxu0 0.0
  %2484 = vmatpush1.msra.mxu0 0.0
  %2485 = vmatprep.subr.mxu0 0.0
  %2486 = vmatpush1.msra.mxu0 0.0
  %2487 = vmatprep.subr.mxu0 0.0
  %2488 = vmatpush1.msra.mxu0 0.0
  %2489 = vmatprep.mubr.f32.mxu0 0.0
  %2490 = vmatmul.mubr.f32.gmra.mrb[0].mxu0 %v2423
  %v2491 = vpop.f32.mrb[0].mxu0
  %v2492 = vadd.f32 0.0, %v2491
  %v2493 = vpop.f32.mrb[0].mxu0
  %2494 = vdwg.mxu0
  %v2495 = vtanh.pop %v2492
  %2496 = vmatprep.subr.mxu0 0.0
  %2497 = vmatpush1.msra.mxu0 %v1911
  %2498 = vmatprep.subr.mxu0 0.0
  %2499 = vmatpush1.msra.mxu0 0.0
  %2500 = vmatprep.subr.mxu0 0.0
  %2501 = vmatpush1.msra.mxu0 0.0
  %2502 = vmatprep.subr.mxu0 0.0
  %2503 = vmatpush1.msra.mxu0 0.0
  %2504 = vmatprep.subr.mxu0 0.0
  %2505 = vmatpush1.msra.mxu0 0.0
  %2506 = vmatprep.subr.mxu0 0.0
  %2507 = vmatpush1.msra.mxu0 0.0
  %2508 = vmatprep.subr.mxu0 0.0
  %2509 = vmatpush1.msra.mxu0 0.0
  %2510 = vmatprep.subr.mxu0 0.0
  %2511 = vmatpush1.msra.mxu0 0.0
  %2512 = vmatprep.subr.mxu0 0.0
  %2513 = vmatpush1.msra.mxu0 0.0
  %2514 = vmatprep.subr.mxu0 0.0
  %2515 = vmatpush1.msra.mxu0 0.0
  %2516 = vmatprep.subr.mxu0 0.0
  %2517 = vmatpush1.msra.mxu0 0.0
  %2518 = vmatprep.subr.mxu0 0.0
  %2519 = vmatpush1.msra.mxu0 0.0
  %2520 = vmatprep.subr.mxu0 0.0
  %2521 = vmatpush1.msra.mxu0 0.0
  %2522 = vmatprep.subr.mxu0 0.0
  %2523 = vmatpush1.msra.mxu0 0.0
  %2524 = vmatprep.subr.mxu0 0.0
  %2525 = vmatpush1.msra.mxu0 0.0
  %2526 = vmatprep.subr.mxu0 0.0
  %2527 = vmatpush1.msra.mxu0 0.0
  %2528 = vmatprep.subr.mxu0 0.0
  %2529 = vmatpush1.msra.mxu0 0.0
  %2530 = vmatprep.subr.mxu0 0.0
  %2531 = vmatpush1.msra.mxu0 0.0
  %2532 = vmatprep.subr.mxu0 0.0
  %2533 = vmatpush1.msra.mxu0 0.0
  %2534 = vmatprep.subr.mxu0 0.0
  %2535 = vmatpush1.msra.mxu0 0.0
  %2536 = vmatprep.subr.mxu0 0.0
  %2537 = vmatpush1.msra.mxu0 0.0
  %2538 = vmatprep.subr.mxu0 0.0
  %2539 = vmatpush1.msra.mxu0 0.0
  %2540 = vmatprep.subr.mxu0 0.0
  %2541 = vmatpush1.msra.mxu0 0.0
  %2542 = vmatprep.subr.mxu0 0.0
  %2543 = vmatpush1.msra.mxu0 0.0
  %2544 = vmatprep.subr.mxu0 0.0
  %2545 = vmatpush1.msra.mxu0 0.0
  %2546 = vmatprep.subr.mxu0 0.0
  %2547 = vmatpush1.msra.mxu0 0.0
  %2548 = vmatprep.subr.mxu0 0.0
  %2549 = vmatpush1.msra.mxu0 0.0
  %2550 = vmatprep.subr.mxu0 0.0
  %2551 = vmatpush1.msra.mxu0 0.0
  %2552 = vmatprep.subr.mxu0 0.0
  %2553 = vmatpush1.msra.mxu0 0.0
  %2554 = vmatprep.subr.mxu0 0.0
  %2555 = vmatpush1.msra.mxu0 0.0
  %2556 = vmatprep.subr.mxu0 0.0
  %2557 = vmatpush1.msra.mxu0 0.0
  %2558 = vmatprep.subr.mxu0 0.0
  %2559 = vmatpush1.msra.mxu0 0.0
  %2560 = vmatprep.mubr.f32.mxu0 0.0
  %2561 = vmatmul.mubr.f32.gmra.mrb[0].mxu0 %v612
  %v2562 = vpop.f32.mrb[0].mxu0
  %v2563 = vadd.f32 0.0, %v2562
  %v2564 = vpop.f32.mrb[0].mxu0
  %2565 = vmatprep.mubr.f32.mxu0 0.0
  %2566 = vmatmul.mubr.f32.gmra.mrb[0].mxu0 %v615
  %v2567 = vpop.f32.mrb[0].mxu0
  %v2568 = vadd.f32 0.0, %v2567
  %v2569 = vpop.f32.mrb[0].mxu0
  %2570 = vmatprep.mubr.f32.mxu0 0.0
  %2571 = vmatmul.mubr.f32.gmra.mrb[0].mxu0 %v618
  %v2572 = vpop.f32.mrb[0].mxu0
  %v2573 = vadd.f32 0.0, %v2572
  %v2574 = vpop.f32.mrb[0].mxu0
  %2575 = vmatprep.mubr.f32.mxu0 0.0
  %2576 = vmatmul.mubr.f32.gmra.mrb[0].mxu0 %v621
  %v2577 = vpop.f32.mrb[0].mxu0
  %v2578 = vadd.f32 0.0, %v2577
  %v2579 = vpop.f32.mrb[0].mxu0
  %2580 = vmatprep.mubr.f32.mxu0 0.0
  %2581 = vmatmul.mubr.f32.gmra.mrb[0].mxu0 %v624
  %v2582 = vpop.f32.mrb[0].mxu0
  %v2583 = vadd.f32 0.0, %v2582
  %v2584 = vpop.f32.mrb[0].mxu0
  %2585 = vmatprep.mubr.f32.mxu0 0.0
  %2586 = vmatmul.mubr.f32.gmra.mrb[0].mxu0 %v627
  %v2587 = vpop.f32.mrb[0].mxu0
  %v2588 = vadd.f32 0.0, %v2587
  %v2589 = vpop.f32.mrb[0].mxu0
  %2590 = vdwg.mxu0
  %v2591 = vmul.f32 %v2563, %v78
  %v2592 = vmul.f32 %v2568, %v79
  %v2593 = vmul.f32 %v2573, %v80
  %v2594 = vmul.f32 %v2578, %v81
  %v2595 = vmul.f32 %v2583, %v82
  %v2596 = vmul.f32 %v2588, %v83
  %v2598 = vsel %vm109, %v2320, 0
  %2600 = vmatprep.subr.mxu0 0.0
  %2601 = vmatpush1.msra.mxu0 %v2591
  %2602 = vmatprep.subr.mxu0 0.0
  %2603 = vmatpush1.msra.mxu0 %v2592
  %2604 = vmatprep.subr.mxu0 0.0
  %2605 = vmatpush1.msra.mxu0 %v2593
  %2606 = vmatprep.subr.mxu0 0.0
  %2607 = vmatpush1.msra.mxu0 %v2594
  %2608 = vmatprep.subr.mxu0 0.0
  %2609 = vmatpush1.msra.mxu0 %v2595
  %2610 = vmatprep.subr.mxu0 0.0
  %2611 = vmatpush1.msra.mxu0 %v2596
  %2612 = vmatprep.subr.mxu0 0.0
  %2613 = vmatpush1.msra.mxu0 0.0
  %2614 = vmatprep.subr.mxu0 0.0
  %2615 = vmatpush1.msra.mxu0 0.0
  %2616 = vmatprep.subr.mxu0 0.0
  %2617 = vmatpush1.msra.mxu0 0.0
  %2618 = vmatprep.subr.mxu0 0.0
  %2619 = vmatpush1.msra.mxu0 0.0
  %2620 = vmatprep.subr.mxu0 0.0
  %2621 = vmatpush1.msra.mxu0 0.0
  %2622 = vmatprep.subr.mxu0 0.0
  %2623 = vmatpush1.msra.mxu0 0.0
  %2624 = vmatprep.subr.mxu0 0.0
  %2625 = vmatpush1.msra.mxu0 0.0
  %2626 = vmatprep.subr.mxu0 0.0
  %2627 = vmatpush1.msra.mxu0 0.0
  %2628 = vmatprep.subr.mxu0 0.0
  %2629 = vmatpush1.msra.mxu0 0.0
  %2630 = vmatprep.subr.mxu0 0.0
  %2631 = vmatpush1.msra.mxu0 0.0
  %2632 = vmatprep.subr.mxu0 0.0
  %2633 = vmatpush1.msra.mxu0 0.0
  %2634 = vmatprep.subr.mxu0 0.0
  %2635 = vmatpush1.msra.mxu0 0.0
  %2636 = vmatprep.subr.mxu0 0.0
  %2637 = vmatpush1.msra.mxu0 0.0
  %2638 = vmatprep.subr.mxu0 0.0
  %2639 = vmatpush1.msra.mxu0 0.0
  %2640 = vmatprep.subr.mxu0 0.0
  %2641 = vmatpush1.msra.mxu0 0.0
  %2642 = vmatprep.subr.mxu0 0.0
  %2643 = vmatpush1.msra.mxu0 0.0
  %2644 = vmatprep.subr.mxu0 0.0
  %2645 = vmatpush1.msra.mxu0 0.0
  %2646 = vmatprep.subr.mxu0 0.0
  %2647 = vmatpush1.msra.mxu0 0.0
  %2648 = vmatprep.subr.mxu0 0.0
  %2649 = vmatpush1.msra.mxu0 0.0
  %2650 = vmatprep.subr.mxu0 0.0
  %2651 = vmatpush1.msra.mxu0 0.0
  %2652 = vmatprep.subr.mxu0 0.0
  %2653 = vmatpush1.msra.mxu0 0.0
  %2654 = vmatprep.subr.mxu0 0.0
  %2655 = vmatpush1.msra.mxu0 0.0
  %2656 = vmatprep.subr.mxu0 0.0
  %2657 = vmatpush1.msra.mxu0 0.0
  %2658 = vmatprep.subr.mxu0 0.0
  %2659 = vmatpush1.msra.mxu0 0.0
  %2660 = vmatprep.subr.mxu0 0.0
  %2661 = vmatpush1.msra.mxu0 0.0
  %2662 = vmatprep.subr.mxu0 0.0
  %2663 = vmatpush1.msra.mxu0 0.0
  %2664 = vmatprep.mubr.f32.mxu0 0.0
  %2665 = vmatmul.mubr.f32.gmra.mrb[0].mxu0 %v2598
  %v2666 = vpop.f32.mrb[0].mxu0
  %v2667 = vadd.f32 0.0, %v2666
  %v2668 = vpop.f32.mrb[0].mxu0
  %2669 = vdwg.mxu0
  %v2670 = vtanh.pop %v2667
  %v2671 = vadd.f32 %v62, %v2495
  %v2672 = vadd.f32 %v63, %v2670
  %v2674 = vsel %vm109, %v2671, 0
  %v2677 = vsel %vm109, %v2672, 0
  %2679 = vmatprep.subr.mxu0 0.0
  %2680 = vmatpush1.msra.mxu0 %v1821
  %2681 = vmatprep.subr.mxu0 0.0
  %2682 = vmatpush1.msra.mxu0 %v1822
  %2683 = vmatprep.subr.mxu0 0.0
  %2684 = vmatpush1.msra.mxu0 %v1823
  %2685 = vmatprep.subr.mxu0 0.0
  %2686 = vmatpush1.msra.mxu0 %v1824
  %2687 = vmatprep.subr.mxu0 0.0
  %2688 = vmatpush1.msra.mxu0 %v1825
  %2689 = vmatprep.subr.mxu0 0.0
  %2690 = vmatpush1.msra.mxu0 %v1826
  %2691 = vmatprep.subr.mxu0 0.0
  %2692 = vmatpush1.msra.mxu0 0.0
  %2693 = vmatprep.subr.mxu0 0.0
  %2694 = vmatpush1.msra.mxu0 0.0
  %2695 = vmatprep.subr.mxu0 0.0
  %2696 = vmatpush1.msra.mxu0 0.0
  %2697 = vmatprep.subr.mxu0 0.0
  %2698 = vmatpush1.msra.mxu0 0.0
  %2699 = vmatprep.subr.mxu0 0.0
  %2700 = vmatpush1.msra.mxu0 0.0
  %2701 = vmatprep.subr.mxu0 0.0
  %2702 = vmatpush1.msra.mxu0 0.0
  %2703 = vmatprep.subr.mxu0 0.0
  %2704 = vmatpush1.msra.mxu0 0.0
  %2705 = vmatprep.subr.mxu0 0.0
  %2706 = vmatpush1.msra.mxu0 0.0
  %2707 = vmatprep.subr.mxu0 0.0
  %2708 = vmatpush1.msra.mxu0 0.0
  %2709 = vmatprep.subr.mxu0 0.0
  %2710 = vmatpush1.msra.mxu0 0.0
  %2711 = vmatprep.subr.mxu0 0.0
  %2712 = vmatpush1.msra.mxu0 0.0
  %2713 = vmatprep.subr.mxu0 0.0
  %2714 = vmatpush1.msra.mxu0 0.0
  %2715 = vmatprep.subr.mxu0 0.0
  %2716 = vmatpush1.msra.mxu0 0.0
  %2717 = vmatprep.subr.mxu0 0.0
  %2718 = vmatpush1.msra.mxu0 0.0
  %2719 = vmatprep.subr.mxu0 0.0
  %2720 = vmatpush1.msra.mxu0 0.0
  %2721 = vmatprep.subr.mxu0 0.0
  %2722 = vmatpush1.msra.mxu0 0.0
  %2723 = vmatprep.subr.mxu0 0.0
  %2724 = vmatpush1.msra.mxu0 0.0
  %2725 = vmatprep.subr.mxu0 0.0
  %2726 = vmatpush1.msra.mxu0 0.0
  %2727 = vmatprep.subr.mxu0 0.0
  %2728 = vmatpush1.msra.mxu0 0.0
  %2729 = vmatprep.subr.mxu0 0.0
  %2730 = vmatpush1.msra.mxu0 0.0
  %2731 = vmatprep.subr.mxu0 0.0
  %2732 = vmatpush1.msra.mxu0 0.0
  %2733 = vmatprep.subr.mxu0 0.0
  %2734 = vmatpush1.msra.mxu0 0.0
  %2735 = vmatprep.subr.mxu0 0.0
  %2736 = vmatpush1.msra.mxu0 0.0
  %2737 = vmatprep.subr.mxu0 0.0
  %2738 = vmatpush1.msra.mxu0 0.0
  %2739 = vmatprep.subr.mxu0 0.0
  %2740 = vmatpush1.msra.mxu0 0.0
  %2741 = vmatprep.subr.mxu0 0.0
  %2742 = vmatpush1.msra.mxu0 0.0
  %2743 = vmatprep.mubr.f32.mxu0 0.0
  %2744 = vmatmul.mubr.f32.gmra.mrb[0].mxu0 %v2674
  %v2745 = vpop.f32.mrb[0].mxu0
  %v2746 = vadd.f32 0.0, %v2745
  %v2747 = vpop.f32.mrb[0].mxu0
  %2748 = vmatprep.mubr.f32.mxu0 0.0
  %2749 = vmatmul.mubr.f32.gmra.mrb[0].mxu0 %v2677
  %v2750 = vpop.f32.mrb[0].mxu0
  %v2751 = vadd.f32 0.0, %v2750
  %v2752 = vpop.f32.mrb[0].mxu0
  %2753 = vdwg.mxu0
  %v2755 = vsel %vm109, %v2746, 0
  %v2758 = vsel %vm109, %v2751, 0
  %2760 = vmatprep.subr.mxu0 0.0
  %2761 = vmatpush1.msra.mxu0 %v1833
  %2762 = vmatprep.subr.mxu0 0.0
  %2763 = vmatpush1.msra.mxu0 %v1834
  %2764 = vmatprep.subr.mxu0 0.0
  %2765 = vmatpush1.msra.mxu0 %v1835
  %2766 = vmatprep.subr.mxu0 0.0
  %2767 = vmatpush1.msra.mxu0 %v1836
  %2768 = vmatprep.subr.mxu0 0.0
  %2769 = vmatpush1.msra.mxu0 %v1837
  %2770 = vmatprep.subr.mxu0 0.0
  %2771 = vmatpush1.msra.mxu0 %v1838
  %2772 = vmatprep.subr.mxu0 0.0
  %2773 = vmatpush1.msra.mxu0 0.0
  %2774 = vmatprep.subr.mxu0 0.0
  %2775 = vmatpush1.msra.mxu0 0.0
  %2776 = vmatprep.subr.mxu0 0.0
  %2777 = vmatpush1.msra.mxu0 0.0
  %2778 = vmatprep.subr.mxu0 0.0
  %2779 = vmatpush1.msra.mxu0 0.0
  %2780 = vmatprep.subr.mxu0 0.0
  %2781 = vmatpush1.msra.mxu0 0.0
  %2782 = vmatprep.subr.mxu0 0.0
  %2783 = vmatpush1.msra.mxu0 0.0
  %2784 = vmatprep.subr.mxu0 0.0
  %2785 = vmatpush1.msra.mxu0 0.0
  %2786 = vmatprep.subr.mxu0 0.0
  %2787 = vmatpush1.msra.mxu0 0.0
  %2788 = vmatprep.subr.mxu0 0.0
  %2789 = vmatpush1.msra.mxu0 0.0
  %2790 = vmatprep.subr.mxu0 0.0
  %2791 = vmatpush1.msra.mxu0 0.0
  %2792 = vmatprep.subr.mxu0 0.0
  %2793 = vmatpush1.msra.mxu0 0.0
  %2794 = vmatprep.subr.mxu0 0.0
  %2795 = vmatpush1.msra.mxu0 0.0
  %2796 = vmatprep.subr.mxu0 0.0
  %2797 = vmatpush1.msra.mxu0 0.0
  %2798 = vmatprep.subr.mxu0 0.0
  %2799 = vmatpush1.msra.mxu0 0.0
  %2800 = vmatprep.subr.mxu0 0.0
  %2801 = vmatpush1.msra.mxu0 0.0
  %2802 = vmatprep.subr.mxu0 0.0
  %2803 = vmatpush1.msra.mxu0 0.0
  %2804 = vmatprep.subr.mxu0 0.0
  %2805 = vmatpush1.msra.mxu0 0.0
  %2806 = vmatprep.subr.mxu0 0.0
  %2807 = vmatpush1.msra.mxu0 0.0
  %2808 = vmatprep.subr.mxu0 0.0
  %2809 = vmatpush1.msra.mxu0 0.0
  %2810 = vmatprep.subr.mxu0 0.0
  %2811 = vmatpush1.msra.mxu0 0.0
  %2812 = vmatprep.subr.mxu0 0.0
  %2813 = vmatpush1.msra.mxu0 0.0
  %2814 = vmatprep.subr.mxu0 0.0
  %2815 = vmatpush1.msra.mxu0 0.0
  %2816 = vmatprep.subr.mxu0 0.0
  %2817 = vmatpush1.msra.mxu0 0.0
  %2818 = vmatprep.subr.mxu0 0.0
  %2819 = vmatpush1.msra.mxu0 0.0
  %2820 = vmatprep.subr.mxu0 0.0
  %2821 = vmatpush1.msra.mxu0 0.0
  %2822 = vmatprep.subr.mxu0 0.0
  %2823 = vmatpush1.msra.mxu0 0.0
  %2824 = vmatprep.mubr.f32.mxu0 0.0
  %2825 = vmatmul.mubr.f32.gmra.mrb[0].mxu0 %v2755
  %v2826 = vpop.f32.mrb[0].mxu0
  %v2827 = vadd.f32 0.0, %v2826
  %v2828 = vpop.f32.mrb[0].mxu0
  %2829 = vmatprep.mubr.f32.mxu0 0.0
  %2830 = vmatmul.mubr.f32.gmra.mrb[0].mxu0 %v2758
  %v2831 = vpop.f32.mrb[0].mxu0
  %v2832 = vadd.f32 0.0, %v2831
  %v2833 = vpop.f32.mrb[0].mxu0
  %2834 = vdwg.mxu0
  %v2835 = vmul.f32 %v2827, %v68
  %v2836 = vmul.f32 %v2832, %v69
  %2837 = vmatprep.subr.mxu0 0.0
  %2838 = vmatpush1.msra.mxu0 %v2835
  %2839 = vmatprep.subr.mxu0 0.0
  %2840 = vmatpush1.msra.mxu0 %v2836
  %2841 = vmatprep.subr.mxu0 0.0
  %2842 = vmatpush1.msra.mxu0 0.0
  %2843 = vmatprep.subr.mxu0 0.0
  %2844 = vmatpush1.msra.mxu0 0.0
  %2845 = vmatprep.subr.mxu0 0.0
  %2846 = vmatpush1.msra.mxu0 0.0
  %2847 = vmatprep.subr.mxu0 0.0
  %2848 = vmatpush1.msra.mxu0 0.0
  %2849 = vmatprep.subr.mxu0 0.0
  %2850 = vmatpush1.msra.mxu0 0.0
  %2851 = vmatprep.subr.mxu0 0.0
  %2852 = vmatpush1.msra.mxu0 0.0
  %2853 = vmatprep.subr.mxu0 0.0
  %2854 = vmatpush1.msra.mxu0 0.0
  %2855 = vmatprep.subr.mxu0 0.0
  %2856 = vmatpush1.msra.mxu0 0.0
  %2857 = vmatprep.subr.mxu0 0.0
  %2858 = vmatpush1.msra.mxu0 0.0
  %2859 = vmatprep.subr.mxu0 0.0
  %2860 = vmatpush1.msra.mxu0 0.0
  %2861 = vmatprep.subr.mxu0 0.0
  %2862 = vmatpush1.msra.mxu0 0.0
  %2863 = vmatprep.subr.mxu0 0.0
  %2864 = vmatpush1.msra.mxu0 0.0
  %2865 = vmatprep.subr.mxu0 0.0
  %2866 = vmatpush1.msra.mxu0 0.0
  %2867 = vmatprep.subr.mxu0 0.0
  %2868 = vmatpush1.msra.mxu0 0.0
  %2869 = vmatprep.subr.mxu0 0.0
  %2870 = vmatpush1.msra.mxu0 0.0
  %2871 = vmatprep.subr.mxu0 0.0
  %2872 = vmatpush1.msra.mxu0 0.0
  %2873 = vmatprep.subr.mxu0 0.0
  %2874 = vmatpush1.msra.mxu0 0.0
  %2875 = vmatprep.subr.mxu0 0.0
  %2876 = vmatpush1.msra.mxu0 0.0
  %2877 = vmatprep.subr.mxu0 0.0
  %2878 = vmatpush1.msra.mxu0 0.0
  %2879 = vmatprep.subr.mxu0 0.0
  %2880 = vmatpush1.msra.mxu0 0.0
  %2881 = vmatprep.subr.mxu0 0.0
  %2882 = vmatpush1.msra.mxu0 0.0
  %2883 = vmatprep.subr.mxu0 0.0
  %2884 = vmatpush1.msra.mxu0 0.0
  %2885 = vmatprep.subr.mxu0 0.0
  %2886 = vmatpush1.msra.mxu0 0.0
  %2887 = vmatprep.subr.mxu0 0.0
  %2888 = vmatpush1.msra.mxu0 0.0
  %2889 = vmatprep.subr.mxu0 0.0
  %2890 = vmatpush1.msra.mxu0 0.0
  %2891 = vmatprep.subr.mxu0 0.0
  %2892 = vmatpush1.msra.mxu0 0.0
  %2893 = vmatprep.subr.mxu0 0.0
  %2894 = vmatpush1.msra.mxu0 0.0
  %2895 = vmatprep.subr.mxu0 0.0
  %2896 = vmatpush1.msra.mxu0 0.0
  %2897 = vmatprep.subr.mxu0 0.0
  %2898 = vmatpush1.msra.mxu0 0.0
  %2899 = vmatprep.subr.mxu0 0.0
  %2900 = vmatpush1.msra.mxu0 0.0
  %2901 = vmatprep.mubr.f32.mxu0 0.0
  %2902 = vmatmul.mubr.f32.gmra.mrb[0].mxu0 %v276
  %v2903 = vpop.f32.mrb[0].mxu0
  %v2904 = vadd.f32 0.0, %v2903
  %v2905 = vpop.f32.mrb[0].mxu0
  %2906 = vmatprep.mubr.f32.mxu0 0.0
  %2907 = vmatmul.mubr.f32.gmra.mrb[0].mxu0 %v279
  %v2908 = vpop.f32.mrb[0].mxu0
  %v2909 = vadd.f32 0.0, %v2908
  %v2910 = vpop.f32.mrb[0].mxu0
  %2911 = vdwg.mxu0
  %2912 = vmatprep.subr.mxu0 0.0
  %2913 = vmatpush1.msra.mxu0 %v1827
  %2914 = vmatprep.subr.mxu0 0.0
  %2915 = vmatpush1.msra.mxu0 %v1828
  %2916 = vmatprep.subr.mxu0 0.0
  %2917 = vmatpush1.msra.mxu0 %v1829
  %2918 = vmatprep.subr.mxu0 0.0
  %2919 = vmatpush1.msra.mxu0 %v1830
  %2920 = vmatprep.subr.mxu0 0.0
  %2921 = vmatpush1.msra.mxu0 %v1831
  %2922 = vmatprep.subr.mxu0 0.0
  %2923 = vmatpush1.msra.mxu0 %v1832
  %2924 = vmatprep.subr.mxu0 0.0
  %2925 = vmatpush1.msra.mxu0 0.0
  %2926 = vmatprep.subr.mxu0 0.0
  %2927 = vmatpush1.msra.mxu0 0.0
  %2928 = vmatprep.subr.mxu0 0.0
  %2929 = vmatpush1.msra.mxu0 0.0
  %2930 = vmatprep.subr.mxu0 0.0
  %2931 = vmatpush1.msra.mxu0 0.0
  %2932 = vmatprep.subr.mxu0 0.0
  %2933 = vmatpush1.msra.mxu0 0.0
  %2934 = vmatprep.subr.mxu0 0.0
  %2935 = vmatpush1.msra.mxu0 0.0
  %2936 = vmatprep.subr.mxu0 0.0
  %2937 = vmatpush1.msra.mxu0 0.0
  %2938 = vmatprep.subr.mxu0 0.0
  %2939 = vmatpush1.msra.mxu0 0.0
  %2940 = vmatprep.subr.mxu0 0.0
  %2941 = vmatpush1.msra.mxu0 0.0
  %2942 = vmatprep.subr.mxu0 0.0
  %2943 = vmatpush1.msra.mxu0 0.0
  %2944 = vmatprep.subr.mxu0 0.0
  %2945 = vmatpush1.msra.mxu0 0.0
  %2946 = vmatprep.subr.mxu0 0.0
  %2947 = vmatpush1.msra.mxu0 0.0
  %2948 = vmatprep.subr.mxu0 0.0
  %2949 = vmatpush1.msra.mxu0 0.0
  %2950 = vmatprep.subr.mxu0 0.0
  %2951 = vmatpush1.msra.mxu0 0.0
  %2952 = vmatprep.subr.mxu0 0.0
  %2953 = vmatpush1.msra.mxu0 0.0
  %2954 = vmatprep.subr.mxu0 0.0
  %2955 = vmatpush1.msra.mxu0 0.0
  %2956 = vmatprep.subr.mxu0 0.0
  %2957 = vmatpush1.msra.mxu0 0.0
  %2958 = vmatprep.subr.mxu0 0.0
  %2959 = vmatpush1.msra.mxu0 0.0
  %2960 = vmatprep.subr.mxu0 0.0
  %2961 = vmatpush1.msra.mxu0 0.0
  %2962 = vmatprep.subr.mxu0 0.0
  %2963 = vmatpush1.msra.mxu0 0.0
  %2964 = vmatprep.subr.mxu0 0.0
  %2965 = vmatpush1.msra.mxu0 0.0
  %2966 = vmatprep.subr.mxu0 0.0
  %2967 = vmatpush1.msra.mxu0 0.0
  %2968 = vmatprep.subr.mxu0 0.0
  %2969 = vmatpush1.msra.mxu0 0.0
  %2970 = vmatprep.subr.mxu0 0.0
  %2971 = vmatpush1.msra.mxu0 0.0
  %2972 = vmatprep.subr.mxu0 0.0
  %2973 = vmatpush1.msra.mxu0 0.0
  %2974 = vmatprep.subr.mxu0 0.0
  %2975 = vmatpush1.msra.mxu0 0.0
  %2976 = vmatprep.mubr.f32.mxu0 0.0
  %2977 = vmatmul.mubr.f32.gmra.mrb[0].mxu0 %v2755
  %v2978 = vpop.f32.mrb[0].mxu0
  %v2979 = vadd.f32 %v2904, %v2978
  %v2980 = vpop.f32.mrb[0].mxu0
  %2981 = vmatprep.mubr.f32.mxu0 0.0
  %2982 = vmatmul.mubr.f32.gmra.mrb[0].mxu0 %v2758
  %v2983 = vpop.f32.mrb[0].mxu0
  %v2984 = vadd.f32 %v2909, %v2983
  %v2985 = vpop.f32.mrb[0].mxu0
  %2986 = vdwg.mxu0
  %v2987 = vtanh.pop %v2979
  %v2988 = vtanh.pop %v2984
  %v2989 = vsel %vm66, -1e-08, %v2987
  %v2990 = vsel %vm67, -1e-08, %v2988
  %v2991 = vmul.f32 %v2989, 1.442695
  %v2992 = vpow.pop %v2991
  %v2993 = vmul.f32 %v2990, 1.442695
  %v2994 = vpow.pop %v2993
  %v2996 = vsel %vm109, %v2992, 0
  %v2999 = vsel %vm109, %v2994, 0
  %3001 = vmatprep.subr.mxu0 0.0
  %3002 = vmatpush1.msra.mxu0 %v84
  %3003 = vmatprep.subr.mxu0 0.0
  %3004 = vmatpush1.msra.mxu0 %v85
  %3005 = vmatprep.subr.mxu0 0.0
  %3006 = vmatpush1.msra.mxu0 %v86
  %3007 = vmatprep.subr.mxu0 0.0
  %3008 = vmatpush1.msra.mxu0 %v87
  %3009 = vmatprep.subr.mxu0 0.0
  %3010 = vmatpush1.msra.mxu0 %v88
  %3011 = vmatprep.subr.mxu0 0.0
  %3012 = vmatpush1.msra.mxu0 %v89
  %3013 = vmatprep.subr.mxu0 0.0
  %3014 = vmatpush1.msra.mxu0 0.0
  %3015 = vmatprep.subr.mxu0 0.0
  %3016 = vmatpush1.msra.mxu0 0.0
  %3017 = vmatprep.subr.mxu0 0.0
  %3018 = vmatpush1.msra.mxu0 0.0
  %3019 = vmatprep.subr.mxu0 0.0
  %3020 = vmatpush1.msra.mxu0 0.0
  %3021 = vmatprep.subr.mxu0 0.0
  %3022 = vmatpush1.msra.mxu0 0.0
  %3023 = vmatprep.subr.mxu0 0.0
  %3024 = vmatpush1.msra.mxu0 0.0
  %3025 = vmatprep.subr.mxu0 0.0
  %3026 = vmatpush1.msra.mxu0 0.0
  %3027 = vmatprep.subr.mxu0 0.0
  %3028 = vmatpush1.msra.mxu0 0.0
  %3029 = vmatprep.subr.mxu0 0.0
  %3030 = vmatpush1.msra.mxu0 0.0
  %3031 = vmatprep.subr.mxu0 0.0
  %3032 = vmatpush1.msra.mxu0 0.0
  %3033 = vmatprep.subr.mxu0 0.0
  %3034 = vmatpush1.msra.mxu0 0.0
  %3035 = vmatprep.subr.mxu0 0.0
  %3036 = vmatpush1.msra.mxu0 0.0
  %3037 = vmatprep.subr.mxu0 0.0
  %3038 = vmatpush1.msra.mxu0 0.0
  %3039 = vmatprep.subr.mxu0 0.0
  %3040 = vmatpush1.msra.mxu0 0.0
  %3041 = vmatprep.subr.mxu0 0.0
  %3042 = vmatpush1.msra.mxu0 0.0
  %3043 = vmatprep.subr.mxu0 0.0
  %3044 = vmatpush1.msra.mxu0 0.0
  %3045 = vmatprep.subr.mxu0 0.0
  %3046 = vmatpush1.msra.mxu0 0.0
  %3047 = vmatprep.subr.mxu0 0.0
  %3048 = vmatpush1.msra.mxu0 0.0
  %3049 = vmatprep.subr.mxu0 0.0
  %3050 = vmatpush1.msra.mxu0 0.0
  %3051 = vmatprep.subr.mxu0 0.0
  %3052 = vmatpush1.msra.mxu0 0.0
  %3053 = vmatprep.subr.mxu0 0.0
  %3054 = vmatpush1.msra.mxu0 0.0
  %3055 = vmatprep.subr.mxu0 0.0
  %3056 = vmatpush1.msra.mxu0 0.0
  %3057 = vmatprep.subr.mxu0 0.0
  %3058 = vmatpush1.msra.mxu0 0.0
  %3059 = vmatprep.subr.mxu0 0.0
  %3060 = vmatpush1.msra.mxu0 0.0
  %3061 = vmatprep.subr.mxu0 0.0
  %3062 = vmatpush1.msra.mxu0 0.0
  %3063 = vmatprep.subr.mxu0 0.0
  %3064 = vmatpush1.msra.mxu0 0.0
  %3065 = vmatprep.mubr.f32.mxu0 0.0
  %3066 = vmatmul.mubr.f32.gmra.mrb[0].mxu0 %v2996
  %v3067 = vpop.f32.mrb[0].mxu0
  %v3068 = vadd.f32 0.0, %v3067
  %v3069 = vpop.f32.mrb[0].mxu0
  %3070 = vmatprep.mubr.f32.mxu0 0.0
  %3071 = vmatmul.mubr.f32.gmra.mrb[0].mxu0 %v2999
  %v3072 = vpop.f32.mrb[0].mxu0
  %v3073 = vadd.f32 0.0, %v3072
  %v3074 = vpop.f32.mrb[0].mxu0
  %3075 = vdwg.mxu0
  %v3077 = vsel %vm520, %v3068, 0
  %v3080 = vsel %vm520, %v3073, 0
  %3082 = vmatprep.subr.mxu0 0.0
  %3083 = vmatpush1.msra.mxu0 %v529
  %3084 = vmatprep.subr.mxu0 0.0
  %3085 = vmatpush1.msra.mxu0 0.0
  %3086 = vmatprep.subr.mxu0 0.0
  %3087 = vmatpush1.msra.mxu0 0.0
  %3088 = vmatprep.subr.mxu0 0.0
  %3089 = vmatpush1.msra.mxu0 0.0
  %3090 = vmatprep.subr.mxu0 0.0
  %3091 = vmatpush1.msra.mxu0 0.0
  %3092 = vmatprep.subr.mxu0 0.0
  %3093 = vmatpush1.msra.mxu0 0.0
  %3094 = vmatprep.subr.mxu0 0.0
  %3095 = vmatpush1.msra.mxu0 0.0
  %3096 = vmatprep.subr.mxu0 0.0
  %3097 = vmatpush1.msra.mxu0 0.0
  %3098 = vmatprep.subr.mxu0 0.0
  %3099 = vmatpush1.msra.mxu0 0.0
  %3100 = vmatprep.subr.mxu0 0.0
  %3101 = vmatpush1.msra.mxu0 0.0
  %3102 = vmatprep.subr.mxu0 0.0
  %3103 = vmatpush1.msra.mxu0 0.0
  %3104 = vmatprep.subr.mxu0 0.0
  %3105 = vmatpush1.msra.mxu0 0.0
  %3106 = vmatprep.subr.mxu0 0.0
  %3107 = vmatpush1.msra.mxu0 0.0
  %3108 = vmatprep.subr.mxu0 0.0
  %3109 = vmatpush1.msra.mxu0 0.0
  %3110 = vmatprep.subr.mxu0 0.0
  %3111 = vmatpush1.msra.mxu0 0.0
  %3112 = vmatprep.subr.mxu0 0.0
  %3113 = vmatpush1.msra.mxu0 0.0
  %3114 = vmatprep.subr.mxu0 0.0
  %3115 = vmatpush1.msra.mxu0 0.0
  %3116 = vmatprep.subr.mxu0 0.0
  %3117 = vmatpush1.msra.mxu0 0.0
  %3118 = vmatprep.subr.mxu0 0.0
  %3119 = vmatpush1.msra.mxu0 0.0
  %3120 = vmatprep.subr.mxu0 0.0
  %3121 = vmatpush1.msra.mxu0 0.0
  %3122 = vmatprep.subr.mxu0 0.0
  %3123 = vmatpush1.msra.mxu0 0.0
  %3124 = vmatprep.subr.mxu0 0.0
  %3125 = vmatpush1.msra.mxu0 0.0
  %3126 = vmatprep.subr.mxu0 0.0
  %3127 = vmatpush1.msra.mxu0 0.0
  %3128 = vmatprep.subr.mxu0 0.0
  %3129 = vmatpush1.msra.mxu0 0.0
  %3130 = vmatprep.subr.mxu0 0.0
  %3131 = vmatpush1.msra.mxu0 0.0
  %3132 = vmatprep.subr.mxu0 0.0
  %3133 = vmatpush1.msra.mxu0 0.0
  %3134 = vmatprep.subr.mxu0 0.0
  %3135 = vmatpush1.msra.mxu0 0.0
  %3136 = vmatprep.subr.mxu0 0.0
  %3137 = vmatpush1.msra.mxu0 0.0
  %3138 = vmatprep.subr.mxu0 0.0
  %3139 = vmatpush1.msra.mxu0 0.0
  %3140 = vmatprep.subr.mxu0 0.0
  %3141 = vmatpush1.msra.mxu0 0.0
  %3142 = vmatprep.subr.mxu0 0.0
  %3143 = vmatpush1.msra.mxu0 0.0
  %3144 = vmatprep.subr.mxu0 0.0
  %3145 = vmatpush1.msra.mxu0 0.0
  %3146 = vmatprep.mubr.f32.mxu0 0.0
  %3147 = vmatmul.mubr.f32.gmra.mrb[0].mxu0 %v3077
  %v3148 = vpop.f32.mrb[0].mxu0
  %v3149 = vadd.f32 0.0, %v3148
  %v3150 = vpop.f32.mrb[0].mxu0
  %3151 = vmatprep.mubr.f32.mxu0 0.0
  %3152 = vmatmul.mubr.f32.gmra.mrb[0].mxu0 %v3080
  %v3153 = vpop.f32.mrb[0].mxu0
  %v3154 = vadd.f32 0.0, %v3153
  %v3155 = vpop.f32.mrb[0].mxu0
  %3156 = vdwg.mxu0
  %v3157 = vrcp.pop %v3149
  %v3158 = vmul.f32 %v2992, %v3157
  %v3159 = vrcp.pop %v3154
  %v3160 = vmul.f32 %v2994, %v3159
  %3161 = vmatprep.subr.mxu0 0.0
  %3162 = vmatpush1.msra.mxu0 %v2746
  %3163 = vmatprep.subr.mxu0 0.0
  %3164 = vmatpush1.msra.mxu0 0.0
  %3165 = vmatprep.subr.mxu0 0.0
  %3166 = vmatpush1.msra.mxu0 0.0
  %3167 = vmatprep.subr.mxu0 0.0
  %3168 = vmatpush1.msra.mxu0 0.0
  %3169 = vmatprep.subr.mxu0 0.0
  %3170 = vmatpush1.msra.mxu0 0.0
  %3171 = vmatprep.subr.mxu0 0.0
  %3172 = vmatpush1.msra.mxu0 0.0
  %3173 = vmatprep.subr.mxu0 0.0
  %3174 = vmatpush1.msra.mxu0 0.0
  %3175 = vmatprep.subr.mxu0 0.0
  %3176 = vmatpush1.msra.mxu0 0.0
  %3177 = vmatprep.subr.mxu0 0.0
  %3178 = vmatpush1.msra.mxu0 0.0
  %3179 = vmatprep.subr.mxu0 0.0
  %3180 = vmatpush1.msra.mxu0 0.0
  %3181 = vmatprep.subr.mxu0 0.0
  %3182 = vmatpush1.msra.mxu0 0.0
  %3183 = vmatprep.subr.mxu0 0.0
  %3184 = vmatpush1.msra.mxu0 0.0
  %3185 = vmatprep.subr.mxu0 0.0
  %3186 = vmatpush1.msra.mxu0 0.0
  %3187 = vmatprep.subr.mxu0 0.0
  %3188 = vmatpush1.msra.mxu0 0.0
  %3189 = vmatprep.subr.mxu0 0.0
  %3190 = vmatpush1.msra.mxu0 0.0
  %3191 = vmatprep.subr.mxu0 0.0
  %3192 = vmatpush1.msra.mxu0 0.0
  %3193 = vmatprep.subr.mxu0 0.0
  %3194 = vmatpush1.msra.mxu0 0.0
  %3195 = vmatprep.subr.mxu0 0.0
  %3196 = vmatpush1.msra.mxu0 0.0
  %3197 = vmatprep.subr.mxu0 0.0
  %3198 = vmatpush1.msra.mxu0 0.0
  %3199 = vmatprep.subr.mxu0 0.0
  %3200 = vmatpush1.msra.mxu0 0.0
  %3201 = vmatprep.subr.mxu0 0.0
  %3202 = vmatpush1.msra.mxu0 0.0
  %3203 = vmatprep.subr.mxu0 0.0
  %3204 = vmatpush1.msra.mxu0 0.0
  %3205 = vmatprep.subr.mxu0 0.0
  %3206 = vmatpush1.msra.mxu0 0.0
  %3207 = vmatprep.subr.mxu0 0.0
  %3208 = vmatpush1.msra.mxu0 0.0
  %3209 = vmatprep.subr.mxu0 0.0
  %3210 = vmatpush1.msra.mxu0 0.0
  %3211 = vmatprep.subr.mxu0 0.0
  %3212 = vmatpush1.msra.mxu0 0.0
  %3213 = vmatprep.subr.mxu0 0.0
  %3214 = vmatpush1.msra.mxu0 0.0
  %3215 = vmatprep.subr.mxu0 0.0
  %3216 = vmatpush1.msra.mxu0 0.0
  %3217 = vmatprep.subr.mxu0 0.0
  %3218 = vmatpush1.msra.mxu0 0.0
  %3219 = vmatprep.subr.mxu0 0.0
  %3220 = vmatpush1.msra.mxu0 0.0
  %3221 = vmatprep.subr.mxu0 0.0
  %3222 = vmatpush1.msra.mxu0 0.0
  %3223 = vmatprep.subr.mxu0 0.0
  %3224 = vmatpush1.msra.mxu0 0.0
  %3225 = vmatprep.mubr.f32.mxu0 0.0
  %3226 = vmatmul.mubr.f32.gmra.mrb[0].mxu0 %v612
  %v3227 = vpop.f32.mrb[0].mxu0
  %v3228 = vadd.f32 0.0, %v3227
  %v3229 = vpop.f32.mrb[0].mxu0
  %3230 = vmatprep.mubr.f32.mxu0 0.0
  %3231 = vmatmul.mubr.f32.gmra.mrb[0].mxu0 %v615
  %v3232 = vpop.f32.mrb[0].mxu0
  %v3233 = vadd.f32 0.0, %v3232
  %v3234 = vpop.f32.mrb[0].mxu0
  %3235 = vmatprep.mubr.f32.mxu0 0.0
  %3236 = vmatmul.mubr.f32.gmra.mrb[0].mxu0 %v618
  %v3237 = vpop.f32.mrb[0].mxu0
  %v3238 = vadd.f32 0.0, %v3237
  %v3239 = vpop.f32.mrb[0].mxu0
  %3240 = vmatprep.mubr.f32.mxu0 0.0
  %3241 = vmatmul.mubr.f32.gmra.mrb[0].mxu0 %v621
  %v3242 = vpop.f32.mrb[0].mxu0
  %v3243 = vadd.f32 0.0, %v3242
  %v3244 = vpop.f32.mrb[0].mxu0
  %3245 = vmatprep.mubr.f32.mxu0 0.0
  %3246 = vmatmul.mubr.f32.gmra.mrb[0].mxu0 %v624
  %v3247 = vpop.f32.mrb[0].mxu0
  %v3248 = vadd.f32 0.0, %v3247
  %v3249 = vpop.f32.mrb[0].mxu0
  %3250 = vmatprep.mubr.f32.mxu0 0.0
  %3251 = vmatmul.mubr.f32.gmra.mrb[0].mxu0 %v627
  %v3252 = vpop.f32.mrb[0].mxu0
  %v3253 = vadd.f32 0.0, %v3252
  %v3254 = vpop.f32.mrb[0].mxu0
  %3255 = vdwg.mxu0
  %v3256 = vmul.f32 %v3228, %v78
  %v3257 = vmul.f32 %v3233, %v79
  %v3258 = vmul.f32 %v3238, %v80
  %v3259 = vmul.f32 %v3243, %v81
  %v3260 = vmul.f32 %v3248, %v82
  %v3261 = vmul.f32 %v3253, %v83
  %v3263 = vsel %vm109, %v3158, 0
  %3265 = vmatprep.subr.mxu0 0.0
  %3266 = vmatpush1.msra.mxu0 %v3256
  %3267 = vmatprep.subr.mxu0 0.0
  %3268 = vmatpush1.msra.mxu0 %v3257
  %3269 = vmatprep.subr.mxu0 0.0
  %3270 = vmatpush1.msra.mxu0 %v3258
  %3271 = vmatprep.subr.mxu0 0.0
  %3272 = vmatpush1.msra.mxu0 %v3259
  %3273 = vmatprep.subr.mxu0 0.0
  %3274 = vmatpush1.msra.mxu0 %v3260
  %3275 = vmatprep.subr.mxu0 0.0
  %3276 = vmatpush1.msra.mxu0 %v3261
  %3277 = vmatprep.subr.mxu0 0.0
  %3278 = vmatpush1.msra.mxu0 0.0
  %3279 = vmatprep.subr.mxu0 0.0
  %3280 = vmatpush1.msra.mxu0 0.0
  %3281 = vmatprep.subr.mxu0 0.0
  %3282 = vmatpush1.msra.mxu0 0.0
  %3283 = vmatprep.subr.mxu0 0.0
  %3284 = vmatpush1.msra.mxu0 0.0
  %3285 = vmatprep.subr.mxu0 0.0
  %3286 = vmatpush1.msra.mxu0 0.0
  %3287 = vmatprep.subr.mxu0 0.0
  %3288 = vmatpush1.msra.mxu0 0.0
  %3289 = vmatprep.subr.mxu0 0.0
  %3290 = vmatpush1.msra.mxu0 0.0
  %3291 = vmatprep.subr.mxu0 0.0
  %3292 = vmatpush1.msra.mxu0 0.0
  %3293 = vmatprep.subr.mxu0 0.0
  %3294 = vmatpush1.msra.mxu0 0.0
  %3295 = vmatprep.subr.mxu0 0.0
  %3296 = vmatpush1.msra.mxu0 0.0
  %3297 = vmatprep.subr.mxu0 0.0
  %3298 = vmatpush1.msra.mxu0 0.0
  %3299 = vmatprep.subr.mxu0 0.0
  %3300 = vmatpush1.msra.mxu0 0.0
  %3301 = vmatprep.subr.mxu0 0.0
  %3302 = vmatpush1.msra.mxu0 0.0
  %3303 = vmatprep.subr.mxu0 0.0
  %3304 = vmatpush1.msra.mxu0 0.0
  %3305 = vmatprep.subr.mxu0 0.0
  %3306 = vmatpush1.msra.mxu0 0.0
  %3307 = vmatprep.subr.mxu0 0.0
  %3308 = vmatpush1.msra.mxu0 0.0
  %3309 = vmatprep.subr.mxu0 0.0
  %3310 = vmatpush1.msra.mxu0 0.0
  %3311 = vmatprep.subr.mxu0 0.0
  %3312 = vmatpush1.msra.mxu0 0.0
  %3313 = vmatprep.subr.mxu0 0.0
  %3314 = vmatpush1.msra.mxu0 0.0
  %3315 = vmatprep.subr.mxu0 0.0
  %3316 = vmatpush1.msra.mxu0 0.0
  %3317 = vmatprep.subr.mxu0 0.0
  %3318 = vmatpush1.msra.mxu0 0.0
  %3319 = vmatprep.subr.mxu0 0.0
  %3320 = vmatpush1.msra.mxu0 0.0
  %3321 = vmatprep.subr.mxu0 0.0
  %3322 = vmatpush1.msra.mxu0 0.0
  %3323 = vmatprep.subr.mxu0 0.0
  %3324 = vmatpush1.msra.mxu0 0.0
  %3325 = vmatprep.subr.mxu0 0.0
  %3326 = vmatpush1.msra.mxu0 0.0
  %3327 = vmatprep.subr.mxu0 0.0
  %3328 = vmatpush1.msra.mxu0 0.0
  %3329 = vmatprep.mubr.f32.mxu0 0.0
  %3330 = vmatmul.mubr.f32.gmra.mrb[0].mxu0 %v3263
  %v3331 = vpop.f32.mrb[0].mxu0
  %v3332 = vadd.f32 0.0, %v3331
  %v3333 = vpop.f32.mrb[0].mxu0
  %3334 = vdwg.mxu0
  %v3335 = vtanh.pop %v3332
  %3336 = vmatprep.subr.mxu0 0.0
  %3337 = vmatpush1.msra.mxu0 %v2751
  %3338 = vmatprep.subr.mxu0 0.0
  %3339 = vmatpush1.msra.mxu0 0.0
  %3340 = vmatprep.subr.mxu0 0.0
  %3341 = vmatpush1.msra.mxu0 0.0
  %3342 = vmatprep.subr.mxu0 0.0
  %3343 = vmatpush1.msra.mxu0 0.0
  %3344 = vmatprep.subr.mxu0 0.0
  %3345 = vmatpush1.msra.mxu0 0.0
  %3346 = vmatprep.subr.mxu0 0.0
  %3347 = vmatpush1.msra.mxu0 0.0
  %3348 = vmatprep.subr.mxu0 0.0
  %3349 = vmatpush1.msra.mxu0 0.0
  %3350 = vmatprep.subr.mxu0 0.0
  %3351 = vmatpush1.msra.mxu0 0.0
  %3352 = vmatprep.subr.mxu0 0.0
  %3353 = vmatpush1.msra.mxu0 0.0
  %3354 = vmatprep.subr.mxu0 0.0
  %3355 = vmatpush1.msra.mxu0 0.0
  %3356 = vmatprep.subr.mxu0 0.0
  %3357 = vmatpush1.msra.mxu0 0.0
  %3358 = vmatprep.subr.mxu0 0.0
  %3359 = vmatpush1.msra.mxu0 0.0
  %3360 = vmatprep.subr.mxu0 0.0
  %3361 = vmatpush1.msra.mxu0 0.0
  %3362 = vmatprep.subr.mxu0 0.0
  %3363 = vmatpush1.msra.mxu0 0.0
  %3364 = vmatprep.subr.mxu0 0.0
  %3365 = vmatpush1.msra.mxu0 0.0
  %3366 = vmatprep.subr.mxu0 0.0
  %3367 = vmatpush1.msra.mxu0 0.0
  %3368 = vmatprep.subr.mxu0 0.0
  %3369 = vmatpush1.msra.mxu0 0.0
  %3370 = vmatprep.subr.mxu0 0.0
  %3371 = vmatpush1.msra.mxu0 0.0
  %3372 = vmatprep.subr.mxu0 0.0
  %3373 = vmatpush1.msra.mxu0 0.0
  %3374 = vmatprep.subr.mxu0 0.0
  %3375 = vmatpush1.msra.mxu0 0.0
  %3376 = vmatprep.subr.mxu0 0.0
  %3377 = vmatpush1.msra.mxu0 0.0
  %3378 = vmatprep.subr.mxu0 0.0
  %3379 = vmatpush1.msra.mxu0 0.0
  %3380 = vmatprep.subr.mxu0 0.0
  %3381 = vmatpush1.msra.mxu0 0.0
  %3382 = vmatprep.subr.mxu0 0.0
  %3383 = vmatpush1.msra.mxu0 0.0
  %3384 = vmatprep.subr.mxu0 0.0
  %3385 = vmatpush1.msra.mxu0 0.0
  %3386 = vmatprep.subr.mxu0 0.0
  %3387 = vmatpush1.msra.mxu0 0.0
  %3388 = vmatprep.subr.mxu0 0.0
  %3389 = vmatpush1.msra.mxu0 0.0
  %3390 = vmatprep.subr.mxu0 0.0
  %3391 = vmatpush1.msra.mxu0 0.0
  %3392 = vmatprep.subr.mxu0 0.0
  %3393 = vmatpush1.msra.mxu0 0.0
  %3394 = vmatprep.subr.mxu0 0.0
  %3395 = vmatpush1.msra.mxu0 0.0
  %3396 = vmatprep.subr.mxu0 0.0
  %3397 = vmatpush1.msra.mxu0 0.0
  %3398 = vmatprep.subr.mxu0 0.0
  %3399 = vmatpush1.msra.mxu0 0.0
  %3400 = vmatprep.mubr.f32.mxu0 0.0
  %3401 = vmatmul.mubr.f32.gmra.mrb[0].mxu0 %v612
  %v3402 = vpop.f32.mrb[0].mxu0
  %v3403 = vadd.f32 0.0, %v3402
  %v3404 = vpop.f32.mrb[0].mxu0
  %3405 = vmatprep.mubr.f32.mxu0 0.0
  %3406 = vmatmul.mubr.f32.gmra.mrb[0].mxu0 %v615
  %v3407 = vpop.f32.mrb[0].mxu0
  %v3408 = vadd.f32 0.0, %v3407
  %v3409 = vpop.f32.mrb[0].mxu0
  %3410 = vmatprep.mubr.f32.mxu0 0.0
  %3411 = vmatmul.mubr.f32.gmra.mrb[0].mxu0 %v618
  %v3412 = vpop.f32.mrb[0].mxu0
  %v3413 = vadd.f32 0.0, %v3412
  %v3414 = vpop.f32.mrb[0].mxu0
  %3415 = vmatprep.mubr.f32.mxu0 0.0
  %3416 = vmatmul.mubr.f32.gmra.mrb[0].mxu0 %v621
  %v3417 = vpop.f32.mrb[0].mxu0
  %v3418 = vadd.f32 0.0, %v3417
  %v3419 = vpop.f32.mrb[0].mxu0
  %3420 = vmatprep.mubr.f32.mxu0 0.0
  %3421 = vmatmul.mubr.f32.gmra.mrb[0].mxu0 %v624
  %v3422 = vpop.f32.mrb[0].mxu0
  %v3423 = vadd.f32 0.0, %v3422
  %v3424 = vpop.f32.mrb[0].mxu0
  %3425 = vmatprep.mubr.f32.mxu0 0.0
  %3426 = vmatmul.mubr.f32.gmra.mrb[0].mxu0 %v627
  %v3427 = vpop.f32.mrb[0].mxu0
  %v3428 = vadd.f32 0.0, %v3427
  %v3429 = vpop.f32.mrb[0].mxu0
  %3430 = vdwg.mxu0
  %v3431 = vmul.f32 %v3403, %v78
  %v3432 = vmul.f32 %v3408, %v79
  %v3433 = vmul.f32 %v3413, %v80
  %v3434 = vmul.f32 %v3418, %v81
  %v3435 = vmul.f32 %v3423, %v82
  %v3436 = vmul.f32 %v3428, %v83
  %v3438 = vsel %vm109, %v3160, 0
  %3440 = vmatprep.subr.mxu0 0.0
  %3441 = vmatpush1.msra.mxu0 %v3431
  %3442 = vmatprep.subr.mxu0 0.0
  %3443 = vmatpush1.msra.mxu0 %v3432
  %3444 = vmatprep.subr.mxu0 0.0
  %3445 = vmatpush1.msra.mxu0 %v3433
  %3446 = vmatprep.subr.mxu0 0.0
  %3447 = vmatpush1.msra.mxu0 %v3434
  %3448 = vmatprep.subr.mxu0 0.0
  %3449 = vmatpush1.msra.mxu0 %v3435
  %3450 = vmatprep.subr.mxu0 0.0
  %3451 = vmatpush1.msra.mxu0 %v3436
  %3452 = vmatprep.subr.mxu0 0.0
  %3453 = vmatpush1.msra.mxu0 0.0
  %3454 = vmatprep.subr.mxu0 0.0
  %3455 = vmatpush1.msra.mxu0 0.0
  %3456 = vmatprep.subr.mxu0 0.0
  %3457 = vmatpush1.msra.mxu0 0.0
  %3458 = vmatprep.subr.mxu0 0.0
  %3459 = vmatpush1.msra.mxu0 0.0
  %3460 = vmatprep.subr.mxu0 0.0
  %3461 = vmatpush1.msra.mxu0 0.0
  %3462 = vmatprep.subr.mxu0 0.0
  %3463 = vmatpush1.msra.mxu0 0.0
  %3464 = vmatprep.subr.mxu0 0.0
  %3465 = vmatpush1.msra.mxu0 0.0
  %3466 = vmatprep.subr.mxu0 0.0
  %3467 = vmatpush1.msra.mxu0 0.0
  %3468 = vmatprep.subr.mxu0 0.0
  %3469 = vmatpush1.msra.mxu0 0.0
  %3470 = vmatprep.subr.mxu0 0.0
  %3471 = vmatpush1.msra.mxu0 0.0
  %3472 = vmatprep.subr.mxu0 0.0
  %3473 = vmatpush1.msra.mxu0 0.0
  %3474 = vmatprep.subr.mxu0 0.0
  %3475 = vmatpush1.msra.mxu0 0.0
  %3476 = vmatprep.subr.mxu0 0.0
  %3477 = vmatpush1.msra.mxu0 0.0
  %3478 = vmatprep.subr.mxu0 0.0
  %3479 = vmatpush1.msra.mxu0 0.0
  %3480 = vmatprep.subr.mxu0 0.0
  %3481 = vmatpush1.msra.mxu0 0.0
  %3482 = vmatprep.subr.mxu0 0.0
  %3483 = vmatpush1.msra.mxu0 0.0
  %3484 = vmatprep.subr.mxu0 0.0
  %3485 = vmatpush1.msra.mxu0 0.0
  %3486 = vmatprep.subr.mxu0 0.0
  %3487 = vmatpush1.msra.mxu0 0.0
  %3488 = vmatprep.subr.mxu0 0.0
  %3489 = vmatpush1.msra.mxu0 0.0
  %3490 = vmatprep.subr.mxu0 0.0
  %3491 = vmatpush1.msra.mxu0 0.0
  %3492 = vmatprep.subr.mxu0 0.0
  %3493 = vmatpush1.msra.mxu0 0.0
  %3494 = vmatprep.subr.mxu0 0.0
  %3495 = vmatpush1.msra.mxu0 0.0
  %3496 = vmatprep.subr.mxu0 0.0
  %3497 = vmatpush1.msra.mxu0 0.0
  %3498 = vmatprep.subr.mxu0 0.0
  %3499 = vmatpush1.msra.mxu0 0.0
  %3500 = vmatprep.subr.mxu0 0.0
  %3501 = vmatpush1.msra.mxu0 0.0
  %3502 = vmatprep.subr.mxu0 0.0
  %3503 = vmatpush1.msra.mxu0 0.0
  %3504 = vmatprep.mubr.f32.mxu0 0.0
  %3505 = vmatmul.mubr.f32.gmra.mrb[0].mxu0 %v3438
  %v3506 = vpop.f32.mrb[0].mxu0
  %v3507 = vadd.f32 0.0, %v3506
  %v3508 = vpop.f32.mrb[0].mxu0
  %3509 = vdwg.mxu0
  %v3510 = vtanh.pop %v3507
  %v3511 = vadd.f32 %v2671, %v3335
  %v3512 = vadd.f32 %v2672, %v3510
  %v3513 = vld [vmem:[%s10 + $0x60] sm:$0xff]
  %v3514 = vld [vmem:[%s10 + $0x68] sm:$0xff]
  %v3515 = vld [vmem:[%s10 + $0x70] sm:$0xff]
  %v3516 = vld [vmem:[%s10 + $0x78] sm:$0xff]
  %v3517 = vld [vmem:[%s10 + $0x80] sm:$0xff]
  %v3518 = vld [vmem:[%s10 + $0x88] sm:$0xff]
  %v3519 = vld [vmem:[%s11 + $0x60] sm:$0xff]
  %v3520 = vld [vmem:[%s11 + $0x68] sm:$0xff]
  %v3521 = vld [vmem:[%s11 + $0x70] sm:$0xff]
  %v3522 = vld [vmem:[%s11 + $0x78] sm:$0xff]
  %v3523 = vld [vmem:[%s11 + $0x80] sm:$0xff]
  %v3524 = vld [vmem:[%s11 + $0x88] sm:$0xff]
  %v3525 = vld [vmem:[%s12 + $0x60] sm:$0xff]
  %v3526 = vld [vmem:[%s12 + $0x68] sm:$0xff]
  %v3527 = vld [vmem:[%s12 + $0x70] sm:$0xff]
  %v3528 = vld [vmem:[%s12 + $0x78] sm:$0xff]
  %v3529 = vld [vmem:[%s12 + $0x80] sm:$0xff]
  %v3530 = vld [vmem:[%s12 + $0x88] sm:$0xff]
  %3531 = vmatprep.subr.mxu0 0.0
  %3532 = vmatpush1.msra.mxu0 %v3513
  %3533 = vmatprep.subr.mxu0 0.0
  %3534 = vmatpush1.msra.mxu0 %v3514
  %3535 = vmatprep.subr.mxu0 0.0
  %3536 = vmatpush1.msra.mxu0 %v3515
  %3537 = vmatprep.subr.mxu0 0.0
  %3538 = vmatpush1.msra.mxu0 %v3516
  %3539 = vmatprep.subr.mxu0 0.0
  %3540 = vmatpush1.msra.mxu0 %v3517
  %3541 = vmatprep.subr.mxu0 0.0
  %3542 = vmatpush1.msra.mxu0 %v3518
  %3543 = vmatprep.subr.mxu0 0.0
  %3544 = vmatpush1.msra.mxu0 0.0
  %3545 = vmatprep.subr.mxu0 0.0
  %3546 = vmatpush1.msra.mxu0 0.0
  %3547 = vmatprep.subr.mxu0 0.0
  %3548 = vmatpush1.msra.mxu0 0.0
  %3549 = vmatprep.subr.mxu0 0.0
  %3550 = vmatpush1.msra.mxu0 0.0
  %3551 = vmatprep.subr.mxu0 0.0
  %3552 = vmatpush1.msra.mxu0 0.0
  %3553 = vmatprep.subr.mxu0 0.0
  %3554 = vmatpush1.msra.mxu0 0.0
  %3555 = vmatprep.subr.mxu0 0.0
  %3556 = vmatpush1.msra.mxu0 0.0
  %3557 = vmatprep.subr.mxu0 0.0
  %3558 = vmatpush1.msra.mxu0 0.0
  %3559 = vmatprep.subr.mxu0 0.0
  %3560 = vmatpush1.msra.mxu0 0.0
  %3561 = vmatprep.subr.mxu0 0.0
  %3562 = vmatpush1.msra.mxu0 0.0
  %3563 = vmatprep.subr.mxu0 0.0
  %3564 = vmatpush1.msra.mxu0 0.0
  %3565 = vmatprep.subr.mxu0 0.0
  %3566 = vmatpush1.msra.mxu0 0.0
  %3567 = vmatprep.subr.mxu0 0.0
  %3568 = vmatpush1.msra.mxu0 0.0
  %3569 = vmatprep.subr.mxu0 0.0
  %3570 = vmatpush1.msra.mxu0 0.0
  %3571 = vmatprep.subr.mxu0 0.0
  %3572 = vmatpush1.msra.mxu0 0.0
  %3573 = vmatprep.subr.mxu0 0.0
  %3574 = vmatpush1.msra.mxu0 0.0
  %3575 = vmatprep.subr.mxu0 0.0
  %3576 = vmatpush1.msra.mxu0 0.0
  %3577 = vmatprep.subr.mxu0 0.0
  %3578 = vmatpush1.msra.mxu0 0.0
  %3579 = vmatprep.subr.mxu0 0.0
  %3580 = vmatpush1.msra.mxu0 0.0
  %3581 = vmatprep.subr.mxu0 0.0
  %3582 = vmatpush1.msra.mxu0 0.0
  %3583 = vmatprep.subr.mxu0 0.0
  %3584 = vmatpush1.msra.mxu0 0.0
  %3585 = vmatprep.subr.mxu0 0.0
  %3586 = vmatpush1.msra.mxu0 0.0
  %3587 = vmatprep.subr.mxu0 0.0
  %3588 = vmatpush1.msra.mxu0 0.0
  %3589 = vmatprep.subr.mxu0 0.0
  %3590 = vmatpush1.msra.mxu0 0.0
  %3591 = vmatprep.subr.mxu0 0.0
  %3592 = vmatpush1.msra.mxu0 0.0
  %3593 = vmatprep.subr.mxu0 0.0
  %3594 = vmatpush1.msra.mxu0 0.0
  %3595 = vmatprep.mubr.f32.mxu0 0.0
  %3596 = vmatmul.mubr.f32.gmra.mrb[0].mxu0 %v111
  %v3597 = vpop.f32.mrb[0].mxu0
  %v3598 = vadd.f32 0.0, %v3597
  %v3599 = vpop.f32.mrb[0].mxu0
  %3600 = vmatprep.mubr.f32.mxu0 0.0
  %3601 = vmatmul.mubr.f32.gmra.mrb[0].mxu0 %v114
  %v3602 = vpop.f32.mrb[0].mxu0
  %v3603 = vadd.f32 0.0, %v3602
  %v3604 = vpop.f32.mrb[0].mxu0
  %3605 = vdwg.mxu0
  %v3607 = vsel %vm109, %v3598, 0
  %v3610 = vsel %vm109, %v3603, 0
  %3612 = vmatprep.subr.mxu0 0.0
  %3613 = vmatpush1.msra.mxu0 %v3525
  %3614 = vmatprep.subr.mxu0 0.0
  %3615 = vmatpush1.msra.mxu0 %v3526
  %3616 = vmatprep.subr.mxu0 0.0
  %3617 = vmatpush1.msra.mxu0 %v3527
  %3618 = vmatprep.subr.mxu0 0.0
  %3619 = vmatpush1.msra.mxu0 %v3528
  %3620 = vmatprep.subr.mxu0 0.0
  %3621 = vmatpush1.msra.mxu0 %v3529
  %3622 = vmatprep.subr.mxu0 0.0
  %3623 = vmatpush1.msra.mxu0 %v3530
  %3624 = vmatprep.subr.mxu0 0.0
  %3625 = vmatpush1.msra.mxu0 0.0
  %3626 = vmatprep.subr.mxu0 0.0
  %3627 = vmatpush1.msra.mxu0 0.0
  %3628 = vmatprep.subr.mxu0 0.0
  %3629 = vmatpush1.msra.mxu0 0.0
  %3630 = vmatprep.subr.mxu0 0.0
  %3631 = vmatpush1.msra.mxu0 0.0
  %3632 = vmatprep.subr.mxu0 0.0
  %3633 = vmatpush1.msra.mxu0 0.0
  %3634 = vmatprep.subr.mxu0 0.0
  %3635 = vmatpush1.msra.mxu0 0.0
  %3636 = vmatprep.subr.mxu0 0.0
  %3637 = vmatpush1.msra.mxu0 0.0
  %3638 = vmatprep.subr.mxu0 0.0
  %3639 = vmatpush1.msra.mxu0 0.0
  %3640 = vmatprep.subr.mxu0 0.0
  %3641 = vmatpush1.msra.mxu0 0.0
  %3642 = vmatprep.subr.mxu0 0.0
  %3643 = vmatpush1.msra.mxu0 0.0
  %3644 = vmatprep.subr.mxu0 0.0
  %3645 = vmatpush1.msra.mxu0 0.0
  %3646 = vmatprep.subr.mxu0 0.0
  %3647 = vmatpush1.msra.mxu0 0.0
  %3648 = vmatprep.subr.mxu0 0.0
  %3649 = vmatpush1.msra.mxu0 0.0
  %3650 = vmatprep.subr.mxu0 0.0
  %3651 = vmatpush1.msra.mxu0 0.0
  %3652 = vmatprep.subr.mxu0 0.0
  %3653 = vmatpush1.msra.mxu0 0.0
  %3654 = vmatprep.subr.mxu0 0.0
  %3655 = vmatpush1.msra.mxu0 0.0
  %3656 = vmatprep.subr.mxu0 0.0
  %3657 = vmatpush1.msra.mxu0 0.0
  %3658 = vmatprep.subr.mxu0 0.0
  %3659 = vmatpush1.msra.mxu0 0.0
  %3660 = vmatprep.subr.mxu0 0.0
  %3661 = vmatpush1.msra.mxu0 0.0
  %3662 = vmatprep.subr.mxu0 0.0
  %3663 = vmatpush1.msra.mxu0 0.0
  %3664 = vmatprep.subr.mxu0 0.0
  %3665 = vmatpush1.msra.mxu0 0.0
  %3666 = vmatprep.subr.mxu0 0.0
  %3667 = vmatpush1.msra.mxu0 0.0
  %3668 = vmatprep.subr.mxu0 0.0
  %3669 = vmatpush1.msra.mxu0 0.0
  %3670 = vmatprep.subr.mxu0 0.0
  %3671 = vmatpush1.msra.mxu0 0.0
  %3672 = vmatprep.subr.mxu0 0.0
  %3673 = vmatpush1.msra.mxu0 0.0
  %3674 = vmatprep.subr.mxu0 0.0
  %3675 = vmatpush1.msra.mxu0 0.0
  %3676 = vmatprep.mubr.f32.mxu0 0.0
  %3677 = vmatmul.mubr.f32.gmra.mrb[0].mxu0 %v3607
  %v3678 = vpop.f32.mrb[0].mxu0
  %v3679 = vadd.f32 0.0, %v3678
  %v3680 = vpop.f32.mrb[0].mxu0
  %3681 = vmatprep.mubr.f32.mxu0 0.0
  %3682 = vmatmul.mubr.f32.gmra.mrb[0].mxu0 %v3610
  %v3683 = vpop.f32.mrb[0].mxu0
  %v3684 = vadd.f32 0.0, %v3683
  %v3685 = vpop.f32.mrb[0].mxu0
  %3686 = vdwg.mxu0
  %v3687 = vmul.f32 %v3679, %v68
  %v3688 = vmul.f32 %v3684, %v69
  %3689 = vmatprep.subr.mxu0 0.0
  %3690 = vmatpush1.msra.mxu0 %v3687
  %3691 = vmatprep.subr.mxu0 0.0
  %3692 = vmatpush1.msra.mxu0 %v3688
  %3693 = vmatprep.subr.mxu0 0.0
  %3694 = vmatpush1.msra.mxu0 0.0
  %3695 = vmatprep.subr.mxu0 0.0
  %3696 = vmatpush1.msra.mxu0 0.0
  %3697 = vmatprep.subr.mxu0 0.0
  %3698 = vmatpush1.msra.mxu0 0.0
  %3699 = vmatprep.subr.mxu0 0.0
  %3700 = vmatpush1.msra.mxu0 0.0
  %3701 = vmatprep.subr.mxu0 0.0
  %3702 = vmatpush1.msra.mxu0 0.0
  %3703 = vmatprep.subr.mxu0 0.0
  %3704 = vmatpush1.msra.mxu0 0.0
  %3705 = vmatprep.subr.mxu0 0.0
  %3706 = vmatpush1.msra.mxu0 0.0
  %3707 = vmatprep.subr.mxu0 0.0
  %3708 = vmatpush1.msra.mxu0 0.0
  %3709 = vmatprep.subr.mxu0 0.0
  %3710 = vmatpush1.msra.mxu0 0.0
  %3711 = vmatprep.subr.mxu0 0.0
  %3712 = vmatpush1.msra.mxu0 0.0
  %3713 = vmatprep.subr.mxu0 0.0
  %3714 = vmatpush1.msra.mxu0 0.0
  %3715 = vmatprep.subr.mxu0 0.0
  %3716 = vmatpush1.msra.mxu0 0.0
  %3717 = vmatprep.subr.mxu0 0.0
  %3718 = vmatpush1.msra.mxu0 0.0
  %3719 = vmatprep.subr.mxu0 0.0
  %3720 = vmatpush1.msra.mxu0 0.0
  %3721 = vmatprep.subr.mxu0 0.0
  %3722 = vmatpush1.msra.mxu0 0.0
  %3723 = vmatprep.subr.mxu0 0.0
  %3724 = vmatpush1.msra.mxu0 0.0
  %3725 = vmatprep.subr.mxu0 0.0
  %3726 = vmatpush1.msra.mxu0 0.0
  %3727 = vmatprep.subr.mxu0 0.0
  %3728 = vmatpush1.msra.mxu0 0.0
  %3729 = vmatprep.subr.mxu0 0.0
  %3730 = vmatpush1.msra.mxu0 0.0
  %3731 = vmatprep.subr.mxu0 0.0
  %3732 = vmatpush1.msra.mxu0 0.0
  %3733 = vmatprep.subr.mxu0 0.0
  %3734 = vmatpush1.msra.mxu0 0.0
  %3735 = vmatprep.subr.mxu0 0.0
  %3736 = vmatpush1.msra.mxu0 0.0
  %3737 = vmatprep.subr.mxu0 0.0
  %3738 = vmatpush1.msra.mxu0 0.0
  %3739 = vmatprep.subr.mxu0 0.0
  %3740 = vmatpush1.msra.mxu0 0.0
  %3741 = vmatprep.subr.mxu0 0.0
  %3742 = vmatpush1.msra.mxu0 0.0
  %3743 = vmatprep.subr.mxu0 0.0
  %3744 = vmatpush1.msra.mxu0 0.0
  %3745 = vmatprep.subr.mxu0 0.0
  %3746 = vmatpush1.msra.mxu0 0.0
  %3747 = vmatprep.subr.mxu0 0.0
  %3748 = vmatpush1.msra.mxu0 0.0
  %3749 = vmatprep.subr.mxu0 0.0
  %3750 = vmatpush1.msra.mxu0 0.0
  %3751 = vmatprep.subr.mxu0 0.0
  %3752 = vmatpush1.msra.mxu0 0.0
  %3753 = vmatprep.mubr.f32.mxu0 0.0
  %3754 = vmatmul.mubr.f32.gmra.mrb[0].mxu0 %v276
  %v3755 = vpop.f32.mrb[0].mxu0
  %v3756 = vadd.f32 0.0, %v3755
  %v3757 = vpop.f32.mrb[0].mxu0
  %3758 = vmatprep.mubr.f32.mxu0 0.0
  %3759 = vmatmul.mubr.f32.gmra.mrb[0].mxu0 %v279
  %v3760 = vpop.f32.mrb[0].mxu0
  %v3761 = vadd.f32 0.0, %v3760
  %v3762 = vpop.f32.mrb[0].mxu0
  %3763 = vdwg.mxu0
  %3764 = vmatprep.subr.mxu0 0.0
  %3765 = vmatpush1.msra.mxu0 %v3519
  %3766 = vmatprep.subr.mxu0 0.0
  %3767 = vmatpush1.msra.mxu0 %v3520
  %3768 = vmatprep.subr.mxu0 0.0
  %3769 = vmatpush1.msra.mxu0 %v3521
  %3770 = vmatprep.subr.mxu0 0.0
  %3771 = vmatpush1.msra.mxu0 %v3522
  %3772 = vmatprep.subr.mxu0 0.0
  %3773 = vmatpush1.msra.mxu0 %v3523
  %3774 = vmatprep.subr.mxu0 0.0
  %3775 = vmatpush1.msra.mxu0 %v3524
  %3776 = vmatprep.subr.mxu0 0.0
  %3777 = vmatpush1.msra.mxu0 0.0
  %3778 = vmatprep.subr.mxu0 0.0
  %3779 = vmatpush1.msra.mxu0 0.0
  %3780 = vmatprep.subr.mxu0 0.0
  %3781 = vmatpush1.msra.mxu0 0.0
  %3782 = vmatprep.subr.mxu0 0.0
  %3783 = vmatpush1.msra.mxu0 0.0
  %3784 = vmatprep.subr.mxu0 0.0
  %3785 = vmatpush1.msra.mxu0 0.0
  %3786 = vmatprep.subr.mxu0 0.0
  %3787 = vmatpush1.msra.mxu0 0.0
  %3788 = vmatprep.subr.mxu0 0.0
  %3789 = vmatpush1.msra.mxu0 0.0
  %3790 = vmatprep.subr.mxu0 0.0
  %3791 = vmatpush1.msra.mxu0 0.0
  %3792 = vmatprep.subr.mxu0 0.0
  %3793 = vmatpush1.msra.mxu0 0.0
  %3794 = vmatprep.subr.mxu0 0.0
  %3795 = vmatpush1.msra.mxu0 0.0
  %3796 = vmatprep.subr.mxu0 0.0
  %3797 = vmatpush1.msra.mxu0 0.0
  %3798 = vmatprep.subr.mxu0 0.0
  %3799 = vmatpush1.msra.mxu0 0.0
  %3800 = vmatprep.subr.mxu0 0.0
  %3801 = vmatpush1.msra.mxu0 0.0
  %3802 = vmatprep.subr.mxu0 0.0
  %3803 = vmatpush1.msra.mxu0 0.0
  %3804 = vmatprep.subr.mxu0 0.0
  %3805 = vmatpush1.msra.mxu0 0.0
  %3806 = vmatprep.subr.mxu0 0.0
  %3807 = vmatpush1.msra.mxu0 0.0
  %3808 = vmatprep.subr.mxu0 0.0
  %3809 = vmatpush1.msra.mxu0 0.0
  %3810 = vmatprep.subr.mxu0 0.0
  %3811 = vmatpush1.msra.mxu0 0.0
  %3812 = vmatprep.subr.mxu0 0.0
  %3813 = vmatpush1.msra.mxu0 0.0
  %3814 = vmatprep.subr.mxu0 0.0
  %3815 = vmatpush1.msra.mxu0 0.0
  %3816 = vmatprep.subr.mxu0 0.0
  %3817 = vmatpush1.msra.mxu0 0.0
  %3818 = vmatprep.subr.mxu0 0.0
  %3819 = vmatpush1.msra.mxu0 0.0
  %3820 = vmatprep.subr.mxu0 0.0
  %3821 = vmatpush1.msra.mxu0 0.0
  %3822 = vmatprep.subr.mxu0 0.0
  %3823 = vmatpush1.msra.mxu0 0.0
  %3824 = vmatprep.subr.mxu0 0.0
  %3825 = vmatpush1.msra.mxu0 0.0
  %3826 = vmatprep.subr.mxu0 0.0
  %3827 = vmatpush1.msra.mxu0 0.0
  %3828 = vmatprep.mubr.f32.mxu0 0.0
  %3829 = vmatmul.mubr.f32.gmra.mrb[0].mxu0 %v3607
  %v3830 = vpop.f32.mrb[0].mxu0
  %v3831 = vadd.f32 %v3756, %v3830
  %v3832 = vpop.f32.mrb[0].mxu0
  %3833 = vmatprep.mubr.f32.mxu0 0.0
  %3834 = vmatmul.mubr.f32.gmra.mrb[0].mxu0 %v3610
  %v3835 = vpop.f32.mrb[0].mxu0
  %v3836 = vadd.f32 %v3761, %v3835
  %v3837 = vpop.f32.mrb[0].mxu0
  %3838 = vdwg.mxu0
  %v3839 = vtanh.pop %v3831
  %v3840 = vtanh.pop %v3836
  %v3841 = vsel %vm66, -1e-08, %v3839
  %v3842 = vsel %vm67, -1e-08, %v3840
  %v3843 = vmul.f32 %v3841, 1.442695
  %v3844 = vpow.pop %v3843
  %v3845 = vmul.f32 %v3842, 1.442695
  %v3846 = vpow.pop %v3845
  %v3848 = vsel %vm109, %v3844, 0
  %v3851 = vsel %vm109, %v3846, 0
  %3853 = vmatprep.subr.mxu0 0.0
  %3854 = vmatpush1.msra.mxu0 %v84
  %3855 = vmatprep.subr.mxu0 0.0
  %3856 = vmatpush1.msra.mxu0 %v85
  %3857 = vmatprep.subr.mxu0 0.0
  %3858 = vmatpush1.msra.mxu0 %v86
  %3859 = vmatprep.subr.mxu0 0.0
  %3860 = vmatpush1.msra.mxu0 %v87
  %3861 = vmatprep.subr.mxu0 0.0
  %3862 = vmatpush1.msra.mxu0 %v88
  %3863 = vmatprep.subr.mxu0 0.0
  %3864 = vmatpush1.msra.mxu0 %v89
  %3865 = vmatprep.subr.mxu0 0.0
  %3866 = vmatpush1.msra.mxu0 0.0
  %3867 = vmatprep.subr.mxu0 0.0
  %3868 = vmatpush1.msra.mxu0 0.0
  %3869 = vmatprep.subr.mxu0 0.0
  %3870 = vmatpush1.msra.mxu0 0.0
  %3871 = vmatprep.subr.mxu0 0.0
  %3872 = vmatpush1.msra.mxu0 0.0
  %3873 = vmatprep.subr.mxu0 0.0
  %3874 = vmatpush1.msra.mxu0 0.0
  %3875 = vmatprep.subr.mxu0 0.0
  %3876 = vmatpush1.msra.mxu0 0.0
  %3877 = vmatprep.subr.mxu0 0.0
  %3878 = vmatpush1.msra.mxu0 0.0
  %3879 = vmatprep.subr.mxu0 0.0
  %3880 = vmatpush1.msra.mxu0 0.0
  %3881 = vmatprep.subr.mxu0 0.0
  %3882 = vmatpush1.msra.mxu0 0.0
  %3883 = vmatprep.subr.mxu0 0.0
  %3884 = vmatpush1.msra.mxu0 0.0
  %3885 = vmatprep.subr.mxu0 0.0
  %3886 = vmatpush1.msra.mxu0 0.0
  %3887 = vmatprep.subr.mxu0 0.0
  %3888 = vmatpush1.msra.mxu0 0.0
  %3889 = vmatprep.subr.mxu0 0.0
  %3890 = vmatpush1.msra.mxu0 0.0
  %3891 = vmatprep.subr.mxu0 0.0
  %3892 = vmatpush1.msra.mxu0 0.0
  %3893 = vmatprep.subr.mxu0 0.0
  %3894 = vmatpush1.msra.mxu0 0.0
  %3895 = vmatprep.subr.mxu0 0.0
  %3896 = vmatpush1.msra.mxu0 0.0
  %3897 = vmatprep.subr.mxu0 0.0
  %3898 = vmatpush1.msra.mxu0 0.0
  %3899 = vmatprep.subr.mxu0 0.0
  %3900 = vmatpush1.msra.mxu0 0.0
  %3901 = vmatprep.subr.mxu0 0.0
  %3902 = vmatpush1.msra.mxu0 0.0
  %3903 = vmatprep.subr.mxu0 0.0
  %3904 = vmatpush1.msra.mxu0 0.0
  %3905 = vmatprep.subr.mxu0 0.0
  %3906 = vmatpush1.msra.mxu0 0.0
  %3907 = vmatprep.subr.mxu0 0.0
  %3908 = vmatpush1.msra.mxu0 0.0
  %3909 = vmatprep.subr.mxu0 0.0
  %3910 = vmatpush1.msra.mxu0 0.0
  %3911 = vmatprep.subr.mxu0 0.0
  %3912 = vmatpush1.msra.mxu0 0.0
  %3913 = vmatprep.subr.mxu0 0.0
  %3914 = vmatpush1.msra.mxu0 0.0
  %3915 = vmatprep.subr.mxu0 0.0
  %3916 = vmatpush1.msra.mxu0 0.0
  %3917 = vmatprep.mubr.f32.mxu0 0.0
  %3918 = vmatmul.mubr.f32.gmra.mrb[0].mxu0 %v3848
  %v3919 = vpop.f32.mrb[0].mxu0
  %v3920 = vadd.f32 0.0, %v3919
  %v3921 = vpop.f32.mrb[0].mxu0
  %3922 = vmatprep.mubr.f32.mxu0 0.0
  %3923 = vmatmul.mubr.f32.gmra.mrb[0].mxu0 %v3851
  %v3924 = vpop.f32.mrb[0].mxu0
  %v3925 = vadd.f32 0.0, %v3924
  %v3926 = vpop.f32.mrb[0].mxu0
  %3927 = vdwg.mxu0
  %v3929 = vsel %vm520, %v3920, 0
  %v3932 = vsel %vm520, %v3925, 0
  %3934 = vmatprep.subr.mxu0 0.0
  %3935 = vmatpush1.msra.mxu0 %v529
  %3936 = vmatprep.subr.mxu0 0.0
  %3937 = vmatpush1.msra.mxu0 0.0
  %3938 = vmatprep.subr.mxu0 0.0
  %3939 = vmatpush1.msra.mxu0 0.0
  %3940 = vmatprep.subr.mxu0 0.0
  %3941 = vmatpush1.msra.mxu0 0.0
  %3942 = vmatprep.subr.mxu0 0.0
  %3943 = vmatpush1.msra.mxu0 0.0
  %3944 = vmatprep.subr.mxu0 0.0
  %3945 = vmatpush1.msra.mxu0 0.0
  %3946 = vmatprep.subr.mxu0 0.0
  %3947 = vmatpush1.msra.mxu0 0.0
  %3948 = vmatprep.subr.mxu0 0.0
  %3949 = vmatpush1.msra.mxu0 0.0
  %3950 = vmatprep.subr.mxu0 0.0
  %3951 = vmatpush1.msra.mxu0 0.0
  %3952 = vmatprep.subr.mxu0 0.0
  %3953 = vmatpush1.msra.mxu0 0.0
  %3954 = vmatprep.subr.mxu0 0.0
  %3955 = vmatpush1.msra.mxu0 0.0
  %3956 = vmatprep.subr.mxu0 0.0
  %3957 = vmatpush1.msra.mxu0 0.0
  %3958 = vmatprep.subr.mxu0 0.0
  %3959 = vmatpush1.msra.mxu0 0.0
  %3960 = vmatprep.subr.mxu0 0.0
  %3961 = vmatpush1.msra.mxu0 0.0
  %3962 = vmatprep.subr.mxu0 0.0
  %3963 = vmatpush1.msra.mxu0 0.0
  %3964 = vmatprep.subr.mxu0 0.0
  %3965 = vmatpush1.msra.mxu0 0.0
  %3966 = vmatprep.subr.mxu0 0.0
  %3967 = vmatpush1.msra.mxu0 0.0
  %3968 = vmatprep.subr.mxu0 0.0
  %3969 = vmatpush1.msra.mxu0 0.0
  %3970 = vmatprep.subr.mxu0 0.0
  %3971 = vmatpush1.msra.mxu0 0.0
  %3972 = vmatprep.subr.mxu0 0.0
  %3973 = vmatpush1.msra.mxu0 0.0
  %3974 = vmatprep.subr.mxu0 0.0
  %3975 = vmatpush1.msra.mxu0 0.0
  %3976 = vmatprep.subr.mxu0 0.0
  %3977 = vmatpush1.msra.mxu0 0.0
  %3978 = vmatprep.subr.mxu0 0.0
  %3979 = vmatpush1.msra.mxu0 0.0
  %3980 = vmatprep.subr.mxu0 0.0
  %3981 = vmatpush1.msra.mxu0 0.0
  %3982 = vmatprep.subr.mxu0 0.0
  %3983 = vmatpush1.msra.mxu0 0.0
  %3984 = vmatprep.subr.mxu0 0.0
  %3985 = vmatpush1.msra.mxu0 0.0
  %3986 = vmatprep.subr.mxu0 0.0
  %3987 = vmatpush1.msra.mxu0 0.0
  %3988 = vmatprep.subr.mxu0 0.0
  %3989 = vmatpush1.msra.mxu0 0.0
  %3990 = vmatprep.subr.mxu0 0.0
  %3991 = vmatpush1.msra.mxu0 0.0
  %3992 = vmatprep.subr.mxu0 0.0
  %3993 = vmatpush1.msra.mxu0 0.0
  %3994 = vmatprep.subr.mxu0 0.0
  %3995 = vmatpush1.msra.mxu0 0.0
  %3996 = vmatprep.subr.mxu0 0.0
  %3997 = vmatpush1.msra.mxu0 0.0
  %3998 = vmatprep.mubr.f32.mxu0 0.0
  %3999 = vmatmul.mubr.f32.gmra.mrb[0].mxu0 %v3929
  %v4000 = vpop.f32.mrb[0].mxu0
  %v4001 = vadd.f32 0.0, %v4000
  %v4002 = vpop.f32.mrb[0].mxu0
  %4003 = vmatprep.mubr.f32.mxu0 0.0
  %4004 = vmatmul.mubr.f32.gmra.mrb[0].mxu0 %v3932
  %v4005 = vpop.f32.mrb[0].mxu0
  %v4006 = vadd.f32 0.0, %v4005
  %v4007 = vpop.f32.mrb[0].mxu0
  %4008 = vdwg.mxu0
  %v4009 = vrcp.pop %v4001
  %v4010 = vmul.f32 %v3844, %v4009
  %v4011 = vrcp.pop %v4006
  %v4012 = vmul.f32 %v3846, %v4011
  %4013 = vmatprep.subr.mxu0 0.0
  %4014 = vmatpush1.msra.mxu0 %v3598
  %4015 = vmatprep.subr.mxu0 0.0
  %4016 = vmatpush1.msra.mxu0 0.0
  %4017 = vmatprep.subr.mxu0 0.0
  %4018 = vmatpush1.msra.mxu0 0.0
  %4019 = vmatprep.subr.mxu0 0.0
  %4020 = vmatpush1.msra.mxu0 0.0
  %4021 = vmatprep.subr.mxu0 0.0
  %4022 = vmatpush1.msra.mxu0 0.0
  %4023 = vmatprep.subr.mxu0 0.0
  %4024 = vmatpush1.msra.mxu0 0.0
  %4025 = vmatprep.subr.mxu0 0.0
  %4026 = vmatpush1.msra.mxu0 0.0
  %4027 = vmatprep.subr.mxu0 0.0
  %4028 = vmatpush1.msra.mxu0 0.0
  %4029 = vmatprep.subr.mxu0 0.0
  %4030 = vmatpush1.msra.mxu0 0.0
  %4031 = vmatprep.subr.mxu0 0.0
  %4032 = vmatpush1.msra.mxu0 0.0
  %4033 = vmatprep.subr.mxu0 0.0
  %4034 = vmatpush1.msra.mxu0 0.0
  %4035 = vmatprep.subr.mxu0 0.0
  %4036 = vmatpush1.msra.mxu0 0.0
  %4037 = vmatprep.subr.mxu0 0.0
  %4038 = vmatpush1.msra.mxu0 0.0
  %4039 = vmatprep.subr.mxu0 0.0
  %4040 = vmatpush1.msra.mxu0 0.0
  %4041 = vmatprep.subr.mxu0 0.0
  %4042 = vmatpush1.msra.mxu0 0.0
  %4043 = vmatprep.subr.mxu0 0.0
  %4044 = vmatpush1.msra.mxu0 0.0
  %4045 = vmatprep.subr.mxu0 0.0
  %4046 = vmatpush1.msra.mxu0 0.0
  %4047 = vmatprep.subr.mxu0 0.0
  %4048 = vmatpush1.msra.mxu0 0.0
  %4049 = vmatprep.subr.mxu0 0.0
  %4050 = vmatpush1.msra.mxu0 0.0
  %4051 = vmatprep.subr.mxu0 0.0
  %4052 = vmatpush1.msra.mxu0 0.0
  %4053 = vmatprep.subr.mxu0 0.0
  %4054 = vmatpush1.msra.mxu0 0.0
  %4055 = vmatprep.subr.mxu0 0.0
  %4056 = vmatpush1.msra.mxu0 0.0
  %4057 = vmatprep.subr.mxu0 0.0
  %4058 = vmatpush1.msra.mxu0 0.0
  %4059 = vmatprep.subr.mxu0 0.0
  %4060 = vmatpush1.msra.mxu0 0.0
  %4061 = vmatprep.subr.mxu0 0.0
  %4062 = vmatpush1.msra.mxu0 0.0
  %4063 = vmatprep.subr.mxu0 0.0
  %4064 = vmatpush1.msra.mxu0 0.0
  %4065 = vmatprep.subr.mxu0 0.0
  %4066 = vmatpush1.msra.mxu0 0.0
  %4067 = vmatprep.subr.mxu0 0.0
  %4068 = vmatpush1.msra.mxu0 0.0
  %4069 = vmatprep.subr.mxu0 0.0
  %4070 = vmatpush1.msra.mxu0 0.0
  %4071 = vmatprep.subr.mxu0 0.0
  %4072 = vmatpush1.msra.mxu0 0.0
  %4073 = vmatprep.subr.mxu0 0.0
  %4074 = vmatpush1.msra.mxu0 0.0
  %4075 = vmatprep.subr.mxu0 0.0
  %4076 = vmatpush1.msra.mxu0 0.0
  %4077 = vmatprep.mubr.f32.mxu0 0.0
  %4078 = vmatmul.mubr.f32.gmra.mrb[0].mxu0 %v612
  %v4079 = vpop.f32.mrb[0].mxu0
  %v4080 = vadd.f32 0.0, %v4079
  %v4081 = vpop.f32.mrb[0].mxu0
  %4082 = vmatprep.mubr.f32.mxu0 0.0
  %4083 = vmatmul.mubr.f32.gmra.mrb[0].mxu0 %v615
  %v4084 = vpop.f32.mrb[0].mxu0
  %v4085 = vadd.f32 0.0, %v4084
  %v4086 = vpop.f32.mrb[0].mxu0
  %4087 = vmatprep.mubr.f32.mxu0 0.0
  %4088 = vmatmul.mubr.f32.gmra.mrb[0].mxu0 %v618
  %v4089 = vpop.f32.mrb[0].mxu0
  %v4090 = vadd.f32 0.0, %v4089
  %v4091 = vpop.f32.mrb[0].mxu0
  %4092 = vmatprep.mubr.f32.mxu0 0.0
  %4093 = vmatmul.mubr.f32.gmra.mrb[0].mxu0 %v621
  %v4094 = vpop.f32.mrb[0].mxu0
  %v4095 = vadd.f32 0.0, %v4094
  %v4096 = vpop.f32.mrb[0].mxu0
  %4097 = vmatprep.mubr.f32.mxu0 0.0
  %4098 = vmatmul.mubr.f32.gmra.mrb[0].mxu0 %v624
  %v4099 = vpop.f32.mrb[0].mxu0
  %v4100 = vadd.f32 0.0, %v4099
  %v4101 = vpop.f32.mrb[0].mxu0
  %4102 = vmatprep.mubr.f32.mxu0 0.0
  %4103 = vmatmul.mubr.f32.gmra.mrb[0].mxu0 %v627
  %v4104 = vpop.f32.mrb[0].mxu0
  %v4105 = vadd.f32 0.0, %v4104
  %v4106 = vpop.f32.mrb[0].mxu0
  %4107 = vdwg.mxu0
  %v4108 = vmul.f32 %v4080, %v78
  %v4109 = vmul.f32 %v4085, %v79
  %v4110 = vmul.f32 %v4090, %v80
  %v4111 = vmul.f32 %v4095, %v81
  %v4112 = vmul.f32 %v4100, %v82
  %v4113 = vmul.f32 %v4105, %v83
  %v4115 = vsel %vm109, %v4010, 0
  %4117 = vmatprep.subr.mxu0 0.0
  %4118 = vmatpush1.msra.mxu0 %v4108
  %4119 = vmatprep.subr.mxu0 0.0
  %4120 = vmatpush1.msra.mxu0 %v4109
  %4121 = vmatprep.subr.mxu0 0.0
  %4122 = vmatpush1.msra.mxu0 %v4110
  %4123 = vmatprep.subr.mxu0 0.0
  %4124 = vmatpush1.msra.mxu0 %v4111
  %4125 = vmatprep.subr.mxu0 0.0
  %4126 = vmatpush1.msra.mxu0 %v4112
  %4127 = vmatprep.subr.mxu0 0.0
  %4128 = vmatpush1.msra.mxu0 %v4113
  %4129 = vmatprep.subr.mxu0 0.0
  %4130 = vmatpush1.msra.mxu0 0.0
  %4131 = vmatprep.subr.mxu0 0.0
  %4132 = vmatpush1.msra.mxu0 0.0
  %4133 = vmatprep.subr.mxu0 0.0
  %4134 = vmatpush1.msra.mxu0 0.0
  %4135 = vmatprep.subr.mxu0 0.0
  %4136 = vmatpush1.msra.mxu0 0.0
  %4137 = vmatprep.subr.mxu0 0.0
  %4138 = vmatpush1.msra.mxu0 0.0
  %4139 = vmatprep.subr.mxu0 0.0
  %4140 = vmatpush1.msra.mxu0 0.0
  %4141 = vmatprep.subr.mxu0 0.0
  %4142 = vmatpush1.msra.mxu0 0.0
  %4143 = vmatprep.subr.mxu0 0.0
  %4144 = vmatpush1.msra.mxu0 0.0
  %4145 = vmatprep.subr.mxu0 0.0
  %4146 = vmatpush1.msra.mxu0 0.0
  %4147 = vmatprep.subr.mxu0 0.0
  %4148 = vmatpush1.msra.mxu0 0.0
  %4149 = vmatprep.subr.mxu0 0.0
  %4150 = vmatpush1.msra.mxu0 0.0
  %4151 = vmatprep.subr.mxu0 0.0
  %4152 = vmatpush1.msra.mxu0 0.0
  %4153 = vmatprep.subr.mxu0 0.0
  %4154 = vmatpush1.msra.mxu0 0.0
  %4155 = vmatprep.subr.mxu0 0.0
  %4156 = vmatpush1.msra.mxu0 0.0
  %4157 = vmatprep.subr.mxu0 0.0
  %4158 = vmatpush1.msra.mxu0 0.0
  %4159 = vmatprep.subr.mxu0 0.0
  %4160 = vmatpush1.msra.mxu0 0.0
  %4161 = vmatprep.subr.mxu0 0.0
  %4162 = vmatpush1.msra.mxu0 0.0
  %4163 = vmatprep.subr.mxu0 0.0
  %4164 = vmatpush1.msra.mxu0 0.0
  %4165 = vmatprep.subr.mxu0 0.0
  %4166 = vmatpush1.msra.mxu0 0.0
  %4167 = vmatprep.subr.mxu0 0.0
  %4168 = vmatpush1.msra.mxu0 0.0
  %4169 = vmatprep.subr.mxu0 0.0
  %4170 = vmatpush1.msra.mxu0 0.0
  %4171 = vmatprep.subr.mxu0 0.0
  %4172 = vmatpush1.msra.mxu0 0.0
  %4173 = vmatprep.subr.mxu0 0.0
  %4174 = vmatpush1.msra.mxu0 0.0
  %4175 = vmatprep.subr.mxu0 0.0
  %4176 = vmatpush1.msra.mxu0 0.0
  %4177 = vmatprep.subr.mxu0 0.0
  %4178 = vmatpush1.msra.mxu0 0.0
  %4179 = vmatprep.subr.mxu0 0.0
  %4180 = vmatpush1.msra.mxu0 0.0
  %4181 = vmatprep.mubr.f32.mxu0 0.0
  %4182 = vmatmul.mubr.f32.gmra.mrb[0].mxu0 %v4115
  %v4183 = vpop.f32.mrb[0].mxu0
  %v4184 = vadd.f32 0.0, %v4183
  %v4185 = vpop.f32.mrb[0].mxu0
  %4186 = vdwg.mxu0
  %v4187 = vtanh.pop %v4184
  %4188 = vmatprep.subr.mxu0 0.0
  %4189 = vmatpush1.msra.mxu0 %v3603
  %4190 = vmatprep.subr.mxu0 0.0
  %4191 = vmatpush1.msra.mxu0 0.0
  %4192 = vmatprep.subr.mxu0 0.0
  %4193 = vmatpush1.msra.mxu0 0.0
  %4194 = vmatprep.subr.mxu0 0.0
  %4195 = vmatpush1.msra.mxu0 0.0
  %4196 = vmatprep.subr.mxu0 0.0
  %4197 = vmatpush1.msra.mxu0 0.0
  %4198 = vmatprep.subr.mxu0 0.0
  %4199 = vmatpush1.msra.mxu0 0.0
  %4200 = vmatprep.subr.mxu0 0.0
  %4201 = vmatpush1.msra.mxu0 0.0
  %4202 = vmatprep.subr.mxu0 0.0
  %4203 = vmatpush1.msra.mxu0 0.0
  %4204 = vmatprep.subr.mxu0 0.0
  %4205 = vmatpush1.msra.mxu0 0.0
  %4206 = vmatprep.subr.mxu0 0.0
  %4207 = vmatpush1.msra.mxu0 0.0
  %4208 = vmatprep.subr.mxu0 0.0
  %4209 = vmatpush1.msra.mxu0 0.0
  %4210 = vmatprep.subr.mxu0 0.0
  %4211 = vmatpush1.msra.mxu0 0.0
  %4212 = vmatprep.subr.mxu0 0.0
  %4213 = vmatpush1.msra.mxu0 0.0
  %4214 = vmatprep.subr.mxu0 0.0
  %4215 = vmatpush1.msra.mxu0 0.0
  %4216 = vmatprep.subr.mxu0 0.0
  %4217 = vmatpush1.msra.mxu0 0.0
  %4218 = vmatprep.subr.mxu0 0.0
  %4219 = vmatpush1.msra.mxu0 0.0
  %4220 = vmatprep.subr.mxu0 0.0
  %4221 = vmatpush1.msra.mxu0 0.0
  %4222 = vmatprep.subr.mxu0 0.0
  %4223 = vmatpush1.msra.mxu0 0.0
  %4224 = vmatprep.subr.mxu0 0.0
  %4225 = vmatpush1.msra.mxu0 0.0
  %4226 = vmatprep.subr.mxu0 0.0
  %4227 = vmatpush1.msra.mxu0 0.0
  %4228 = vmatprep.subr.mxu0 0.0
  %4229 = vmatpush1.msra.mxu0 0.0
  %4230 = vmatprep.subr.mxu0 0.0
  %4231 = vmatpush1.msra.mxu0 0.0
  %4232 = vmatprep.subr.mxu0 0.0
  %4233 = vmatpush1.msra.mxu0 0.0
  %4234 = vmatprep.subr.mxu0 0.0
  %4235 = vmatpush1.msra.mxu0 0.0
  %4236 = vmatprep.subr.mxu0 0.0
  %4237 = vmatpush1.msra.mxu0 0.0
  %4238 = vmatprep.subr.mxu0 0.0
  %4239 = vmatpush1.msra.mxu0 0.0
  %4240 = vmatprep.subr.mxu0 0.0
  %4241 = vmatpush1.msra.mxu0 0.0
  %4242 = vmatprep.subr.mxu0 0.0
  %4243 = vmatpush1.msra.mxu0 0.0
  %4244 = vmatprep.subr.mxu0 0.0
  %4245 = vmatpush1.msra.mxu0 0.0
  %4246 = vmatprep.subr.mxu0 0.0
  %4247 = vmatpush1.msra.mxu0 0.0
  %4248 = vmatprep.subr.mxu0 0.0
  %4249 = vmatpush1.msra.mxu0 0.0
  %4250 = vmatprep.subr.mxu0 0.0
  %4251 = vmatpush1.msra.mxu0 0.0
  %4252 = vmatprep.mubr.f32.mxu0 0.0
  %4253 = vmatmul.mubr.f32.gmra.mrb[0].mxu0 %v612
  %v4254 = vpop.f32.mrb[0].mxu0
  %v4255 = vadd.f32 0.0, %v4254
  %v4256 = vpop.f32.mrb[0].mxu0
  %4257 = vmatprep.mubr.f32.mxu0 0.0
  %4258 = vmatmul.mubr.f32.gmra.mrb[0].mxu0 %v615
  %v4259 = vpop.f32.mrb[0].mxu0
  %v4260 = vadd.f32 0.0, %v4259
  %v4261 = vpop.f32.mrb[0].mxu0
  %4262 = vmatprep.mubr.f32.mxu0 0.0
  %4263 = vmatmul.mubr.f32.gmra.mrb[0].mxu0 %v618
  %v4264 = vpop.f32.mrb[0].mxu0
  %v4265 = vadd.f32 0.0, %v4264
  %v4266 = vpop.f32.mrb[0].mxu0
  %4267 = vmatprep.mubr.f32.mxu0 0.0
  %4268 = vmatmul.mubr.f32.gmra.mrb[0].mxu0 %v621
  %v4269 = vpop.f32.mrb[0].mxu0
  %v4270 = vadd.f32 0.0, %v4269
  %v4271 = vpop.f32.mrb[0].mxu0
  %4272 = vmatprep.mubr.f32.mxu0 0.0
  %4273 = vmatmul.mubr.f32.gmra.mrb[0].mxu0 %v624
  %v4274 = vpop.f32.mrb[0].mxu0
  %v4275 = vadd.f32 0.0, %v4274
  %v4276 = vpop.f32.mrb[0].mxu0
  %4277 = vmatprep.mubr.f32.mxu0 0.0
  %4278 = vmatmul.mubr.f32.gmra.mrb[0].mxu0 %v627
  %v4279 = vpop.f32.mrb[0].mxu0
  %v4280 = vadd.f32 0.0, %v4279
  %v4281 = vpop.f32.mrb[0].mxu0
  %4282 = vdwg.mxu0
  %v4283 = vmul.f32 %v4255, %v78
  %v4284 = vmul.f32 %v4260, %v79
  %v4285 = vmul.f32 %v4265, %v80
  %v4286 = vmul.f32 %v4270, %v81
  %v4287 = vmul.f32 %v4275, %v82
  %v4288 = vmul.f32 %v4280, %v83
  %v4290 = vsel %vm109, %v4012, 0
  %4292 = vmatprep.subr.mxu0 0.0
  %4293 = vmatpush1.msra.mxu0 %v4283
  %4294 = vmatprep.subr.mxu0 0.0
  %4295 = vmatpush1.msra.mxu0 %v4284
  %4296 = vmatprep.subr.mxu0 0.0
  %4297 = vmatpush1.msra.mxu0 %v4285
  %4298 = vmatprep.subr.mxu0 0.0
  %4299 = vmatpush1.msra.mxu0 %v4286
  %4300 = vmatprep.subr.mxu0 0.0
  %4301 = vmatpush1.msra.mxu0 %v4287
  %4302 = vmatprep.subr.mxu0 0.0
  %4303 = vmatpush1.msra.mxu0 %v4288
  %4304 = vmatprep.subr.mxu0 0.0
  %4305 = vmatpush1.msra.mxu0 0.0
  %4306 = vmatprep.subr.mxu0 0.0
  %4307 = vmatpush1.msra.mxu0 0.0
  %4308 = vmatprep.subr.mxu0 0.0
  %4309 = vmatpush1.msra.mxu0 0.0
  %4310 = vmatprep.subr.mxu0 0.0
  %4311 = vmatpush1.msra.mxu0 0.0
  %4312 = vmatprep.subr.mxu0 0.0
  %4313 = vmatpush1.msra.mxu0 0.0
  %4314 = vmatprep.subr.mxu0 0.0
  %4315 = vmatpush1.msra.mxu0 0.0
  %4316 = vmatprep.subr.mxu0 0.0
  %4317 = vmatpush1.msra.mxu0 0.0
  %4318 = vmatprep.subr.mxu0 0.0
  %4319 = vmatpush1.msra.mxu0 0.0
  %4320 = vmatprep.subr.mxu0 0.0
  %4321 = vmatpush1.msra.mxu0 0.0
  %4322 = vmatprep.subr.mxu0 0.0
  %4323 = vmatpush1.msra.mxu0 0.0
  %4324 = vmatprep.subr.mxu0 0.0
  %4325 = vmatpush1.msra.mxu0 0.0
  %4326 = vmatprep.subr.mxu0 0.0
  %4327 = vmatpush1.msra.mxu0 0.0
  %4328 = vmatprep.subr.mxu0 0.0
  %4329 = vmatpush1.msra.mxu0 0.0
  %4330 = vmatprep.subr.mxu0 0.0
  %4331 = vmatpush1.msra.mxu0 0.0
  %4332 = vmatprep.subr.mxu0 0.0
  %4333 = vmatpush1.msra.mxu0 0.0
  %4334 = vmatprep.subr.mxu0 0.0
  %4335 = vmatpush1.msra.mxu0 0.0
  %4336 = vmatprep.subr.mxu0 0.0
  %4337 = vmatpush1.msra.mxu0 0.0
  %4338 = vmatprep.subr.mxu0 0.0
  %4339 = vmatpush1.msra.mxu0 0.0
  %4340 = vmatprep.subr.mxu0 0.0
  %4341 = vmatpush1.msra.mxu0 0.0
  %4342 = vmatprep.subr.mxu0 0.0
  %4343 = vmatpush1.msra.mxu0 0.0
  %4344 = vmatprep.subr.mxu0 0.0
  %4345 = vmatpush1.msra.mxu0 0.0
  %4346 = vmatprep.subr.mxu0 0.0
  %4347 = vmatpush1.msra.mxu0 0.0
  %4348 = vmatprep.subr.mxu0 0.0
  %4349 = vmatpush1.msra.mxu0 0.0
  %4350 = vmatprep.subr.mxu0 0.0
  %4351 = vmatpush1.msra.mxu0 0.0
  %4352 = vmatprep.subr.mxu0 0.0
  %4353 = vmatpush1.msra.mxu0 0.0
  %4354 = vmatprep.subr.mxu0 0.0
  %4355 = vmatpush1.msra.mxu0 0.0
  %4356 = vmatprep.mubr.f32.mxu0 0.0
  %4357 = vmatmul.mubr.f32.gmra.mrb[0].mxu0 %v4290
  %v4358 = vpop.f32.mrb[0].mxu0
  %v4359 = vadd.f32 0.0, %v4358
  %v4360 = vpop.f32.mrb[0].mxu0
  %4361 = vdwg.mxu0
  %v4362 = vtanh.pop %v4359
  %v4363 = vadd.f32 %v62, %v4187
  %v4364 = vadd.f32 %v63, %v4362
  %v4366 = vsel %vm109, %v4363, 0
  %v4369 = vsel %vm109, %v4364, 0
  %4371 = vmatprep.subr.mxu0 0.0
  %4372 = vmatpush1.msra.mxu0 %v3513
  %4373 = vmatprep.subr.mxu0 0.0
  %4374 = vmatpush1.msra.mxu0 %v3514
  %4375 = vmatprep.subr.mxu0 0.0
  %4376 = vmatpush1.msra.mxu0 %v3515
  %4377 = vmatprep.subr.mxu0 0.0
  %4378 = vmatpush1.msra.mxu0 %v3516
  %4379 = vmatprep.subr.mxu0 0.0
  %4380 = vmatpush1.msra.mxu0 %v3517
  %4381 = vmatprep.subr.mxu0 0.0
  %4382 = vmatpush1.msra.mxu0 %v3518
  %4383 = vmatprep.subr.mxu0 0.0
  %4384 = vmatpush1.msra.mxu0 0.0
  %4385 = vmatprep.subr.mxu0 0.0
  %4386 = vmatpush1.msra.mxu0 0.0
  %4387 = vmatprep.subr.mxu0 0.0
  %4388 = vmatpush1.msra.mxu0 0.0
  %4389 = vmatprep.subr.mxu0 0.0
  %4390 = vmatpush1.msra.mxu0 0.0
  %4391 = vmatprep.subr.mxu0 0.0
  %4392 = vmatpush1.msra.mxu0 0.0
  %4393 = vmatprep.subr.mxu0 0.0
  %4394 = vmatpush1.msra.mxu0 0.0
  %4395 = vmatprep.subr.mxu0 0.0
  %4396 = vmatpush1.msra.mxu0 0.0
  %4397 = vmatprep.subr.mxu0 0.0
  %4398 = vmatpush1.msra.mxu0 0.0
  %4399 = vmatprep.subr.mxu0 0.0
  %4400 = vmatpush1.msra.mxu0 0.0
  %4401 = vmatprep.subr.mxu0 0.0
  %4402 = vmatpush1.msra.mxu0 0.0
  %4403 = vmatprep.subr.mxu0 0.0
  %4404 = vmatpush1.msra.mxu0 0.0
  %4405 = vmatprep.subr.mxu0 0.0
  %4406 = vmatpush1.msra.mxu0 0.0
  %4407 = vmatprep.subr.mxu0 0.0
  %4408 = vmatpush1.msra.mxu0 0.0
  %4409 = vmatprep.subr.mxu0 0.0
  %4410 = vmatpush1.msra.mxu0 0.0
  %4411 = vmatprep.subr.mxu0 0.0
  %4412 = vmatpush1.msra.mxu0 0.0
  %4413 = vmatprep.subr.mxu0 0.0
  %4414 = vmatpush1.msra.mxu0 0.0
  %4415 = vmatprep.subr.mxu0 0.0
  %4416 = vmatpush1.msra.mxu0 0.0
  %4417 = vmatprep.subr.mxu0 0.0
  %4418 = vmatpush1.msra.mxu0 0.0
  %4419 = vmatprep.subr.mxu0 0.0
  %4420 = vmatpush1.msra.mxu0 0.0
  %4421 = vmatprep.subr.mxu0 0.0
  %4422 = vmatpush1.msra.mxu0 0.0
  %4423 = vmatprep.subr.mxu0 0.0
  %4424 = vmatpush1.msra.mxu0 0.0
  %4425 = vmatprep.subr.mxu0 0.0
  %4426 = vmatpush1.msra.mxu0 0.0
  %4427 = vmatprep.subr.mxu0 0.0
  %4428 = vmatpush1.msra.mxu0 0.0
  %4429 = vmatprep.subr.mxu0 0.0
  %4430 = vmatpush1.msra.mxu0 0.0
  %4431 = vmatprep.subr.mxu0 0.0
  %4432 = vmatpush1.msra.mxu0 0.0
  %4433 = vmatprep.subr.mxu0 0.0
  %4434 = vmatpush1.msra.mxu0 0.0
  %4435 = vmatprep.mubr.f32.mxu0 0.0
  %4436 = vmatmul.mubr.f32.gmra.mrb[0].mxu0 %v4366
  %v4437 = vpop.f32.mrb[0].mxu0
  %v4438 = vadd.f32 0.0, %v4437
  %v4439 = vpop.f32.mrb[0].mxu0
  %4440 = vmatprep.mubr.f32.mxu0 0.0
  %4441 = vmatmul.mubr.f32.gmra.mrb[0].mxu0 %v4369
  %v4442 = vpop.f32.mrb[0].mxu0
  %v4443 = vadd.f32 0.0, %v4442
  %v4444 = vpop.f32.mrb[0].mxu0
  %4445 = vdwg.mxu0
  %v4447 = vsel %vm109, %v4438, 0
  %v4450 = vsel %vm109, %v4443, 0
  %4452 = vmatprep.subr.mxu0 0.0
  %4453 = vmatpush1.msra.mxu0 %v3525
  %4454 = vmatprep.subr.mxu0 0.0
  %4455 = vmatpush1.msra.mxu0 %v3526
  %4456 = vmatprep.subr.mxu0 0.0
  %4457 = vmatpush1.msra.mxu0 %v3527
  %4458 = vmatprep.subr.mxu0 0.0
  %4459 = vmatpush1.msra.mxu0 %v3528
  %4460 = vmatprep.subr.mxu0 0.0
  %4461 = vmatpush1.msra.mxu0 %v3529
  %4462 = vmatprep.subr.mxu0 0.0
  %4463 = vmatpush1.msra.mxu0 %v3530
  %4464 = vmatprep.subr.mxu0 0.0
  %4465 = vmatpush1.msra.mxu0 0.0
  %4466 = vmatprep.subr.mxu0 0.0
  %4467 = vmatpush1.msra.mxu0 0.0
  %4468 = vmatprep.subr.mxu0 0.0
  %4469 = vmatpush1.msra.mxu0 0.0
  %4470 = vmatprep.subr.mxu0 0.0
  %4471 = vmatpush1.msra.mxu0 0.0
  %4472 = vmatprep.subr.mxu0 0.0
  %4473 = vmatpush1.msra.mxu0 0.0
  %4474 = vmatprep.subr.mxu0 0.0
  %4475 = vmatpush1.msra.mxu0 0.0
  %4476 = vmatprep.subr.mxu0 0.0
  %4477 = vmatpush1.msra.mxu0 0.0
  %4478 = vmatprep.subr.mxu0 0.0
  %4479 = vmatpush1.msra.mxu0 0.0
  %4480 = vmatprep.subr.mxu0 0.0
  %4481 = vmatpush1.msra.mxu0 0.0
  %4482 = vmatprep.subr.mxu0 0.0
  %4483 = vmatpush1.msra.mxu0 0.0
  %4484 = vmatprep.subr.mxu0 0.0
  %4485 = vmatpush1.msra.mxu0 0.0
  %4486 = vmatprep.subr.mxu0 0.0
  %4487 = vmatpush1.msra.mxu0 0.0
  %4488 = vmatprep.subr.mxu0 0.0
  %4489 = vmatpush1.msra.mxu0 0.0
  %4490 = vmatprep.subr.mxu0 0.0
  %4491 = vmatpush1.msra.mxu0 0.0
  %4492 = vmatprep.subr.mxu0 0.0
  %4493 = vmatpush1.msra.mxu0 0.0
  %4494 = vmatprep.subr.mxu0 0.0
  %4495 = vmatpush1.msra.mxu0 0.0
  %4496 = vmatprep.subr.mxu0 0.0
  %4497 = vmatpush1.msra.mxu0 0.0
  %4498 = vmatprep.subr.mxu0 0.0
  %4499 = vmatpush1.msra.mxu0 0.0
  %4500 = vmatprep.subr.mxu0 0.0
  %4501 = vmatpush1.msra.mxu0 0.0
  %4502 = vmatprep.subr.mxu0 0.0
  %4503 = vmatpush1.msra.mxu0 0.0
  %4504 = vmatprep.subr.mxu0 0.0
  %4505 = vmatpush1.msra.mxu0 0.0
  %4506 = vmatprep.subr.mxu0 0.0
  %4507 = vmatpush1.msra.mxu0 0.0
  %4508 = vmatprep.subr.mxu0 0.0
  %4509 = vmatpush1.msra.mxu0 0.0
  %4510 = vmatprep.subr.mxu0 0.0
  %4511 = vmatpush1.msra.mxu0 0.0
  %4512 = vmatprep.subr.mxu0 0.0
  %4513 = vmatpush1.msra.mxu0 0.0
  %4514 = vmatprep.subr.mxu0 0.0
  %4515 = vmatpush1.msra.mxu0 0.0
  %4516 = vmatprep.mubr.f32.mxu0 0.0
  %4517 = vmatmul.mubr.f32.gmra.mrb[0].mxu0 %v4447
  %v4518 = vpop.f32.mrb[0].mxu0
  %v4519 = vadd.f32 0.0, %v4518
  %v4520 = vpop.f32.mrb[0].mxu0
  %4521 = vmatprep.mubr.f32.mxu0 0.0
  %4522 = vmatmul.mubr.f32.gmra.mrb[0].mxu0 %v4450
  %v4523 = vpop.f32.mrb[0].mxu0
  %v4524 = vadd.f32 0.0, %v4523
  %v4525 = vpop.f32.mrb[0].mxu0
  %4526 = vdwg.mxu0
  %v4527 = vmul.f32 %v4519, %v68
  %v4528 = vmul.f32 %v4524, %v69
  %4529 = vmatprep.subr.mxu0 0.0
  %4530 = vmatpush1.msra.mxu0 %v4527
  %4531 = vmatprep.subr.mxu0 0.0
  %4532 = vmatpush1.msra.mxu0 %v4528
  %4533 = vmatprep.subr.mxu0 0.0
  %4534 = vmatpush1.msra.mxu0 0.0
  %4535 = vmatprep.subr.mxu0 0.0
  %4536 = vmatpush1.msra.mxu0 0.0
  %4537 = vmatprep.subr.mxu0 0.0
  %4538 = vmatpush1.msra.mxu0 0.0
  %4539 = vmatprep.subr.mxu0 0.0
  %4540 = vmatpush1.msra.mxu0 0.0
  %4541 = vmatprep.subr.mxu0 0.0
  %4542 = vmatpush1.msra.mxu0 0.0
  %4543 = vmatprep.subr.mxu0 0.0
  %4544 = vmatpush1.msra.mxu0 0.0
  %4545 = vmatprep.subr.mxu0 0.0
  %4546 = vmatpush1.msra.mxu0 0.0
  %4547 = vmatprep.subr.mxu0 0.0
  %4548 = vmatpush1.msra.mxu0 0.0
  %4549 = vmatprep.subr.mxu0 0.0
  %4550 = vmatpush1.msra.mxu0 0.0
  %4551 = vmatprep.subr.mxu0 0.0
  %4552 = vmatpush1.msra.mxu0 0.0
  %4553 = vmatprep.subr.mxu0 0.0
  %4554 = vmatpush1.msra.mxu0 0.0
  %4555 = vmatprep.subr.mxu0 0.0
  %4556 = vmatpush1.msra.mxu0 0.0
  %4557 = vmatprep.subr.mxu0 0.0
  %4558 = vmatpush1.msra.mxu0 0.0
  %4559 = vmatprep.subr.mxu0 0.0
  %4560 = vmatpush1.msra.mxu0 0.0
  %4561 = vmatprep.subr.mxu0 0.0
  %4562 = vmatpush1.msra.mxu0 0.0
  %4563 = vmatprep.subr.mxu0 0.0
  %4564 = vmatpush1.msra.mxu0 0.0
  %4565 = vmatprep.subr.mxu0 0.0
  %4566 = vmatpush1.msra.mxu0 0.0
  %4567 = vmatprep.subr.mxu0 0.0
  %4568 = vmatpush1.msra.mxu0 0.0
  %4569 = vmatprep.subr.mxu0 0.0
  %4570 = vmatpush1.msra.mxu0 0.0
  %4571 = vmatprep.subr.mxu0 0.0
  %4572 = vmatpush1.msra.mxu0 0.0
  %4573 = vmatprep.subr.mxu0 0.0
  %4574 = vmatpush1.msra.mxu0 0.0
  %4575 = vmatprep.subr.mxu0 0.0
  %4576 = vmatpush1.msra.mxu0 0.0
  %4577 = vmatprep.subr.mxu0 0.0
  %4578 = vmatpush1.msra.mxu0 0.0
  %4579 = vmatprep.subr.mxu0 0.0
  %4580 = vmatpush1.msra.mxu0 0.0
  %4581 = vmatprep.subr.mxu0 0.0
  %4582 = vmatpush1.msra.mxu0 0.0
  %4583 = vmatprep.subr.mxu0 0.0
  %4584 = vmatpush1.msra.mxu0 0.0
  %4585 = vmatprep.subr.mxu0 0.0
  %4586 = vmatpush1.msra.mxu0 0.0
  %4587 = vmatprep.subr.mxu0 0.0
  %4588 = vmatpush1.msra.mxu0 0.0
  %4589 = vmatprep.subr.mxu0 0.0
  %4590 = vmatpush1.msra.mxu0 0.0
  %4591 = vmatprep.subr.mxu0 0.0
  %4592 = vmatpush1.msra.mxu0 0.0
  %4593 = vmatprep.mubr.f32.mxu0 0.0
  %4594 = vmatmul.mubr.f32.gmra.mrb[0].mxu0 %v276
  %v4595 = vpop.f32.mrb[0].mxu0
  %v4596 = vadd.f32 0.0, %v4595
  %v4597 = vpop.f32.mrb[0].mxu0
  %4598 = vmatprep.mubr.f32.mxu0 0.0
  %4599 = vmatmul.mubr.f32.gmra.mrb[0].mxu0 %v279
  %v4600 = vpop.f32.mrb[0].mxu0
  %v4601 = vadd.f32 0.0, %v4600
  %v4602 = vpop.f32.mrb[0].mxu0
  %4603 = vdwg.mxu0
  %4604 = vmatprep.subr.mxu0 0.0
  %4605 = vmatpush1.msra.mxu0 %v3519
  %4606 = vmatprep.subr.mxu0 0.0
  %4607 = vmatpush1.msra.mxu0 %v3520
  %4608 = vmatprep.subr.mxu0 0.0
  %4609 = vmatpush1.msra.mxu0 %v3521
  %4610 = vmatprep.subr.mxu0 0.0
  %4611 = vmatpush1.msra.mxu0 %v3522
  %4612 = vmatprep.subr.mxu0 0.0
  %4613 = vmatpush1.msra.mxu0 %v3523
  %4614 = vmatprep.subr.mxu0 0.0
  %4615 = vmatpush1.msra.mxu0 %v3524
  %4616 = vmatprep.subr.mxu0 0.0
  %4617 = vmatpush1.msra.mxu0 0.0
  %4618 = vmatprep.subr.mxu0 0.0
  %4619 = vmatpush1.msra.mxu0 0.0
  %4620 = vmatprep.subr.mxu0 0.0
  %4621 = vmatpush1.msra.mxu0 0.0
  %4622 = vmatprep.subr.mxu0 0.0
  %4623 = vmatpush1.msra.mxu0 0.0
  %4624 = vmatprep.subr.mxu0 0.0
  %4625 = vmatpush1.msra.mxu0 0.0
  %4626 = vmatprep.subr.mxu0 0.0
  %4627 = vmatpush1.msra.mxu0 0.0
  %4628 = vmatprep.subr.mxu0 0.0
  %4629 = vmatpush1.msra.mxu0 0.0
  %4630 = vmatprep.subr.mxu0 0.0
  %4631 = vmatpush1.msra.mxu0 0.0
  %4632 = vmatprep.subr.mxu0 0.0
  %4633 = vmatpush1.msra.mxu0 0.0
  %4634 = vmatprep.subr.mxu0 0.0
  %4635 = vmatpush1.msra.mxu0 0.0
  %4636 = vmatprep.subr.mxu0 0.0
  %4637 = vmatpush1.msra.mxu0 0.0
  %4638 = vmatprep.subr.mxu0 0.0
  %4639 = vmatpush1.msra.mxu0 0.0
  %4640 = vmatprep.subr.mxu0 0.0
  %4641 = vmatpush1.msra.mxu0 0.0
  %4642 = vmatprep.subr.mxu0 0.0
  %4643 = vmatpush1.msra.mxu0 0.0
  %4644 = vmatprep.subr.mxu0 0.0
  %4645 = vmatpush1.msra.mxu0 0.0
  %4646 = vmatprep.subr.mxu0 0.0
  %4647 = vmatpush1.msra.mxu0 0.0
  %4648 = vmatprep.subr.mxu0 0.0
  %4649 = vmatpush1.msra.mxu0 0.0
  %4650 = vmatprep.subr.mxu0 0.0
  %4651 = vmatpush1.msra.mxu0 0.0
  %4652 = vmatprep.subr.mxu0 0.0
  %4653 = vmatpush1.msra.mxu0 0.0
  %4654 = vmatprep.subr.mxu0 0.0
  %4655 = vmatpush1.msra.mxu0 0.0
  %4656 = vmatprep.subr.mxu0 0.0
  %4657 = vmatpush1.msra.mxu0 0.0
  %4658 = vmatprep.subr.mxu0 0.0
  %4659 = vmatpush1.msra.mxu0 0.0
  %4660 = vmatprep.subr.mxu0 0.0
  %4661 = vmatpush1.msra.mxu0 0.0
  %4662 = vmatprep.subr.mxu0 0.0
  %4663 = vmatpush1.msra.mxu0 0.0
  %4664 = vmatprep.subr.mxu0 0.0
  %4665 = vmatpush1.msra.mxu0 0.0
  %4666 = vmatprep.subr.mxu0 0.0
  %4667 = vmatpush1.msra.mxu0 0.0
  %4668 = vmatprep.mubr.f32.mxu0 0.0
  %4669 = vmatmul.mubr.f32.gmra.mrb[0].mxu0 %v4447
  %v4670 = vpop.f32.mrb[0].mxu0
  %v4671 = vadd.f32 %v4596, %v4670
  %v4672 = vpop.f32.mrb[0].mxu0
  %4673 = vmatprep.mubr.f32.mxu0 0.0
  %4674 = vmatmul.mubr.f32.gmra.mrb[0].mxu0 %v4450
  %v4675 = vpop.f32.mrb[0].mxu0
  %v4676 = vadd.f32 %v4601, %v4675
  %v4677 = vpop.f32.mrb[0].mxu0
  %4678 = vdwg.mxu0
  %v4679 = vtanh.pop %v4671
  %v4680 = vtanh.pop %v4676
  %v4681 = vsel %vm66, -1e-08, %v4679
  %v4682 = vsel %vm67, -1e-08, %v4680
  %v4683 = vmul.f32 %v4681, 1.442695
  %v4684 = vpow.pop %v4683
  %v4685 = vmul.f32 %v4682, 1.442695
  %v4686 = vpow.pop %v4685
  %v4688 = vsel %vm109, %v4684, 0
  %v4691 = vsel %vm109, %v4686, 0
  %4693 = vmatprep.subr.mxu0 0.0
  %4694 = vmatpush1.msra.mxu0 %v84
  %4695 = vmatprep.subr.mxu0 0.0
  %4696 = vmatpush1.msra.mxu0 %v85
  %4697 = vmatprep.subr.mxu0 0.0
  %4698 = vmatpush1.msra.mxu0 %v86
  %4699 = vmatprep.subr.mxu0 0.0
  %4700 = vmatpush1.msra.mxu0 %v87
  %4701 = vmatprep.subr.mxu0 0.0
  %4702 = vmatpush1.msra.mxu0 %v88
  %4703 = vmatprep.subr.mxu0 0.0
  %4704 = vmatpush1.msra.mxu0 %v89
  %4705 = vmatprep.subr.mxu0 0.0
  %4706 = vmatpush1.msra.mxu0 0.0
  %4707 = vmatprep.subr.mxu0 0.0
  %4708 = vmatpush1.msra.mxu0 0.0
  %4709 = vmatprep.subr.mxu0 0.0
  %4710 = vmatpush1.msra.mxu0 0.0
  %4711 = vmatprep.subr.mxu0 0.0
  %4712 = vmatpush1.msra.mxu0 0.0
  %4713 = vmatprep.subr.mxu0 0.0
  %4714 = vmatpush1.msra.mxu0 0.0
  %4715 = vmatprep.subr.mxu0 0.0
  %4716 = vmatpush1.msra.mxu0 0.0
  %4717 = vmatprep.subr.mxu0 0.0
  %4718 = vmatpush1.msra.mxu0 0.0
  %4719 = vmatprep.subr.mxu0 0.0
  %4720 = vmatpush1.msra.mxu0 0.0
  %4721 = vmatprep.subr.mxu0 0.0
  %4722 = vmatpush1.msra.mxu0 0.0
  %4723 = vmatprep.subr.mxu0 0.0
  %4724 = vmatpush1.msra.mxu0 0.0
  %4725 = vmatprep.subr.mxu0 0.0
  %4726 = vmatpush1.msra.mxu0 0.0
  %4727 = vmatprep.subr.mxu0 0.0
  %4728 = vmatpush1.msra.mxu0 0.0
  %4729 = vmatprep.subr.mxu0 0.0
  %4730 = vmatpush1.msra.mxu0 0.0
  %4731 = vmatprep.subr.mxu0 0.0
  %4732 = vmatpush1.msra.mxu0 0.0
  %4733 = vmatprep.subr.mxu0 0.0
  %4734 = vmatpush1.msra.mxu0 0.0
  %4735 = vmatprep.subr.mxu0 0.0
  %4736 = vmatpush1.msra.mxu0 0.0
  %4737 = vmatprep.subr.mxu0 0.0
  %4738 = vmatpush1.msra.mxu0 0.0
  %4739 = vmatprep.subr.mxu0 0.0
  %4740 = vmatpush1.msra.mxu0 0.0
  %4741 = vmatprep.subr.mxu0 0.0
  %4742 = vmatpush1.msra.mxu0 0.0
  %4743 = vmatprep.subr.mxu0 0.0
  %4744 = vmatpush1.msra.mxu0 0.0
  %4745 = vmatprep.subr.mxu0 0.0
  %4746 = vmatpush1.msra.mxu0 0.0
  %4747 = vmatprep.subr.mxu0 0.0
  %4748 = vmatpush1.msra.mxu0 0.0
  %4749 = vmatprep.subr.mxu0 0.0
  %4750 = vmatpush1.msra.mxu0 0.0
  %4751 = vmatprep.subr.mxu0 0.0
  %4752 = vmatpush1.msra.mxu0 0.0
  %4753 = vmatprep.subr.mxu0 0.0
  %4754 = vmatpush1.msra.mxu0 0.0
  %4755 = vmatprep.subr.mxu0 0.0
  %4756 = vmatpush1.msra.mxu0 0.0
  %4757 = vmatprep.mubr.f32.mxu0 0.0
  %4758 = vmatmul.mubr.f32.gmra.mrb[0].mxu0 %v4688
  %v4759 = vpop.f32.mrb[0].mxu0
  %v4760 = vadd.f32 0.0, %v4759
  %v4761 = vpop.f32.mrb[0].mxu0
  %4762 = vmatprep.mubr.f32.mxu0 0.0
  %4763 = vmatmul.mubr.f32.gmra.mrb[0].mxu0 %v4691
  %v4764 = vpop.f32.mrb[0].mxu0
  %v4765 = vadd.f32 0.0, %v4764
  %v4766 = vpop.f32.mrb[0].mxu0
  %4767 = vdwg.mxu0
  %v4769 = vsel %vm520, %v4760, 0
  %v4772 = vsel %vm520, %v4765, 0
  %4774 = vmatprep.subr.mxu0 0.0
  %4775 = vmatpush1.msra.mxu0 %v529
  %4776 = vmatprep.subr.mxu0 0.0
  %4777 = vmatpush1.msra.mxu0 0.0
  %4778 = vmatprep.subr.mxu0 0.0
  %4779 = vmatpush1.msra.mxu0 0.0
  %4780 = vmatprep.subr.mxu0 0.0
  %4781 = vmatpush1.msra.mxu0 0.0
  %4782 = vmatprep.subr.mxu0 0.0
  %4783 = vmatpush1.msra.mxu0 0.0
  %4784 = vmatprep.subr.mxu0 0.0
  %4785 = vmatpush1.msra.mxu0 0.0
  %4786 = vmatprep.subr.mxu0 0.0
  %4787 = vmatpush1.msra.mxu0 0.0
  %4788 = vmatprep.subr.mxu0 0.0
  %4789 = vmatpush1.msra.mxu0 0.0
  %4790 = vmatprep.subr.mxu0 0.0
  %4791 = vmatpush1.msra.mxu0 0.0
  %4792 = vmatprep.subr.mxu0 0.0
  %4793 = vmatpush1.msra.mxu0 0.0
  %4794 = vmatprep.subr.mxu0 0.0
  %4795 = vmatpush1.msra.mxu0 0.0
  %4796 = vmatprep.subr.mxu0 0.0
  %4797 = vmatpush1.msra.mxu0 0.0
  %4798 = vmatprep.subr.mxu0 0.0
  %4799 = vmatpush1.msra.mxu0 0.0
  %4800 = vmatprep.subr.mxu0 0.0
  %4801 = vmatpush1.msra.mxu0 0.0
  %4802 = vmatprep.subr.mxu0 0.0
  %4803 = vmatpush1.msra.mxu0 0.0
  %4804 = vmatprep.subr.mxu0 0.0
  %4805 = vmatpush1.msra.mxu0 0.0
  %4806 = vmatprep.subr.mxu0 0.0
  %4807 = vmatpush1.msra.mxu0 0.0
  %4808 = vmatprep.subr.mxu0 0.0
  %4809 = vmatpush1.msra.mxu0 0.0
  %4810 = vmatprep.subr.mxu0 0.0
  %4811 = vmatpush1.msra.mxu0 0.0
  %4812 = vmatprep.subr.mxu0 0.0
  %4813 = vmatpush1.msra.mxu0 0.0
  %4814 = vmatprep.subr.mxu0 0.0
  %4815 = vmatpush1.msra.mxu0 0.0
  %4816 = vmatprep.subr.mxu0 0.0
  %4817 = vmatpush1.msra.mxu0 0.0
  %4818 = vmatprep.subr.mxu0 0.0
  %4819 = vmatpush1.msra.mxu0 0.0
  %4820 = vmatprep.subr.mxu0 0.0
  %4821 = vmatpush1.msra.mxu0 0.0
  %4822 = vmatprep.subr.mxu0 0.0
  %4823 = vmatpush1.msra.mxu0 0.0
  %4824 = vmatprep.subr.mxu0 0.0
  %4825 = vmatpush1.msra.mxu0 0.0
  %4826 = vmatprep.subr.mxu0 0.0
  %4827 = vmatpush1.msra.mxu0 0.0
  %4828 = vmatprep.subr.mxu0 0.0
  %4829 = vmatpush1.msra.mxu0 0.0
  %4830 = vmatprep.subr.mxu0 0.0
  %4831 = vmatpush1.msra.mxu0 0.0
  %4832 = vmatprep.subr.mxu0 0.0
  %4833 = vmatpush1.msra.mxu0 0.0
  %4834 = vmatprep.subr.mxu0 0.0
  %4835 = vmatpush1.msra.mxu0 0.0
  %4836 = vmatprep.subr.mxu0 0.0
  %4837 = vmatpush1.msra.mxu0 0.0
  %4838 = vmatprep.mubr.f32.mxu0 0.0
  %4839 = vmatmul.mubr.f32.gmra.mrb[0].mxu0 %v4769
  %v4840 = vpop.f32.mrb[0].mxu0
  %v4841 = vadd.f32 0.0, %v4840
  %v4842 = vpop.f32.mrb[0].mxu0
  %4843 = vmatprep.mubr.f32.mxu0 0.0
  %4844 = vmatmul.mubr.f32.gmra.mrb[0].mxu0 %v4772
  %v4845 = vpop.f32.mrb[0].mxu0
  %v4846 = vadd.f32 0.0, %v4845
  %v4847 = vpop.f32.mrb[0].mxu0
  %4848 = vdwg.mxu0
  %v4849 = vrcp.pop %v4841
  %v4850 = vmul.f32 %v4684, %v4849
  %v4851 = vrcp.pop %v4846
  %v4852 = vmul.f32 %v4686, %v4851
  %4853 = vmatprep.subr.mxu0 0.0
  %4854 = vmatpush1.msra.mxu0 %v4438
  %4855 = vmatprep.subr.mxu0 0.0
  %4856 = vmatpush1.msra.mxu0 0.0
  %4857 = vmatprep.subr.mxu0 0.0
  %4858 = vmatpush1.msra.mxu0 0.0
  %4859 = vmatprep.subr.mxu0 0.0
  %4860 = vmatpush1.msra.mxu0 0.0
  %4861 = vmatprep.subr.mxu0 0.0
  %4862 = vmatpush1.msra.mxu0 0.0
  %4863 = vmatprep.subr.mxu0 0.0
  %4864 = vmatpush1.msra.mxu0 0.0
  %4865 = vmatprep.subr.mxu0 0.0
  %4866 = vmatpush1.msra.mxu0 0.0
  %4867 = vmatprep.subr.mxu0 0.0
  %4868 = vmatpush1.msra.mxu0 0.0
  %4869 = vmatprep.subr.mxu0 0.0
  %4870 = vmatpush1.msra.mxu0 0.0
  %4871 = vmatprep.subr.mxu0 0.0
  %4872 = vmatpush1.msra.mxu0 0.0
  %4873 = vmatprep.subr.mxu0 0.0
  %4874 = vmatpush1.msra.mxu0 0.0
  %4875 = vmatprep.subr.mxu0 0.0
  %4876 = vmatpush1.msra.mxu0 0.0
  %4877 = vmatprep.subr.mxu0 0.0
  %4878 = vmatpush1.msra.mxu0 0.0
  %4879 = vmatprep.subr.mxu0 0.0
  %4880 = vmatpush1.msra.mxu0 0.0
  %4881 = vmatprep.subr.mxu0 0.0
  %4882 = vmatpush1.msra.mxu0 0.0
  %4883 = vmatprep.subr.mxu0 0.0
  %4884 = vmatpush1.msra.mxu0 0.0
  %4885 = vmatprep.subr.mxu0 0.0
  %4886 = vmatpush1.msra.mxu0 0.0
  %4887 = vmatprep.subr.mxu0 0.0
  %4888 = vmatpush1.msra.mxu0 0.0
  %4889 = vmatprep.subr.mxu0 0.0
  %4890 = vmatpush1.msra.mxu0 0.0
  %4891 = vmatprep.subr.mxu0 0.0
  %4892 = vmatpush1.msra.mxu0 0.0
  %4893 = vmatprep.subr.mxu0 0.0
  %4894 = vmatpush1.msra.mxu0 0.0
  %4895 = vmatprep.subr.mxu0 0.0
  %4896 = vmatpush1.msra.mxu0 0.0
  %4897 = vmatprep.subr.mxu0 0.0
  %4898 = vmatpush1.msra.mxu0 0.0
  %4899 = vmatprep.subr.mxu0 0.0
  %4900 = vmatpush1.msra.mxu0 0.0
  %4901 = vmatprep.subr.mxu0 0.0
  %4902 = vmatpush1.msra.mxu0 0.0
  %4903 = vmatprep.subr.mxu0 0.0
  %4904 = vmatpush1.msra.mxu0 0.0
  %4905 = vmatprep.subr.mxu0 0.0
  %4906 = vmatpush1.msra.mxu0 0.0
  %4907 = vmatprep.subr.mxu0 0.0
  %4908 = vmatpush1.msra.mxu0 0.0
  %4909 = vmatprep.subr.mxu0 0.0
  %4910 = vmatpush1.msra.mxu0 0.0
  %4911 = vmatprep.subr.mxu0 0.0
  %4912 = vmatpush1.msra.mxu0 0.0
  %4913 = vmatprep.subr.mxu0 0.0
  %4914 = vmatpush1.msra.mxu0 0.0
  %4915 = vmatprep.subr.mxu0 0.0
  %4916 = vmatpush1.msra.mxu0 0.0
  %4917 = vmatprep.mubr.f32.mxu0 0.0
  %4918 = vmatmul.mubr.f32.gmra.mrb[0].mxu0 %v612
  %v4919 = vpop.f32.mrb[0].mxu0
  %v4920 = vadd.f32 0.0, %v4919
  %v4921 = vpop.f32.mrb[0].mxu0
  %4922 = vmatprep.mubr.f32.mxu0 0.0
  %4923 = vmatmul.mubr.f32.gmra.mrb[0].mxu0 %v615
  %v4924 = vpop.f32.mrb[0].mxu0
  %v4925 = vadd.f32 0.0, %v4924
  %v4926 = vpop.f32.mrb[0].mxu0
  %4927 = vmatprep.mubr.f32.mxu0 0.0
  %4928 = vmatmul.mubr.f32.gmra.mrb[0].mxu0 %v618
  %v4929 = vpop.f32.mrb[0].mxu0
  %v4930 = vadd.f32 0.0, %v4929
  %v4931 = vpop.f32.mrb[0].mxu0
  %4932 = vmatprep.mubr.f32.mxu0 0.0
  %4933 = vmatmul.mubr.f32.gmra.mrb[0].mxu0 %v621
  %v4934 = vpop.f32.mrb[0].mxu0
  %v4935 = vadd.f32 0.0, %v4934
  %v4936 = vpop.f32.mrb[0].mxu0
  %4937 = vmatprep.mubr.f32.mxu0 0.0
  %4938 = vmatmul.mubr.f32.gmra.mrb[0].mxu0 %v624
  %v4939 = vpop.f32.mrb[0].mxu0
  %v4940 = vadd.f32 0.0, %v4939
  %v4941 = vpop.f32.mrb[0].mxu0
  %4942 = vmatprep.mubr.f32.mxu0 0.0
  %4943 = vmatmul.mubr.f32.gmra.mrb[0].mxu0 %v627
  %v4944 = vpop.f32.mrb[0].mxu0
  %v4945 = vadd.f32 0.0, %v4944
  %v4946 = vpop.f32.mrb[0].mxu0
  %4947 = vdwg.mxu0
  %v4948 = vmul.f32 %v4920, %v78
  %v4949 = vmul.f32 %v4925, %v79
  %v4950 = vmul.f32 %v4930, %v80
  %v4951 = vmul.f32 %v4935, %v81
  %v4952 = vmul.f32 %v4940, %v82
  %v4953 = vmul.f32 %v4945, %v83
  %v4955 = vsel %vm109, %v4850, 0
  %4957 = vmatprep.subr.mxu0 0.0
  %4958 = vmatpush1.msra.mxu0 %v4948
  %4959 = vmatprep.subr.mxu0 0.0
  %4960 = vmatpush1.msra.mxu0 %v4949
  %4961 = vmatprep.subr.mxu0 0.0
  %4962 = vmatpush1.msra.mxu0 %v4950
  %4963 = vmatprep.subr.mxu0 0.0
  %4964 = vmatpush1.msra.mxu0 %v4951
  %4965 = vmatprep.subr.mxu0 0.0
  %4966 = vmatpush1.msra.mxu0 %v4952
  %4967 = vmatprep.subr.mxu0 0.0
  %4968 = vmatpush1.msra.mxu0 %v4953
  %4969 = vmatprep.subr.mxu0 0.0
  %4970 = vmatpush1.msra.mxu0 0.0
  %4971 = vmatprep.subr.mxu0 0.0
  %4972 = vmatpush1.msra.mxu0 0.0
  %4973 = vmatprep.subr.mxu0 0.0
  %4974 = vmatpush1.msra.mxu0 0.0
  %4975 = vmatprep.subr.mxu0 0.0
  %4976 = vmatpush1.msra.mxu0 0.0
  %4977 = vmatprep.subr.mxu0 0.0
  %4978 = vmatpush1.msra.mxu0 0.0
  %4979 = vmatprep.subr.mxu0 0.0
  %4980 = vmatpush1.msra.mxu0 0.0
  %4981 = vmatprep.subr.mxu0 0.0
  %4982 = vmatpush1.msra.mxu0 0.0
  %4983 = vmatprep.subr.mxu0 0.0
  %4984 = vmatpush1.msra.mxu0 0.0
  %4985 = vmatprep.subr.mxu0 0.0
  %4986 = vmatpush1.msra.mxu0 0.0
  %4987 = vmatprep.subr.mxu0 0.0
  %4988 = vmatpush1.msra.mxu0 0.0
  %4989 = vmatprep.subr.mxu0 0.0
  %4990 = vmatpush1.msra.mxu0 0.0
  %4991 = vmatprep.subr.mxu0 0.0
  %4992 = vmatpush1.msra.mxu0 0.0
  %4993 = vmatprep.subr.mxu0 0.0
  %4994 = vmatpush1.msra.mxu0 0.0
  %4995 = vmatprep.subr.mxu0 0.0
  %4996 = vmatpush1.msra.mxu0 0.0
  %4997 = vmatprep.subr.mxu0 0.0
  %4998 = vmatpush1.msra.mxu0 0.0
  %4999 = vmatprep.subr.mxu0 0.0
  %5000 = vmatpush1.msra.mxu0 0.0
  %5001 = vmatprep.subr.mxu0 0.0
  %5002 = vmatpush1.msra.mxu0 0.0
  %5003 = vmatprep.subr.mxu0 0.0
  %5004 = vmatpush1.msra.mxu0 0.0
  %5005 = vmatprep.subr.mxu0 0.0
  %5006 = vmatpush1.msra.mxu0 0.0
  %5007 = vmatprep.subr.mxu0 0.0
  %5008 = vmatpush1.msra.mxu0 0.0
  %5009 = vmatprep.subr.mxu0 0.0
  %5010 = vmatpush1.msra.mxu0 0.0
  %5011 = vmatprep.subr.mxu0 0.0
  %5012 = vmatpush1.msra.mxu0 0.0
  %5013 = vmatprep.subr.mxu0 0.0
  %5014 = vmatpush1.msra.mxu0 0.0
  %5015 = vmatprep.subr.mxu0 0.0
  %5016 = vmatpush1.msra.mxu0 0.0
  %5017 = vmatprep.subr.mxu0 0.0
  %5018 = vmatpush1.msra.mxu0 0.0
  %5019 = vmatprep.subr.mxu0 0.0
  %5020 = vmatpush1.msra.mxu0 0.0
  %5021 = vmatprep.mubr.f32.mxu0 0.0
  %5022 = vmatmul.mubr.f32.gmra.mrb[0].mxu0 %v4955
  %v5023 = vpop.f32.mrb[0].mxu0
  %v5024 = vadd.f32 0.0, %v5023
  %v5025 = vpop.f32.mrb[0].mxu0
  %5026 = vdwg.mxu0
  %v5027 = vtanh.pop %v5024
  %5028 = vmatprep.subr.mxu0 0.0
  %5029 = vmatpush1.msra.mxu0 %v4443
  %5030 = vmatprep.subr.mxu0 0.0
  %5031 = vmatpush1.msra.mxu0 0.0
  %5032 = vmatprep.subr.mxu0 0.0
  %5033 = vmatpush1.msra.mxu0 0.0
  %5034 = vmatprep.subr.mxu0 0.0
  %5035 = vmatpush1.msra.mxu0 0.0
  %5036 = vmatprep.subr.mxu0 0.0
  %5037 = vmatpush1.msra.mxu0 0.0
  %5038 = vmatprep.subr.mxu0 0.0
  %5039 = vmatpush1.msra.mxu0 0.0
  %5040 = vmatprep.subr.mxu0 0.0
  %5041 = vmatpush1.msra.mxu0 0.0
  %5042 = vmatprep.subr.mxu0 0.0
  %5043 = vmatpush1.msra.mxu0 0.0
  %5044 = vmatprep.subr.mxu0 0.0
  %5045 = vmatpush1.msra.mxu0 0.0
  %5046 = vmatprep.subr.mxu0 0.0
  %5047 = vmatpush1.msra.mxu0 0.0
  %5048 = vmatprep.subr.mxu0 0.0
  %5049 = vmatpush1.msra.mxu0 0.0
  %5050 = vmatprep.subr.mxu0 0.0
  %5051 = vmatpush1.msra.mxu0 0.0
  %5052 = vmatprep.subr.mxu0 0.0
  %5053 = vmatpush1.msra.mxu0 0.0
  %5054 = vmatprep.subr.mxu0 0.0
  %5055 = vmatpush1.msra.mxu0 0.0
  %5056 = vmatprep.subr.mxu0 0.0
  %5057 = vmatpush1.msra.mxu0 0.0
  %5058 = vmatprep.subr.mxu0 0.0
  %5059 = vmatpush1.msra.mxu0 0.0
  %5060 = vmatprep.subr.mxu0 0.0
  %5061 = vmatpush1.msra.mxu0 0.0
  %5062 = vmatprep.subr.mxu0 0.0
  %5063 = vmatpush1.msra.mxu0 0.0
  %5064 = vmatprep.subr.mxu0 0.0
  %5065 = vmatpush1.msra.mxu0 0.0
  %5066 = vmatprep.subr.mxu0 0.0
  %5067 = vmatpush1.msra.mxu0 0.0
  %5068 = vmatprep.subr.mxu0 0.0
  %5069 = vmatpush1.msra.mxu0 0.0
  %5070 = vmatprep.subr.mxu0 0.0
  %5071 = vmatpush1.msra.mxu0 0.0
  %5072 = vmatprep.subr.mxu0 0.0
  %5073 = vmatpush1.msra.mxu0 0.0
  %5074 = vmatprep.subr.mxu0 0.0
  %5075 = vmatpush1.msra.mxu0 0.0
  %5076 = vmatprep.subr.mxu0 0.0
  %5077 = vmatpush1.msra.mxu0 0.0
  %5078 = vmatprep.subr.mxu0 0.0
  %5079 = vmatpush1.msra.mxu0 0.0
  %5080 = vmatprep.subr.mxu0 0.0
  %5081 = vmatpush1.msra.mxu0 0.0
  %5082 = vmatprep.subr.mxu0 0.0
  %5083 = vmatpush1.msra.mxu0 0.0
  %5084 = vmatprep.subr.mxu0 0.0
  %5085 = vmatpush1.msra.mxu0 0.0
  %5086 = vmatprep.subr.mxu0 0.0
  %5087 = vmatpush1.msra.mxu0 0.0
  %5088 = vmatprep.subr.mxu0 0.0
  %5089 = vmatpush1.msra.mxu0 0.0
  %5090 = vmatprep.subr.mxu0 0.0
  %5091 = vmatpush1.msra.mxu0 0.0
  %5092 = vmatprep.mubr.f32.mxu0 0.0
  %5093 = vmatmul.mubr.f32.gmra.mrb[0].mxu0 %v612
  %v5094 = vpop.f32.mrb[0].mxu0
  %v5095 = vadd.f32 0.0, %v5094
  %v5096 = vpop.f32.mrb[0].mxu0
  %5097 = vmatprep.mubr.f32.mxu0 0.0
  %5098 = vmatmul.mubr.f32.gmra.mrb[0].mxu0 %v615
  %v5099 = vpop.f32.mrb[0].mxu0
  %v5100 = vadd.f32 0.0, %v5099
  %v5101 = vpop.f32.mrb[0].mxu0
  %5102 = vmatprep.mubr.f32.mxu0 0.0
  %5103 = vmatmul.mubr.f32.gmra.mrb[0].mxu0 %v618
  %v5104 = vpop.f32.mrb[0].mxu0
  %v5105 = vadd.f32 0.0, %v5104
  %v5106 = vpop.f32.mrb[0].mxu0
  %5107 = vmatprep.mubr.f32.mxu0 0.0
  %5108 = vmatmul.mubr.f32.gmra.mrb[0].mxu0 %v621
  %v5109 = vpop.f32.mrb[0].mxu0
  %v5110 = vadd.f32 0.0, %v5109
  %v5111 = vpop.f32.mrb[0].mxu0
  %5112 = vmatprep.mubr.f32.mxu0 0.0
  %5113 = vmatmul.mubr.f32.gmra.mrb[0].mxu0 %v624
  %v5114 = vpop.f32.mrb[0].mxu0
  %v5115 = vadd.f32 0.0, %v5114
  %v5116 = vpop.f32.mrb[0].mxu0
  %5117 = vmatprep.mubr.f32.mxu0 0.0
  %5118 = vmatmul.mubr.f32.gmra.mrb[0].mxu0 %v627
  %v5119 = vpop.f32.mrb[0].mxu0
  %v5120 = vadd.f32 0.0, %v5119
  %v5121 = vpop.f32.mrb[0].mxu0
  %5122 = vdwg.mxu0
  %v5123 = vmul.f32 %v5095, %v78
  %v5124 = vmul.f32 %v5100, %v79
  %v5125 = vmul.f32 %v5105, %v80
  %v5126 = vmul.f32 %v5110, %v81
  %v5127 = vmul.f32 %v5115, %v82
  %v5128 = vmul.f32 %v5120, %v83
  %v5130 = vsel %vm109, %v4852, 0
  %5132 = vmatprep.subr.mxu0 0.0
  %5133 = vmatpush1.msra.mxu0 %v5123
  %5134 = vmatprep.subr.mxu0 0.0
  %5135 = vmatpush1.msra.mxu0 %v5124
  %5136 = vmatprep.subr.mxu0 0.0
  %5137 = vmatpush1.msra.mxu0 %v5125
  %5138 = vmatprep.subr.mxu0 0.0
  %5139 = vmatpush1.msra.mxu0 %v5126
  %5140 = vmatprep.subr.mxu0 0.0
  %5141 = vmatpush1.msra.mxu0 %v5127
  %5142 = vmatprep.subr.mxu0 0.0
  %5143 = vmatpush1.msra.mxu0 %v5128
  %5144 = vmatprep.subr.mxu0 0.0
  %5145 = vmatpush1.msra.mxu0 0.0
  %5146 = vmatprep.subr.mxu0 0.0
  %5147 = vmatpush1.msra.mxu0 0.0
  %5148 = vmatprep.subr.mxu0 0.0
  %5149 = vmatpush1.msra.mxu0 0.0
  %5150 = vmatprep.subr.mxu0 0.0
  %5151 = vmatpush1.msra.mxu0 0.0
  %5152 = vmatprep.subr.mxu0 0.0
  %5153 = vmatpush1.msra.mxu0 0.0
  %5154 = vmatprep.subr.mxu0 0.0
  %5155 = vmatpush1.msra.mxu0 0.0
  %5156 = vmatprep.subr.mxu0 0.0
  %5157 = vmatpush1.msra.mxu0 0.0
  %5158 = vmatprep.subr.mxu0 0.0
  %5159 = vmatpush1.msra.mxu0 0.0
  %5160 = vmatprep.subr.mxu0 0.0
  %5161 = vmatpush1.msra.mxu0 0.0
  %5162 = vmatprep.subr.mxu0 0.0
  %5163 = vmatpush1.msra.mxu0 0.0
  %5164 = vmatprep.subr.mxu0 0.0
  %5165 = vmatpush1.msra.mxu0 0.0
  %5166 = vmatprep.subr.mxu0 0.0
  %5167 = vmatpush1.msra.mxu0 0.0
  %5168 = vmatprep.subr.mxu0 0.0
  %5169 = vmatpush1.msra.mxu0 0.0
  %5170 = vmatprep.subr.mxu0 0.0
  %5171 = vmatpush1.msra.mxu0 0.0
  %5172 = vmatprep.subr.mxu0 0.0
  %5173 = vmatpush1.msra.mxu0 0.0
  %5174 = vmatprep.subr.mxu0 0.0
  %5175 = vmatpush1.msra.mxu0 0.0
  %5176 = vmatprep.subr.mxu0 0.0
  %5177 = vmatpush1.msra.mxu0 0.0
  %5178 = vmatprep.subr.mxu0 0.0
  %5179 = vmatpush1.msra.mxu0 0.0
  %5180 = vmatprep.subr.mxu0 0.0
  %5181 = vmatpush1.msra.mxu0 0.0
  %5182 = vmatprep.subr.mxu0 0.0
  %5183 = vmatpush1.msra.mxu0 0.0
  %5184 = vmatprep.subr.mxu0 0.0
  %5185 = vmatpush1.msra.mxu0 0.0
  %5186 = vmatprep.subr.mxu0 0.0
  %5187 = vmatpush1.msra.mxu0 0.0
  %5188 = vmatprep.subr.mxu0 0.0
  %5189 = vmatpush1.msra.mxu0 0.0
  %5190 = vmatprep.subr.mxu0 0.0
  %5191 = vmatpush1.msra.mxu0 0.0
  %5192 = vmatprep.subr.mxu0 0.0
  %5193 = vmatpush1.msra.mxu0 0.0
  %5194 = vmatprep.subr.mxu0 0.0
  %5195 = vmatpush1.msra.mxu0 0.0
  %5196 = vmatprep.mubr.f32.mxu0 0.0
  %5197 = vmatmul.mubr.f32.gmra.mrb[0].mxu0 %v5130
  %v5198 = vpop.f32.mrb[0].mxu0
  %v5199 = vadd.f32 0.0, %v5198
  %v5200 = vpop.f32.mrb[0].mxu0
  %5201 = vdwg.mxu0
  %v5202 = vtanh.pop %v5199
  %v5203 = vadd.f32 %v4363, %v5027
  %v5204 = vadd.f32 %v4364, %v5202
  %v5205 = vld [vmem:[%s10 + $0x90] sm:$0xff]
  %v5206 = vld [vmem:[%s10 + $0x98] sm:$0xff]
  %v5207 = vld [vmem:[%s10 + $0xa0] sm:$0xff]
  %v5208 = vld [vmem:[%s10 + $0xa8] sm:$0xff]
  %v5209 = vld [vmem:[%s10 + $0xb0] sm:$0xff]
  %v5210 = vld [vmem:[%s10 + $0xb8] sm:$0xff]
  %v5211 = vld [vmem:[%s11 + $0x90] sm:$0xff]
  %v5212 = vld [vmem:[%s11 + $0x98] sm:$0xff]
  %v5213 = vld [vmem:[%s11 + $0xa0] sm:$0xff]
  %v5214 = vld [vmem:[%s11 + $0xa8] sm:$0xff]
  %v5215 = vld [vmem:[%s11 + $0xb0] sm:$0xff]
  %v5216 = vld [vmem:[%s11 + $0xb8] sm:$0xff]
  %v5217 = vld [vmem:[%s12 + $0x90] sm:$0xff]
  %v5218 = vld [vmem:[%s12 + $0x98] sm:$0xff]
  %v5219 = vld [vmem:[%s12 + $0xa0] sm:$0xff]
  %v5220 = vld [vmem:[%s12 + $0xa8] sm:$0xff]
  %v5221 = vld [vmem:[%s12 + $0xb0] sm:$0xff]
  %v5222 = vld [vmem:[%s12 + $0xb8] sm:$0xff]
  %5223 = vmatprep.subr.mxu0 0.0
  %5224 = vmatpush1.msra.mxu0 %v5205
  %5225 = vmatprep.subr.mxu0 0.0
  %5226 = vmatpush1.msra.mxu0 %v5206
  %5227 = vmatprep.subr.mxu0 0.0
  %5228 = vmatpush1.msra.mxu0 %v5207
  %5229 = vmatprep.subr.mxu0 0.0
  %5230 = vmatpush1.msra.mxu0 %v5208
  %5231 = vmatprep.subr.mxu0 0.0
  %5232 = vmatpush1.msra.mxu0 %v5209
  %5233 = vmatprep.subr.mxu0 0.0
  %5234 = vmatpush1.msra.mxu0 %v5210
  %5235 = vmatprep.subr.mxu0 0.0
  %5236 = vmatpush1.msra.mxu0 0.0
  %5237 = vmatprep.subr.mxu0 0.0
  %5238 = vmatpush1.msra.mxu0 0.0
  %5239 = vmatprep.subr.mxu0 0.0
  %5240 = vmatpush1.msra.mxu0 0.0
  %5241 = vmatprep.subr.mxu0 0.0
  %5242 = vmatpush1.msra.mxu0 0.0
  %5243 = vmatprep.subr.mxu0 0.0
  %5244 = vmatpush1.msra.mxu0 0.0
  %5245 = vmatprep.subr.mxu0 0.0
  %5246 = vmatpush1.msra.mxu0 0.0
  %5247 = vmatprep.subr.mxu0 0.0
  %5248 = vmatpush1.msra.mxu0 0.0
  %5249 = vmatprep.subr.mxu0 0.0
  %5250 = vmatpush1.msra.mxu0 0.0
  %5251 = vmatprep.subr.mxu0 0.0
  %5252 = vmatpush1.msra.mxu0 0.0
  %5253 = vmatprep.subr.mxu0 0.0
  %5254 = vmatpush1.msra.mxu0 0.0
  %5255 = vmatprep.subr.mxu0 0.0
  %5256 = vmatpush1.msra.mxu0 0.0
  %5257 = vmatprep.subr.mxu0 0.0
  %5258 = vmatpush1.msra.mxu0 0.0
  %5259 = vmatprep.subr.mxu0 0.0
  %5260 = vmatpush1.msra.mxu0 0.0
  %5261 = vmatprep.subr.mxu0 0.0
  %5262 = vmatpush1.msra.mxu0 0.0
  %5263 = vmatprep.subr.mxu0 0.0
  %5264 = vmatpush1.msra.mxu0 0.0
  %5265 = vmatprep.subr.mxu0 0.0
  %5266 = vmatpush1.msra.mxu0 0.0
  %5267 = vmatprep.subr.mxu0 0.0
  %5268 = vmatpush1.msra.mxu0 0.0
  %5269 = vmatprep.subr.mxu0 0.0
  %5270 = vmatpush1.msra.mxu0 0.0
  %5271 = vmatprep.subr.mxu0 0.0
  %5272 = vmatpush1.msra.mxu0 0.0
  %5273 = vmatprep.subr.mxu0 0.0
  %5274 = vmatpush1.msra.mxu0 0.0
  %5275 = vmatprep.subr.mxu0 0.0
  %5276 = vmatpush1.msra.mxu0 0.0
  %5277 = vmatprep.subr.mxu0 0.0
  %5278 = vmatpush1.msra.mxu0 0.0
  %5279 = vmatprep.subr.mxu0 0.0
  %5280 = vmatpush1.msra.mxu0 0.0
  %5281 = vmatprep.subr.mxu0 0.0
  %5282 = vmatpush1.msra.mxu0 0.0
  %5283 = vmatprep.subr.mxu0 0.0
  %5284 = vmatpush1.msra.mxu0 0.0
  %5285 = vmatprep.subr.mxu0 0.0
  %5286 = vmatpush1.msra.mxu0 0.0
  %5287 = vmatprep.mubr.f32.mxu0 0.0
  %5288 = vmatmul.mubr.f32.gmra.mrb[0].mxu0 %v111
  %v5289 = vpop.f32.mrb[0].mxu0
  %v5290 = vadd.f32 0.0, %v5289
  %v5291 = vpop.f32.mrb[0].mxu0
  %5292 = vmatprep.mubr.f32.mxu0 0.0
  %5293 = vmatmul.mubr.f32.gmra.mrb[0].mxu0 %v114
  %v5294 = vpop.f32.mrb[0].mxu0
  %v5295 = vadd.f32 0.0, %v5294
  %v5296 = vpop.f32.mrb[0].mxu0
  %5297 = vdwg.mxu0
  %v5299 = vsel %vm109, %v5290, 0
  %v5302 = vsel %vm109, %v5295, 0
  %5304 = vmatprep.subr.mxu0 0.0
  %5305 = vmatpush1.msra.mxu0 %v5217
  %5306 = vmatprep.subr.mxu0 0.0
  %5307 = vmatpush1.msra.mxu0 %v5218
  %5308 = vmatprep.subr.mxu0 0.0
  %5309 = vmatpush1.msra.mxu0 %v5219
  %5310 = vmatprep.subr.mxu0 0.0
  %5311 = vmatpush1.msra.mxu0 %v5220
  %5312 = vmatprep.subr.mxu0 0.0
  %5313 = vmatpush1.msra.mxu0 %v5221
  %5314 = vmatprep.subr.mxu0 0.0
  %5315 = vmatpush1.msra.mxu0 %v5222
  %5316 = vmatprep.subr.mxu0 0.0
  %5317 = vmatpush1.msra.mxu0 0.0
  %5318 = vmatprep.subr.mxu0 0.0
  %5319 = vmatpush1.msra.mxu0 0.0
  %5320 = vmatprep.subr.mxu0 0.0
  %5321 = vmatpush1.msra.mxu0 0.0
  %5322 = vmatprep.subr.mxu0 0.0
  %5323 = vmatpush1.msra.mxu0 0.0
  %5324 = vmatprep.subr.mxu0 0.0
  %5325 = vmatpush1.msra.mxu0 0.0
  %5326 = vmatprep.subr.mxu0 0.0
  %5327 = vmatpush1.msra.mxu0 0.0
  %5328 = vmatprep.subr.mxu0 0.0
  %5329 = vmatpush1.msra.mxu0 0.0
  %5330 = vmatprep.subr.mxu0 0.0
  %5331 = vmatpush1.msra.mxu0 0.0
  %5332 = vmatprep.subr.mxu0 0.0
  %5333 = vmatpush1.msra.mxu0 0.0
  %5334 = vmatprep.subr.mxu0 0.0
  %5335 = vmatpush1.msra.mxu0 0.0
  %5336 = vmatprep.subr.mxu0 0.0
  %5337 = vmatpush1.msra.mxu0 0.0
  %5338 = vmatprep.subr.mxu0 0.0
  %5339 = vmatpush1.msra.mxu0 0.0
  %5340 = vmatprep.subr.mxu0 0.0
  %5341 = vmatpush1.msra.mxu0 0.0
  %5342 = vmatprep.subr.mxu0 0.0
  %5343 = vmatpush1.msra.mxu0 0.0
  %5344 = vmatprep.subr.mxu0 0.0
  %5345 = vmatpush1.msra.mxu0 0.0
  %5346 = vmatprep.subr.mxu0 0.0
  %5347 = vmatpush1.msra.mxu0 0.0
  %5348 = vmatprep.subr.mxu0 0.0
  %5349 = vmatpush1.msra.mxu0 0.0
  %5350 = vmatprep.subr.mxu0 0.0
  %5351 = vmatpush1.msra.mxu0 0.0
  %5352 = vmatprep.subr.mxu0 0.0
  %5353 = vmatpush1.msra.mxu0 0.0
  %5354 = vmatprep.subr.mxu0 0.0
  %5355 = vmatpush1.msra.mxu0 0.0
  %5356 = vmatprep.subr.mxu0 0.0
  %5357 = vmatpush1.msra.mxu0 0.0
  %5358 = vmatprep.subr.mxu0 0.0
  %5359 = vmatpush1.msra.mxu0 0.0
  %5360 = vmatprep.subr.mxu0 0.0
  %5361 = vmatpush1.msra.mxu0 0.0
  %5362 = vmatprep.subr.mxu0 0.0
  %5363 = vmatpush1.msra.mxu0 0.0
  %5364 = vmatprep.subr.mxu0 0.0
  %5365 = vmatpush1.msra.mxu0 0.0
  %5366 = vmatprep.subr.mxu0 0.0
  %5367 = vmatpush1.msra.mxu0 0.0
  %5368 = vmatprep.mubr.f32.mxu0 0.0
  %5369 = vmatmul.mubr.f32.gmra.mrb[0].mxu0 %v5299
  %v5370 = vpop.f32.mrb[0].mxu0
  %v5371 = vadd.f32 0.0, %v5370
  %v5372 = vpop.f32.mrb[0].mxu0
  %5373 = vmatprep.mubr.f32.mxu0 0.0
  %5374 = vmatmul.mubr.f32.gmra.mrb[0].mxu0 %v5302
  %v5375 = vpop.f32.mrb[0].mxu0
  %v5376 = vadd.f32 0.0, %v5375
  %v5377 = vpop.f32.mrb[0].mxu0
  %5378 = vdwg.mxu0
  %v5379 = vmul.f32 %v5371, %v68
  %v5380 = vmul.f32 %v5376, %v69
  %5381 = vmatprep.subr.mxu0 0.0
  %5382 = vmatpush1.msra.mxu0 %v5379
  %5383 = vmatprep.subr.mxu0 0.0
  %5384 = vmatpush1.msra.mxu0 %v5380
  %5385 = vmatprep.subr.mxu0 0.0
  %5386 = vmatpush1.msra.mxu0 0.0
  %5387 = vmatprep.subr.mxu0 0.0
  %5388 = vmatpush1.msra.mxu0 0.0
  %5389 = vmatprep.subr.mxu0 0.0
  %5390 = vmatpush1.msra.mxu0 0.0
  %5391 = vmatprep.subr.mxu0 0.0
  %5392 = vmatpush1.msra.mxu0 0.0
  %5393 = vmatprep.subr.mxu0 0.0
  %5394 = vmatpush1.msra.mxu0 0.0
  %5395 = vmatprep.subr.mxu0 0.0
  %5396 = vmatpush1.msra.mxu0 0.0
  %5397 = vmatprep.subr.mxu0 0.0
  %5398 = vmatpush1.msra.mxu0 0.0
  %5399 = vmatprep.subr.mxu0 0.0
  %5400 = vmatpush1.msra.mxu0 0.0
  %5401 = vmatprep.subr.mxu0 0.0
  %5402 = vmatpush1.msra.mxu0 0.0
  %5403 = vmatprep.subr.mxu0 0.0
  %5404 = vmatpush1.msra.mxu0 0.0
  %5405 = vmatprep.subr.mxu0 0.0
  %5406 = vmatpush1.msra.mxu0 0.0
  %5407 = vmatprep.subr.mxu0 0.0
  %5408 = vmatpush1.msra.mxu0 0.0
  %5409 = vmatprep.subr.mxu0 0.0
  %5410 = vmatpush1.msra.mxu0 0.0
  %5411 = vmatprep.subr.mxu0 0.0
  %5412 = vmatpush1.msra.mxu0 0.0
  %5413 = vmatprep.subr.mxu0 0.0
  %5414 = vmatpush1.msra.mxu0 0.0
  %5415 = vmatprep.subr.mxu0 0.0
  %5416 = vmatpush1.msra.mxu0 0.0
  %5417 = vmatprep.subr.mxu0 0.0
  %5418 = vmatpush1.msra.mxu0 0.0
  %5419 = vmatprep.subr.mxu0 0.0
  %5420 = vmatpush1.msra.mxu0 0.0
  %5421 = vmatprep.subr.mxu0 0.0
  %5422 = vmatpush1.msra.mxu0 0.0
  %5423 = vmatprep.subr.mxu0 0.0
  %5424 = vmatpush1.msra.mxu0 0.0
  %5425 = vmatprep.subr.mxu0 0.0
  %5426 = vmatpush1.msra.mxu0 0.0
  %5427 = vmatprep.subr.mxu0 0.0
  %5428 = vmatpush1.msra.mxu0 0.0
  %5429 = vmatprep.subr.mxu0 0.0
  %5430 = vmatpush1.msra.mxu0 0.0
  %5431 = vmatprep.subr.mxu0 0.0
  %5432 = vmatpush1.msra.mxu0 0.0
  %5433 = vmatprep.subr.mxu0 0.0
  %5434 = vmatpush1.msra.mxu0 0.0
  %5435 = vmatprep.subr.mxu0 0.0
  %5436 = vmatpush1.msra.mxu0 0.0
  %5437 = vmatprep.subr.mxu0 0.0
  %5438 = vmatpush1.msra.mxu0 0.0
  %5439 = vmatprep.subr.mxu0 0.0
  %5440 = vmatpush1.msra.mxu0 0.0
  %5441 = vmatprep.subr.mxu0 0.0
  %5442 = vmatpush1.msra.mxu0 0.0
  %5443 = vmatprep.subr.mxu0 0.0
  %5444 = vmatpush1.msra.mxu0 0.0
  %5445 = vmatprep.mubr.f32.mxu0 0.0
  %5446 = vmatmul.mubr.f32.gmra.mrb[0].mxu0 %v276
  %v5447 = vpop.f32.mrb[0].mxu0
  %v5448 = vadd.f32 0.0, %v5447
  %v5449 = vpop.f32.mrb[0].mxu0
  %5450 = vmatprep.mubr.f32.mxu0 0.0
  %5451 = vmatmul.mubr.f32.gmra.mrb[0].mxu0 %v279
  %v5452 = vpop.f32.mrb[0].mxu0
  %v5453 = vadd.f32 0.0, %v5452
  %v5454 = vpop.f32.mrb[0].mxu0
  %5455 = vdwg.mxu0
  %5456 = vmatprep.subr.mxu0 0.0
  %5457 = vmatpush1.msra.mxu0 %v5211
  %5458 = vmatprep.subr.mxu0 0.0
  %5459 = vmatpush1.msra.mxu0 %v5212
  %5460 = vmatprep.subr.mxu0 0.0
  %5461 = vmatpush1.msra.mxu0 %v5213
  %5462 = vmatprep.subr.mxu0 0.0
  %5463 = vmatpush1.msra.mxu0 %v5214
  %5464 = vmatprep.subr.mxu0 0.0
  %5465 = vmatpush1.msra.mxu0 %v5215
  %5466 = vmatprep.subr.mxu0 0.0
  %5467 = vmatpush1.msra.mxu0 %v5216
  %5468 = vmatprep.subr.mxu0 0.0
  %5469 = vmatpush1.msra.mxu0 0.0
  %5470 = vmatprep.subr.mxu0 0.0
  %5471 = vmatpush1.msra.mxu0 0.0
  %5472 = vmatprep.subr.mxu0 0.0
  %5473 = vmatpush1.msra.mxu0 0.0
  %5474 = vmatprep.subr.mxu0 0.0
  %5475 = vmatpush1.msra.mxu0 0.0
  %5476 = vmatprep.subr.mxu0 0.0
  %5477 = vmatpush1.msra.mxu0 0.0
  %5478 = vmatprep.subr.mxu0 0.0
  %5479 = vmatpush1.msra.mxu0 0.0
  %5480 = vmatprep.subr.mxu0 0.0
  %5481 = vmatpush1.msra.mxu0 0.0
  %5482 = vmatprep.subr.mxu0 0.0
  %5483 = vmatpush1.msra.mxu0 0.0
  %5484 = vmatprep.subr.mxu0 0.0
  %5485 = vmatpush1.msra.mxu0 0.0
  %5486 = vmatprep.subr.mxu0 0.0
  %5487 = vmatpush1.msra.mxu0 0.0
  %5488 = vmatprep.subr.mxu0 0.0
  %5489 = vmatpush1.msra.mxu0 0.0
  %5490 = vmatprep.subr.mxu0 0.0
  %5491 = vmatpush1.msra.mxu0 0.0
  %5492 = vmatprep.subr.mxu0 0.0
  %5493 = vmatpush1.msra.mxu0 0.0
  %5494 = vmatprep.subr.mxu0 0.0
  %5495 = vmatpush1.msra.mxu0 0.0
  %5496 = vmatprep.subr.mxu0 0.0
  %5497 = vmatpush1.msra.mxu0 0.0
  %5498 = vmatprep.subr.mxu0 0.0
  %5499 = vmatpush1.msra.mxu0 0.0
  %5500 = vmatprep.subr.mxu0 0.0
  %5501 = vmatpush1.msra.mxu0 0.0
  %5502 = vmatprep.subr.mxu0 0.0
  %5503 = vmatpush1.msra.mxu0 0.0
  %5504 = vmatprep.subr.mxu0 0.0
  %5505 = vmatpush1.msra.mxu0 0.0
  %5506 = vmatprep.subr.mxu0 0.0
  %5507 = vmatpush1.msra.mxu0 0.0
  %5508 = vmatprep.subr.mxu0 0.0
  %5509 = vmatpush1.msra.mxu0 0.0
  %5510 = vmatprep.subr.mxu0 0.0
  %5511 = vmatpush1.msra.mxu0 0.0
  %5512 = vmatprep.subr.mxu0 0.0
  %5513 = vmatpush1.msra.mxu0 0.0
  %5514 = vmatprep.subr.mxu0 0.0
  %5515 = vmatpush1.msra.mxu0 0.0
  %5516 = vmatprep.subr.mxu0 0.0
  %5517 = vmatpush1.msra.mxu0 0.0
  %5518 = vmatprep.subr.mxu0 0.0
  %5519 = vmatpush1.msra.mxu0 0.0
  %5520 = vmatprep.mubr.f32.mxu0 0.0
  %5521 = vmatmul.mubr.f32.gmra.mrb[0].mxu0 %v5299
  %v5522 = vpop.f32.mrb[0].mxu0
  %v5523 = vadd.f32 %v5448, %v5522
  %v5524 = vpop.f32.mrb[0].mxu0
  %5525 = vmatprep.mubr.f32.mxu0 0.0
  %5526 = vmatmul.mubr.f32.gmra.mrb[0].mxu0 %v5302
  %v5527 = vpop.f32.mrb[0].mxu0
  %v5528 = vadd.f32 %v5453, %v5527
  %v5529 = vpop.f32.mrb[0].mxu0
  %5530 = vdwg.mxu0
  %v5531 = vtanh.pop %v5523
  %v5532 = vtanh.pop %v5528
  %v5533 = vsel %vm66, -1e-08, %v5531
  %v5534 = vsel %vm67, -1e-08, %v5532
  %v5535 = vmul.f32 %v5533, 1.442695
  %v5536 = vpow.pop %v5535
  %v5537 = vmul.f32 %v5534, 1.442695
  %v5538 = vpow.pop %v5537
  %v5540 = vsel %vm109, %v5536, 0
  %v5543 = vsel %vm109, %v5538, 0
  %5545 = vmatprep.subr.mxu0 0.0
  %5546 = vmatpush1.msra.mxu0 %v84
  %5547 = vmatprep.subr.mxu0 0.0
  %5548 = vmatpush1.msra.mxu0 %v85
  %5549 = vmatprep.subr.mxu0 0.0
  %5550 = vmatpush1.msra.mxu0 %v86
  %5551 = vmatprep.subr.mxu0 0.0
  %5552 = vmatpush1.msra.mxu0 %v87
  %5553 = vmatprep.subr.mxu0 0.0
  %5554 = vmatpush1.msra.mxu0 %v88
  %5555 = vmatprep.subr.mxu0 0.0
  %5556 = vmatpush1.msra.mxu0 %v89
  %5557 = vmatprep.subr.mxu0 0.0
  %5558 = vmatpush1.msra.mxu0 0.0
  %5559 = vmatprep.subr.mxu0 0.0
  %5560 = vmatpush1.msra.mxu0 0.0
  %5561 = vmatprep.subr.mxu0 0.0
  %5562 = vmatpush1.msra.mxu0 0.0
  %5563 = vmatprep.subr.mxu0 0.0
  %5564 = vmatpush1.msra.mxu0 0.0
  %5565 = vmatprep.subr.mxu0 0.0
  %5566 = vmatpush1.msra.mxu0 0.0
  %5567 = vmatprep.subr.mxu0 0.0
  %5568 = vmatpush1.msra.mxu0 0.0
  %5569 = vmatprep.subr.mxu0 0.0
  %5570 = vmatpush1.msra.mxu0 0.0
  %5571 = vmatprep.subr.mxu0 0.0
  %5572 = vmatpush1.msra.mxu0 0.0
  %5573 = vmatprep.subr.mxu0 0.0
  %5574 = vmatpush1.msra.mxu0 0.0
  %5575 = vmatprep.subr.mxu0 0.0
  %5576 = vmatpush1.msra.mxu0 0.0
  %5577 = vmatprep.subr.mxu0 0.0
  %5578 = vmatpush1.msra.mxu0 0.0
  %5579 = vmatprep.subr.mxu0 0.0
  %5580 = vmatpush1.msra.mxu0 0.0
  %5581 = vmatprep.subr.mxu0 0.0
  %5582 = vmatpush1.msra.mxu0 0.0
  %5583 = vmatprep.subr.mxu0 0.0
  %5584 = vmatpush1.msra.mxu0 0.0
  %5585 = vmatprep.subr.mxu0 0.0
  %5586 = vmatpush1.msra.mxu0 0.0
  %5587 = vmatprep.subr.mxu0 0.0
  %5588 = vmatpush1.msra.mxu0 0.0
  %5589 = vmatprep.subr.mxu0 0.0
  %5590 = vmatpush1.msra.mxu0 0.0
  %5591 = vmatprep.subr.mxu0 0.0
  %5592 = vmatpush1.msra.mxu0 0.0
  %5593 = vmatprep.subr.mxu0 0.0
  %5594 = vmatpush1.msra.mxu0 0.0
  %5595 = vmatprep.subr.mxu0 0.0
  %5596 = vmatpush1.msra.mxu0 0.0
  %5597 = vmatprep.subr.mxu0 0.0
  %5598 = vmatpush1.msra.mxu0 0.0
  %5599 = vmatprep.subr.mxu0 0.0
  %5600 = vmatpush1.msra.mxu0 0.0
  %5601 = vmatprep.subr.mxu0 0.0
  %5602 = vmatpush1.msra.mxu0 0.0
  %5603 = vmatprep.subr.mxu0 0.0
  %5604 = vmatpush1.msra.mxu0 0.0
  %5605 = vmatprep.subr.mxu0 0.0
  %5606 = vmatpush1.msra.mxu0 0.0
  %5607 = vmatprep.subr.mxu0 0.0
  %5608 = vmatpush1.msra.mxu0 0.0
  %5609 = vmatprep.mubr.f32.mxu0 0.0
  %5610 = vmatmul.mubr.f32.gmra.mrb[0].mxu0 %v5540
  %v5611 = vpop.f32.mrb[0].mxu0
  %v5612 = vadd.f32 0.0, %v5611
  %v5613 = vpop.f32.mrb[0].mxu0
  %5614 = vmatprep.mubr.f32.mxu0 0.0
  %5615 = vmatmul.mubr.f32.gmra.mrb[0].mxu0 %v5543
  %v5616 = vpop.f32.mrb[0].mxu0
  %v5617 = vadd.f32 0.0, %v5616
  %v5618 = vpop.f32.mrb[0].mxu0
  %5619 = vdwg.mxu0
  %v5621 = vsel %vm520, %v5612, 0
  %v5624 = vsel %vm520, %v5617, 0
  %5626 = vmatprep.subr.mxu0 0.0
  %5627 = vmatpush1.msra.mxu0 %v529
  %5628 = vmatprep.subr.mxu0 0.0
  %5629 = vmatpush1.msra.mxu0 0.0
  %5630 = vmatprep.subr.mxu0 0.0
  %5631 = vmatpush1.msra.mxu0 0.0
  %5632 = vmatprep.subr.mxu0 0.0
  %5633 = vmatpush1.msra.mxu0 0.0
  %5634 = vmatprep.subr.mxu0 0.0
  %5635 = vmatpush1.msra.mxu0 0.0
  %5636 = vmatprep.subr.mxu0 0.0
  %5637 = vmatpush1.msra.mxu0 0.0
  %5638 = vmatprep.subr.mxu0 0.0
  %5639 = vmatpush1.msra.mxu0 0.0
  %5640 = vmatprep.subr.mxu0 0.0
  %5641 = vmatpush1.msra.mxu0 0.0
  %5642 = vmatprep.subr.mxu0 0.0
  %5643 = vmatpush1.msra.mxu0 0.0
  %5644 = vmatprep.subr.mxu0 0.0
  %5645 = vmatpush1.msra.mxu0 0.0
  %5646 = vmatprep.subr.mxu0 0.0
  %5647 = vmatpush1.msra.mxu0 0.0
  %5648 = vmatprep.subr.mxu0 0.0
  %5649 = vmatpush1.msra.mxu0 0.0
  %5650 = vmatprep.subr.mxu0 0.0
  %5651 = vmatpush1.msra.mxu0 0.0
  %5652 = vmatprep.subr.mxu0 0.0
  %5653 = vmatpush1.msra.mxu0 0.0
  %5654 = vmatprep.subr.mxu0 0.0
  %5655 = vmatpush1.msra.mxu0 0.0
  %5656 = vmatprep.subr.mxu0 0.0
  %5657 = vmatpush1.msra.mxu0 0.0
  %5658 = vmatprep.subr.mxu0 0.0
  %5659 = vmatpush1.msra.mxu0 0.0
  %5660 = vmatprep.subr.mxu0 0.0
  %5661 = vmatpush1.msra.mxu0 0.0
  %5662 = vmatprep.subr.mxu0 0.0
  %5663 = vmatpush1.msra.mxu0 0.0
  %5664 = vmatprep.subr.mxu0 0.0
  %5665 = vmatpush1.msra.mxu0 0.0
  %5666 = vmatprep.subr.mxu0 0.0
  %5667 = vmatpush1.msra.mxu0 0.0
  %5668 = vmatprep.subr.mxu0 0.0
  %5669 = vmatpush1.msra.mxu0 0.0
  %5670 = vmatprep.subr.mxu0 0.0
  %5671 = vmatpush1.msra.mxu0 0.0
  %5672 = vmatprep.subr.mxu0 0.0
  %5673 = vmatpush1.msra.mxu0 0.0
  %5674 = vmatprep.subr.mxu0 0.0
  %5675 = vmatpush1.msra.mxu0 0.0
  %5676 = vmatprep.subr.mxu0 0.0
  %5677 = vmatpush1.msra.mxu0 0.0
  %5678 = vmatprep.subr.mxu0 0.0
  %5679 = vmatpush1.msra.mxu0 0.0
  %5680 = vmatprep.subr.mxu0 0.0
  %5681 = vmatpush1.msra.mxu0 0.0
  %5682 = vmatprep.subr.mxu0 0.0
  %5683 = vmatpush1.msra.mxu0 0.0
  %5684 = vmatprep.subr.mxu0 0.0
  %5685 = vmatpush1.msra.mxu0 0.0
  %5686 = vmatprep.subr.mxu0 0.0
  %5687 = vmatpush1.msra.mxu0 0.0
  %5688 = vmatprep.subr.mxu0 0.0
  %5689 = vmatpush1.msra.mxu0 0.0
  %5690 = vmatprep.mubr.f32.mxu0 0.0
  %5691 = vmatmul.mubr.f32.gmra.mrb[0].mxu0 %v5621
  %v5692 = vpop.f32.mrb[0].mxu0
  %v5693 = vadd.f32 0.0, %v5692
  %v5694 = vpop.f32.mrb[0].mxu0
  %5695 = vmatprep.mubr.f32.mxu0 0.0
  %5696 = vmatmul.mubr.f32.gmra.mrb[0].mxu0 %v5624
  %v5697 = vpop.f32.mrb[0].mxu0
  %v5698 = vadd.f32 0.0, %v5697
  %v5699 = vpop.f32.mrb[0].mxu0
  %5700 = vdwg.mxu0
  %v5701 = vrcp.pop %v5693
  %v5702 = vmul.f32 %v5536, %v5701
  %v5703 = vrcp.pop %v5698
  %v5704 = vmul.f32 %v5538, %v5703
  %5705 = vmatprep.subr.mxu0 0.0
  %5706 = vmatpush1.msra.mxu0 %v5290
  %5707 = vmatprep.subr.mxu0 0.0
  %5708 = vmatpush1.msra.mxu0 0.0
  %5709 = vmatprep.subr.mxu0 0.0
  %5710 = vmatpush1.msra.mxu0 0.0
  %5711 = vmatprep.subr.mxu0 0.0
  %5712 = vmatpush1.msra.mxu0 0.0
  %5713 = vmatprep.subr.mxu0 0.0
  %5714 = vmatpush1.msra.mxu0 0.0
  %5715 = vmatprep.subr.mxu0 0.0
  %5716 = vmatpush1.msra.mxu0 0.0
  %5717 = vmatprep.subr.mxu0 0.0
  %5718 = vmatpush1.msra.mxu0 0.0
  %5719 = vmatprep.subr.mxu0 0.0
  %5720 = vmatpush1.msra.mxu0 0.0
  %5721 = vmatprep.subr.mxu0 0.0
  %5722 = vmatpush1.msra.mxu0 0.0
  %5723 = vmatprep.subr.mxu0 0.0
  %5724 = vmatpush1.msra.mxu0 0.0
  %5725 = vmatprep.subr.mxu0 0.0
  %5726 = vmatpush1.msra.mxu0 0.0
  %5727 = vmatprep.subr.mxu0 0.0
  %5728 = vmatpush1.msra.mxu0 0.0
  %5729 = vmatprep.subr.mxu0 0.0
  %5730 = vmatpush1.msra.mxu0 0.0
  %5731 = vmatprep.subr.mxu0 0.0
  %5732 = vmatpush1.msra.mxu0 0.0
  %5733 = vmatprep.subr.mxu0 0.0
  %5734 = vmatpush1.msra.mxu0 0.0
  %5735 = vmatprep.subr.mxu0 0.0
  %5736 = vmatpush1.msra.mxu0 0.0
  %5737 = vmatprep.subr.mxu0 0.0
  %5738 = vmatpush1.msra.mxu0 0.0
  %5739 = vmatprep.subr.mxu0 0.0
  %5740 = vmatpush1.msra.mxu0 0.0
  %5741 = vmatprep.subr.mxu0 0.0
  %5742 = vmatpush1.msra.mxu0 0.0
  %5743 = vmatprep.subr.mxu0 0.0
  %5744 = vmatpush1.msra.mxu0 0.0
  %5745 = vmatprep.subr.mxu0 0.0
  %5746 = vmatpush1.msra.mxu0 0.0
  %5747 = vmatprep.subr.mxu0 0.0
  %5748 = vmatpush1.msra.mxu0 0.0
  %5749 = vmatprep.subr.mxu0 0.0
  %5750 = vmatpush1.msra.mxu0 0.0
  %5751 = vmatprep.subr.mxu0 0.0
  %5752 = vmatpush1.msra.mxu0 0.0
  %5753 = vmatprep.subr.mxu0 0.0
  %5754 = vmatpush1.msra.mxu0 0.0
  %5755 = vmatprep.subr.mxu0 0.0
  %5756 = vmatpush1.msra.mxu0 0.0
  %5757 = vmatprep.subr.mxu0 0.0
  %5758 = vmatpush1.msra.mxu0 0.0
  %5759 = vmatprep.subr.mxu0 0.0
  %5760 = vmatpush1.msra.mxu0 0.0
  %5761 = vmatprep.subr.mxu0 0.0
  %5762 = vmatpush1.msra.mxu0 0.0
  %5763 = vmatprep.subr.mxu0 0.0
  %5764 = vmatpush1.msra.mxu0 0.0
  %5765 = vmatprep.subr.mxu0 0.0
  %5766 = vmatpush1.msra.mxu0 0.0
  %5767 = vmatprep.subr.mxu0 0.0
  %5768 = vmatpush1.msra.mxu0 0.0
  %5769 = vmatprep.mubr.f32.mxu0 0.0
  %5770 = vmatmul.mubr.f32.gmra.mrb[0].mxu0 %v612
  %v5771 = vpop.f32.mrb[0].mxu0
  %v5772 = vadd.f32 0.0, %v5771
  %v5773 = vpop.f32.mrb[0].mxu0
  %5774 = vmatprep.mubr.f32.mxu0 0.0
  %5775 = vmatmul.mubr.f32.gmra.mrb[0].mxu0 %v615
  %v5776 = vpop.f32.mrb[0].mxu0
  %v5777 = vadd.f32 0.0, %v5776
  %v5778 = vpop.f32.mrb[0].mxu0
  %5779 = vmatprep.mubr.f32.mxu0 0.0
  %5780 = vmatmul.mubr.f32.gmra.mrb[0].mxu0 %v618
  %v5781 = vpop.f32.mrb[0].mxu0
  %v5782 = vadd.f32 0.0, %v5781
  %v5783 = vpop.f32.mrb[0].mxu0
  %5784 = vmatprep.mubr.f32.mxu0 0.0
  %5785 = vmatmul.mubr.f32.gmra.mrb[0].mxu0 %v621
  %v5786 = vpop.f32.mrb[0].mxu0
  %v5787 = vadd.f32 0.0, %v5786
  %v5788 = vpop.f32.mrb[0].mxu0
  %5789 = vmatprep.mubr.f32.mxu0 0.0
  %5790 = vmatmul.mubr.f32.gmra.mrb[0].mxu0 %v624
  %v5791 = vpop.f32.mrb[0].mxu0
  %v5792 = vadd.f32 0.0, %v5791
  %v5793 = vpop.f32.mrb[0].mxu0
  %5794 = vmatprep.mubr.f32.mxu0 0.0
  %5795 = vmatmul.mubr.f32.gmra.mrb[0].mxu0 %v627
  %v5796 = vpop.f32.mrb[0].mxu0
  %v5797 = vadd.f32 0.0, %v5796
  %v5798 = vpop.f32.mrb[0].mxu0
  %5799 = vdwg.mxu0
  %v5800 = vmul.f32 %v5772, %v78
  %v5801 = vmul.f32 %v5777, %v79
  %v5802 = vmul.f32 %v5782, %v80
  %v5803 = vmul.f32 %v5787, %v81
  %v5804 = vmul.f32 %v5792, %v82
  %v5805 = vmul.f32 %v5797, %v83
  %v5807 = vsel %vm109, %v5702, 0
  %5809 = vmatprep.subr.mxu0 0.0
  %5810 = vmatpush1.msra.mxu0 %v5800
  %5811 = vmatprep.subr.mxu0 0.0
  %5812 = vmatpush1.msra.mxu0 %v5801
  %5813 = vmatprep.subr.mxu0 0.0
  %5814 = vmatpush1.msra.mxu0 %v5802
  %5815 = vmatprep.subr.mxu0 0.0
  %5816 = vmatpush1.msra.mxu0 %v5803
  %5817 = vmatprep.subr.mxu0 0.0
  %5818 = vmatpush1.msra.mxu0 %v5804
  %5819 = vmatprep.subr.mxu0 0.0
  %5820 = vmatpush1.msra.mxu0 %v5805
  %5821 = vmatprep.subr.mxu0 0.0
  %5822 = vmatpush1.msra.mxu0 0.0
  %5823 = vmatprep.subr.mxu0 0.0
  %5824 = vmatpush1.msra.mxu0 0.0
  %5825 = vmatprep.subr.mxu0 0.0
  %5826 = vmatpush1.msra.mxu0 0.0
  %5827 = vmatprep.subr.mxu0 0.0
  %5828 = vmatpush1.msra.mxu0 0.0
  %5829 = vmatprep.subr.mxu0 0.0
  %5830 = vmatpush1.msra.mxu0 0.0
  %5831 = vmatprep.subr.mxu0 0.0
  %5832 = vmatpush1.msra.mxu0 0.0
  %5833 = vmatprep.subr.mxu0 0.0
  %5834 = vmatpush1.msra.mxu0 0.0
  %5835 = vmatprep.subr.mxu0 0.0
  %5836 = vmatpush1.msra.mxu0 0.0
  %5837 = vmatprep.subr.mxu0 0.0
  %5838 = vmatpush1.msra.mxu0 0.0
  %5839 = vmatprep.subr.mxu0 0.0
  %5840 = vmatpush1.msra.mxu0 0.0
  %5841 = vmatprep.subr.mxu0 0.0
  %5842 = vmatpush1.msra.mxu0 0.0
  %5843 = vmatprep.subr.mxu0 0.0
  %5844 = vmatpush1.msra.mxu0 0.0
  %5845 = vmatprep.subr.mxu0 0.0
  %5846 = vmatpush1.msra.mxu0 0.0
  %5847 = vmatprep.subr.mxu0 0.0
  %5848 = vmatpush1.msra.mxu0 0.0
  %5849 = vmatprep.subr.mxu0 0.0
  %5850 = vmatpush1.msra.mxu0 0.0
  %5851 = vmatprep.subr.mxu0 0.0
  %5852 = vmatpush1.msra.mxu0 0.0
  %5853 = vmatprep.subr.mxu0 0.0
  %5854 = vmatpush1.msra.mxu0 0.0
  %5855 = vmatprep.subr.mxu0 0.0
  %5856 = vmatpush1.msra.mxu0 0.0
  %5857 = vmatprep.subr.mxu0 0.0
  %5858 = vmatpush1.msra.mxu0 0.0
  %5859 = vmatprep.subr.mxu0 0.0
  %5860 = vmatpush1.msra.mxu0 0.0
  %5861 = vmatprep.subr.mxu0 0.0
  %5862 = vmatpush1.msra.mxu0 0.0
  %5863 = vmatprep.subr.mxu0 0.0
  %5864 = vmatpush1.msra.mxu0 0.0
  %5865 = vmatprep.subr.mxu0 0.0
  %5866 = vmatpush1.msra.mxu0 0.0
  %5867 = vmatprep.subr.mxu0 0.0
  %5868 = vmatpush1.msra.mxu0 0.0
  %5869 = vmatprep.subr.mxu0 0.0
  %5870 = vmatpush1.msra.mxu0 0.0
  %5871 = vmatprep.subr.mxu0 0.0
  %5872 = vmatpush1.msra.mxu0 0.0
  %5873 = vmatprep.mubr.f32.mxu0 0.0
  %5874 = vmatmul.mubr.f32.gmra.mrb[0].mxu0 %v5807
  %v5875 = vpop.f32.mrb[0].mxu0
  %v5876 = vadd.f32 0.0, %v5875
  %v5877 = vpop.f32.mrb[0].mxu0
  %5878 = vdwg.mxu0
  %v5879 = vtanh.pop %v5876
  %5880 = vmatprep.subr.mxu0 0.0
  %5881 = vmatpush1.msra.mxu0 %v5295
  %5882 = vmatprep.subr.mxu0 0.0
  %5883 = vmatpush1.msra.mxu0 0.0
  %5884 = vmatprep.subr.mxu0 0.0
  %5885 = vmatpush1.msra.mxu0 0.0
  %5886 = vmatprep.subr.mxu0 0.0
  %5887 = vmatpush1.msra.mxu0 0.0
  %5888 = vmatprep.subr.mxu0 0.0
  %5889 = vmatpush1.msra.mxu0 0.0
  %5890 = vmatprep.subr.mxu0 0.0
  %5891 = vmatpush1.msra.mxu0 0.0
  %5892 = vmatprep.subr.mxu0 0.0
  %5893 = vmatpush1.msra.mxu0 0.0
  %5894 = vmatprep.subr.mxu0 0.0
  %5895 = vmatpush1.msra.mxu0 0.0
  %5896 = vmatprep.subr.mxu0 0.0
  %5897 = vmatpush1.msra.mxu0 0.0
  %5898 = vmatprep.subr.mxu0 0.0
  %5899 = vmatpush1.msra.mxu0 0.0
  %5900 = vmatprep.subr.mxu0 0.0
  %5901 = vmatpush1.msra.mxu0 0.0
  %5902 = vmatprep.subr.mxu0 0.0
  %5903 = vmatpush1.msra.mxu0 0.0
  %5904 = vmatprep.subr.mxu0 0.0
  %5905 = vmatpush1.msra.mxu0 0.0
  %5906 = vmatprep.subr.mxu0 0.0
  %5907 = vmatpush1.msra.mxu0 0.0
  %5908 = vmatprep.subr.mxu0 0.0
  %5909 = vmatpush1.msra.mxu0 0.0
  %5910 = vmatprep.subr.mxu0 0.0
  %5911 = vmatpush1.msra.mxu0 0.0
  %5912 = vmatprep.subr.mxu0 0.0
  %5913 = vmatpush1.msra.mxu0 0.0
  %5914 = vmatprep.subr.mxu0 0.0
  %5915 = vmatpush1.msra.mxu0 0.0
  %5916 = vmatprep.subr.mxu0 0.0
  %5917 = vmatpush1.msra.mxu0 0.0
  %5918 = vmatprep.subr.mxu0 0.0
  %5919 = vmatpush1.msra.mxu0 0.0
  %5920 = vmatprep.subr.mxu0 0.0
  %5921 = vmatpush1.msra.mxu0 0.0
  %5922 = vmatprep.subr.mxu0 0.0
  %5923 = vmatpush1.msra.mxu0 0.0
  %5924 = vmatprep.subr.mxu0 0.0
  %5925 = vmatpush1.msra.mxu0 0.0
  %5926 = vmatprep.subr.mxu0 0.0
  %5927 = vmatpush1.msra.mxu0 0.0
  %5928 = vmatprep.subr.mxu0 0.0
  %5929 = vmatpush1.msra.mxu0 0.0
  %5930 = vmatprep.subr.mxu0 0.0
  %5931 = vmatpush1.msra.mxu0 0.0
  %5932 = vmatprep.subr.mxu0 0.0
  %5933 = vmatpush1.msra.mxu0 0.0
  %5934 = vmatprep.subr.mxu0 0.0
  %5935 = vmatpush1.msra.mxu0 0.0
  %5936 = vmatprep.subr.mxu0 0.0
  %5937 = vmatpush1.msra.mxu0 0.0
  %5938 = vmatprep.subr.mxu0 0.0
  %5939 = vmatpush1.msra.mxu0 0.0
  %5940 = vmatprep.subr.mxu0 0.0
  %5941 = vmatpush1.msra.mxu0 0.0
  %5942 = vmatprep.subr.mxu0 0.0
  %5943 = vmatpush1.msra.mxu0 0.0
  %5944 = vmatprep.mubr.f32.mxu0 0.0
  %5945 = vmatmul.mubr.f32.gmra.mrb[0].mxu0 %v612
  %v5946 = vpop.f32.mrb[0].mxu0
  %v5947 = vadd.f32 0.0, %v5946
  %v5948 = vpop.f32.mrb[0].mxu0
  %5949 = vmatprep.mubr.f32.mxu0 0.0
  %5950 = vmatmul.mubr.f32.gmra.mrb[0].mxu0 %v615
  %v5951 = vpop.f32.mrb[0].mxu0
  %v5952 = vadd.f32 0.0, %v5951
  %v5953 = vpop.f32.mrb[0].mxu0
  %5954 = vmatprep.mubr.f32.mxu0 0.0
  %5955 = vmatmul.mubr.f32.gmra.mrb[0].mxu0 %v618
  %v5956 = vpop.f32.mrb[0].mxu0
  %v5957 = vadd.f32 0.0, %v5956
  %v5958 = vpop.f32.mrb[0].mxu0
  %5959 = vmatprep.mubr.f32.mxu0 0.0
  %5960 = vmatmul.mubr.f32.gmra.mrb[0].mxu0 %v621
  %v5961 = vpop.f32.mrb[0].mxu0
  %v5962 = vadd.f32 0.0, %v5961
  %v5963 = vpop.f32.mrb[0].mxu0
  %5964 = vmatprep.mubr.f32.mxu0 0.0
  %5965 = vmatmul.mubr.f32.gmra.mrb[0].mxu0 %v624
  %v5966 = vpop.f32.mrb[0].mxu0
  %v5967 = vadd.f32 0.0, %v5966
  %v5968 = vpop.f32.mrb[0].mxu0
  %5969 = vmatprep.mubr.f32.mxu0 0.0
  %5970 = vmatmul.mubr.f32.gmra.mrb[0].mxu0 %v627
  %v5971 = vpop.f32.mrb[0].mxu0
  %v5972 = vadd.f32 0.0, %v5971
  %v5973 = vpop.f32.mrb[0].mxu0
  %5974 = vdwg.mxu0
  %v5975 = vmul.f32 %v5947, %v78
  %v5976 = vmul.f32 %v5952, %v79
  %v5977 = vmul.f32 %v5957, %v80
  %v5978 = vmul.f32 %v5962, %v81
  %v5979 = vmul.f32 %v5967, %v82
  %v5980 = vmul.f32 %v5972, %v83
  %v5982 = vsel %vm109, %v5704, 0
  %5984 = vmatprep.subr.mxu0 0.0
  %5985 = vmatpush1.msra.mxu0 %v5975
  %5986 = vmatprep.subr.mxu0 0.0
  %5987 = vmatpush1.msra.mxu0 %v5976
  %5988 = vmatprep.subr.mxu0 0.0
  %5989 = vmatpush1.msra.mxu0 %v5977
  %5990 = vmatprep.subr.mxu0 0.0
  %5991 = vmatpush1.msra.mxu0 %v5978
  %5992 = vmatprep.subr.mxu0 0.0
  %5993 = vmatpush1.msra.mxu0 %v5979
  %5994 = vmatprep.subr.mxu0 0.0
  %5995 = vmatpush1.msra.mxu0 %v5980
  %5996 = vmatprep.subr.mxu0 0.0
  %5997 = vmatpush1.msra.mxu0 0.0
  %5998 = vmatprep.subr.mxu0 0.0
  %5999 = vmatpush1.msra.mxu0 0.0
  %6000 = vmatprep.subr.mxu0 0.0
  %6001 = vmatpush1.msra.mxu0 0.0
  %6002 = vmatprep.subr.mxu0 0.0
  %6003 = vmatpush1.msra.mxu0 0.0
  %6004 = vmatprep.subr.mxu0 0.0
  %6005 = vmatpush1.msra.mxu0 0.0
  %6006 = vmatprep.subr.mxu0 0.0
  %6007 = vmatpush1.msra.mxu0 0.0
  %6008 = vmatprep.subr.mxu0 0.0
  %6009 = vmatpush1.msra.mxu0 0.0
  %6010 = vmatprep.subr.mxu0 0.0
  %6011 = vmatpush1.msra.mxu0 0.0
  %6012 = vmatprep.subr.mxu0 0.0
  %6013 = vmatpush1.msra.mxu0 0.0
  %6014 = vmatprep.subr.mxu0 0.0
  %6015 = vmatpush1.msra.mxu0 0.0
  %6016 = vmatprep.subr.mxu0 0.0
  %6017 = vmatpush1.msra.mxu0 0.0
  %6018 = vmatprep.subr.mxu0 0.0
  %6019 = vmatpush1.msra.mxu0 0.0
  %6020 = vmatprep.subr.mxu0 0.0
  %6021 = vmatpush1.msra.mxu0 0.0
  %6022 = vmatprep.subr.mxu0 0.0
  %6023 = vmatpush1.msra.mxu0 0.0
  %6024 = vmatprep.subr.mxu0 0.0
  %6025 = vmatpush1.msra.mxu0 0.0
  %6026 = vmatprep.subr.mxu0 0.0
  %6027 = vmatpush1.msra.mxu0 0.0
  %6028 = vmatprep.subr.mxu0 0.0
  %6029 = vmatpush1.msra.mxu0 0.0
  %6030 = vmatprep.subr.mxu0 0.0
  %6031 = vmatpush1.msra.mxu0 0.0
  %6032 = vmatprep.subr.mxu0 0.0
  %6033 = vmatpush1.msra.mxu0 0.0
  %6034 = vmatprep.subr.mxu0 0.0
  %6035 = vmatpush1.msra.mxu0 0.0
  %6036 = vmatprep.subr.mxu0 0.0
  %6037 = vmatpush1.msra.mxu0 0.0
  %6038 = vmatprep.subr.mxu0 0.0
  %6039 = vmatpush1.msra.mxu0 0.0
  %6040 = vmatprep.subr.mxu0 0.0
  %6041 = vmatpush1.msra.mxu0 0.0
  %6042 = vmatprep.subr.mxu0 0.0
  %6043 = vmatpush1.msra.mxu0 0.0
  %6044 = vmatprep.subr.mxu0 0.0
  %6045 = vmatpush1.msra.mxu0 0.0
  %6046 = vmatprep.subr.mxu0 0.0
  %6047 = vmatpush1.msra.mxu0 0.0
  %6048 = vmatprep.mubr.f32.mxu0 0.0
  %6049 = vmatmul.mubr.f32.gmra.mrb[0].mxu0 %v5982
  %v6050 = vpop.f32.mrb[0].mxu0
  %v6051 = vadd.f32 0.0, %v6050
  %v6052 = vpop.f32.mrb[0].mxu0
  %6053 = vdwg.mxu0
  %v6054 = vtanh.pop %v6051
  %v6055 = vadd.f32 %v62, %v5879
  %v6056 = vadd.f32 %v63, %v6054
  %v6058 = vsel %vm109, %v6055, 0
  %v6061 = vsel %vm109, %v6056, 0
  %6063 = vmatprep.subr.mxu0 0.0
  %6064 = vmatpush1.msra.mxu0 %v5205
  %6065 = vmatprep.subr.mxu0 0.0
  %6066 = vmatpush1.msra.mxu0 %v5206
  %6067 = vmatprep.subr.mxu0 0.0
  %6068 = vmatpush1.msra.mxu0 %v5207
  %6069 = vmatprep.subr.mxu0 0.0
  %6070 = vmatpush1.msra.mxu0 %v5208
  %6071 = vmatprep.subr.mxu0 0.0
  %6072 = vmatpush1.msra.mxu0 %v5209
  %6073 = vmatprep.subr.mxu0 0.0
  %6074 = vmatpush1.msra.mxu0 %v5210
  %6075 = vmatprep.subr.mxu0 0.0
  %6076 = vmatpush1.msra.mxu0 0.0
  %6077 = vmatprep.subr.mxu0 0.0
  %6078 = vmatpush1.msra.mxu0 0.0
  %6079 = vmatprep.subr.mxu0 0.0
  %6080 = vmatpush1.msra.mxu0 0.0
  %6081 = vmatprep.subr.mxu0 0.0
  %6082 = vmatpush1.msra.mxu0 0.0
  %6083 = vmatprep.subr.mxu0 0.0
  %6084 = vmatpush1.msra.mxu0 0.0
  %6085 = vmatprep.subr.mxu0 0.0
  %6086 = vmatpush1.msra.mxu0 0.0
  %6087 = vmatprep.subr.mxu0 0.0
  %6088 = vmatpush1.msra.mxu0 0.0
  %6089 = vmatprep.subr.mxu0 0.0
  %6090 = vmatpush1.msra.mxu0 0.0
  %6091 = vmatprep.subr.mxu0 0.0
  %6092 = vmatpush1.msra.mxu0 0.0
  %6093 = vmatprep.subr.mxu0 0.0
  %6094 = vmatpush1.msra.mxu0 0.0
  %6095 = vmatprep.subr.mxu0 0.0
  %6096 = vmatpush1.msra.mxu0 0.0
  %6097 = vmatprep.subr.mxu0 0.0
  %6098 = vmatpush1.msra.mxu0 0.0
  %6099 = vmatprep.subr.mxu0 0.0
  %6100 = vmatpush1.msra.mxu0 0.0
  %6101 = vmatprep.subr.mxu0 0.0
  %6102 = vmatpush1.msra.mxu0 0.0
  %6103 = vmatprep.subr.mxu0 0.0
  %6104 = vmatpush1.msra.mxu0 0.0
  %6105 = vmatprep.subr.mxu0 0.0
  %6106 = vmatpush1.msra.mxu0 0.0
  %6107 = vmatprep.subr.mxu0 0.0
  %6108 = vmatpush1.msra.mxu0 0.0
  %6109 = vmatprep.subr.mxu0 0.0
  %6110 = vmatpush1.msra.mxu0 0.0
  %6111 = vmatprep.subr.mxu0 0.0
  %6112 = vmatpush1.msra.mxu0 0.0
  %6113 = vmatprep.subr.mxu0 0.0
  %6114 = vmatpush1.msra.mxu0 0.0
  %6115 = vmatprep.subr.mxu0 0.0
  %6116 = vmatpush1.msra.mxu0 0.0
  %6117 = vmatprep.subr.mxu0 0.0
  %6118 = vmatpush1.msra.mxu0 0.0
  %6119 = vmatprep.subr.mxu0 0.0
  %6120 = vmatpush1.msra.mxu0 0.0
  %6121 = vmatprep.subr.mxu0 0.0
  %6122 = vmatpush1.msra.mxu0 0.0
  %6123 = vmatprep.subr.mxu0 0.0
  %6124 = vmatpush1.msra.mxu0 0.0
  %6125 = vmatprep.subr.mxu0 0.0
  %6126 = vmatpush1.msra.mxu0 0.0
  %6127 = vmatprep.mubr.f32.mxu0 0.0
  %6128 = vmatmul.mubr.f32.gmra.mrb[0].mxu0 %v6058
  %v6129 = vpop.f32.mrb[0].mxu0
  %v6130 = vadd.f32 0.0, %v6129
  %v6131 = vpop.f32.mrb[0].mxu0
  %6132 = vmatprep.mubr.f32.mxu0 0.0
  %6133 = vmatmul.mubr.f32.gmra.mrb[0].mxu0 %v6061
  %v6134 = vpop.f32.mrb[0].mxu0
  %v6135 = vadd.f32 0.0, %v6134
  %v6136 = vpop.f32.mrb[0].mxu0
  %6137 = vdwg.mxu0
  %v6139 = vsel %vm109, %v6130, 0
  %v6142 = vsel %vm109, %v6135, 0
  %6144 = vmatprep.subr.mxu0 0.0
  %6145 = vmatpush1.msra.mxu0 %v5217
  %6146 = vmatprep.subr.mxu0 0.0
  %6147 = vmatpush1.msra.mxu0 %v5218
  %6148 = vmatprep.subr.mxu0 0.0
  %6149 = vmatpush1.msra.mxu0 %v5219
  %6150 = vmatprep.subr.mxu0 0.0
  %6151 = vmatpush1.msra.mxu0 %v5220
  %6152 = vmatprep.subr.mxu0 0.0
  %6153 = vmatpush1.msra.mxu0 %v5221
  %6154 = vmatprep.subr.mxu0 0.0
  %6155 = vmatpush1.msra.mxu0 %v5222
  %6156 = vmatprep.subr.mxu0 0.0
  %6157 = vmatpush1.msra.mxu0 0.0
  %6158 = vmatprep.subr.mxu0 0.0
  %6159 = vmatpush1.msra.mxu0 0.0
  %6160 = vmatprep.subr.mxu0 0.0
  %6161 = vmatpush1.msra.mxu0 0.0
  %6162 = vmatprep.subr.mxu0 0.0
  %6163 = vmatpush1.msra.mxu0 0.0
  %6164 = vmatprep.subr.mxu0 0.0
  %6165 = vmatpush1.msra.mxu0 0.0
  %6166 = vmatprep.subr.mxu0 0.0
  %6167 = vmatpush1.msra.mxu0 0.0
  %6168 = vmatprep.subr.mxu0 0.0
  %6169 = vmatpush1.msra.mxu0 0.0
  %6170 = vmatprep.subr.mxu0 0.0
  %6171 = vmatpush1.msra.mxu0 0.0
  %6172 = vmatprep.subr.mxu0 0.0
  %6173 = vmatpush1.msra.mxu0 0.0
  %6174 = vmatprep.subr.mxu0 0.0
  %6175 = vmatpush1.msra.mxu0 0.0
  %6176 = vmatprep.subr.mxu0 0.0
  %6177 = vmatpush1.msra.mxu0 0.0
  %6178 = vmatprep.subr.mxu0 0.0
  %6179 = vmatpush1.msra.mxu0 0.0
  %6180 = vmatprep.subr.mxu0 0.0
  %6181 = vmatpush1.msra.mxu0 0.0
  %6182 = vmatprep.subr.mxu0 0.0
  %6183 = vmatpush1.msra.mxu0 0.0
  %6184 = vmatprep.subr.mxu0 0.0
  %6185 = vmatpush1.msra.mxu0 0.0
  %6186 = vmatprep.subr.mxu0 0.0
  %6187 = vmatpush1.msra.mxu0 0.0
  %6188 = vmatprep.subr.mxu0 0.0
  %6189 = vmatpush1.msra.mxu0 0.0
  %6190 = vmatprep.subr.mxu0 0.0
  %6191 = vmatpush1.msra.mxu0 0.0
  %6192 = vmatprep.subr.mxu0 0.0
  %6193 = vmatpush1.msra.mxu0 0.0
  %6194 = vmatprep.subr.mxu0 0.0
  %6195 = vmatpush1.msra.mxu0 0.0
  %6196 = vmatprep.subr.mxu0 0.0
  %6197 = vmatpush1.msra.mxu0 0.0
  %6198 = vmatprep.subr.mxu0 0.0
  %6199 = vmatpush1.msra.mxu0 0.0
  %6200 = vmatprep.subr.mxu0 0.0
  %6201 = vmatpush1.msra.mxu0 0.0
  %6202 = vmatprep.subr.mxu0 0.0
  %6203 = vmatpush1.msra.mxu0 0.0
  %6204 = vmatprep.subr.mxu0 0.0
  %6205 = vmatpush1.msra.mxu0 0.0
  %6206 = vmatprep.subr.mxu0 0.0
  %6207 = vmatpush1.msra.mxu0 0.0
  %6208 = vmatprep.mubr.f32.mxu0 0.0
  %6209 = vmatmul.mubr.f32.gmra.mrb[0].mxu0 %v6139
  %v6210 = vpop.f32.mrb[0].mxu0
  %v6211 = vadd.f32 0.0, %v6210
  %v6212 = vpop.f32.mrb[0].mxu0
  %6213 = vmatprep.mubr.f32.mxu0 0.0
  %6214 = vmatmul.mubr.f32.gmra.mrb[0].mxu0 %v6142
  %v6215 = vpop.f32.mrb[0].mxu0
  %v6216 = vadd.f32 0.0, %v6215
  %v6217 = vpop.f32.mrb[0].mxu0
  %6218 = vdwg.mxu0
  %v6219 = vmul.f32 %v6211, %v68
  %v6220 = vmul.f32 %v6216, %v69
  %6221 = vmatprep.subr.mxu0 0.0
  %6222 = vmatpush1.msra.mxu0 %v6219
  %6223 = vmatprep.subr.mxu0 0.0
  %6224 = vmatpush1.msra.mxu0 %v6220
  %6225 = vmatprep.subr.mxu0 0.0
  %6226 = vmatpush1.msra.mxu0 0.0
  %6227 = vmatprep.subr.mxu0 0.0
  %6228 = vmatpush1.msra.mxu0 0.0
  %6229 = vmatprep.subr.mxu0 0.0
  %6230 = vmatpush1.msra.mxu0 0.0
  %6231 = vmatprep.subr.mxu0 0.0
  %6232 = vmatpush1.msra.mxu0 0.0
  %6233 = vmatprep.subr.mxu0 0.0
  %6234 = vmatpush1.msra.mxu0 0.0
  %6235 = vmatprep.subr.mxu0 0.0
  %6236 = vmatpush1.msra.mxu0 0.0
  %6237 = vmatprep.subr.mxu0 0.0
  %6238 = vmatpush1.msra.mxu0 0.0
  %6239 = vmatprep.subr.mxu0 0.0
  %6240 = vmatpush1.msra.mxu0 0.0
  %6241 = vmatprep.subr.mxu0 0.0
  %6242 = vmatpush1.msra.mxu0 0.0
  %6243 = vmatprep.subr.mxu0 0.0
  %6244 = vmatpush1.msra.mxu0 0.0
  %6245 = vmatprep.subr.mxu0 0.0
  %6246 = vmatpush1.msra.mxu0 0.0
  %6247 = vmatprep.subr.mxu0 0.0
  %6248 = vmatpush1.msra.mxu0 0.0
  %6249 = vmatprep.subr.mxu0 0.0
  %6250 = vmatpush1.msra.mxu0 0.0
  %6251 = vmatprep.subr.mxu0 0.0
  %6252 = vmatpush1.msra.mxu0 0.0
  %6253 = vmatprep.subr.mxu0 0.0
  %6254 = vmatpush1.msra.mxu0 0.0
  %6255 = vmatprep.subr.mxu0 0.0
  %6256 = vmatpush1.msra.mxu0 0.0
  %6257 = vmatprep.subr.mxu0 0.0
  %6258 = vmatpush1.msra.mxu0 0.0
  %6259 = vmatprep.subr.mxu0 0.0
  %6260 = vmatpush1.msra.mxu0 0.0
  %6261 = vmatprep.subr.mxu0 0.0
  %6262 = vmatpush1.msra.mxu0 0.0
  %6263 = vmatprep.subr.mxu0 0.0
  %6264 = vmatpush1.msra.mxu0 0.0
  %6265 = vmatprep.subr.mxu0 0.0
  %6266 = vmatpush1.msra.mxu0 0.0
  %6267 = vmatprep.subr.mxu0 0.0
  %6268 = vmatpush1.msra.mxu0 0.0
  %6269 = vmatprep.subr.mxu0 0.0
  %6270 = vmatpush1.msra.mxu0 0.0
  %6271 = vmatprep.subr.mxu0 0.0
  %6272 = vmatpush1.msra.mxu0 0.0
  %6273 = vmatprep.subr.mxu0 0.0
  %6274 = vmatpush1.msra.mxu0 0.0
  %6275 = vmatprep.subr.mxu0 0.0
  %6276 = vmatpush1.msra.mxu0 0.0
  %6277 = vmatprep.subr.mxu0 0.0
  %6278 = vmatpush1.msra.mxu0 0.0
  %6279 = vmatprep.subr.mxu0 0.0
  %6280 = vmatpush1.msra.mxu0 0.0
  %6281 = vmatprep.subr.mxu0 0.0
  %6282 = vmatpush1.msra.mxu0 0.0
  %6283 = vmatprep.subr.mxu0 0.0
  %6284 = vmatpush1.msra.mxu0 0.0
  %6285 = vmatprep.mubr.f32.mxu0 0.0
  %6286 = vmatmul.mubr.f32.gmra.mrb[0].mxu0 %v276
  %v6287 = vpop.f32.mrb[0].mxu0
  %v6288 = vadd.f32 0.0, %v6287
  %v6289 = vpop.f32.mrb[0].mxu0
  %6290 = vmatprep.mubr.f32.mxu0 0.0
  %6291 = vmatmul.mubr.f32.gmra.mrb[0].mxu0 %v279
  %v6292 = vpop.f32.mrb[0].mxu0
  %v6293 = vadd.f32 0.0, %v6292
  %v6294 = vpop.f32.mrb[0].mxu0
  %6295 = vdwg.mxu0
  %6296 = vmatprep.subr.mxu0 0.0
  %6297 = vmatpush1.msra.mxu0 %v5211
  %6298 = vmatprep.subr.mxu0 0.0
  %6299 = vmatpush1.msra.mxu0 %v5212
  %6300 = vmatprep.subr.mxu0 0.0
  %6301 = vmatpush1.msra.mxu0 %v5213
  %6302 = vmatprep.subr.mxu0 0.0
  %6303 = vmatpush1.msra.mxu0 %v5214
  %6304 = vmatprep.subr.mxu0 0.0
  %6305 = vmatpush1.msra.mxu0 %v5215
  %6306 = vmatprep.subr.mxu0 0.0
  %6307 = vmatpush1.msra.mxu0 %v5216
  %6308 = vmatprep.subr.mxu0 0.0
  %6309 = vmatpush1.msra.mxu0 0.0
  %6310 = vmatprep.subr.mxu0 0.0
  %6311 = vmatpush1.msra.mxu0 0.0
  %6312 = vmatprep.subr.mxu0 0.0
  %6313 = vmatpush1.msra.mxu0 0.0
  %6314 = vmatprep.subr.mxu0 0.0
  %6315 = vmatpush1.msra.mxu0 0.0
  %6316 = vmatprep.subr.mxu0 0.0
  %6317 = vmatpush1.msra.mxu0 0.0
  %6318 = vmatprep.subr.mxu0 0.0
  %6319 = vmatpush1.msra.mxu0 0.0
  %6320 = vmatprep.subr.mxu0 0.0
  %6321 = vmatpush1.msra.mxu0 0.0
  %6322 = vmatprep.subr.mxu0 0.0
  %6323 = vmatpush1.msra.mxu0 0.0
  %6324 = vmatprep.subr.mxu0 0.0
  %6325 = vmatpush1.msra.mxu0 0.0
  %6326 = vmatprep.subr.mxu0 0.0
  %6327 = vmatpush1.msra.mxu0 0.0
  %6328 = vmatprep.subr.mxu0 0.0
  %6329 = vmatpush1.msra.mxu0 0.0
  %6330 = vmatprep.subr.mxu0 0.0
  %6331 = vmatpush1.msra.mxu0 0.0
  %6332 = vmatprep.subr.mxu0 0.0
  %6333 = vmatpush1.msra.mxu0 0.0
  %6334 = vmatprep.subr.mxu0 0.0
  %6335 = vmatpush1.msra.mxu0 0.0
  %6336 = vmatprep.subr.mxu0 0.0
  %6337 = vmatpush1.msra.mxu0 0.0
  %6338 = vmatprep.subr.mxu0 0.0
  %6339 = vmatpush1.msra.mxu0 0.0
  %6340 = vmatprep.subr.mxu0 0.0
  %6341 = vmatpush1.msra.mxu0 0.0
  %6342 = vmatprep.subr.mxu0 0.0
  %6343 = vmatpush1.msra.mxu0 0.0
  %6344 = vmatprep.subr.mxu0 0.0
  %6345 = vmatpush1.msra.mxu0 0.0
  %6346 = vmatprep.subr.mxu0 0.0
  %6347 = vmatpush1.msra.mxu0 0.0
  %6348 = vmatprep.subr.mxu0 0.0
  %6349 = vmatpush1.msra.mxu0 0.0
  %6350 = vmatprep.subr.mxu0 0.0
  %6351 = vmatpush1.msra.mxu0 0.0
  %6352 = vmatprep.subr.mxu0 0.0
  %6353 = vmatpush1.msra.mxu0 0.0
  %6354 = vmatprep.subr.mxu0 0.0
  %6355 = vmatpush1.msra.mxu0 0.0
  %6356 = vmatprep.subr.mxu0 0.0
  %6357 = vmatpush1.msra.mxu0 0.0
  %6358 = vmatprep.subr.mxu0 0.0
  %6359 = vmatpush1.msra.mxu0 0.0
  %6360 = vmatprep.mubr.f32.mxu0 0.0
  %6361 = vmatmul.mubr.f32.gmra.mrb[0].mxu0 %v6139
  %v6362 = vpop.f32.mrb[0].mxu0
  %v6363 = vadd.f32 %v6288, %v6362
  %v6364 = vpop.f32.mrb[0].mxu0
  %6365 = vmatprep.mubr.f32.mxu0 0.0
  %6366 = vmatmul.mubr.f32.gmra.mrb[0].mxu0 %v6142
  %v6367 = vpop.f32.mrb[0].mxu0
  %v6368 = vadd.f32 %v6293, %v6367
  %v6369 = vpop.f32.mrb[0].mxu0
  %6370 = vdwg.mxu0
  %v6371 = vtanh.pop %v6363
  %v6372 = vtanh.pop %v6368
  %v6373 = vsel %vm66, -1e-08, %v6371
  %v6374 = vsel %vm67, -1e-08, %v6372
  %v6375 = vmul.f32 %v6373, 1.442695
  %v6376 = vpow.pop %v6375
  %v6377 = vmul.f32 %v6374, 1.442695
  %v6378 = vpow.pop %v6377
  %v6380 = vsel %vm109, %v6376, 0
  %v6383 = vsel %vm109, %v6378, 0
  %6385 = vmatprep.subr.mxu0 0.0
  %6386 = vmatpush1.msra.mxu0 %v84
  %6387 = vmatprep.subr.mxu0 0.0
  %6388 = vmatpush1.msra.mxu0 %v85
  %6389 = vmatprep.subr.mxu0 0.0
  %6390 = vmatpush1.msra.mxu0 %v86
  %6391 = vmatprep.subr.mxu0 0.0
  %6392 = vmatpush1.msra.mxu0 %v87
  %6393 = vmatprep.subr.mxu0 0.0
  %6394 = vmatpush1.msra.mxu0 %v88
  %6395 = vmatprep.subr.mxu0 0.0
  %6396 = vmatpush1.msra.mxu0 %v89
  %6397 = vmatprep.subr.mxu0 0.0
  %6398 = vmatpush1.msra.mxu0 0.0
  %6399 = vmatprep.subr.mxu0 0.0
  %6400 = vmatpush1.msra.mxu0 0.0
  %6401 = vmatprep.subr.mxu0 0.0
  %6402 = vmatpush1.msra.mxu0 0.0
  %6403 = vmatprep.subr.mxu0 0.0
  %6404 = vmatpush1.msra.mxu0 0.0
  %6405 = vmatprep.subr.mxu0 0.0
  %6406 = vmatpush1.msra.mxu0 0.0
  %6407 = vmatprep.subr.mxu0 0.0
  %6408 = vmatpush1.msra.mxu0 0.0
  %6409 = vmatprep.subr.mxu0 0.0
  %6410 = vmatpush1.msra.mxu0 0.0
  %6411 = vmatprep.subr.mxu0 0.0
  %6412 = vmatpush1.msra.mxu0 0.0
  %6413 = vmatprep.subr.mxu0 0.0
  %6414 = vmatpush1.msra.mxu0 0.0
  %6415 = vmatprep.subr.mxu0 0.0
  %6416 = vmatpush1.msra.mxu0 0.0
  %6417 = vmatprep.subr.mxu0 0.0
  %6418 = vmatpush1.msra.mxu0 0.0
  %6419 = vmatprep.subr.mxu0 0.0
  %6420 = vmatpush1.msra.mxu0 0.0
  %6421 = vmatprep.subr.mxu0 0.0
  %6422 = vmatpush1.msra.mxu0 0.0
  %6423 = vmatprep.subr.mxu0 0.0
  %6424 = vmatpush1.msra.mxu0 0.0
  %6425 = vmatprep.subr.mxu0 0.0
  %6426 = vmatpush1.msra.mxu0 0.0
  %6427 = vmatprep.subr.mxu0 0.0
  %6428 = vmatpush1.msra.mxu0 0.0
  %6429 = vmatprep.subr.mxu0 0.0
  %6430 = vmatpush1.msra.mxu0 0.0
  %6431 = vmatprep.subr.mxu0 0.0
  %6432 = vmatpush1.msra.mxu0 0.0
  %6433 = vmatprep.subr.mxu0 0.0
  %6434 = vmatpush1.msra.mxu0 0.0
  %6435 = vmatprep.subr.mxu0 0.0
  %6436 = vmatpush1.msra.mxu0 0.0
  %6437 = vmatprep.subr.mxu0 0.0
  %6438 = vmatpush1.msra.mxu0 0.0
  %6439 = vmatprep.subr.mxu0 0.0
  %6440 = vmatpush1.msra.mxu0 0.0
  %6441 = vmatprep.subr.mxu0 0.0
  %6442 = vmatpush1.msra.mxu0 0.0
  %6443 = vmatprep.subr.mxu0 0.0
  %6444 = vmatpush1.msra.mxu0 0.0
  %6445 = vmatprep.subr.mxu0 0.0
  %6446 = vmatpush1.msra.mxu0 0.0
  %6447 = vmatprep.subr.mxu0 0.0
  %6448 = vmatpush1.msra.mxu0 0.0
  %6449 = vmatprep.mubr.f32.mxu0 0.0
  %6450 = vmatmul.mubr.f32.gmra.mrb[0].mxu0 %v6380
  %v6451 = vpop.f32.mrb[0].mxu0
  %v6452 = vadd.f32 0.0, %v6451
  %v6453 = vpop.f32.mrb[0].mxu0
  %6454 = vmatprep.mubr.f32.mxu0 0.0
  %6455 = vmatmul.mubr.f32.gmra.mrb[0].mxu0 %v6383
  %v6456 = vpop.f32.mrb[0].mxu0
  %v6457 = vadd.f32 0.0, %v6456
  %v6458 = vpop.f32.mrb[0].mxu0
  %6459 = vdwg.mxu0
  %v6461 = vsel %vm520, %v6452, 0
  %v6464 = vsel %vm520, %v6457, 0
  %6466 = vmatprep.subr.mxu0 0.0
  %6467 = vmatpush1.msra.mxu0 %v529
  %6468 = vmatprep.subr.mxu0 0.0
  %6469 = vmatpush1.msra.mxu0 0.0
  %6470 = vmatprep.subr.mxu0 0.0
  %6471 = vmatpush1.msra.mxu0 0.0
  %6472 = vmatprep.subr.mxu0 0.0
  %6473 = vmatpush1.msra.mxu0 0.0
  %6474 = vmatprep.subr.mxu0 0.0
  %6475 = vmatpush1.msra.mxu0 0.0
  %6476 = vmatprep.subr.mxu0 0.0
  %6477 = vmatpush1.msra.mxu0 0.0
  %6478 = vmatprep.subr.mxu0 0.0
  %6479 = vmatpush1.msra.mxu0 0.0
  %6480 = vmatprep.subr.mxu0 0.0
  %6481 = vmatpush1.msra.mxu0 0.0
  %6482 = vmatprep.subr.mxu0 0.0
  %6483 = vmatpush1.msra.mxu0 0.0
  %6484 = vmatprep.subr.mxu0 0.0
  %6485 = vmatpush1.msra.mxu0 0.0
  %6486 = vmatprep.subr.mxu0 0.0
  %6487 = vmatpush1.msra.mxu0 0.0
  %6488 = vmatprep.subr.mxu0 0.0
  %6489 = vmatpush1.msra.mxu0 0.0
  %6490 = vmatprep.subr.mxu0 0.0
  %6491 = vmatpush1.msra.mxu0 0.0
  %6492 = vmatprep.subr.mxu0 0.0
  %6493 = vmatpush1.msra.mxu0 0.0
  %6494 = vmatprep.subr.mxu0 0.0
  %6495 = vmatpush1.msra.mxu0 0.0
  %6496 = vmatprep.subr.mxu0 0.0
  %6497 = vmatpush1.msra.mxu0 0.0
  %6498 = vmatprep.subr.mxu0 0.0
  %6499 = vmatpush1.msra.mxu0 0.0
  %6500 = vmatprep.subr.mxu0 0.0
  %6501 = vmatpush1.msra.mxu0 0.0
  %6502 = vmatprep.subr.mxu0 0.0
  %6503 = vmatpush1.msra.mxu0 0.0
  %6504 = vmatprep.subr.mxu0 0.0
  %6505 = vmatpush1.msra.mxu0 0.0
  %6506 = vmatprep.subr.mxu0 0.0
  %6507 = vmatpush1.msra.mxu0 0.0
  %6508 = vmatprep.subr.mxu0 0.0
  %6509 = vmatpush1.msra.mxu0 0.0
  %6510 = vmatprep.subr.mxu0 0.0
  %6511 = vmatpush1.msra.mxu0 0.0
  %6512 = vmatprep.subr.mxu0 0.0
  %6513 = vmatpush1.msra.mxu0 0.0
  %6514 = vmatprep.subr.mxu0 0.0
  %6515 = vmatpush1.msra.mxu0 0.0
  %6516 = vmatprep.subr.mxu0 0.0
  %6517 = vmatpush1.msra.mxu0 0.0
  %6518 = vmatprep.subr.mxu0 0.0
  %6519 = vmatpush1.msra.mxu0 0.0
  %6520 = vmatprep.subr.mxu0 0.0
  %6521 = vmatpush1.msra.mxu0 0.0
  %6522 = vmatprep.subr.mxu0 0.0
  %6523 = vmatpush1.msra.mxu0 0.0
  %6524 = vmatprep.subr.mxu0 0.0
  %6525 = vmatpush1.msra.mxu0 0.0
  %6526 = vmatprep.subr.mxu0 0.0
  %6527 = vmatpush1.msra.mxu0 0.0
  %6528 = vmatprep.subr.mxu0 0.0
  %6529 = vmatpush1.msra.mxu0 0.0
  %6530 = vmatprep.mubr.f32.mxu0 0.0
  %6531 = vmatmul.mubr.f32.gmra.mrb[0].mxu0 %v6461
  %v6532 = vpop.f32.mrb[0].mxu0
  %v6533 = vadd.f32 0.0, %v6532
  %v6534 = vpop.f32.mrb[0].mxu0
  %6535 = vmatprep.mubr.f32.mxu0 0.0
  %6536 = vmatmul.mubr.f32.gmra.mrb[0].mxu0 %v6464
  %v6537 = vpop.f32.mrb[0].mxu0
  %v6538 = vadd.f32 0.0, %v6537
  %v6539 = vpop.f32.mrb[0].mxu0
  %6540 = vdwg.mxu0
  %v6541 = vrcp.pop %v6533
  %v6542 = vmul.f32 %v6376, %v6541
  %v6543 = vrcp.pop %v6538
  %v6544 = vmul.f32 %v6378, %v6543
  %6545 = vmatprep.subr.mxu0 0.0
  %6546 = vmatpush1.msra.mxu0 %v6130
  %6547 = vmatprep.subr.mxu0 0.0
  %6548 = vmatpush1.msra.mxu0 0.0
  %6549 = vmatprep.subr.mxu0 0.0
  %6550 = vmatpush1.msra.mxu0 0.0
  %6551 = vmatprep.subr.mxu0 0.0
  %6552 = vmatpush1.msra.mxu0 0.0
  %6553 = vmatprep.subr.mxu0 0.0
  %6554 = vmatpush1.msra.mxu0 0.0
  %6555 = vmatprep.subr.mxu0 0.0
  %6556 = vmatpush1.msra.mxu0 0.0
  %6557 = vmatprep.subr.mxu0 0.0
  %6558 = vmatpush1.msra.mxu0 0.0
  %6559 = vmatprep.subr.mxu0 0.0
  %6560 = vmatpush1.msra.mxu0 0.0
  %6561 = vmatprep.subr.mxu0 0.0
  %6562 = vmatpush1.msra.mxu0 0.0
  %6563 = vmatprep.subr.mxu0 0.0
  %6564 = vmatpush1.msra.mxu0 0.0
  %6565 = vmatprep.subr.mxu0 0.0
  %6566 = vmatpush1.msra.mxu0 0.0
  %6567 = vmatprep.subr.mxu0 0.0
  %6568 = vmatpush1.msra.mxu0 0.0
  %6569 = vmatprep.subr.mxu0 0.0
  %6570 = vmatpush1.msra.mxu0 0.0
  %6571 = vmatprep.subr.mxu0 0.0
  %6572 = vmatpush1.msra.mxu0 0.0
  %6573 = vmatprep.subr.mxu0 0.0
  %6574 = vmatpush1.msra.mxu0 0.0
  %6575 = vmatprep.subr.mxu0 0.0
  %6576 = vmatpush1.msra.mxu0 0.0
  %6577 = vmatprep.subr.mxu0 0.0
  %6578 = vmatpush1.msra.mxu0 0.0
  %6579 = vmatprep.subr.mxu0 0.0
  %6580 = vmatpush1.msra.mxu0 0.0
  %6581 = vmatprep.subr.mxu0 0.0
  %6582 = vmatpush1.msra.mxu0 0.0
  %6583 = vmatprep.subr.mxu0 0.0
  %6584 = vmatpush1.msra.mxu0 0.0
  %6585 = vmatprep.subr.mxu0 0.0
  %6586 = vmatpush1.msra.mxu0 0.0
  %6587 = vmatprep.subr.mxu0 0.0
  %6588 = vmatpush1.msra.mxu0 0.0
  %6589 = vmatprep.subr.mxu0 0.0
  %6590 = vmatpush1.msra.mxu0 0.0
  %6591 = vmatprep.subr.mxu0 0.0
  %6592 = vmatpush1.msra.mxu0 0.0
  %6593 = vmatprep.subr.mxu0 0.0
  %6594 = vmatpush1.msra.mxu0 0.0
  %6595 = vmatprep.subr.mxu0 0.0
  %6596 = vmatpush1.msra.mxu0 0.0
  %6597 = vmatprep.subr.mxu0 0.0
  %6598 = vmatpush1.msra.mxu0 0.0
  %6599 = vmatprep.subr.mxu0 0.0
  %6600 = vmatpush1.msra.mxu0 0.0
  %6601 = vmatprep.subr.mxu0 0.0
  %6602 = vmatpush1.msra.mxu0 0.0
  %6603 = vmatprep.subr.mxu0 0.0
  %6604 = vmatpush1.msra.mxu0 0.0
  %6605 = vmatprep.subr.mxu0 0.0
  %6606 = vmatpush1.msra.mxu0 0.0
  %6607 = vmatprep.subr.mxu0 0.0
  %6608 = vmatpush1.msra.mxu0 0.0
  %6609 = vmatprep.mubr.f32.mxu0 0.0
  %6610 = vmatmul.mubr.f32.gmra.mrb[0].mxu0 %v612
  %v6611 = vpop.f32.mrb[0].mxu0
  %v6612 = vadd.f32 0.0, %v6611
  %v6613 = vpop.f32.mrb[0].mxu0
  %6614 = vmatprep.mubr.f32.mxu0 0.0
  %6615 = vmatmul.mubr.f32.gmra.mrb[0].mxu0 %v615
  %v6616 = vpop.f32.mrb[0].mxu0
  %v6617 = vadd.f32 0.0, %v6616
  %v6618 = vpop.f32.mrb[0].mxu0
  %6619 = vmatprep.mubr.f32.mxu0 0.0
  %6620 = vmatmul.mubr.f32.gmra.mrb[0].mxu0 %v618
  %v6621 = vpop.f32.mrb[0].mxu0
  %v6622 = vadd.f32 0.0, %v6621
  %v6623 = vpop.f32.mrb[0].mxu0
  %6624 = vmatprep.mubr.f32.mxu0 0.0
  %6625 = vmatmul.mubr.f32.gmra.mrb[0].mxu0 %v621
  %v6626 = vpop.f32.mrb[0].mxu0
  %v6627 = vadd.f32 0.0, %v6626
  %v6628 = vpop.f32.mrb[0].mxu0
  %6629 = vmatprep.mubr.f32.mxu0 0.0
  %6630 = vmatmul.mubr.f32.gmra.mrb[0].mxu0 %v624
  %v6631 = vpop.f32.mrb[0].mxu0
  %v6632 = vadd.f32 0.0, %v6631
  %v6633 = vpop.f32.mrb[0].mxu0
  %6634 = vmatprep.mubr.f32.mxu0 0.0
  %6635 = vmatmul.mubr.f32.gmra.mrb[0].mxu0 %v627
  %v6636 = vpop.f32.mrb[0].mxu0
  %v6637 = vadd.f32 0.0, %v6636
  %v6638 = vpop.f32.mrb[0].mxu0
  %6639 = vdwg.mxu0
  %v6640 = vmul.f32 %v6612, %v78
  %v6641 = vmul.f32 %v6617, %v79
  %v6642 = vmul.f32 %v6622, %v80
  %v6643 = vmul.f32 %v6627, %v81
  %v6644 = vmul.f32 %v6632, %v82
  %v6645 = vmul.f32 %v6637, %v83
  %v6647 = vsel %vm109, %v6542, 0
  %6649 = vmatprep.subr.mxu0 0.0
  %6650 = vmatpush1.msra.mxu0 %v6640
  %6651 = vmatprep.subr.mxu0 0.0
  %6652 = vmatpush1.msra.mxu0 %v6641
  %6653 = vmatprep.subr.mxu0 0.0
  %6654 = vmatpush1.msra.mxu0 %v6642
  %6655 = vmatprep.subr.mxu0 0.0
  %6656 = vmatpush1.msra.mxu0 %v6643
  %6657 = vmatprep.subr.mxu0 0.0
  %6658 = vmatpush1.msra.mxu0 %v6644
  %6659 = vmatprep.subr.mxu0 0.0
  %6660 = vmatpush1.msra.mxu0 %v6645
  %6661 = vmatprep.subr.mxu0 0.0
  %6662 = vmatpush1.msra.mxu0 0.0
  %6663 = vmatprep.subr.mxu0 0.0
  %6664 = vmatpush1.msra.mxu0 0.0
  %6665 = vmatprep.subr.mxu0 0.0
  %6666 = vmatpush1.msra.mxu0 0.0
  %6667 = vmatprep.subr.mxu0 0.0
  %6668 = vmatpush1.msra.mxu0 0.0
  %6669 = vmatprep.subr.mxu0 0.0
  %6670 = vmatpush1.msra.mxu0 0.0
  %6671 = vmatprep.subr.mxu0 0.0
  %6672 = vmatpush1.msra.mxu0 0.0
  %6673 = vmatprep.subr.mxu0 0.0
  %6674 = vmatpush1.msra.mxu0 0.0
  %6675 = vmatprep.subr.mxu0 0.0
  %6676 = vmatpush1.msra.mxu0 0.0
  %6677 = vmatprep.subr.mxu0 0.0
  %6678 = vmatpush1.msra.mxu0 0.0
  %6679 = vmatprep.subr.mxu0 0.0
  %6680 = vmatpush1.msra.mxu0 0.0
  %6681 = vmatprep.subr.mxu0 0.0
  %6682 = vmatpush1.msra.mxu0 0.0
  %6683 = vmatprep.subr.mxu0 0.0
  %6684 = vmatpush1.msra.mxu0 0.0
  %6685 = vmatprep.subr.mxu0 0.0
  %6686 = vmatpush1.msra.mxu0 0.0
  %6687 = vmatprep.subr.mxu0 0.0
  %6688 = vmatpush1.msra.mxu0 0.0
  %6689 = vmatprep.subr.mxu0 0.0
  %6690 = vmatpush1.msra.mxu0 0.0
  %6691 = vmatprep.subr.mxu0 0.0
  %6692 = vmatpush1.msra.mxu0 0.0
  %6693 = vmatprep.subr.mxu0 0.0
  %6694 = vmatpush1.msra.mxu0 0.0
  %6695 = vmatprep.subr.mxu0 0.0
  %6696 = vmatpush1.msra.mxu0 0.0
  %6697 = vmatprep.subr.mxu0 0.0
  %6698 = vmatpush1.msra.mxu0 0.0
  %6699 = vmatprep.subr.mxu0 0.0
  %6700 = vmatpush1.msra.mxu0 0.0
  %6701 = vmatprep.subr.mxu0 0.0
  %6702 = vmatpush1.msra.mxu0 0.0
  %6703 = vmatprep.subr.mxu0 0.0
  %6704 = vmatpush1.msra.mxu0 0.0
  %6705 = vmatprep.subr.mxu0 0.0
  %6706 = vmatpush1.msra.mxu0 0.0
  %6707 = vmatprep.subr.mxu0 0.0
  %6708 = vmatpush1.msra.mxu0 0.0
  %6709 = vmatprep.subr.mxu0 0.0
  %6710 = vmatpush1.msra.mxu0 0.0
  %6711 = vmatprep.subr.mxu0 0.0
  %6712 = vmatpush1.msra.mxu0 0.0
  %6713 = vmatprep.mubr.f32.mxu0 0.0
  %6714 = vmatmul.mubr.f32.gmra.mrb[0].mxu0 %v6647
  %v6715 = vpop.f32.mrb[0].mxu0
  %v6716 = vadd.f32 0.0, %v6715
  %v6717 = vpop.f32.mrb[0].mxu0
  %6718 = vdwg.mxu0
  %v6719 = vtanh.pop %v6716
  %6720 = vmatprep.subr.mxu0 0.0
  %6721 = vmatpush1.msra.mxu0 %v6135
  %6722 = vmatprep.subr.mxu0 0.0
  %6723 = vmatpush1.msra.mxu0 0.0
  %6724 = vmatprep.subr.mxu0 0.0
  %6725 = vmatpush1.msra.mxu0 0.0
  %6726 = vmatprep.subr.mxu0 0.0
  %6727 = vmatpush1.msra.mxu0 0.0
  %6728 = vmatprep.subr.mxu0 0.0
  %6729 = vmatpush1.msra.mxu0 0.0
  %6730 = vmatprep.subr.mxu0 0.0
  %6731 = vmatpush1.msra.mxu0 0.0
  %6732 = vmatprep.subr.mxu0 0.0
  %6733 = vmatpush1.msra.mxu0 0.0
  %6734 = vmatprep.subr.mxu0 0.0
  %6735 = vmatpush1.msra.mxu0 0.0
  %6736 = vmatprep.subr.mxu0 0.0
  %6737 = vmatpush1.msra.mxu0 0.0
  %6738 = vmatprep.subr.mxu0 0.0
  %6739 = vmatpush1.msra.mxu0 0.0
  %6740 = vmatprep.subr.mxu0 0.0
  %6741 = vmatpush1.msra.mxu0 0.0
  %6742 = vmatprep.subr.mxu0 0.0
  %6743 = vmatpush1.msra.mxu0 0.0
  %6744 = vmatprep.subr.mxu0 0.0
  %6745 = vmatpush1.msra.mxu0 0.0
  %6746 = vmatprep.subr.mxu0 0.0
  %6747 = vmatpush1.msra.mxu0 0.0
  %6748 = vmatprep.subr.mxu0 0.0
  %6749 = vmatpush1.msra.mxu0 0.0
  %6750 = vmatprep.subr.mxu0 0.0
  %6751 = vmatpush1.msra.mxu0 0.0
  %6752 = vmatprep.subr.mxu0 0.0
  %6753 = vmatpush1.msra.mxu0 0.0
  %6754 = vmatprep.subr.mxu0 0.0
  %6755 = vmatpush1.msra.mxu0 0.0
  %6756 = vmatprep.subr.mxu0 0.0
  %6757 = vmatpush1.msra.mxu0 0.0
  %6758 = vmatprep.subr.mxu0 0.0
  %6759 = vmatpush1.msra.mxu0 0.0
  %6760 = vmatprep.subr.mxu0 0.0
  %6761 = vmatpush1.msra.mxu0 0.0
  %6762 = vmatprep.subr.mxu0 0.0
  %6763 = vmatpush1.msra.mxu0 0.0
  %6764 = vmatprep.subr.mxu0 0.0
  %6765 = vmatpush1.msra.mxu0 0.0
  %6766 = vmatprep.subr.mxu0 0.0
  %6767 = vmatpush1.msra.mxu0 0.0
  %6768 = vmatprep.subr.mxu0 0.0
  %6769 = vmatpush1.msra.mxu0 0.0
  %6770 = vmatprep.subr.mxu0 0.0
  %6771 = vmatpush1.msra.mxu0 0.0
  %6772 = vmatprep.subr.mxu0 0.0
  %6773 = vmatpush1.msra.mxu0 0.0
  %6774 = vmatprep.subr.mxu0 0.0
  %6775 = vmatpush1.msra.mxu0 0.0
  %6776 = vmatprep.subr.mxu0 0.0
  %6777 = vmatpush1.msra.mxu0 0.0
  %6778 = vmatprep.subr.mxu0 0.0
  %6779 = vmatpush1.msra.mxu0 0.0
  %6780 = vmatprep.subr.mxu0 0.0
  %6781 = vmatpush1.msra.mxu0 0.0
  %6782 = vmatprep.subr.mxu0 0.0
  %6783 = vmatpush1.msra.mxu0 0.0
  %6784 = vmatprep.mubr.f32.mxu0 0.0
  %6785 = vmatmul.mubr.f32.gmra.mrb[0].mxu0 %v612
  %v6786 = vpop.f32.mrb[0].mxu0
  %v6787 = vadd.f32 0.0, %v6786
  %v6788 = vpop.f32.mrb[0].mxu0
  %6789 = vmatprep.mubr.f32.mxu0 0.0
  %6790 = vmatmul.mubr.f32.gmra.mrb[0].mxu0 %v615
  %v6791 = vpop.f32.mrb[0].mxu0
  %v6792 = vadd.f32 0.0, %v6791
  %v6793 = vpop.f32.mrb[0].mxu0
  %6794 = vmatprep.mubr.f32.mxu0 0.0
  %6795 = vmatmul.mubr.f32.gmra.mrb[0].mxu0 %v618
  %v6796 = vpop.f32.mrb[0].mxu0
  %v6797 = vadd.f32 0.0, %v6796
  %v6798 = vpop.f32.mrb[0].mxu0
  %6799 = vmatprep.mubr.f32.mxu0 0.0
  %6800 = vmatmul.mubr.f32.gmra.mrb[0].mxu0 %v621
  %v6801 = vpop.f32.mrb[0].mxu0
  %v6802 = vadd.f32 0.0, %v6801
  %v6803 = vpop.f32.mrb[0].mxu0
  %6804 = vmatprep.mubr.f32.mxu0 0.0
  %6805 = vmatmul.mubr.f32.gmra.mrb[0].mxu0 %v624
  %v6806 = vpop.f32.mrb[0].mxu0
  %v6807 = vadd.f32 0.0, %v6806
  %v6808 = vpop.f32.mrb[0].mxu0
  %6809 = vmatprep.mubr.f32.mxu0 0.0
  %6810 = vmatmul.mubr.f32.gmra.mrb[0].mxu0 %v627
  %v6811 = vpop.f32.mrb[0].mxu0
  %v6812 = vadd.f32 0.0, %v6811
  %v6813 = vpop.f32.mrb[0].mxu0
  %6814 = vdwg.mxu0
  %v6815 = vmul.f32 %v6787, %v78
  %v6816 = vmul.f32 %v6792, %v79
  %v6817 = vmul.f32 %v6797, %v80
  %v6818 = vmul.f32 %v6802, %v81
  %v6819 = vmul.f32 %v6807, %v82
  %v6820 = vmul.f32 %v6812, %v83
  %v6822 = vsel %vm109, %v6544, 0
  %6824 = vmatprep.subr.mxu0 0.0
  %6825 = vmatpush1.msra.mxu0 %v6815
  %6826 = vmatprep.subr.mxu0 0.0
  %6827 = vmatpush1.msra.mxu0 %v6816
  %6828 = vmatprep.subr.mxu0 0.0
  %6829 = vmatpush1.msra.mxu0 %v6817
  %6830 = vmatprep.subr.mxu0 0.0
  %6831 = vmatpush1.msra.mxu0 %v6818
  %6832 = vmatprep.subr.mxu0 0.0
  %6833 = vmatpush1.msra.mxu0 %v6819
  %6834 = vmatprep.subr.mxu0 0.0
  %6835 = vmatpush1.msra.mxu0 %v6820
  %6836 = vmatprep.subr.mxu0 0.0
  %6837 = vmatpush1.msra.mxu0 0.0
  %6838 = vmatprep.subr.mxu0 0.0
  %6839 = vmatpush1.msra.mxu0 0.0
  %6840 = vmatprep.subr.mxu0 0.0
  %6841 = vmatpush1.msra.mxu0 0.0
  %6842 = vmatprep.subr.mxu0 0.0
  %6843 = vmatpush1.msra.mxu0 0.0
  %6844 = vmatprep.subr.mxu0 0.0
  %6845 = vmatpush1.msra.mxu0 0.0
  %6846 = vmatprep.subr.mxu0 0.0
  %6847 = vmatpush1.msra.mxu0 0.0
  %6848 = vmatprep.subr.mxu0 0.0
  %6849 = vmatpush1.msra.mxu0 0.0
  %6850 = vmatprep.subr.mxu0 0.0
  %6851 = vmatpush1.msra.mxu0 0.0
  %6852 = vmatprep.subr.mxu0 0.0
  %6853 = vmatpush1.msra.mxu0 0.0
  %6854 = vmatprep.subr.mxu0 0.0
  %6855 = vmatpush1.msra.mxu0 0.0
  %6856 = vmatprep.subr.mxu0 0.0
  %6857 = vmatpush1.msra.mxu0 0.0
  %6858 = vmatprep.subr.mxu0 0.0
  %6859 = vmatpush1.msra.mxu0 0.0
  %6860 = vmatprep.subr.mxu0 0.0
  %6861 = vmatpush1.msra.mxu0 0.0
  %6862 = vmatprep.subr.mxu0 0.0
  %6863 = vmatpush1.msra.mxu0 0.0
  %6864 = vmatprep.subr.mxu0 0.0
  %6865 = vmatpush1.msra.mxu0 0.0
  %6866 = vmatprep.subr.mxu0 0.0
  %6867 = vmatpush1.msra.mxu0 0.0
  %6868 = vmatprep.subr.mxu0 0.0
  %6869 = vmatpush1.msra.mxu0 0.0
  %6870 = vmatprep.subr.mxu0 0.0
  %6871 = vmatpush1.msra.mxu0 0.0
  %6872 = vmatprep.subr.mxu0 0.0
  %6873 = vmatpush1.msra.mxu0 0.0
  %6874 = vmatprep.subr.mxu0 0.0
  %6875 = vmatpush1.msra.mxu0 0.0
  %6876 = vmatprep.subr.mxu0 0.0
  %6877 = vmatpush1.msra.mxu0 0.0
  %6878 = vmatprep.subr.mxu0 0.0
  %6879 = vmatpush1.msra.mxu0 0.0
  %6880 = vmatprep.subr.mxu0 0.0
  %6881 = vmatpush1.msra.mxu0 0.0
  %6882 = vmatprep.subr.mxu0 0.0
  %6883 = vmatpush1.msra.mxu0 0.0
  %6884 = vmatprep.subr.mxu0 0.0
  %6885 = vmatpush1.msra.mxu0 0.0
  %6886 = vmatprep.subr.mxu0 0.0
  %6887 = vmatpush1.msra.mxu0 0.0
  %6888 = vmatprep.mubr.f32.mxu0 0.0
  %6889 = vmatmul.mubr.f32.gmra.mrb[0].mxu0 %v6822
  %v6890 = vpop.f32.mrb[0].mxu0
  %v6891 = vadd.f32 0.0, %v6890
  %v6892 = vpop.f32.mrb[0].mxu0
  %6893 = vdwg.mxu0
  %v6894 = vtanh.pop %v6891
  %v6895 = vadd.f32 %v6055, %v6719
  %v6896 = vadd.f32 %v6056, %v6894
  %v6897 = vld [vmem:[%s8] sm:$0xff]
  %vm6898 = vcmask 523264
  %v6900 = vsel %vm6898, %v6897, 0
  %6902 = vmatprep.subr.mxu0 0.0
  %6903 = vmatpush1.msra.mxu0 %v1819
  %6904 = vmatprep.subr.mxu0 0.0
  %6905 = vmatpush1.msra.mxu0 %v1820
  %6906 = vmatprep.subr.mxu0 0.0
  %6907 = vmatpush1.msra.mxu0 %v3511
  %6908 = vmatprep.subr.mxu0 0.0
  %6909 = vmatpush1.msra.mxu0 %v3512
  %6910 = vmatprep.subr.mxu0 0.0
  %6911 = vmatpush1.msra.mxu0 %v5203
  %6912 = vmatprep.subr.mxu0 0.0
  %6913 = vmatpush1.msra.mxu0 %v5204
  %6914 = vmatprep.subr.mxu0 0.0
  %6915 = vmatpush1.msra.mxu0 %v6895
  %6916 = vmatprep.subr.mxu0 0.0
  %6917 = vmatpush1.msra.mxu0 %v6896
  %6918 = vmatprep.subr.mxu0 0.0
  %6919 = vmatpush1.msra.mxu0 0.0
  %6920 = vmatprep.subr.mxu0 0.0
  %6921 = vmatpush1.msra.mxu0 0.0
  %6922 = vmatprep.subr.mxu0 0.0
  %6923 = vmatpush1.msra.mxu0 0.0
  %6924 = vmatprep.subr.mxu0 0.0
  %6925 = vmatpush1.msra.mxu0 0.0
  %6926 = vmatprep.subr.mxu0 0.0
  %6927 = vmatpush1.msra.mxu0 0.0
  %6928 = vmatprep.subr.mxu0 0.0
  %6929 = vmatpush1.msra.mxu0 0.0
  %6930 = vmatprep.subr.mxu0 0.0
  %6931 = vmatpush1.msra.mxu0 0.0
  %6932 = vmatprep.subr.mxu0 0.0
  %6933 = vmatpush1.msra.mxu0 0.0
  %6934 = vmatprep.subr.mxu0 0.0
  %6935 = vmatpush1.msra.mxu0 0.0
  %6936 = vmatprep.subr.mxu0 0.0
  %6937 = vmatpush1.msra.mxu0 0.0
  %6938 = vmatprep.subr.mxu0 0.0
  %6939 = vmatpush1.msra.mxu0 0.0
  %6940 = vmatprep.subr.mxu0 0.0
  %6941 = vmatpush1.msra.mxu0 0.0
  %6942 = vmatprep.subr.mxu0 0.0
  %6943 = vmatpush1.msra.mxu0 0.0
  %6944 = vmatprep.subr.mxu0 0.0
  %6945 = vmatpush1.msra.mxu0 0.0
  %6946 = vmatprep.subr.mxu0 0.0
  %6947 = vmatpush1.msra.mxu0 0.0
  %6948 = vmatprep.subr.mxu0 0.0
  %6949 = vmatpush1.msra.mxu0 0.0
  %6950 = vmatprep.subr.mxu0 0.0
  %6951 = vmatpush1.msra.mxu0 0.0
  %6952 = vmatprep.subr.mxu0 0.0
  %6953 = vmatpush1.msra.mxu0 0.0
  %6954 = vmatprep.subr.mxu0 0.0
  %6955 = vmatpush1.msra.mxu0 0.0
  %6956 = vmatprep.subr.mxu0 0.0
  %6957 = vmatpush1.msra.mxu0 0.0
  %6958 = vmatprep.subr.mxu0 0.0
  %6959 = vmatpush1.msra.mxu0 0.0
  %6960 = vmatprep.subr.mxu0 0.0
  %6961 = vmatpush1.msra.mxu0 0.0
  %6962 = vmatprep.subr.mxu0 0.0
  %6963 = vmatpush1.msra.mxu0 0.0
  %6964 = vmatprep.subr.mxu0 0.0
  %6965 = vmatpush1.msra.mxu0 0.0
  %6966 = vmatprep.mubr.f32.mxu0 0.0
  %6967 = vmatmul.mubr.f32.gmra.mrb[0].mxu0 %v6900
  %v6968 = vpop.f32.mrb[0].mxu0
  %v6969 = vadd.f32 0.0, %v6968
  %v6970 = vpop.f32.mrb[0].mxu0
  %6971 = vdwg.mxu0
  %v6972 = vld [vmem:[%s13] sm:$0xff]
  %v6973 = vld [vmem:[%s13 + $0x8] sm:$0xff]
  %v6974 = vld [vmem:[%s13 + $0x10] sm:$0xff]
  %v6975 = vld [vmem:[%s13 + $0x18] sm:$0xff]
  %v6976 = vld [vmem:[%s13 + $0x20] sm:$0xff]
  %v6977 = vld [vmem:[%s13 + $0x28] sm:$0xff]
  %v6978 = vld [vmem:[%s14] sm:$0x1]
  %v6980 = vlaneseq
  %v6981 = vshrl.u32 %v6980, 7
  %v6982 = vsub.s32 0, %v6981
  %v6983 = vrot.slane %v6978, %v6982
  %v6986 = vsel %vm109, %v6969, 0
  %6988 = vmatprep.subr.mxu0 0.0
  %6989 = vmatpush1.msra.mxu0 %v6972
  %6990 = vmatprep.subr.mxu0 0.0
  %6991 = vmatpush1.msra.mxu0 %v6973
  %6992 = vmatprep.subr.mxu0 0.0
  %6993 = vmatpush1.msra.mxu0 %v6974
  %6994 = vmatprep.subr.mxu0 0.0
  %6995 = vmatpush1.msra.mxu0 %v6975
  %6996 = vmatprep.subr.mxu0 0.0
  %6997 = vmatpush1.msra.mxu0 %v6976
  %6998 = vmatprep.subr.mxu0 0.0
  %6999 = vmatpush1.msra.mxu0 %v6977
  %7000 = vmatprep.subr.mxu0 0.0
  %7001 = vmatpush1.msra.mxu0 0.0
  %7002 = vmatprep.subr.mxu0 0.0
  %7003 = vmatpush1.msra.mxu0 0.0
  %7004 = vmatprep.subr.mxu0 0.0
  %7005 = vmatpush1.msra.mxu0 0.0
  %7006 = vmatprep.subr.mxu0 0.0
  %7007 = vmatpush1.msra.mxu0 0.0
  %7008 = vmatprep.subr.mxu0 0.0
  %7009 = vmatpush1.msra.mxu0 0.0
  %7010 = vmatprep.subr.mxu0 0.0
  %7011 = vmatpush1.msra.mxu0 0.0
  %7012 = vmatprep.subr.mxu0 0.0
  %7013 = vmatpush1.msra.mxu0 0.0
  %7014 = vmatprep.subr.mxu0 0.0
  %7015 = vmatpush1.msra.mxu0 0.0
  %7016 = vmatprep.subr.mxu0 0.0
  %7017 = vmatpush1.msra.mxu0 0.0
  %7018 = vmatprep.subr.mxu0 0.0
  %7019 = vmatpush1.msra.mxu0 0.0
  %7020 = vmatprep.subr.mxu0 0.0
  %7021 = vmatpush1.msra.mxu0 0.0
  %7022 = vmatprep.subr.mxu0 0.0
  %7023 = vmatpush1.msra.mxu0 0.0
  %7024 = vmatprep.subr.mxu0 0.0
  %7025 = vmatpush1.msra.mxu0 0.0
  %7026 = vmatprep.subr.mxu0 0.0
  %7027 = vmatpush1.msra.mxu0 0.0
  %7028 = vmatprep.subr.mxu0 0.0
  %7029 = vmatpush1.msra.mxu0 0.0
  %7030 = vmatprep.subr.mxu0 0.0
  %7031 = vmatpush1.msra.mxu0 0.0
  %7032 = vmatprep.subr.mxu0 0.0
  %7033 = vmatpush1.msra.mxu0 0.0
  %7034 = vmatprep.subr.mxu0 0.0
  %7035 = vmatpush1.msra.mxu0 0.0
  %7036 = vmatprep.subr.mxu0 0.0
  %7037 = vmatpush1.msra.mxu0 0.0
  %7038 = vmatprep.subr.mxu0 0.0
  %7039 = vmatpush1.msra.mxu0 0.0
  %7040 = vmatprep.subr.mxu0 0.0
  %7041 = vmatpush1.msra.mxu0 0.0
  %7042 = vmatprep.subr.mxu0 0.0
  %7043 = vmatpush1.msra.mxu0 0.0
  %7044 = vmatprep.subr.mxu0 0.0
  %7045 = vmatpush1.msra.mxu0 0.0
  %7046 = vmatprep.subr.mxu0 0.0
  %7047 = vmatpush1.msra.mxu0 0.0
  %7048 = vmatprep.subr.mxu0 0.0
  %7049 = vmatpush1.msra.mxu0 0.0
  %7050 = vmatprep.subr.mxu0 0.0
  %7051 = vmatpush1.msra.mxu0 0.0
  %7052 = vmatprep.mubr.f32.mxu0 0.0
  %7053 = vmatmul.mubr.f32.gmra.mrb[0].mxu0 %v6986
  %v7054 = vpop.f32.mrb[0].mxu0
  %v7055 = vadd.f32 %v6983, %v7054
  %v7056 = vpop.f32.mrb[0].mxu0
  %7057 = vdwg.mxu0
  %v7058 = vmax.f32 %v7055, 0.0
  %v7059 = vld [vmem:[%s15] sm:$0xff]
  %v7060 = vld [vmem:[%s15 + $0x8] sm:$0xff]
  %v7061 = vld [vmem:[%s15 + $0x10] sm:$0xff]
  %v7062 = vld [vmem:[%s15 + $0x18] sm:$0xff]
  %v7063 = vld [vmem:[%s16] sm:$0x1]
  %v7065 = vlaneseq
  %v7066 = vshrl.u32 %v7065, 7
  %v7067 = vsub.s32 0, %v7066
  %v7068 = vrot.slane %v7063, %v7067
  %vm7070 = vcmask 261120
  %v7072 = vsel %vm7070, %v7058, 0
  %7074 = vmatprep.subr.mxu0 0.0
  %7075 = vmatpush1.msra.mxu0 %v7059
  %7076 = vmatprep.subr.mxu0 0.0
  %7077 = vmatpush1.msra.mxu0 %v7060
  %7078 = vmatprep.subr.mxu0 0.0
  %7079 = vmatpush1.msra.mxu0 %v7061
  %7080 = vmatprep.subr.mxu0 0.0
  %7081 = vmatpush1.msra.mxu0 %v7062
  %7082 = vmatprep.subr.mxu0 0.0
  %7083 = vmatpush1.msra.mxu0 0.0
  %7084 = vmatprep.subr.mxu0 0.0
  %7085 = vmatpush1.msra.mxu0 0.0
  %7086 = vmatprep.subr.mxu0 0.0
  %7087 = vmatpush1.msra.mxu0 0.0
  %7088 = vmatprep.subr.mxu0 0.0
  %7089 = vmatpush1.msra.mxu0 0.0
  %7090 = vmatprep.subr.mxu0 0.0
  %7091 = vmatpush1.msra.mxu0 0.0
  %7092 = vmatprep.subr.mxu0 0.0
  %7093 = vmatpush1.msra.mxu0 0.0
  %7094 = vmatprep.subr.mxu0 0.0
  %7095 = vmatpush1.msra.mxu0 0.0
  %7096 = vmatprep.subr.mxu0 0.0
  %7097 = vmatpush1.msra.mxu0 0.0
  %7098 = vmatprep.subr.mxu0 0.0
  %7099 = vmatpush1.msra.mxu0 0.0
  %7100 = vmatprep.subr.mxu0 0.0
  %7101 = vmatpush1.msra.mxu0 0.0
  %7102 = vmatprep.subr.mxu0 0.0
  %7103 = vmatpush1.msra.mxu0 0.0
  %7104 = vmatprep.subr.mxu0 0.0
  %7105 = vmatpush1.msra.mxu0 0.0
  %7106 = vmatprep.subr.mxu0 0.0
  %7107 = vmatpush1.msra.mxu0 0.0
  %7108 = vmatprep.subr.mxu0 0.0
  %7109 = vmatpush1.msra.mxu0 0.0
  %7110 = vmatprep.subr.mxu0 0.0
  %7111 = vmatpush1.msra.mxu0 0.0
  %7112 = vmatprep.subr.mxu0 0.0
  %7113 = vmatpush1.msra.mxu0 0.0
  %7114 = vmatprep.subr.mxu0 0.0
  %7115 = vmatpush1.msra.mxu0 0.0
  %7116 = vmatprep.subr.mxu0 0.0
  %7117 = vmatpush1.msra.mxu0 0.0
  %7118 = vmatprep.subr.mxu0 0.0
  %7119 = vmatpush1.msra.mxu0 0.0
  %7120 = vmatprep.subr.mxu0 0.0
  %7121 = vmatpush1.msra.mxu0 0.0
  %7122 = vmatprep.subr.mxu0 0.0
  %7123 = vmatpush1.msra.mxu0 0.0
  %7124 = vmatprep.subr.mxu0 0.0
  %7125 = vmatpush1.msra.mxu0 0.0
  %7126 = vmatprep.subr.mxu0 0.0
  %7127 = vmatpush1.msra.mxu0 0.0
  %7128 = vmatprep.subr.mxu0 0.0
  %7129 = vmatpush1.msra.mxu0 0.0
  %7130 = vmatprep.subr.mxu0 0.0
  %7131 = vmatpush1.msra.mxu0 0.0
  %7132 = vmatprep.subr.mxu0 0.0
  %7133 = vmatpush1.msra.mxu0 0.0
  %7134 = vmatprep.subr.mxu0 0.0
  %7135 = vmatpush1.msra.mxu0 0.0
  %7136 = vmatprep.subr.mxu0 0.0
  %7137 = vmatpush1.msra.mxu0 0.0
  %7138 = vmatprep.mubr.f32.mxu0 0.0
  %7139 = vmatmul.mubr.f32.gmra.mrb[0].mxu0 %v7072
  %v7140 = vpop.f32.mrb[0].mxu0
  %v7141 = vadd.f32 %v7068, %v7140
  %v7142 = vpop.f32.mrb[0].mxu0
  %7143 = vdwg.mxu0
  %v7144 = vmax.f32 %v7141, 0.0
  %v7145 = vld [vmem:[%s17] sm:$0xff]
  %v7146 = vld [vmem:[%s17 + $0x8] sm:$0xff]
  %v7147 = vld [vmem:[%s17 + $0x10] sm:$0xff]
  %v7148 = vld [vmem:[%s17 + $0x18] sm:$0xff]
  %v7149 = vld [vmem:[%s18] sm:$0x1]
  %v7151 = vlaneseq
  %v7152 = vshrl.u32 %v7151, 7
  %v7153 = vsub.s32 0, %v7152
  %v7154 = vrot.slane %v7149, %v7153
  %v7157 = vsel %vm7070, %v7144, 0
  %7159 = vmatprep.subr.mxu0 0.0
  %7160 = vmatpush1.msra.mxu0 %v7145
  %7161 = vmatprep.subr.mxu0 0.0
  %7162 = vmatpush1.msra.mxu0 %v7146
  %7163 = vmatprep.subr.mxu0 0.0
  %7164 = vmatpush1.msra.mxu0 %v7147
  %7165 = vmatprep.subr.mxu0 0.0
  %7166 = vmatpush1.msra.mxu0 %v7148
  %7167 = vmatprep.subr.mxu0 0.0
  %7168 = vmatpush1.msra.mxu0 0.0
  %7169 = vmatprep.subr.mxu0 0.0
  %7170 = vmatpush1.msra.mxu0 0.0
  %7171 = vmatprep.subr.mxu0 0.0
  %7172 = vmatpush1.msra.mxu0 0.0
  %7173 = vmatprep.subr.mxu0 0.0
  %7174 = vmatpush1.msra.mxu0 0.0
  %7175 = vmatprep.subr.mxu0 0.0
  %7176 = vmatpush1.msra.mxu0 0.0
  %7177 = vmatprep.subr.mxu0 0.0
  %7178 = vmatpush1.msra.mxu0 0.0
  %7179 = vmatprep.subr.mxu0 0.0
  %7180 = vmatpush1.msra.mxu0 0.0
  %7181 = vmatprep.subr.mxu0 0.0
  %7182 = vmatpush1.msra.mxu0 0.0
  %7183 = vmatprep.subr.mxu0 0.0
  %7184 = vmatpush1.msra.mxu0 0.0
  %7185 = vmatprep.subr.mxu0 0.0
  %7186 = vmatpush1.msra.mxu0 0.0
  %7187 = vmatprep.subr.mxu0 0.0
  %7188 = vmatpush1.msra.mxu0 0.0
  %7189 = vmatprep.subr.mxu0 0.0
  %7190 = vmatpush1.msra.mxu0 0.0
  %7191 = vmatprep.subr.mxu0 0.0
  %7192 = vmatpush1.msra.mxu0 0.0
  %7193 = vmatprep.subr.mxu0 0.0
  %7194 = vmatpush1.msra.mxu0 0.0
  %7195 = vmatprep.subr.mxu0 0.0
  %7196 = vmatpush1.msra.mxu0 0.0
  %7197 = vmatprep.subr.mxu0 0.0
  %7198 = vmatpush1.msra.mxu0 0.0
  %7199 = vmatprep.subr.mxu0 0.0
  %7200 = vmatpush1.msra.mxu0 0.0
  %7201 = vmatprep.subr.mxu0 0.0
  %7202 = vmatpush1.msra.mxu0 0.0
  %7203 = vmatprep.subr.mxu0 0.0
  %7204 = vmatpush1.msra.mxu0 0.0
  %7205 = vmatprep.subr.mxu0 0.0
  %7206 = vmatpush1.msra.mxu0 0.0
  %7207 = vmatprep.subr.mxu0 0.0
  %7208 = vmatpush1.msra.mxu0 0.0
  %7209 = vmatprep.subr.mxu0 0.0
  %7210 = vmatpush1.msra.mxu0 0.0
  %7211 = vmatprep.subr.mxu0 0.0
  %7212 = vmatpush1.msra.mxu0 0.0
  %7213 = vmatprep.subr.mxu0 0.0
  %7214 = vmatpush1.msra.mxu0 0.0
  %7215 = vmatprep.subr.mxu0 0.0
  %7216 = vmatpush1.msra.mxu0 0.0
  %7217 = vmatprep.subr.mxu0 0.0
  %7218 = vmatpush1.msra.mxu0 0.0
  %7219 = vmatprep.subr.mxu0 0.0
  %7220 = vmatpush1.msra.mxu0 0.0
  %7221 = vmatprep.subr.mxu0 0.0
  %7222 = vmatpush1.msra.mxu0 0.0
  %7223 = vmatprep.mubr.f32.mxu0 0.0
  %7224 = vmatmul.mubr.f32.gmra.mrb[0].mxu0 %v7157
  %v7225 = vpop.f32.mrb[0].mxu0
  %v7226 = vadd.f32 %v7154, %v7225
  %v7227 = vpop.f32.mrb[0].mxu0
  %7228 = vdwg.mxu0
  %v7229 = vld [vmem:[%s9] sm:$0xf]
  %v7230 = vlaneseq
  %v7231 = vshrl.u32 %v7230, 7
  %v7232 = vsub.s32 0, %v7231
  %v7233 = vrot.slane %v7229, %v7232
  %v7234 = vmul.f32 %v7226, %v7233
  %v7235 = vadd.f32 %v7234, 0.0
  %v7236 = vlaneseq
  %v7237 = vshrl.u32 %v7236, 7
  %v7238 = vsub.s32 1, %v7237
  %v7239 = vrot.slane %v7229, %v7238
  %v7240 = vmul.f32 %v7226, %v7239
  %v7242 = vrot.slane %v7240, 2
  %v7244 = vadd.f32 %v7235, %v7242
  %v7245 = vlaneseq
  %v7246 = vshrl.u32 %v7245, 7
  %v7247 = vsub.s32 2, %v7246
  %v7248 = vrot.slane %v7229, %v7247
  %v7249 = vmul.f32 %v7226, %v7248
  %v7251 = vrot.slane %v7249, 4
  %v7253 = vadd.f32 %v7244, %v7251
  %v7254 = vlaneseq
  %v7255 = vshrl.u32 %v7254, 7
  %v7256 = vsub.s32 3, %v7255
  %v7257 = vrot.slane %v7229, %v7256
  %v7258 = vmul.f32 %v7226, %v7257
  %v7260 = vrot.slane %v7258, 6
  %v7262 = vadd.f32 %v7253, %v7260
  %vm7263 = vcmask 91136
  %7264 = vst.msk [vmem:[%s19] sm:$0x3] %vm7263, %v7262
  // Predicated region
  $region78: #{_multigat_forward.1} parent=0 // pred_check
    _
  $region79: #{_multigat_forward.1} parent=0 // pred_check_branch
    %7266 = sbr.rel (0) target = $region81
  $region80: #{_multigat_forward.1} parent=0 // pred_region
    _
  $region81: #{_multigat_forward.1} parent=0 // pred_fallthru
    _
  // Predicated region
  $region82: #{_multigat_forward.1} parent=0 // pred_check
    _
  $region83: #{_multigat_forward.1} parent=0 // pred_check_branch
    %7268 = sbr.rel (0) target = $region85
  $region84: #{_multigat_forward.1} parent=0 // pred_region
    _
  $region85: #{_multigat_forward.1} parent=0 // pred_fallthru
    _

</llo_original>
